<compile_context>
chip_gen: v7x
topology: tpu7x:2x2x1
jax: 0.10.0
libtpu: 0.0.40
codegen_flags: <defaults>
</compile_context>

<pallas_src>
import jax
import jax.numpy as jnp
from jax import lax
from jax.experimental import pallas as pl
from jax.experimental.pallas import tpu as pltpu

EMB_DIM = 384
NUM_HEADS = 6
HEAD_SIZE = EMB_DIM // NUM_HEADS  # 64
BLOCK_SIZE = 256                  # max sequence length (causal mask size)


def multihead_kernel(x_ref, wqkv_ref, wp_ref, bp_ref, o_ref, qkv_ref, att_ref):
    # x_ref: (1, T, C) f32 block for one batch element.
    # wqkv_ref: (C, 3C) bf16 (Q columns pre-scaled), wp_ref: (C, C) bf16,
    # bp_ref: (1, C) f32.
    # qkv_ref: (T, 3C) bf16 scratch, att_ref: (T, C) bf16 concat scratch.
    T = x_ref.shape[1]
    xb = x_ref[0].astype(jnp.bfloat16)                                 # (T, C)

    # Fused QKV projection: one wide matmul (f32 accumulate), stored as bf16.
    qkv_ref[...] = jnp.dot(
        xb, wqkv_ref[...], preferred_element_type=jnp.float32
    ).astype(jnp.bfloat16)                                             # (T, 3C)

    # Causal mask, built once per batch element (hoisted out of the head loop).
    row = lax.broadcasted_iota(jnp.int32, (T, T), 0)
    col = lax.broadcasted_iota(jnp.int32, (T, T), 1)
    causal = col <= row                                                # tril mask

    # Static unroll over the 6 heads.
    for h in range(NUM_HEADS):
        q = qkv_ref[:, h * HEAD_SIZE:(h + 1) * HEAD_SIZE]              # (T,64) bf16
        k = qkv_ref[:, EMB_DIM + h * HEAD_SIZE:
                       EMB_DIM + (h + 1) * HEAD_SIZE]                  # (T,64) bf16
        v = qkv_ref[:, 2 * EMB_DIM + h * HEAD_SIZE:
                       2 * EMB_DIM + (h + 1) * HEAD_SIZE]              # (T,64) bf16

        # Contract the shared last dim directly -> no materialized transpose.
        s = lax.dot_general(q, k, (((1,), (1,)), ((), ())),
                            preferred_element_type=jnp.float32)        # (T,T) f32
        s = jnp.where(causal, s, -jnp.inf)
        s = s - jnp.max(s, axis=-1, keepdims=True)
        p = jnp.exp(s)
        inv = pl.reciprocal(jnp.sum(p, axis=-1, keepdims=True), approx=True)
        p = (p * inv).astype(jnp.bfloat16)                             # softmax
        # (attention dropout is identity in eval mode)

        head_out = jnp.dot(p, v, preferred_element_type=jnp.float32)   # (T,64)
        att_ref[:, h * HEAD_SIZE:(h + 1) * HEAD_SIZE] = head_out.astype(jnp.bfloat16)

    # Single full-depth output projection + bias (one broadcast, one store).
    proj = jnp.dot(att_ref[...], wp_ref[...],
                   preferred_element_type=jnp.float32)                 # (T, C) f32
    o_ref[0] = proj + bp_ref[...]
    # (output dropout is identity in eval mode)


def multihead(x, wq, wk, wv, wp, bp):
    B, T, C = x.shape
    assert C == EMB_DIM and T <= BLOCK_SIZE and T % 8 == 0

    # (H, C, hs) -> (C, H*hs), columns grouped by head; fuse Q|K|V side by side.
    def to2d(w):
        return jnp.transpose(w, (1, 0, 2)).reshape(C, NUM_HEADS * HEAD_SIZE)

    scale = float(C) ** -0.5  # matches `C ** (-0.5)` in the torch forward
    w_qkv = jnp.concatenate([to2d(wq) * scale, to2d(wk), to2d(wv)],
                            axis=1).astype(jnp.bfloat16)               # (C, 3C)
    wp_b = wp.astype(jnp.bfloat16)                                     # (C, C)

    return pl.pallas_call(
        multihead_kernel,
        out_shape=jax.ShapeDtypeStruct((B, T, C), jnp.float32),
        grid=(B,),
        in_specs=[
            pl.BlockSpec((1, T, C), lambda b: (b, 0, 0)),              # x
            pl.BlockSpec((C, 3 * C), lambda b: (0, 0)),                # fused Wqkv
            pl.BlockSpec((C, C), lambda b: (0, 0)),                    # Wp
            pl.BlockSpec((1, C), lambda b: (0, 0)),                    # bp
        ],
        out_specs=pl.BlockSpec((1, T, C), lambda b: (b, 0, 0)),
        scratch_shapes=[pltpu.VMEM((T, 3 * C), jnp.bfloat16),          # QKV buffer
                        pltpu.VMEM((T, C), jnp.bfloat16)],             # head concat
        compiler_params=pltpu.CompilerParams(dimension_semantics=("parallel",)),
    )(x, w_qkv, wp_b, bp)


def multihead_ref(x, wq, wk, wv, wp, bp):
    """Pure-JAX f32 reference mirroring the PyTorch forward (eval mode)."""
    B, T, C = x.shape
    mask = jnp.tril(jnp.ones((T, T), dtype=bool))
    outs = []
    for h in range(NUM_HEADS):
        q = x @ wq[h]
        k = x @ wk[h]
        v = x @ wv[h]
        s = (q @ jnp.swapaxes(k, -1, -2)) * (C ** -0.5)
        s = jnp.where(mask, s, -jnp.inf)
        p = jax.nn.softmax(s, axis=-1)
        outs.append(p @ v)
    cat = jnp.concatenate(outs, axis=-1)
    return cat @ wp + bp


if __name__ == "__main__":
    key = jax.random.PRNGKey(0)
    k_x, k_q, k_k, k_v, k_p, k_b = jax.random.split(key, 6)

    B, T = 2, 128  # T <= block_size, multiple of 8
    x = jax.random.normal(k_x, (B, T, EMB_DIM), dtype=jnp.float32)

    # deterministic parameter init (shapes from the module's __init__)
    wq = 0.02 * jax.random.normal(k_q, (NUM_HEADS, EMB_DIM, HEAD_SIZE), dtype=jnp.float32)
    wk = 0.02 * jax.random.normal(k_k, (NUM_HEADS, EMB_DIM, HEAD_SIZE), dtype=jnp.float32)
    wv = 0.02 * jax.random.normal(k_v, (NUM_HEADS, EMB_DIM, HEAD_SIZE), dtype=jnp.float32)
    wp = 0.02 * jax.random.normal(k_p, (EMB_DIM, EMB_DIM), dtype=jnp.float32)
    bp = 0.02 * jax.random.normal(k_b, (1, EMB_DIM), dtype=jnp.float32)

    out = multihead(x, wq, wk, wv, wp, bp)
    out = jax.block_until_ready(out)

    ref = multihead_ref(x, wq, wk, wv, wp, bp)
    assert out.shape == (B, T, EMB_DIM)
    # bf16 matmul operands + approx reciprocal -> loosened tolerance vs f32 ref
    assert jnp.allclose(out, ref, atol=3e-2, rtol=3e-2), "mismatch vs. reference"

    print("KERNEL_OK")
</pallas_src>

<mosaic_0001>
module attributes {stable_mosaic.version = 11 : i64} {
  func.func @multihead_kernel(%arg0: i32, %arg1: memref<1x128x384xf32, #tpu.memory_space<vmem>>, %arg2: memref<384x1152xbf16, #tpu.memory_space<vmem>>, %arg3: memref<384x384xbf16, #tpu.memory_space<vmem>>, %arg4: memref<1x384xf32, #tpu.memory_space<vmem>>, %arg5: memref<1x128x384xf32, #tpu.memory_space<vmem>>, %arg6: memref<128x1152xbf16, #tpu.memory_space<vmem>>, %arg7: memref<128x384xbf16, #tpu.memory_space<vmem>>) attributes {dimension_semantics = [#tpu.dimension_semantics<parallel>], iteration_bounds = array<i64: 2>, scalar_prefetch = 0 : i64, scratch_operands = 2 : i64, tpu.core_type = #tpu.core_type<tc>, window_params = [{transform_indices = @transform_0, window_bounds = array<i64: 1, 128, 384>}, {pipeline_mode = #tpu.pipeline_mode<synchronous>, transform_indices = @transform_1, window_bounds = array<i64: 384, 1152>}, {pipeline_mode = #tpu.pipeline_mode<synchronous>, transform_indices = @transform_2, window_bounds = array<i64: 384, 384>}, {pipeline_mode = #tpu.pipeline_mode<synchronous>, transform_indices = @transform_3, window_bounds = array<i64: 1, 384>}, {transform_indices = @transform_4, window_bounds = array<i64: 1, 128, 384>}]} {
    %c0 = arith.constant 0 : index
    %c0_0 = arith.constant 0 : index
    %c0_1 = arith.constant 0 : index
    %0 = vector.load %arg1[%c0, %c0_0, %c0_1] : memref<1x128x384xf32, #tpu.memory_space<vmem>>, vector<1x128x384xf32>
    %1 = vector.shape_cast %0 : vector<1x128x384xf32> to vector<128x384xf32>
    %2 = arith.truncf %1 : vector<128x384xf32> to vector<128x384xbf16>
    %c0_2 = arith.constant 0 : index
    %c0_3 = arith.constant 0 : index
    %3 = vector.load %arg2[%c0_2, %c0_3] : memref<384x1152xbf16, #tpu.memory_space<vmem>>, vector<384x1152xbf16>
    %cst = arith.constant dense<0.000000e+00> : vector<128x1152xf32>
    %4 = tpu.matmul %2, %3, %cst {dimension_numbers = #tpu.dot_dimension_numbers<[1], [0], [0], [1], [0, 0, 1, 1], [], []>} : vector<128x384xbf16>, vector<384x1152xbf16>, vector<128x1152xf32> -> vector<128x1152xf32>
    %5 = arith.truncf %4 : vector<128x1152xf32> to vector<128x1152xbf16>
    %c0_4 = arith.constant 0 : index
    %c0_5 = arith.constant 0 : index
    %6 = vector.load %arg6[%c0_4, %c0_5] : memref<128x1152xbf16, #tpu.memory_space<vmem>>, vector<128x1152xbf16>
    tpu.vector_store %arg6[%c0_4, %c0_5], %5 {strides = array<i32>} : memref<128x1152xbf16, #tpu.memory_space<vmem>>, vector<128x1152xbf16>,
    %7 = tpu.iota {dimensions = array<i32: 0>} : vector<128x128xi32>
    %8 = tpu.iota {dimensions = array<i32: 1>} : vector<128x128xi32>
    %9 = arith.cmpi sle, %8, %7 : vector<128x128xi32>
    %c0_6 = arith.constant 0 : index
    %c0_7 = arith.constant 0 : index
    %10 = vector.load %arg6[%c0_6, %c0_7] : memref<128x1152xbf16, #tpu.memory_space<vmem>>, vector<128x64xbf16>
    %c0_8 = arith.constant 0 : index
    %c384 = arith.constant 384 : index
    %11 = vector.load %arg6[%c0_8, %c384] : memref<128x1152xbf16, #tpu.memory_space<vmem>>, vector<128x64xbf16>
    %c0_9 = arith.constant 0 : index
    %c768 = arith.constant 768 : index
    %12 = vector.load %arg6[%c0_9, %c768] : memref<128x1152xbf16, #tpu.memory_space<vmem>>, vector<128x64xbf16>
    %cst_10 = arith.constant dense<0.000000e+00> : vector<128x128xf32>
    %13 = tpu.matmul %10, %11, %cst_10 {dimension_numbers = #tpu.dot_dimension_numbers<[1], [1], [0], [0], [0, 0, 1, 0], [], []>} : vector<128x64xbf16>, vector<128x64xbf16>, vector<128x128xf32> -> vector<128x128xf32>
    %cst_11 = arith.constant 0xFF800000 : f32
    %14 = vector.broadcast %cst_11 : f32 to vector<128x128xf32>
    %15 = arith.select %9, %13, %14 : vector<128x128xi1>, vector<128x128xf32>
    %cst_12 = arith.constant dense<0xFF800000> : vector<128xf32>
    %16 = vector.multi_reduction <maximumf>, %15, %cst_12 [1] : vector<128x128xf32> to vector<128xf32>
    %17 = vector.shape_cast %16 : vector<128xf32> to vector<128x1xf32>
    %18 = vector.broadcast %17 : vector<128x1xf32> to vector<128x128xf32>
    %19 = arith.subf %15, %18 : vector<128x128xf32>
    %20 = math.exp %19 : vector<128x128xf32>
    %cst_13 = arith.constant dense<0.000000e+00> : vector<128xf32>
    %21 = vector.multi_reduction <add>, %20, %cst_13 [1] : vector<128x128xf32> to vector<128xf32>
    %22 = vector.shape_cast %21 : vector<128xf32> to vector<128x1xf32>
    %23 = tpu.reciprocal %22 {approx = true} : vector<128x1xf32> -> vector<128x1xf32>
    %24 = vector.broadcast %23 : vector<128x1xf32> to vector<128x128xf32>
    %25 = arith.mulf %20, %24 : vector<128x128xf32>
    %26 = arith.truncf %25 : vector<128x128xf32> to vector<128x128xbf16>
    %cst_14 = arith.constant dense<0.000000e+00> : vector<128x64xf32>
    %27 = tpu.matmul %26, %12, %cst_14 {dimension_numbers = #tpu.dot_dimension_numbers<[1], [0], [0], [1], [0, 0, 1, 1], [], []>} : vector<128x128xbf16>, vector<128x64xbf16>, vector<128x64xf32> -> vector<128x64xf32>
    %28 = arith.truncf %27 : vector<128x64xf32> to vector<128x64xbf16>
    %c0_15 = arith.constant 0 : index
    %c0_16 = arith.constant 0 : index
    %29 = vector.load %arg7[%c0_15, %c0_16] : memref<128x384xbf16, #tpu.memory_space<vmem>>, vector<128x64xbf16>
    tpu.vector_store %arg7[%c0_15, %c0_16], %28 {strides = array<i32>} : memref<128x384xbf16, #tpu.memory_space<vmem>>, vector<128x64xbf16>,
    %c0_17 = arith.constant 0 : index
    %c64 = arith.constant 64 : index
    %30 = vector.load %arg6[%c0_17, %c64] : memref<128x1152xbf16, #tpu.memory_space<vmem>>, vector<128x64xbf16>
    %c0_18 = arith.constant 0 : index
    %c448 = arith.constant 448 : index
    %31 = vector.load %arg6[%c0_18, %c448] : memref<128x1152xbf16, #tpu.memory_space<vmem>>, vector<128x64xbf16>
    %c0_19 = arith.constant 0 : index
    %c832 = arith.constant 832 : index
    %32 = vector.load %arg6[%c0_19, %c832] : memref<128x1152xbf16, #tpu.memory_space<vmem>>, vector<128x64xbf16>
    %cst_20 = arith.constant dense<0.000000e+00> : vector<128x128xf32>
    %33 = tpu.matmul %30, %31, %cst_20 {dimension_numbers = #tpu.dot_dimension_numbers<[1], [1], [0], [0], [0, 0, 1, 0], [], []>} : vector<128x64xbf16>, vector<128x64xbf16>, vector<128x128xf32> -> vector<128x128xf32>
    %cst_21 = arith.constant 0xFF800000 : f32
    %34 = vector.broadcast %cst_21 : f32 to vector<128x128xf32>
    %35 = arith.select %9, %33, %34 : vector<128x128xi1>, vector<128x128xf32>
    %cst_22 = arith.constant dense<0xFF800000> : vector<128xf32>
    %36 = vector.multi_reduction <maximumf>, %35, %cst_22 [1] : vector<128x128xf32> to vector<128xf32>
    %37 = vector.shape_cast %36 : vector<128xf32> to vector<128x1xf32>
    %38 = vector.broadcast %37 : vector<128x1xf32> to vector<128x128xf32>
    %39 = arith.subf %35, %38 : vector<128x128xf32>
    %40 = math.exp %39 : vector<128x128xf32>
    %cst_23 = arith.constant dense<0.000000e+00> : vector<128xf32>
    %41 = vector.multi_reduction <add>, %40, %cst_23 [1] : vector<128x128xf32> to vector<128xf32>
    %42 = vector.shape_cast %41 : vector<128xf32> to vector<128x1xf32>
    %43 = tpu.reciprocal %42 {approx = true} : vector<128x1xf32> -> vector<128x1xf32>
    %44 = vector.broadcast %43 : vector<128x1xf32> to vector<128x128xf32>
    %45 = arith.mulf %40, %44 : vector<128x128xf32>
    %46 = arith.truncf %45 : vector<128x128xf32> to vector<128x128xbf16>
    %cst_24 = arith.constant dense<0.000000e+00> : vector<128x64xf32>
    %47 = tpu.matmul %46, %32, %cst_24 {dimension_numbers = #tpu.dot_dimension_numbers<[1], [0], [0], [1], [0, 0, 1, 1], [], []>} : vector<128x128xbf16>, vector<128x64xbf16>, vector<128x64xf32> -> vector<128x64xf32>
    %48 = arith.truncf %47 : vector<128x64xf32> to vector<128x64xbf16>
    %c0_25 = arith.constant 0 : index
    %c64_26 = arith.constant 64 : index
    %49 = vector.load %arg7[%c0_25, %c64_26] : memref<128x384xbf16, #tpu.memory_space<vmem>>, vector<128x64xbf16>
    tpu.vector_store %arg7[%c0_25, %c64_26], %48 {strides = array<i32>} : memref<128x384xbf16, #tpu.memory_space<vmem>>, vector<128x64xbf16>,
    %c0_27 = arith.constant 0 : index
    %c128 = arith.constant 128 : index
    %50 = vector.load %arg6[%c0_27, %c128] : memref<128x1152xbf16, #tpu.memory_space<vmem>>, vector<128x64xbf16>
    %c0_28 = arith.constant 0 : index
    %c512 = arith.constant 512 : index
    %51 = vector.load %arg6[%c0_28, %c512] : memref<128x1152xbf16, #tpu.memory_space<vmem>>, vector<128x64xbf16>
    %c0_29 = arith.constant 0 : index
    %c896 = arith.constant 896 : index
    %52 = vector.load %arg6[%c0_29, %c896] : memref<128x1152xbf16, #tpu.memory_space<vmem>>, vector<128x64xbf16>
    %cst_30 = arith.constant dense<0.000000e+00> : vector<128x128xf32>
    %53 = tpu.matmul %50, %51, %cst_30 {dimension_numbers = #tpu.dot_dimension_numbers<[1], [1], [0], [0], [0, 0, 1, 0], [], []>} : vector<128x64xbf16>, vector<128x64xbf16>, vector<128x128xf32> -> vector<128x128xf32>
    %cst_31 = arith.constant 0xFF800000 : f32
    %54 = vector.broadcast %cst_31 : f32 to vector<128x128xf32>
    %55 = arith.select %9, %53, %54 : vector<128x128xi1>, vector<128x128xf32>
    %cst_32 = arith.constant dense<0xFF800000> : vector<128xf32>
    %56 = vector.multi_reduction <maximumf>, %55, %cst_32 [1] : vector<128x128xf32> to vector<128xf32>
    %57 = vector.shape_cast %56 : vector<128xf32> to vector<128x1xf32>
    %58 = vector.broadcast %57 : vector<128x1xf32> to vector<128x128xf32>
    %59 = arith.subf %55, %58 : vector<128x128xf32>
    %60 = math.exp %59 : vector<128x128xf32>
    %cst_33 = arith.constant dense<0.000000e+00> : vector<128xf32>
    %61 = vector.multi_reduction <add>, %60, %cst_33 [1] : vector<128x128xf32> to vector<128xf32>
    %62 = vector.shape_cast %61 : vector<128xf32> to vector<128x1xf32>
    %63 = tpu.reciprocal %62 {approx = true} : vector<128x1xf32> -> vector<128x1xf32>
    %64 = vector.broadcast %63 : vector<128x1xf32> to vector<128x128xf32>
    %65 = arith.mulf %60, %64 : vector<128x128xf32>
    %66 = arith.truncf %65 : vector<128x128xf32> to vector<128x128xbf16>
    %cst_34 = arith.constant dense<0.000000e+00> : vector<128x64xf32>
    %67 = tpu.matmul %66, %52, %cst_34 {dimension_numbers = #tpu.dot_dimension_numbers<[1], [0], [0], [1], [0, 0, 1, 1], [], []>} : vector<128x128xbf16>, vector<128x64xbf16>, vector<128x64xf32> -> vector<128x64xf32>
    %68 = arith.truncf %67 : vector<128x64xf32> to vector<128x64xbf16>
    %c0_35 = arith.constant 0 : index
    %c128_36 = arith.constant 128 : index
    %69 = vector.load %arg7[%c0_35, %c128_36] : memref<128x384xbf16, #tpu.memory_space<vmem>>, vector<128x64xbf16>
    tpu.vector_store %arg7[%c0_35, %c128_36], %68 {strides = array<i32>} : memref<128x384xbf16, #tpu.memory_space<vmem>>, vector<128x64xbf16>,
    %c0_37 = arith.constant 0 : index
    %c192 = arith.constant 192 : index
    %70 = vector.load %arg6[%c0_37, %c192] : memref<128x1152xbf16, #tpu.memory_space<vmem>>, vector<128x64xbf16>
    %c0_38 = arith.constant 0 : index
    %c576 = arith.constant 576 : index
    %71 = vector.load %arg6[%c0_38, %c576] : memref<128x1152xbf16, #tpu.memory_space<vmem>>, vector<128x64xbf16>
    %c0_39 = arith.constant 0 : index
    %c960 = arith.constant 960 : index
    %72 = vector.load %arg6[%c0_39, %c960] : memref<128x1152xbf16, #tpu.memory_space<vmem>>, vector<128x64xbf16>
    %cst_40 = arith.constant dense<0.000000e+00> : vector<128x128xf32>
    %73 = tpu.matmul %70, %71, %cst_40 {dimension_numbers = #tpu.dot_dimension_numbers<[1], [1], [0], [0], [0, 0, 1, 0], [], []>} : vector<128x64xbf16>, vector<128x64xbf16>, vector<128x128xf32> -> vector<128x128xf32>
    %cst_41 = arith.constant 0xFF800000 : f32
    %74 = vector.broadcast %cst_41 : f32 to vector<128x128xf32>
    %75 = arith.select %9, %73, %74 : vector<128x128xi1>, vector<128x128xf32>
    %cst_42 = arith.constant dense<0xFF800000> : vector<128xf32>
    %76 = vector.multi_reduction <maximumf>, %75, %cst_42 [1] : vector<128x128xf32> to vector<128xf32>
    %77 = vector.shape_cast %76 : vector<128xf32> to vector<128x1xf32>
    %78 = vector.broadcast %77 : vector<128x1xf32> to vector<128x128xf32>
    %79 = arith.subf %75, %78 : vector<128x128xf32>
    %80 = math.exp %79 : vector<128x128xf32>
    %cst_43 = arith.constant dense<0.000000e+00> : vector<128xf32>
    %81 = vector.multi_reduction <add>, %80, %cst_43 [1] : vector<128x128xf32> to vector<128xf32>
    %82 = vector.shape_cast %81 : vector<128xf32> to vector<128x1xf32>
    %83 = tpu.reciprocal %82 {approx = true} : vector<128x1xf32> -> vector<128x1xf32>
    %84 = vector.broadcast %83 : vector<128x1xf32> to vector<128x128xf32>
    %85 = arith.mulf %80, %84 : vector<128x128xf32>
    %86 = arith.truncf %85 : vector<128x128xf32> to vector<128x128xbf16>
    %cst_44 = arith.constant dense<0.000000e+00> : vector<128x64xf32>
    %87 = tpu.matmul %86, %72, %cst_44 {dimension_numbers = #tpu.dot_dimension_numbers<[1], [0], [0], [1], [0, 0, 1, 1], [], []>} : vector<128x128xbf16>, vector<128x64xbf16>, vector<128x64xf32> -> vector<128x64xf32>
    %88 = arith.truncf %87 : vector<128x64xf32> to vector<128x64xbf16>
    %c0_45 = arith.constant 0 : index
    %c192_46 = arith.constant 192 : index
    %89 = vector.load %arg7[%c0_45, %c192_46] : memref<128x384xbf16, #tpu.memory_space<vmem>>, vector<128x64xbf16>
    tpu.vector_store %arg7[%c0_45, %c192_46], %88 {strides = array<i32>} : memref<128x384xbf16, #tpu.memory_space<vmem>>, vector<128x64xbf16>,
    %c0_47 = arith.constant 0 : index
    %c256 = arith.constant 256 : index
    %90 = vector.load %arg6[%c0_47, %c256] : memref<128x1152xbf16, #tpu.memory_space<vmem>>, vector<128x64xbf16>
    %c0_48 = arith.constant 0 : index
    %c640 = arith.constant 640 : index
    %91 = vector.load %arg6[%c0_48, %c640] : memref<128x1152xbf16, #tpu.memory_space<vmem>>, vector<128x64xbf16>
    %c0_49 = arith.constant 0 : index
    %c1024 = arith.constant 1024 : index
    %92 = vector.load %arg6[%c0_49, %c1024] : memref<128x1152xbf16, #tpu.memory_space<vmem>>, vector<128x64xbf16>
    %cst_50 = arith.constant dense<0.000000e+00> : vector<128x128xf32>
    %93 = tpu.matmul %90, %91, %cst_50 {dimension_numbers = #tpu.dot_dimension_numbers<[1], [1], [0], [0], [0, 0, 1, 0], [], []>} : vector<128x64xbf16>, vector<128x64xbf16>, vector<128x128xf32> -> vector<128x128xf32>
    %cst_51 = arith.constant 0xFF800000 : f32
    %94 = vector.broadcast %cst_51 : f32 to vector<128x128xf32>
    %95 = arith.select %9, %93, %94 : vector<128x128xi1>, vector<128x128xf32>
    %cst_52 = arith.constant dense<0xFF800000> : vector<128xf32>
    %96 = vector.multi_reduction <maximumf>, %95, %cst_52 [1] : vector<128x128xf32> to vector<128xf32>
    %97 = vector.shape_cast %96 : vector<128xf32> to vector<128x1xf32>
    %98 = vector.broadcast %97 : vector<128x1xf32> to vector<128x128xf32>
    %99 = arith.subf %95, %98 : vector<128x128xf32>
    %100 = math.exp %99 : vector<128x128xf32>
    %cst_53 = arith.constant dense<0.000000e+00> : vector<128xf32>
    %101 = vector.multi_reduction <add>, %100, %cst_53 [1] : vector<128x128xf32> to vector<128xf32>
    %102 = vector.shape_cast %101 : vector<128xf32> to vector<128x1xf32>
    %103 = tpu.reciprocal %102 {approx = true} : vector<128x1xf32> -> vector<128x1xf32>
    %104 = vector.broadcast %103 : vector<128x1xf32> to vector<128x128xf32>
    %105 = arith.mulf %100, %104 : vector<128x128xf32>
    %106 = arith.truncf %105 : vector<128x128xf32> to vector<128x128xbf16>
    %cst_54 = arith.constant dense<0.000000e+00> : vector<128x64xf32>
    %107 = tpu.matmul %106, %92, %cst_54 {dimension_numbers = #tpu.dot_dimension_numbers<[1], [0], [0], [1], [0, 0, 1, 1], [], []>} : vector<128x128xbf16>, vector<128x64xbf16>, vector<128x64xf32> -> vector<128x64xf32>
    %108 = arith.truncf %107 : vector<128x64xf32> to vector<128x64xbf16>
    %c0_55 = arith.constant 0 : index
    %c256_56 = arith.constant 256 : index
    %109 = vector.load %arg7[%c0_55, %c256_56] : memref<128x384xbf16, #tpu.memory_space<vmem>>, vector<128x64xbf16>
    tpu.vector_store %arg7[%c0_55, %c256_56], %108 {strides = array<i32>} : memref<128x384xbf16, #tpu.memory_space<vmem>>, vector<128x64xbf16>,
    %c0_57 = arith.constant 0 : index
    %c320 = arith.constant 320 : index
    %110 = vector.load %arg6[%c0_57, %c320] : memref<128x1152xbf16, #tpu.memory_space<vmem>>, vector<128x64xbf16>
    %c0_58 = arith.constant 0 : index
    %c704 = arith.constant 704 : index
    %111 = vector.load %arg6[%c0_58, %c704] : memref<128x1152xbf16, #tpu.memory_space<vmem>>, vector<128x64xbf16>
    %c0_59 = arith.constant 0 : index
    %c1088 = arith.constant 1088 : index
    %112 = vector.load %arg6[%c0_59, %c1088] : memref<128x1152xbf16, #tpu.memory_space<vmem>>, vector<128x64xbf16>
    %cst_60 = arith.constant dense<0.000000e+00> : vector<128x128xf32>
    %113 = tpu.matmul %110, %111, %cst_60 {dimension_numbers = #tpu.dot_dimension_numbers<[1], [1], [0], [0], [0, 0, 1, 0], [], []>} : vector<128x64xbf16>, vector<128x64xbf16>, vector<128x128xf32> -> vector<128x128xf32>
    %cst_61 = arith.constant 0xFF800000 : f32
    %114 = vector.broadcast %cst_61 : f32 to vector<128x128xf32>
    %115 = arith.select %9, %113, %114 : vector<128x128xi1>, vector<128x128xf32>
    %cst_62 = arith.constant dense<0xFF800000> : vector<128xf32>
    %116 = vector.multi_reduction <maximumf>, %115, %cst_62 [1] : vector<128x128xf32> to vector<128xf32>
    %117 = vector.shape_cast %116 : vector<128xf32> to vector<128x1xf32>
    %118 = vector.broadcast %117 : vector<128x1xf32> to vector<128x128xf32>
    %119 = arith.subf %115, %118 : vector<128x128xf32>
    %120 = math.exp %119 : vector<128x128xf32>
    %cst_63 = arith.constant dense<0.000000e+00> : vector<128xf32>
    %121 = vector.multi_reduction <add>, %120, %cst_63 [1] : vector<128x128xf32> to vector<128xf32>
    %122 = vector.shape_cast %121 : vector<128xf32> to vector<128x1xf32>
    %123 = tpu.reciprocal %122 {approx = true} : vector<128x1xf32> -> vector<128x1xf32>
    %124 = vector.broadcast %123 : vector<128x1xf32> to vector<128x128xf32>
    %125 = arith.mulf %120, %124 : vector<128x128xf32>
    %126 = arith.truncf %125 : vector<128x128xf32> to vector<128x128xbf16>
    %cst_64 = arith.constant dense<0.000000e+00> : vector<128x64xf32>
    %127 = tpu.matmul %126, %112, %cst_64 {dimension_numbers = #tpu.dot_dimension_numbers<[1], [0], [0], [1], [0, 0, 1, 1], [], []>} : vector<128x128xbf16>, vector<128x64xbf16>, vector<128x64xf32> -> vector<128x64xf32>
    %128 = arith.truncf %127 : vector<128x64xf32> to vector<128x64xbf16>
    %c0_65 = arith.constant 0 : index
    %c320_66 = arith.constant 320 : index
    %129 = vector.load %arg7[%c0_65, %c320_66] : memref<128x384xbf16, #tpu.memory_space<vmem>>, vector<128x64xbf16>
    tpu.vector_store %arg7[%c0_65, %c320_66], %128 {strides = array<i32>} : memref<128x384xbf16, #tpu.memory_space<vmem>>, vector<128x64xbf16>,
    %c0_67 = arith.constant 0 : index
    %c0_68 = arith.constant 0 : index
    %130 = vector.load %arg7[%c0_67, %c0_68] : memref<128x384xbf16, #tpu.memory_space<vmem>>, vector<128x384xbf16>
    %c0_69 = arith.constant 0 : index
    %c0_70 = arith.constant 0 : index
    %131 = vector.load %arg3[%c0_69, %c0_70] : memref<384x384xbf16, #tpu.memory_space<vmem>>, vector<384x384xbf16>
    %cst_71 = arith.constant dense<0.000000e+00> : vector<128x384xf32>
    %132 = tpu.matmul %130, %131, %cst_71 {dimension_numbers = #tpu.dot_dimension_numbers<[1], [0], [0], [1], [0, 0, 1, 1], [], []>} : vector<128x384xbf16>, vector<384x384xbf16>, vector<128x384xf32> -> vector<128x384xf32>
    %c0_72 = arith.constant 0 : index
    %c0_73 = arith.constant 0 : index
    %133 = vector.load %arg4[%c0_72, %c0_73] : memref<1x384xf32, #tpu.memory_space<vmem>>, vector<1x384xf32>
    %134 = vector.broadcast %133 : vector<1x384xf32> to vector<128x384xf32>
    %135 = arith.addf %132, %134 : vector<128x384xf32>
    %c0_74 = arith.constant 0 : index
    %c0_75 = arith.constant 0 : index
    %c0_76 = arith.constant 0 : index
    %136 = vector.load %arg5[%c0_74, %c0_75, %c0_76] : memref<1x128x384xf32, #tpu.memory_space<vmem>>, vector<1x128x384xf32>
    %137 = vector.shape_cast %136 : vector<1x128x384xf32> to vector<128x384xf32>
    %138 = vector.shape_cast %135 : vector<128x384xf32> to vector<1x128x384xf32>
    tpu.vector_store %arg5[%c0_74, %c0_75, %c0_76], %138 {strides = array<i32>} : memref<1x128x384xf32, #tpu.memory_space<vmem>>, vector<1x128x384xf32>,
    return
  }
  func.func @transform_0(%arg0: i32) -> (i32, i32, i32) {
    %c0_i32 = arith.constant 0 : i32
    %c0_i32_0 = arith.constant 0 : i32
    %c0_i32_1 = arith.constant 0 : i32
    return %arg0, %c0_i32, %c0_i32_0 : i32, i32, i32
  }
  func.func @transform_1(%arg0: i32) -> (i32, i32) {
    %c0_i32 = arith.constant 0 : i32
    %c0_i32_0 = arith.constant 0 : i32
    %c0_i32_1 = arith.constant 0 : i32
    return %c0_i32, %c0_i32_0 : i32, i32
  }
  func.func @transform_2(%arg0: i32) -> (i32, i32) {
    %c0_i32 = arith.constant 0 : i32
    %c0_i32_0 = arith.constant 0 : i32
    %c0_i32_1 = arith.constant 0 : i32
    return %c0_i32, %c0_i32_0 : i32, i32
  }
  func.func @transform_3(%arg0: i32) -> (i32, i32) {
    %c0_i32 = arith.constant 0 : i32
    %c0_i32_0 = arith.constant 0 : i32
    %c0_i32_1 = arith.constant 0 : i32
    return %c0_i32, %c0_i32_0 : i32, i32
  }
  func.func @transform_4(%arg0: i32) -> (i32, i32, i32) {
    %c0_i32 = arith.constant 0 : i32
    %c0_i32_0 = arith.constant 0 : i32
    %c0_i32_1 = arith.constant 0 : i32
    return %arg0, %c0_i32, %c0_i32_0 : i32, i32, i32
  }
}

</mosaic_0001>

<llo_original>
// kernel: tpu_custom_call.1
$region0: #{tpu_custom_call.1}
  #allocation0 [shape = 'u32[]', space=smem, size = 0x4, offset = 0x4, fixed_abs, tag = 'smem constant byte address 0x4 - core index']
  #allocation1 [shape = 'u32[144,128]{1,0:T(1,128)}', space=vmem, size = 0x12000, scoped, tag = 'internal scratch']
  #allocation2 [shape = 'bf16[128,1152]{1,0:T(16,128)(2,1)}', space=vmem, size = 0x48000, scoped, tag = 'scratch operand']
  #allocation3 [shape = 'bf16[128,384]{1,0:T(16,128)(2,1)}', space=vmem, size = 0x18000, scoped, tag = 'scratch operand']
  %s0 = inlined_call_operand.hbm [shape: f32[2,128,384], index: 0, kind: input, shape index: {}]
  %s1 = inlined_call_operand.hbm [shape: bf16[384,1152], index: 1, kind: input, shape index: {}]
  %s2 = inlined_call_operand.hbm [shape: bf16[384,384], index: 2, kind: input, shape index: {}]
  %s3 = inlined_call_operand.vmem [shape: f32[1,384], index: 3, kind: input, shape index: {}]
  %s4 = inlined_call_operand.hbm [shape: f32[2,128,384], index: 4, kind: output, shape index: {}]
  %s5 = sld [smem:[#allocation0]]
  $region61: #{tpu_custom_call.1} parent=0
    _
  %s7 = ssub.s32 1, %s5
  %s8 = scalar_select 0, %s7, %s5
  $region1: #{tpu_custom_call.1} parent=0
    #allocation4 [shape = 'u8[393216]{0}', space=vmem, size = 0x60000, scoped, tag = 'input window, operand 0']
    #allocation5 [shape = 's32[2]{0}', space=sflag, size = 0x8, scoped, tag = 'scoped memory for tpu_custom_call.1']
    #allocation6 [shape = 's32[2]{0}', space=sflag, size = 0x8, scoped, tag = 'scoped memory for tpu_custom_call.1']
    #allocation7 [shape = 'u8[884736]{0}', space=vmem, size = 0xd8000, scoped, tag = 'input window, operand 1, single buffered']
    #allocation8 [shape = 's32[1]{0}', space=sflag, size = 0x4, scoped, tag = 'scoped memory for tpu_custom_call.1']
    #allocation9 [shape = 'u8[294912]{0}', space=vmem, size = 0x48000, scoped, tag = 'input window, operand 2, single buffered']
    #allocation10 [shape = 'u8[393216]{0}', space=vmem, size = 0x60000, scoped, tag = 'output window, operand 0']
    %9 = vsyncpa [#allocation5], 0
    %s10 = scalar_lea.sflag [#allocation5], 1
    %11 = vsyncpa %s10, 0
    %12 = vsyncpa [#allocation8], 0
    %13 = vsyncpa [#allocation6], 0
    %s14 = scalar_lea.sflag [#allocation6], 1
    %15 = vsyncpa %s14, 0
    loop: start=0, step=1, limit=4
    $region2: #{tpu_custom_call.1} parent=1 // loop_pre_header
      _
    $region3: #{tpu_custom_call.1} parent=1 // loop_header
      %s17 = sphi 0, %s21
      %p18 = scmp.ge.s32.totalorder %s17, 4
      %s27 = sphi 0, %s29
      %s30 = sphi 0, %s27
      %s31 = sphi 0, %s30
      %s47 = sphi 0, %s31
      %s51 = sphi 0, %s51
      %s53 = sphi 0, %s51
      %s54 = sphi 0, %s53
      %s68 = sphi 0, %s54
      %s72 = sphi 0, %s72
      %s74 = sphi 0, %s72
      %s75 = sphi 0, %s74
      %s89 = sphi 0, %s75
      %s93 = sphi 0, %s93
      %s95 = sphi 0, %s93
      %s96 = sphi 0, %s95
      %s110 = sphi 0, %s96
      %s116 = sphi 0, %s118
      %s119 = sphi 0, %s116
      %s120 = sphi 0, %s119
      %s136 = sphi 0, %s120
    $region4: #{tpu_custom_call.1} parent=1 // loop_header_branch
      %20 = sbr.rel (%p18) target = $region8
    $region5: #{tpu_custom_call.1} parent=1 // loop_body
      %s22 = ssub.s32 %s17, 1
      %s23 = ssub.s32 %s17, 2
      %s24 = sadd.s32 %s17, 1
      %s25 = ssub.s32 %s17, %s24
      %p26 = scmp.eq.s32.totalorder %s25, 0
      %s28 = sadd.s32 %s27, 1
      %s29 = scalar_select %p26, %s27, %s28
      %p32 = pneg %p26
      %p33 = scmp.eq.s32.totalorder %s17, 1
      %p34 = por %p32, %p33
      %p35 = scmp.ne.s32.totalorder %s27, %s30
      %p36 = scmp.eq.s32.totalorder %s17, 0
      %p37 = por %p35, %p36
      %p38 = scmp.ne.s32.totalorder %s27, %s30
      %p39 = scmp.eq.s32.totalorder %s22, 1
      %p40 = por %p38, %p39
      %p41 = scmp.ne.s32.totalorder %s30, %s31
      %p42 = scmp.eq.s32.totalorder %s22, 0
      %p43 = por %p41, %p42
      %p44 = scmp.ne.s32.totalorder %s30, %s31
      %p45 = scmp.eq.s32.totalorder %s23, 1
      %p46 = por %p44, %p45
      %p48 = scmp.ne.s32.totalorder %s31, %s47
      %p49 = scmp.eq.s32.totalorder %s23, 0
      %p50 = por %p48, %p49
      %s52 = sadd.s32 %s51, 1
      %p55 = scmp.eq.s32.totalorder %s17, 1
      %p56 = scmp.ne.s32.totalorder %s51, %s53
      %p57 = scmp.eq.s32.totalorder %s17, 0
      %p58 = por %p56, %p57
      %p59 = scmp.ne.s32.totalorder %s51, %s53
      %p60 = scmp.eq.s32.totalorder %s22, 1
      %p61 = por %p59, %p60
      %p62 = scmp.ne.s32.totalorder %s53, %s54
      %p63 = scmp.eq.s32.totalorder %s22, 0
      %p64 = por %p62, %p63
      %p65 = scmp.ne.s32.totalorder %s53, %s54
      %p66 = scmp.eq.s32.totalorder %s23, 1
      %p67 = por %p65, %p66
      %p69 = scmp.ne.s32.totalorder %s54, %s68
      %p70 = scmp.eq.s32.totalorder %s23, 0
      %p71 = por %p69, %p70
      %s73 = sadd.s32 %s72, 1
      %p76 = scmp.eq.s32.totalorder %s17, 1
      %p77 = scmp.ne.s32.totalorder %s72, %s74
      %p78 = scmp.eq.s32.totalorder %s17, 0
      %p79 = por %p77, %p78
      %p80 = scmp.ne.s32.totalorder %s72, %s74
      %p81 = scmp.eq.s32.totalorder %s22, 1
      %p82 = por %p80, %p81
      %p83 = scmp.ne.s32.totalorder %s74, %s75
      %p84 = scmp.eq.s32.totalorder %s22, 0
      %p85 = por %p83, %p84
      %p86 = scmp.ne.s32.totalorder %s74, %s75
      %p87 = scmp.eq.s32.totalorder %s23, 1
      %p88 = por %p86, %p87
      %p90 = scmp.ne.s32.totalorder %s75, %s89
      %p91 = scmp.eq.s32.totalorder %s23, 0
      %p92 = por %p90, %p91
      %s94 = sadd.s32 %s93, 1
      %p97 = scmp.eq.s32.totalorder %s17, 1
      %p98 = scmp.ne.s32.totalorder %s93, %s95
      %p99 = scmp.eq.s32.totalorder %s17, 0
      %p100 = por %p98, %p99
      %p101 = scmp.ne.s32.totalorder %s93, %s95
      %p102 = scmp.eq.s32.totalorder %s22, 1
      %p103 = por %p101, %p102
      %p104 = scmp.ne.s32.totalorder %s95, %s96
      %p105 = scmp.eq.s32.totalorder %s22, 0
      %p106 = por %p104, %p105
      %p107 = scmp.ne.s32.totalorder %s95, %s96
      %p108 = scmp.eq.s32.totalorder %s23, 1
      %p109 = por %p107, %p108
      %p111 = scmp.ne.s32.totalorder %s96, %s110
      %p112 = scmp.eq.s32.totalorder %s23, 0
      %p113 = por %p111, %p112
      %s114 = ssub.s32 %s17, %s24
      %p115 = scmp.eq.s32.totalorder %s114, 0
      %s117 = sadd.s32 %s116, 1
      %s118 = scalar_select %p115, %s116, %s117
      %p121 = pneg %p115
      %p122 = scmp.eq.s32.totalorder %s17, 1
      %p123 = por %p121, %p122
      %p124 = scmp.ne.s32.totalorder %s116, %s119
      %p125 = scmp.eq.s32.totalorder %s17, 0
      %p126 = por %p124, %p125
      %p127 = scmp.ne.s32.totalorder %s116, %s119
      %p128 = scmp.eq.s32.totalorder %s22, 1
      %p129 = por %p127, %p128
      %p130 = scmp.ne.s32.totalorder %s119, %s120
      %p131 = scmp.eq.s32.totalorder %s22, 0
      %p132 = por %p130, %p131
      %p133 = scmp.ne.s32.totalorder %s119, %s120
      %p134 = scmp.eq.s32.totalorder %s23, 1
      %p135 = por %p133, %p134
      %p137 = scmp.ne.s32.totalorder %s120, %s136
      %p138 = scmp.eq.s32.totalorder %s23, 0
      %p139 = por %p137, %p138
      %p140 = scmp.le.s32.totalorder 1, %s17
      %p141 = scmp.lt.s32.totalorder %s17, 3
      %p142 = pnand %p140, %p141
      %p143 = pneg %p142
      // Predicated region
      $region9: #{tpu_custom_call.1} parent=5 // pred_check
        _
      $region10: #{tpu_custom_call.1} parent=5 // pred_check_branch
        %145 = sbr.rel (%p142) target = $region12
      $region11: #{tpu_custom_call.1} parent=5 // pred_region
        %s146 = ssub.s32 %s17, 1
        // Predicated region
        $region13: #{tpu_custom_call.1} parent=11 // pred_check
          %p147 = pneg %p64
        $region14: #{tpu_custom_call.1} parent=11 // pred_check_branch
          %149 = sbr.rel (%p147) target = $region16
        $region15: #{tpu_custom_call.1} parent=11 // pred_region
          %s151 = ssub.s32 27648, 27648
          %152 = vsyncadd [#allocation8], %s151
          %s153 = sshll.u32 [#allocation7], 4
          %s154 = int_to_ptr.vmem [resolvable:$true] %s153
          %159 = dma.hbm_to_vmem [thread:$0]  %s1, 27648, %s154, [#allocation8], 576, 576, 36
        $region16: #{tpu_custom_call.1} parent=11 // pred_fallthru
          _
        // Predicated region
        $region17: #{tpu_custom_call.1} parent=11 // pred_check
          %p160 = pneg %p85
        $region18: #{tpu_custom_call.1} parent=11 // pred_check_branch
          %162 = sbr.rel (%p160) target = $region20
        $region19: #{tpu_custom_call.1} parent=11 // pred_region
          %s164 = ssub.s32 9216, 9216
          %165 = vsyncadd [#allocation8], %s164
          %s166 = sshll.u32 [#allocation9], 4
          %s167 = int_to_ptr.vmem [resolvable:$true] %s166
          %172 = dma.hbm_to_vmem [thread:$0]  %s2, 9216, %s167, [#allocation8], 192, 192, 12
        $region20: #{tpu_custom_call.1} parent=11 // pred_fallthru
          _
        // Predicated region
        $region21: #{tpu_custom_call.1} parent=11 // pred_check
          %p173 = pneg %p106
        $region22: #{tpu_custom_call.1} parent=11 // pred_check_branch
          %175 = sbr.rel (%p173) target = $region24
        $region23: #{tpu_custom_call.1} parent=11 // pred_region
          _
        $region24: #{tpu_custom_call.1} parent=11 // pred_fallthru
          _
      $region12: #{tpu_custom_call.1} parent=5 // pred_fallthru
        _
      %p176 = scmp.lt.s32.totalorder %s17, 2
      // Predicated region
      $region25: #{tpu_custom_call.1} parent=5 // pred_check
        %p177 = pneg %p176
      $region26: #{tpu_custom_call.1} parent=5 // pred_check_branch
        %179 = sbr.rel (%p177) target = $region28
      $region27: #{tpu_custom_call.1} parent=5 // pred_region
        // Predicated region
        $region29: #{tpu_custom_call.1} parent=27 // pred_check
          %p180 = pneg %p37
        $region30: #{tpu_custom_call.1} parent=27 // pred_check_branch
          %182 = sbr.rel (%p180) target = $region32
        $region31: #{tpu_custom_call.1} parent=27 // pred_region
          %s183 = sand.u32 %s27, 1
          %s184 = scalar_lea.sflag [#allocation5], %s183
          %s185 = sand.u32 %s27, 1
          %s186 = smul.addr %s185, 384
          %s187 = scalar_lea.vmem [#allocation4], %s186
          %s189 = ssub.s32 6144, 6144
          %190 = vsyncadd %s184, %s189
          %s191 = smul.addr %s17, 48
          %s192 = smul.addr %s191, 128
          %s193 = scalar_lea.hbm %s0, %s192
          %s194 = sshll.u32 %s187, 4
          %s195 = int_to_ptr.vmem [resolvable:$true] %s194
          %200 = dma.hbm_to_vmem [thread:$0]  %s193, 6144, %s195, %s184, 384, 384, 24
        $region32: #{tpu_custom_call.1} parent=27 // pred_fallthru
          _
      $region28: #{tpu_custom_call.1} parent=5 // pred_fallthru
        _
      %p201 = scmp.le.s32.totalorder 1, %s17
      %p202 = scmp.lt.s32.totalorder %s17, 3
      %p203 = pnand %p201, %p202
      %p204 = pneg %p203
      // Predicated region
      $region33: #{tpu_custom_call.1} parent=5 // pred_check
        _
      $region34: #{tpu_custom_call.1} parent=5 // pred_check_branch
        %206 = sbr.rel (%p203) target = $region36
      $region35: #{tpu_custom_call.1} parent=5 // pred_region
        %s207 = ssub.s32 %s17, 1
        %s208 = sand.u32 %s30, 1
        %s209 = scalar_lea.sflag [#allocation5], %s208
        %s210 = sand.u32 %s30, 1
        %s211 = smul.addr %s210, 384
        %s212 = scalar_lea.vmem [#allocation4], %s211
        // Predicated region
        $region37: #{tpu_custom_call.1} parent=35 // pred_check
          %p213 = pneg %p43
        $region38: #{tpu_custom_call.1} parent=35 // pred_check_branch
          %215 = sbr.rel (%p213) target = $region40
        $region39: #{tpu_custom_call.1} parent=35 // pred_region
          %216 = dma.done %s209, 6144
        $region40: #{tpu_custom_call.1} parent=35 // pred_fallthru
          _
        // Predicated region
        $region41: #{tpu_custom_call.1} parent=35 // pred_check
          %p217 = pneg %p64
        $region42: #{tpu_custom_call.1} parent=35 // pred_check_branch
          %219 = sbr.rel (%p217) target = $region44
        $region43: #{tpu_custom_call.1} parent=35 // pred_region
          %220 = dma.done [#allocation8], 27648
        $region44: #{tpu_custom_call.1} parent=35 // pred_fallthru
          _
        // Predicated region
        $region45: #{tpu_custom_call.1} parent=35 // pred_check
          %p221 = pneg %p85
        $region46: #{tpu_custom_call.1} parent=35 // pred_check_branch
          %223 = sbr.rel (%p221) target = $region48
        $region47: #{tpu_custom_call.1} parent=35 // pred_region
          %224 = dma.done [#allocation8], 9216
        $region48: #{tpu_custom_call.1} parent=35 // pred_fallthru
          _
        %s225 = sand.u32 %s30, 1
        %s226 = scalar_lea.sflag [#allocation5], %s225
        %s227 = sand.u32 %s30, 1
        %s228 = smul.addr %s227, 384
        %s229 = scalar_lea.vmem [#allocation4], %s228
        %p230 = pneg %p43
        %p231 = pneg %p40
        %p232 = pneg %p64
        %p233 = pneg %p61
        %p234 = pneg %p85
        %p235 = pneg %p82
        %p236 = pneg %p106
        %p237 = pneg %p103
        %p238 = pneg %p132
        %p239 = pneg %p129
        %s240 = sand.u32 %s119, 1
        %s241 = scalar_lea.sflag [#allocation6], %s240
        %s242 = sand.u32 %s119, 1
        %s243 = smul.addr %s242, 384
        %s244 = scalar_lea.vmem [#allocation10], %s243
        %v246 = vld [vmem:[%s212] sm:$0xff]
        %v247 = vld [vmem:[%s212 + $0x8] sm:$0xff]
        %v248 = vld [vmem:[%s212 + $0x10] sm:$0xff]
        %v249 = vld [vmem:[%s212 + $0x18] sm:$0xff]
        %v250 = vld [vmem:[%s212 + $0x20] sm:$0xff]
        %v251 = vld [vmem:[%s212 + $0x28] sm:$0xff]
        %v252 = vld [vmem:[%s212 + $0x30] sm:$0xff]
        %v253 = vld [vmem:[%s212 + $0x38] sm:$0xff]
        %v254 = vld [vmem:[%s212 + $0x40] sm:$0xff]
        %v255 = vld [vmem:[%s212 + $0x48] sm:$0xff]
        %v256 = vld [vmem:[%s212 + $0x50] sm:$0xff]
        %v257 = vld [vmem:[%s212 + $0x58] sm:$0xff]
        %v258 = vld [vmem:[%s212 + $0x60] sm:$0xff]
        %v259 = vld [vmem:[%s212 + $0x68] sm:$0xff]
        %v260 = vld [vmem:[%s212 + $0x70] sm:$0xff]
        %v261 = vld [vmem:[%s212 + $0x78] sm:$0xff]
        %v262 = vld [vmem:[%s212 + $0x80] sm:$0xff]
        %v263 = vld [vmem:[%s212 + $0x88] sm:$0xff]
        %v264 = vld [vmem:[%s212 + $0x90] sm:$0xff]
        %v265 = vld [vmem:[%s212 + $0x98] sm:$0xff]
        %v266 = vld [vmem:[%s212 + $0xa0] sm:$0xff]
        %v267 = vld [vmem:[%s212 + $0xa8] sm:$0xff]
        %v268 = vld [vmem:[%s212 + $0xb0] sm:$0xff]
        %v269 = vld [vmem:[%s212 + $0xb8] sm:$0xff]
        %v270 = vld [vmem:[%s212 + $0xc0] sm:$0xff]
        %v271 = vld [vmem:[%s212 + $0xc8] sm:$0xff]
        %v272 = vld [vmem:[%s212 + $0xd0] sm:$0xff]
        %v273 = vld [vmem:[%s212 + $0xd8] sm:$0xff]
        %v274 = vld [vmem:[%s212 + $0xe0] sm:$0xff]
        %v275 = vld [vmem:[%s212 + $0xe8] sm:$0xff]
        %v276 = vld [vmem:[%s212 + $0xf0] sm:$0xff]
        %v277 = vld [vmem:[%s212 + $0xf8] sm:$0xff]
        %v278 = vld [vmem:[%s212 + $0x100] sm:$0xff]
        %v279 = vld [vmem:[%s212 + $0x108] sm:$0xff]
        %v280 = vld [vmem:[%s212 + $0x110] sm:$0xff]
        %v281 = vld [vmem:[%s212 + $0x118] sm:$0xff]
        %v282 = vld [vmem:[%s212 + $0x120] sm:$0xff]
        %v283 = vld [vmem:[%s212 + $0x128] sm:$0xff]
        %v284 = vld [vmem:[%s212 + $0x130] sm:$0xff]
        %v285 = vld [vmem:[%s212 + $0x138] sm:$0xff]
        %v286 = vld [vmem:[%s212 + $0x140] sm:$0xff]
        %v287 = vld [vmem:[%s212 + $0x148] sm:$0xff]
        %v288 = vld [vmem:[%s212 + $0x150] sm:$0xff]
        %v289 = vld [vmem:[%s212 + $0x158] sm:$0xff]
        %v290 = vld [vmem:[%s212 + $0x160] sm:$0xff]
        %v291 = vld [vmem:[%s212 + $0x168] sm:$0xff]
        %v292 = vld [vmem:[%s212 + $0x170] sm:$0xff]
        %v293 = vld [vmem:[%s212 + $0x178] sm:$0xff]
        %v294 = vpack.c.bf16 %v249, %v246
        %v295 = vpack.c.bf16 %v250, %v247
        %v296 = vpack.c.bf16 %v251, %v248
        %v297 = vpack.c.bf16 %v255, %v252
        %v298 = vpack.c.bf16 %v256, %v253
        %v299 = vpack.c.bf16 %v257, %v254
        %v300 = vpack.c.bf16 %v261, %v258
        %v301 = vpack.c.bf16 %v262, %v259
        %v302 = vpack.c.bf16 %v263, %v260
        %v303 = vpack.c.bf16 %v267, %v264
        %v304 = vpack.c.bf16 %v268, %v265
        %v305 = vpack.c.bf16 %v269, %v266
        %v306 = vpack.c.bf16 %v273, %v270
        %v307 = vpack.c.bf16 %v274, %v271
        %v308 = vpack.c.bf16 %v275, %v272
        %v309 = vpack.c.bf16 %v279, %v276
        %v310 = vpack.c.bf16 %v280, %v277
        %v311 = vpack.c.bf16 %v281, %v278
        %v312 = vpack.c.bf16 %v285, %v282
        %v313 = vpack.c.bf16 %v286, %v283
        %v314 = vpack.c.bf16 %v287, %v284
        %v315 = vpack.c.bf16 %v291, %v288
        %v316 = vpack.c.bf16 %v292, %v289
        %v317 = vpack.c.bf16 %v293, %v290
        %v318 = vld [vmem:[#allocation7] sm:$0xff]
        %v319 = vld [vmem:[#allocation7 + $0x8] sm:$0xff]
        %v320 = vld [vmem:[#allocation7 + $0x10] sm:$0xff]
        %v321 = vld [vmem:[#allocation7 + $0x18] sm:$0xff]
        %v322 = vld [vmem:[#allocation7 + $0x20] sm:$0xf]
        %v323 = vld [vmem:[#allocation7 + $0x24] sm:$0xff]
        %v324 = vld [vmem:[#allocation7 + $0x2c] sm:$0xff]
        %v325 = vld [vmem:[#allocation7 + $0x34] sm:$0xff]
        %v326 = vld [vmem:[#allocation7 + $0x3c] sm:$0xff]
        %v327 = vld [vmem:[#allocation7 + $0x44] sm:$0xf]
        %v328 = vld [vmem:[#allocation7 + $0x48] sm:$0xff]
        %v329 = vld [vmem:[#allocation7 + $0x50] sm:$0xff]
        %v330 = vld [vmem:[#allocation7 + $0x58] sm:$0xff]
        %v331 = vld [vmem:[#allocation7 + $0x60] sm:$0xff]
        %v332 = vld [vmem:[#allocation7 + $0x68] sm:$0xf]
        %v333 = vld [vmem:[#allocation7 + $0x6c] sm:$0xff]
        %v334 = vld [vmem:[#allocation7 + $0x74] sm:$0xff]
        %v335 = vld [vmem:[#allocation7 + $0x7c] sm:$0xff]
        %v336 = vld [vmem:[#allocation7 + $0x84] sm:$0xff]
        %v337 = vld [vmem:[#allocation7 + $0x8c] sm:$0xf]
        %v338 = vld [vmem:[#allocation7 + $0x90] sm:$0xff]
        %v339 = vld [vmem:[#allocation7 + $0x98] sm:$0xff]
        %v340 = vld [vmem:[#allocation7 + $0xa0] sm:$0xff]
        %v341 = vld [vmem:[#allocation7 + $0xa8] sm:$0xff]
        %v342 = vld [vmem:[#allocation7 + $0xb0] sm:$0xf]
        %v343 = vld [vmem:[#allocation7 + $0xb4] sm:$0xff]
        %v344 = vld [vmem:[#allocation7 + $0xbc] sm:$0xff]
        %v345 = vld [vmem:[#allocation7 + $0xc4] sm:$0xff]
        %v346 = vld [vmem:[#allocation7 + $0xcc] sm:$0xff]
        %v347 = vld [vmem:[#allocation7 + $0xd4] sm:$0xf]
        %v348 = vld [vmem:[#allocation7 + $0xd8] sm:$0xff]
        %v349 = vld [vmem:[#allocation7 + $0xe0] sm:$0xff]
        %v350 = vld [vmem:[#allocation7 + $0xe8] sm:$0xff]
        %v351 = vld [vmem:[#allocation7 + $0xf0] sm:$0xff]
        %v352 = vld [vmem:[#allocation7 + $0xf8] sm:$0xf]
        %v353 = vld [vmem:[#allocation7 + $0xfc] sm:$0xff]
        %v354 = vld [vmem:[#allocation7 + $0x104] sm:$0xff]
        %v355 = vld [vmem:[#allocation7 + $0x10c] sm:$0xff]
        %v356 = vld [vmem:[#allocation7 + $0x114] sm:$0xff]
        %v357 = vld [vmem:[#allocation7 + $0x11c] sm:$0xf]
        %v358 = vld [vmem:[#allocation7 + $0x120] sm:$0xff]
        %v359 = vld [vmem:[#allocation7 + $0x128] sm:$0xff]
        %v360 = vld [vmem:[#allocation7 + $0x130] sm:$0xff]
        %v361 = vld [vmem:[#allocation7 + $0x138] sm:$0xff]
        %v362 = vld [vmem:[#allocation7 + $0x140] sm:$0xf]
        %v363 = vld [vmem:[#allocation7 + $0x144] sm:$0xff]
        %v364 = vld [vmem:[#allocation7 + $0x14c] sm:$0xff]
        %v365 = vld [vmem:[#allocation7 + $0x154] sm:$0xff]
        %v366 = vld [vmem:[#allocation7 + $0x15c] sm:$0xff]
        %v367 = vld [vmem:[#allocation7 + $0x164] sm:$0xf]
        %v368 = vld [vmem:[#allocation7 + $0x168] sm:$0xff]
        %v369 = vld [vmem:[#allocation7 + $0x170] sm:$0xff]
        %v370 = vld [vmem:[#allocation7 + $0x178] sm:$0xff]
        %v371 = vld [vmem:[#allocation7 + $0x180] sm:$0xff]
        %v372 = vld [vmem:[#allocation7 + $0x188] sm:$0xf]
        %v373 = vld [vmem:[#allocation7 + $0x18c] sm:$0xff]
        %v374 = vld [vmem:[#allocation7 + $0x194] sm:$0xff]
        %v375 = vld [vmem:[#allocation7 + $0x19c] sm:$0xff]
        %v376 = vld [vmem:[#allocation7 + $0x1a4] sm:$0xff]
        %v377 = vld [vmem:[#allocation7 + $0x1ac] sm:$0xf]
        %v378 = vld [vmem:[#allocation7 + $0x1b0] sm:$0xff]
        %v379 = vld [vmem:[#allocation7 + $0x1b8] sm:$0xff]
        %v380 = vld [vmem:[#allocation7 + $0x1c0] sm:$0xff]
        %v381 = vld [vmem:[#allocation7 + $0x1c8] sm:$0xff]
        %v382 = vld [vmem:[#allocation7 + $0x1d0] sm:$0xf]
        %v383 = vld [vmem:[#allocation7 + $0x1d4] sm:$0xff]
        %v384 = vld [vmem:[#allocation7 + $0x1dc] sm:$0xff]
        %v385 = vld [vmem:[#allocation7 + $0x1e4] sm:$0xff]
        %v386 = vld [vmem:[#allocation7 + $0x1ec] sm:$0xff]
        %v387 = vld [vmem:[#allocation7 + $0x1f4] sm:$0xf]
        %v388 = vld [vmem:[#allocation7 + $0x1f8] sm:$0xff]
        %v389 = vld [vmem:[#allocation7 + $0x200] sm:$0xff]
        %v390 = vld [vmem:[#allocation7 + $0x208] sm:$0xff]
        %v391 = vld [vmem:[#allocation7 + $0x210] sm:$0xff]
        %v392 = vld [vmem:[#allocation7 + $0x218] sm:$0xf]
        %v393 = vld [vmem:[#allocation7 + $0x21c] sm:$0xff]
        %v394 = vld [vmem:[#allocation7 + $0x224] sm:$0xff]
        %v395 = vld [vmem:[#allocation7 + $0x22c] sm:$0xff]
        %v396 = vld [vmem:[#allocation7 + $0x234] sm:$0xff]
        %v397 = vld [vmem:[#allocation7 + $0x23c] sm:$0xf]
        %v398 = vld [vmem:[#allocation7 + $0x240] sm:$0xff]
        %v399 = vld [vmem:[#allocation7 + $0x248] sm:$0xff]
        %v400 = vld [vmem:[#allocation7 + $0x250] sm:$0xff]
        %v401 = vld [vmem:[#allocation7 + $0x258] sm:$0xff]
        %v402 = vld [vmem:[#allocation7 + $0x260] sm:$0xf]
        %v403 = vld [vmem:[#allocation7 + $0x264] sm:$0xff]
        %v404 = vld [vmem:[#allocation7 + $0x26c] sm:$0xff]
        %v405 = vld [vmem:[#allocation7 + $0x274] sm:$0xff]
        %v406 = vld [vmem:[#allocation7 + $0x27c] sm:$0xff]
        %v407 = vld [vmem:[#allocation7 + $0x284] sm:$0xf]
        %v408 = vld [vmem:[#allocation7 + $0x288] sm:$0xff]
        %v409 = vld [vmem:[#allocation7 + $0x290] sm:$0xff]
        %v410 = vld [vmem:[#allocation7 + $0x298] sm:$0xff]
        %v411 = vld [vmem:[#allocation7 + $0x2a0] sm:$0xff]
        %v412 = vld [vmem:[#allocation7 + $0x2a8] sm:$0xf]
        %v413 = vld [vmem:[#allocation7 + $0x2ac] sm:$0xff]
        %v414 = vld [vmem:[#allocation7 + $0x2b4] sm:$0xff]
        %v415 = vld [vmem:[#allocation7 + $0x2bc] sm:$0xff]
        %v416 = vld [vmem:[#allocation7 + $0x2c4] sm:$0xff]
        %v417 = vld [vmem:[#allocation7 + $0x2cc] sm:$0xf]
        %v418 = vld [vmem:[#allocation7 + $0x2d0] sm:$0xff]
        %v419 = vld [vmem:[#allocation7 + $0x2d8] sm:$0xff]
        %v420 = vld [vmem:[#allocation7 + $0x2e0] sm:$0xff]
        %v421 = vld [vmem:[#allocation7 + $0x2e8] sm:$0xff]
        %v422 = vld [vmem:[#allocation7 + $0x2f0] sm:$0xf]
        %v423 = vld [vmem:[#allocation7 + $0x2f4] sm:$0xff]
        %v424 = vld [vmem:[#allocation7 + $0x2fc] sm:$0xff]
        %v425 = vld [vmem:[#allocation7 + $0x304] sm:$0xff]
        %v426 = vld [vmem:[#allocation7 + $0x30c] sm:$0xff]
        %v427 = vld [vmem:[#allocation7 + $0x314] sm:$0xf]
        %v428 = vld [vmem:[#allocation7 + $0x318] sm:$0xff]
        %v429 = vld [vmem:[#allocation7 + $0x320] sm:$0xff]
        %v430 = vld [vmem:[#allocation7 + $0x328] sm:$0xff]
        %v431 = vld [vmem:[#allocation7 + $0x330] sm:$0xff]
        %v432 = vld [vmem:[#allocation7 + $0x338] sm:$0xf]
        %v433 = vld [vmem:[#allocation7 + $0x33c] sm:$0xff]
        %v434 = vld [vmem:[#allocation7 + $0x344] sm:$0xff]
        %v435 = vld [vmem:[#allocation7 + $0x34c] sm:$0xff]
        %v436 = vld [vmem:[#allocation7 + $0x354] sm:$0xff]
        %v437 = vld [vmem:[#allocation7 + $0x35c] sm:$0xf]
        %v438 = vld [vmem:[#allocation7 + $0x360] sm:$0xff]
        %v439 = vld [vmem:[#allocation7 + $0x368] sm:$0xff]
        %v440 = vld [vmem:[#allocation7 + $0x370] sm:$0xff]
        %v441 = vld [vmem:[#allocation7 + $0x378] sm:$0xff]
        %v442 = vld [vmem:[#allocation7 + $0x380] sm:$0xf]
        %v443 = vld [vmem:[#allocation7 + $0x384] sm:$0xff]
        %v444 = vld [vmem:[#allocation7 + $0x38c] sm:$0xff]
        %v445 = vld [vmem:[#allocation7 + $0x394] sm:$0xff]
        %v446 = vld [vmem:[#allocation7 + $0x39c] sm:$0xff]
        %v447 = vld [vmem:[#allocation7 + $0x3a4] sm:$0xf]
        %v448 = vld [vmem:[#allocation7 + $0x3a8] sm:$0xff]
        %v449 = vld [vmem:[#allocation7 + $0x3b0] sm:$0xff]
        %v450 = vld [vmem:[#allocation7 + $0x3b8] sm:$0xff]
        %v451 = vld [vmem:[#allocation7 + $0x3c0] sm:$0xff]
        %v452 = vld [vmem:[#allocation7 + $0x3c8] sm:$0xf]
        %v453 = vld [vmem:[#allocation7 + $0x3cc] sm:$0xff]
        %v454 = vld [vmem:[#allocation7 + $0x3d4] sm:$0xff]
        %v455 = vld [vmem:[#allocation7 + $0x3dc] sm:$0xff]
        %v456 = vld [vmem:[#allocation7 + $0x3e4] sm:$0xff]
        %v457 = vld [vmem:[#allocation7 + $0x3ec] sm:$0xf]
        %v458 = vld [vmem:[#allocation7 + $0x3f0] sm:$0xff]
        %v459 = vld [vmem:[#allocation7 + $0x3f8] sm:$0xff]
        %v460 = vld [vmem:[#allocation7 + $0x400] sm:$0xff]
        %v461 = vld [vmem:[#allocation7 + $0x408] sm:$0xff]
        %v462 = vld [vmem:[#allocation7 + $0x410] sm:$0xf]
        %v463 = vld [vmem:[#allocation7 + $0x414] sm:$0xff]
        %v464 = vld [vmem:[#allocation7 + $0x41c] sm:$0xff]
        %v465 = vld [vmem:[#allocation7 + $0x424] sm:$0xff]
        %v466 = vld [vmem:[#allocation7 + $0x42c] sm:$0xff]
        %v467 = vld [vmem:[#allocation7 + $0x434] sm:$0xf]
        %v468 = vld [vmem:[#allocation7 + $0x438] sm:$0xff]
        %v469 = vld [vmem:[#allocation7 + $0x440] sm:$0xff]
        %v470 = vld [vmem:[#allocation7 + $0x448] sm:$0xff]
        %v471 = vld [vmem:[#allocation7 + $0x450] sm:$0xff]
        %v472 = vld [vmem:[#allocation7 + $0x458] sm:$0xf]
        %v473 = vld [vmem:[#allocation7 + $0x45c] sm:$0xff]
        %v474 = vld [vmem:[#allocation7 + $0x464] sm:$0xff]
        %v475 = vld [vmem:[#allocation7 + $0x46c] sm:$0xff]
        %v476 = vld [vmem:[#allocation7 + $0x474] sm:$0xff]
        %v477 = vld [vmem:[#allocation7 + $0x47c] sm:$0xf]
        %v478 = vld [vmem:[#allocation7 + $0x480] sm:$0xff]
        %v479 = vld [vmem:[#allocation7 + $0x488] sm:$0xff]
        %v480 = vld [vmem:[#allocation7 + $0x490] sm:$0xff]
        %v481 = vld [vmem:[#allocation7 + $0x498] sm:$0xff]
        %v482 = vld [vmem:[#allocation7 + $0x4a0] sm:$0xf]
        %v483 = vld [vmem:[#allocation7 + $0x4a4] sm:$0xff]
        %v484 = vld [vmem:[#allocation7 + $0x4ac] sm:$0xff]
        %v485 = vld [vmem:[#allocation7 + $0x4b4] sm:$0xff]
        %v486 = vld [vmem:[#allocation7 + $0x4bc] sm:$0xff]
        %v487 = vld [vmem:[#allocation7 + $0x4c4] sm:$0xf]
        %v488 = vld [vmem:[#allocation7 + $0x4c8] sm:$0xff]
        %v489 = vld [vmem:[#allocation7 + $0x4d0] sm:$0xff]
        %v490 = vld [vmem:[#allocation7 + $0x4d8] sm:$0xff]
        %v491 = vld [vmem:[#allocation7 + $0x4e0] sm:$0xff]
        %v492 = vld [vmem:[#allocation7 + $0x4e8] sm:$0xf]
        %v493 = vld [vmem:[#allocation7 + $0x4ec] sm:$0xff]
        %v494 = vld [vmem:[#allocation7 + $0x4f4] sm:$0xff]
        %v495 = vld [vmem:[#allocation7 + $0x4fc] sm:$0xff]
        %v496 = vld [vmem:[#allocation7 + $0x504] sm:$0xff]
        %v497 = vld [vmem:[#allocation7 + $0x50c] sm:$0xf]
        %v498 = vld [vmem:[#allocation7 + $0x510] sm:$0xff]
        %v499 = vld [vmem:[#allocation7 + $0x518] sm:$0xff]
        %v500 = vld [vmem:[#allocation7 + $0x520] sm:$0xff]
        %v501 = vld [vmem:[#allocation7 + $0x528] sm:$0xff]
        %v502 = vld [vmem:[#allocation7 + $0x530] sm:$0xf]
        %v503 = vld [vmem:[#allocation7 + $0x534] sm:$0xff]
        %v504 = vld [vmem:[#allocation7 + $0x53c] sm:$0xff]
        %v505 = vld [vmem:[#allocation7 + $0x544] sm:$0xff]
        %v506 = vld [vmem:[#allocation7 + $0x54c] sm:$0xff]
        %v507 = vld [vmem:[#allocation7 + $0x554] sm:$0xf]
        %v508 = vld [vmem:[#allocation7 + $0x558] sm:$0xff]
        %v509 = vld [vmem:[#allocation7 + $0x560] sm:$0xff]
        %v510 = vld [vmem:[#allocation7 + $0x568] sm:$0xff]
        %v511 = vld [vmem:[#allocation7 + $0x570] sm:$0xff]
        %v512 = vld [vmem:[#allocation7 + $0x578] sm:$0xf]
        %v513 = vld [vmem:[#allocation7 + $0x57c] sm:$0xff]
        %v514 = vld [vmem:[#allocation7 + $0x584] sm:$0xff]
        %v515 = vld [vmem:[#allocation7 + $0x58c] sm:$0xff]
        %v516 = vld [vmem:[#allocation7 + $0x594] sm:$0xff]
        %v517 = vld [vmem:[#allocation7 + $0x59c] sm:$0xf]
        %v518 = vld [vmem:[#allocation7 + $0x5a0] sm:$0xff]
        %v519 = vld [vmem:[#allocation7 + $0x5a8] sm:$0xff]
        %v520 = vld [vmem:[#allocation7 + $0x5b0] sm:$0xff]
        %v521 = vld [vmem:[#allocation7 + $0x5b8] sm:$0xff]
        %v522 = vld [vmem:[#allocation7 + $0x5c0] sm:$0xf]
        %v523 = vld [vmem:[#allocation7 + $0x5c4] sm:$0xff]
        %v524 = vld [vmem:[#allocation7 + $0x5cc] sm:$0xff]
        %v525 = vld [vmem:[#allocation7 + $0x5d4] sm:$0xff]
        %v526 = vld [vmem:[#allocation7 + $0x5dc] sm:$0xff]
        %v527 = vld [vmem:[#allocation7 + $0x5e4] sm:$0xf]
        %v528 = vld [vmem:[#allocation7 + $0x5e8] sm:$0xff]
        %v529 = vld [vmem:[#allocation7 + $0x5f0] sm:$0xff]
        %v530 = vld [vmem:[#allocation7 + $0x5f8] sm:$0xff]
        %v531 = vld [vmem:[#allocation7 + $0x600] sm:$0xff]
        %v532 = vld [vmem:[#allocation7 + $0x608] sm:$0xf]
        %v533 = vld [vmem:[#allocation7 + $0x60c] sm:$0xff]
        %v534 = vld [vmem:[#allocation7 + $0x614] sm:$0xff]
        %v535 = vld [vmem:[#allocation7 + $0x61c] sm:$0xff]
        %v536 = vld [vmem:[#allocation7 + $0x624] sm:$0xff]
        %v537 = vld [vmem:[#allocation7 + $0x62c] sm:$0xf]
        %v538 = vld [vmem:[#allocation7 + $0x630] sm:$0xff]
        %v539 = vld [vmem:[#allocation7 + $0x638] sm:$0xff]
        %v540 = vld [vmem:[#allocation7 + $0x640] sm:$0xff]
        %v541 = vld [vmem:[#allocation7 + $0x648] sm:$0xff]
        %v542 = vld [vmem:[#allocation7 + $0x650] sm:$0xf]
        %v543 = vld [vmem:[#allocation7 + $0x654] sm:$0xff]
        %v544 = vld [vmem:[#allocation7 + $0x65c] sm:$0xff]
        %v545 = vld [vmem:[#allocation7 + $0x664] sm:$0xff]
        %v546 = vld [vmem:[#allocation7 + $0x66c] sm:$0xff]
        %v547 = vld [vmem:[#allocation7 + $0x674] sm:$0xf]
        %v548 = vld [vmem:[#allocation7 + $0x678] sm:$0xff]
        %v549 = vld [vmem:[#allocation7 + $0x680] sm:$0xff]
        %v550 = vld [vmem:[#allocation7 + $0x688] sm:$0xff]
        %v551 = vld [vmem:[#allocation7 + $0x690] sm:$0xff]
        %v552 = vld [vmem:[#allocation7 + $0x698] sm:$0xf]
        %v553 = vld [vmem:[#allocation7 + $0x69c] sm:$0xff]
        %v554 = vld [vmem:[#allocation7 + $0x6a4] sm:$0xff]
        %v555 = vld [vmem:[#allocation7 + $0x6ac] sm:$0xff]
        %v556 = vld [vmem:[#allocation7 + $0x6b4] sm:$0xff]
        %v557 = vld [vmem:[#allocation7 + $0x6bc] sm:$0xf]
        %v798 = vunpack.c.l.b16 %v318
        %v799 = vunpack.c.h.b16 %v318
        %v800 = vunpack.c.l.b16 %v319
        %v801 = vunpack.c.h.b16 %v319
        %v802 = vunpack.c.l.b16 %v320
        %v803 = vunpack.c.h.b16 %v320
        %v804 = vunpack.c.l.b16 %v321
        %v805 = vunpack.c.h.b16 %v321
        %v806 = vunpack.c.l.b16 %v322
        %v807 = vunpack.c.l.b16 %v323
        %v808 = vunpack.c.h.b16 %v323
        %v809 = vunpack.c.l.b16 %v324
        %v810 = vunpack.c.h.b16 %v324
        %v811 = vunpack.c.l.b16 %v325
        %v812 = vunpack.c.h.b16 %v325
        %v813 = vunpack.c.l.b16 %v326
        %v814 = vunpack.c.h.b16 %v326
        %v815 = vunpack.c.l.b16 %v327
        %v816 = vunpack.c.l.b16 %v328
        %v817 = vunpack.c.h.b16 %v328
        %v818 = vunpack.c.l.b16 %v329
        %v819 = vunpack.c.h.b16 %v329
        %v820 = vunpack.c.l.b16 %v330
        %v821 = vunpack.c.h.b16 %v330
        %v822 = vunpack.c.l.b16 %v331
        %v823 = vunpack.c.h.b16 %v331
        %v824 = vunpack.c.l.b16 %v332
        %v825 = vunpack.c.l.b16 %v333
        %v826 = vunpack.c.h.b16 %v333
        %v827 = vunpack.c.l.b16 %v334
        %v828 = vunpack.c.h.b16 %v334
        %v829 = vunpack.c.l.b16 %v335
        %v830 = vunpack.c.h.b16 %v335
        %v831 = vunpack.c.l.b16 %v336
        %v832 = vunpack.c.h.b16 %v336
        %v833 = vunpack.c.l.b16 %v337
        %v834 = vunpack.c.l.b16 %v338
        %v835 = vunpack.c.h.b16 %v338
        %v836 = vunpack.c.l.b16 %v339
        %v837 = vunpack.c.h.b16 %v339
        %v838 = vunpack.c.l.b16 %v340
        %v839 = vunpack.c.h.b16 %v340
        %v840 = vunpack.c.l.b16 %v341
        %v841 = vunpack.c.h.b16 %v341
        %v842 = vunpack.c.l.b16 %v342
        %v843 = vunpack.c.l.b16 %v343
        %v844 = vunpack.c.h.b16 %v343
        %v845 = vunpack.c.l.b16 %v344
        %v846 = vunpack.c.h.b16 %v344
        %v847 = vunpack.c.l.b16 %v345
        %v848 = vunpack.c.h.b16 %v345
        %v849 = vunpack.c.l.b16 %v346
        %v850 = vunpack.c.h.b16 %v346
        %v851 = vunpack.c.l.b16 %v347
        %v852 = vunpack.c.l.b16 %v348
        %v853 = vunpack.c.h.b16 %v348
        %v854 = vunpack.c.l.b16 %v349
        %v855 = vunpack.c.h.b16 %v349
        %v856 = vunpack.c.l.b16 %v350
        %v857 = vunpack.c.h.b16 %v350
        %v858 = vunpack.c.l.b16 %v351
        %v859 = vunpack.c.h.b16 %v351
        %v860 = vunpack.c.l.b16 %v352
        %v861 = vunpack.c.l.b16 %v353
        %v862 = vunpack.c.h.b16 %v353
        %v863 = vunpack.c.l.b16 %v354
        %v864 = vunpack.c.h.b16 %v354
        %v865 = vunpack.c.l.b16 %v355
        %v866 = vunpack.c.h.b16 %v355
        %v867 = vunpack.c.l.b16 %v356
        %v868 = vunpack.c.h.b16 %v356
        %v869 = vunpack.c.l.b16 %v357
        %v870 = vunpack.c.l.b16 %v358
        %v871 = vunpack.c.h.b16 %v358
        %v872 = vunpack.c.l.b16 %v359
        %v873 = vunpack.c.h.b16 %v359
        %v874 = vunpack.c.l.b16 %v360
        %v875 = vunpack.c.h.b16 %v360
        %v876 = vunpack.c.l.b16 %v361
        %v877 = vunpack.c.h.b16 %v361
        %v878 = vunpack.c.l.b16 %v362
        %v879 = vunpack.c.l.b16 %v363
        %v880 = vunpack.c.h.b16 %v363
        %v881 = vunpack.c.l.b16 %v364
        %v882 = vunpack.c.h.b16 %v364
        %v883 = vunpack.c.l.b16 %v365
        %v884 = vunpack.c.h.b16 %v365
        %v885 = vunpack.c.l.b16 %v366
        %v886 = vunpack.c.h.b16 %v366
        %v887 = vunpack.c.l.b16 %v367
        %v888 = vunpack.c.l.b16 %v368
        %v889 = vunpack.c.h.b16 %v368
        %v890 = vunpack.c.l.b16 %v369
        %v891 = vunpack.c.h.b16 %v369
        %v892 = vunpack.c.l.b16 %v370
        %v893 = vunpack.c.h.b16 %v370
        %v894 = vunpack.c.l.b16 %v371
        %v895 = vunpack.c.h.b16 %v371
        %v896 = vunpack.c.l.b16 %v372
        %v897 = vunpack.c.l.b16 %v373
        %v898 = vunpack.c.h.b16 %v373
        %v899 = vunpack.c.l.b16 %v374
        %v900 = vunpack.c.h.b16 %v374
        %v901 = vunpack.c.l.b16 %v375
        %v902 = vunpack.c.h.b16 %v375
        %v903 = vunpack.c.l.b16 %v376
        %v904 = vunpack.c.h.b16 %v376
        %v905 = vunpack.c.l.b16 %v377
        %v906 = vunpack.c.l.b16 %v378
        %v907 = vunpack.c.h.b16 %v378
        %v908 = vunpack.c.l.b16 %v379
        %v909 = vunpack.c.h.b16 %v379
        %v910 = vunpack.c.l.b16 %v380
        %v911 = vunpack.c.h.b16 %v380
        %v912 = vunpack.c.l.b16 %v381
        %v913 = vunpack.c.h.b16 %v381
        %v914 = vunpack.c.l.b16 %v382
        %v915 = vunpack.c.l.b16 %v383
        %v916 = vunpack.c.h.b16 %v383
        %v917 = vunpack.c.l.b16 %v384
        %v918 = vunpack.c.h.b16 %v384
        %v919 = vunpack.c.l.b16 %v385
        %v920 = vunpack.c.h.b16 %v385
        %v921 = vunpack.c.l.b16 %v386
        %v922 = vunpack.c.h.b16 %v386
        %v923 = vunpack.c.l.b16 %v387
        %v924 = vunpack.c.l.b16 %v388
        %v925 = vunpack.c.h.b16 %v388
        %v926 = vunpack.c.l.b16 %v389
        %v927 = vunpack.c.h.b16 %v389
        %v928 = vunpack.c.l.b16 %v390
        %v929 = vunpack.c.h.b16 %v390
        %v930 = vunpack.c.l.b16 %v391
        %v931 = vunpack.c.h.b16 %v391
        %v932 = vunpack.c.l.b16 %v392
        %v933 = vunpack.c.l.b16 %v393
        %v934 = vunpack.c.h.b16 %v393
        %v935 = vunpack.c.l.b16 %v394
        %v936 = vunpack.c.h.b16 %v394
        %v937 = vunpack.c.l.b16 %v395
        %v938 = vunpack.c.h.b16 %v395
        %v939 = vunpack.c.l.b16 %v396
        %v940 = vunpack.c.h.b16 %v396
        %v941 = vunpack.c.l.b16 %v397
        %v942 = vunpack.c.l.b16 %v398
        %v943 = vunpack.c.h.b16 %v398
        %v944 = vunpack.c.l.b16 %v399
        %v945 = vunpack.c.h.b16 %v399
        %v946 = vunpack.c.l.b16 %v400
        %v947 = vunpack.c.h.b16 %v400
        %v948 = vunpack.c.l.b16 %v401
        %v949 = vunpack.c.h.b16 %v401
        %v950 = vunpack.c.l.b16 %v402
        %v951 = vunpack.c.l.b16 %v403
        %v952 = vunpack.c.h.b16 %v403
        %v953 = vunpack.c.l.b16 %v404
        %v954 = vunpack.c.h.b16 %v404
        %v955 = vunpack.c.l.b16 %v405
        %v956 = vunpack.c.h.b16 %v405
        %v957 = vunpack.c.l.b16 %v406
        %v958 = vunpack.c.h.b16 %v406
        %v959 = vunpack.c.l.b16 %v407
        %v960 = vunpack.c.l.b16 %v408
        %v961 = vunpack.c.h.b16 %v408
        %v962 = vunpack.c.l.b16 %v409
        %v963 = vunpack.c.h.b16 %v409
        %v964 = vunpack.c.l.b16 %v410
        %v965 = vunpack.c.h.b16 %v410
        %v966 = vunpack.c.l.b16 %v411
        %v967 = vunpack.c.h.b16 %v411
        %v968 = vunpack.c.l.b16 %v412
        %v969 = vunpack.c.l.b16 %v413
        %v970 = vunpack.c.h.b16 %v413
        %v971 = vunpack.c.l.b16 %v414
        %v972 = vunpack.c.h.b16 %v414
        %v973 = vunpack.c.l.b16 %v415
        %v974 = vunpack.c.h.b16 %v415
        %v975 = vunpack.c.l.b16 %v416
        %v976 = vunpack.c.h.b16 %v416
        %v977 = vunpack.c.l.b16 %v417
        %v978 = vunpack.c.l.b16 %v418
        %v979 = vunpack.c.h.b16 %v418
        %v980 = vunpack.c.l.b16 %v419
        %v981 = vunpack.c.h.b16 %v419
        %v982 = vunpack.c.l.b16 %v420
        %v983 = vunpack.c.h.b16 %v420
        %v984 = vunpack.c.l.b16 %v421
        %v985 = vunpack.c.h.b16 %v421
        %v986 = vunpack.c.l.b16 %v422
        %v987 = vunpack.c.l.b16 %v423
        %v988 = vunpack.c.h.b16 %v423
        %v989 = vunpack.c.l.b16 %v424
        %v990 = vunpack.c.h.b16 %v424
        %v991 = vunpack.c.l.b16 %v425
        %v992 = vunpack.c.h.b16 %v425
        %v993 = vunpack.c.l.b16 %v426
        %v994 = vunpack.c.h.b16 %v426
        %v995 = vunpack.c.l.b16 %v427
        %v996 = vunpack.c.l.b16 %v428
        %v997 = vunpack.c.h.b16 %v428
        %v998 = vunpack.c.l.b16 %v429
        %v999 = vunpack.c.h.b16 %v429
        %v1000 = vunpack.c.l.b16 %v430
        %v1001 = vunpack.c.h.b16 %v430
        %v1002 = vunpack.c.l.b16 %v431
        %v1003 = vunpack.c.h.b16 %v431
        %v1004 = vunpack.c.l.b16 %v432
        %v1005 = vunpack.c.l.b16 %v433
        %v1006 = vunpack.c.h.b16 %v433
        %v1007 = vunpack.c.l.b16 %v434
        %v1008 = vunpack.c.h.b16 %v434
        %v1009 = vunpack.c.l.b16 %v435
        %v1010 = vunpack.c.h.b16 %v435
        %v1011 = vunpack.c.l.b16 %v436
        %v1012 = vunpack.c.h.b16 %v436
        %v1013 = vunpack.c.l.b16 %v437
        %v1014 = vunpack.c.l.b16 %v438
        %v1015 = vunpack.c.h.b16 %v438
        %v1016 = vunpack.c.l.b16 %v439
        %v1017 = vunpack.c.h.b16 %v439
        %v1018 = vunpack.c.l.b16 %v440
        %v1019 = vunpack.c.h.b16 %v440
        %v1020 = vunpack.c.l.b16 %v441
        %v1021 = vunpack.c.h.b16 %v441
        %v1022 = vunpack.c.l.b16 %v442
        %v1023 = vunpack.c.l.b16 %v443
        %v1024 = vunpack.c.h.b16 %v443
        %v1025 = vunpack.c.l.b16 %v444
        %v1026 = vunpack.c.h.b16 %v444
        %v1027 = vunpack.c.l.b16 %v445
        %v1028 = vunpack.c.h.b16 %v445
        %v1029 = vunpack.c.l.b16 %v446
        %v1030 = vunpack.c.h.b16 %v446
        %v1031 = vunpack.c.l.b16 %v447
        %v1032 = vunpack.c.l.b16 %v448
        %v1033 = vunpack.c.h.b16 %v448
        %v1034 = vunpack.c.l.b16 %v449
        %v1035 = vunpack.c.h.b16 %v449
        %v1036 = vunpack.c.l.b16 %v450
        %v1037 = vunpack.c.h.b16 %v450
        %v1038 = vunpack.c.l.b16 %v451
        %v1039 = vunpack.c.h.b16 %v451
        %v1040 = vunpack.c.l.b16 %v452
        %v1041 = vunpack.c.l.b16 %v453
        %v1042 = vunpack.c.h.b16 %v453
        %v1043 = vunpack.c.l.b16 %v454
        %v1044 = vunpack.c.h.b16 %v454
        %v1045 = vunpack.c.l.b16 %v455
        %v1046 = vunpack.c.h.b16 %v455
        %v1047 = vunpack.c.l.b16 %v456
        %v1048 = vunpack.c.h.b16 %v456
        %v1049 = vunpack.c.l.b16 %v457
        %v1050 = vunpack.c.l.b16 %v458
        %v1051 = vunpack.c.h.b16 %v458
        %v1052 = vunpack.c.l.b16 %v459
        %v1053 = vunpack.c.h.b16 %v459
        %v1054 = vunpack.c.l.b16 %v460
        %v1055 = vunpack.c.h.b16 %v460
        %v1056 = vunpack.c.l.b16 %v461
        %v1057 = vunpack.c.h.b16 %v461
        %v1058 = vunpack.c.l.b16 %v462
        %v1059 = vunpack.c.l.b16 %v463
        %v1060 = vunpack.c.h.b16 %v463
        %v1061 = vunpack.c.l.b16 %v464
        %v1062 = vunpack.c.h.b16 %v464
        %v1063 = vunpack.c.l.b16 %v465
        %v1064 = vunpack.c.h.b16 %v465
        %v1065 = vunpack.c.l.b16 %v466
        %v1066 = vunpack.c.h.b16 %v466
        %v1067 = vunpack.c.l.b16 %v467
        %v1068 = vunpack.c.l.b16 %v468
        %v1069 = vunpack.c.h.b16 %v468
        %v1070 = vunpack.c.l.b16 %v469
        %v1071 = vunpack.c.h.b16 %v469
        %v1072 = vunpack.c.l.b16 %v470
        %v1073 = vunpack.c.h.b16 %v470
        %v1074 = vunpack.c.l.b16 %v471
        %v1075 = vunpack.c.h.b16 %v471
        %v1076 = vunpack.c.l.b16 %v472
        %v1077 = vunpack.c.l.b16 %v473
        %v1078 = vunpack.c.h.b16 %v473
        %v1079 = vunpack.c.l.b16 %v474
        %v1080 = vunpack.c.h.b16 %v474
        %v1081 = vunpack.c.l.b16 %v475
        %v1082 = vunpack.c.h.b16 %v475
        %v1083 = vunpack.c.l.b16 %v476
        %v1084 = vunpack.c.h.b16 %v476
        %v1085 = vunpack.c.l.b16 %v477
        %v1086 = vunpack.c.l.b16 %v478
        %v1087 = vunpack.c.h.b16 %v478
        %v1088 = vunpack.c.l.b16 %v479
        %v1089 = vunpack.c.h.b16 %v479
        %v1090 = vunpack.c.l.b16 %v480
        %v1091 = vunpack.c.h.b16 %v480
        %v1092 = vunpack.c.l.b16 %v481
        %v1093 = vunpack.c.h.b16 %v481
        %v1094 = vunpack.c.l.b16 %v482
        %v1095 = vunpack.c.l.b16 %v483
        %v1096 = vunpack.c.h.b16 %v483
        %v1097 = vunpack.c.l.b16 %v484
        %v1098 = vunpack.c.h.b16 %v484
        %v1099 = vunpack.c.l.b16 %v485
        %v1100 = vunpack.c.h.b16 %v485
        %v1101 = vunpack.c.l.b16 %v486
        %v1102 = vunpack.c.h.b16 %v486
        %v1103 = vunpack.c.l.b16 %v487
        %v1104 = vunpack.c.l.b16 %v488
        %v1105 = vunpack.c.h.b16 %v488
        %v1106 = vunpack.c.l.b16 %v489
        %v1107 = vunpack.c.h.b16 %v489
        %v1108 = vunpack.c.l.b16 %v490
        %v1109 = vunpack.c.h.b16 %v490
        %v1110 = vunpack.c.l.b16 %v491
        %v1111 = vunpack.c.h.b16 %v491
        %v1112 = vunpack.c.l.b16 %v492
        %v1113 = vunpack.c.l.b16 %v493
        %v1114 = vunpack.c.h.b16 %v493
        %v1115 = vunpack.c.l.b16 %v494
        %v1116 = vunpack.c.h.b16 %v494
        %v1117 = vunpack.c.l.b16 %v495
        %v1118 = vunpack.c.h.b16 %v495
        %v1119 = vunpack.c.l.b16 %v496
        %v1120 = vunpack.c.h.b16 %v496
        %v1121 = vunpack.c.l.b16 %v497
        %v1122 = vunpack.c.l.b16 %v498
        %v1123 = vunpack.c.h.b16 %v498
        %v1124 = vunpack.c.l.b16 %v499
        %v1125 = vunpack.c.h.b16 %v499
        %v1126 = vunpack.c.l.b16 %v500
        %v1127 = vunpack.c.h.b16 %v500
        %v1128 = vunpack.c.l.b16 %v501
        %v1129 = vunpack.c.h.b16 %v501
        %v1130 = vunpack.c.l.b16 %v502
        %v1131 = vunpack.c.l.b16 %v503
        %v1132 = vunpack.c.h.b16 %v503
        %v1133 = vunpack.c.l.b16 %v504
        %v1134 = vunpack.c.h.b16 %v504
        %v1135 = vunpack.c.l.b16 %v505
        %v1136 = vunpack.c.h.b16 %v505
        %v1137 = vunpack.c.l.b16 %v506
        %v1138 = vunpack.c.h.b16 %v506
        %v1139 = vunpack.c.l.b16 %v507
        %v1140 = vunpack.c.l.b16 %v508
        %v1141 = vunpack.c.h.b16 %v508
        %v1142 = vunpack.c.l.b16 %v509
        %v1143 = vunpack.c.h.b16 %v509
        %v1144 = vunpack.c.l.b16 %v510
        %v1145 = vunpack.c.h.b16 %v510
        %v1146 = vunpack.c.l.b16 %v511
        %v1147 = vunpack.c.h.b16 %v511
        %v1148 = vunpack.c.l.b16 %v512
        %v1149 = vunpack.c.l.b16 %v513
        %v1150 = vunpack.c.h.b16 %v513
        %v1151 = vunpack.c.l.b16 %v514
        %v1152 = vunpack.c.h.b16 %v514
        %v1153 = vunpack.c.l.b16 %v515
        %v1154 = vunpack.c.h.b16 %v515
        %v1155 = vunpack.c.l.b16 %v516
        %v1156 = vunpack.c.h.b16 %v516
        %v1157 = vunpack.c.l.b16 %v517
        %v1158 = vunpack.c.l.b16 %v518
        %v1159 = vunpack.c.h.b16 %v518
        %v1160 = vunpack.c.l.b16 %v519
        %v1161 = vunpack.c.h.b16 %v519
        %v1162 = vunpack.c.l.b16 %v520
        %v1163 = vunpack.c.h.b16 %v520
        %v1164 = vunpack.c.l.b16 %v521
        %v1165 = vunpack.c.h.b16 %v521
        %v1166 = vunpack.c.l.b16 %v522
        %v1167 = vunpack.c.l.b16 %v523
        %v1168 = vunpack.c.h.b16 %v523
        %v1169 = vunpack.c.l.b16 %v524
        %v1170 = vunpack.c.h.b16 %v524
        %v1171 = vunpack.c.l.b16 %v525
        %v1172 = vunpack.c.h.b16 %v525
        %v1173 = vunpack.c.l.b16 %v526
        %v1174 = vunpack.c.h.b16 %v526
        %v1175 = vunpack.c.l.b16 %v527
        %v1176 = vunpack.c.l.b16 %v528
        %v1177 = vunpack.c.h.b16 %v528
        %v1178 = vunpack.c.l.b16 %v529
        %v1179 = vunpack.c.h.b16 %v529
        %v1180 = vunpack.c.l.b16 %v530
        %v1181 = vunpack.c.h.b16 %v530
        %v1182 = vunpack.c.l.b16 %v531
        %v1183 = vunpack.c.h.b16 %v531
        %v1184 = vunpack.c.l.b16 %v532
        %v1185 = vunpack.c.l.b16 %v533
        %v1186 = vunpack.c.h.b16 %v533
        %v1187 = vunpack.c.l.b16 %v534
        %v1188 = vunpack.c.h.b16 %v534
        %v1189 = vunpack.c.l.b16 %v535
        %v1190 = vunpack.c.h.b16 %v535
        %v1191 = vunpack.c.l.b16 %v536
        %v1192 = vunpack.c.h.b16 %v536
        %v1193 = vunpack.c.l.b16 %v537
        %v1194 = vunpack.c.l.b16 %v538
        %v1195 = vunpack.c.h.b16 %v538
        %v1196 = vunpack.c.l.b16 %v539
        %v1197 = vunpack.c.h.b16 %v539
        %v1198 = vunpack.c.l.b16 %v540
        %v1199 = vunpack.c.h.b16 %v540
        %v1200 = vunpack.c.l.b16 %v541
        %v1201 = vunpack.c.h.b16 %v541
        %v1202 = vunpack.c.l.b16 %v542
        %v1203 = vunpack.c.l.b16 %v543
        %v1204 = vunpack.c.h.b16 %v543
        %v1205 = vunpack.c.l.b16 %v544
        %v1206 = vunpack.c.h.b16 %v544
        %v1207 = vunpack.c.l.b16 %v545
        %v1208 = vunpack.c.h.b16 %v545
        %v1209 = vunpack.c.l.b16 %v546
        %v1210 = vunpack.c.h.b16 %v546
        %v1211 = vunpack.c.l.b16 %v547
        %v1212 = vunpack.c.l.b16 %v548
        %v1213 = vunpack.c.h.b16 %v548
        %v1214 = vunpack.c.l.b16 %v549
        %v1215 = vunpack.c.h.b16 %v549
        %v1216 = vunpack.c.l.b16 %v550
        %v1217 = vunpack.c.h.b16 %v550
        %v1218 = vunpack.c.l.b16 %v551
        %v1219 = vunpack.c.h.b16 %v551
        %v1220 = vunpack.c.l.b16 %v552
        %v1221 = vunpack.c.l.b16 %v553
        %v1222 = vunpack.c.h.b16 %v553
        %v1223 = vunpack.c.l.b16 %v554
        %v1224 = vunpack.c.h.b16 %v554
        %v1225 = vunpack.c.l.b16 %v555
        %v1226 = vunpack.c.h.b16 %v555
        %v1227 = vunpack.c.l.b16 %v556
        %v1228 = vunpack.c.h.b16 %v556
        %v1229 = vunpack.c.l.b16 %v557
        %v1230 = vpack.c.b16 %v807, %v798
        %v1231 = vpack.c.b16 %v808, %v799
        %v1232 = vpack.c.b16 %v809, %v800
        %v1233 = vpack.c.b16 %v810, %v801
        %v1234 = vpack.c.b16 %v811, %v802
        %v1235 = vpack.c.b16 %v812, %v803
        %v1236 = vpack.c.b16 %v813, %v804
        %v1237 = vpack.c.b16 %v814, %v805
        %v1238 = vpack.c.b16 %v815, %v806
        %v1239 = vpack.c.b16 %v825, %v816
        %v1240 = vpack.c.b16 %v826, %v817
        %v1241 = vpack.c.b16 %v827, %v818
        %v1242 = vpack.c.b16 %v828, %v819
        %v1243 = vpack.c.b16 %v829, %v820
        %v1244 = vpack.c.b16 %v830, %v821
        %v1245 = vpack.c.b16 %v831, %v822
        %v1246 = vpack.c.b16 %v832, %v823
        %v1247 = vpack.c.b16 %v833, %v824
        %v1248 = vpack.c.b16 %v843, %v834
        %v1249 = vpack.c.b16 %v844, %v835
        %v1250 = vpack.c.b16 %v845, %v836
        %v1251 = vpack.c.b16 %v846, %v837
        %v1252 = vpack.c.b16 %v847, %v838
        %v1253 = vpack.c.b16 %v848, %v839
        %v1254 = vpack.c.b16 %v849, %v840
        %v1255 = vpack.c.b16 %v850, %v841
        %v1256 = vpack.c.b16 %v851, %v842
        %v1257 = vpack.c.b16 %v861, %v852
        %v1258 = vpack.c.b16 %v862, %v853
        %v1259 = vpack.c.b16 %v863, %v854
        %v1260 = vpack.c.b16 %v864, %v855
        %v1261 = vpack.c.b16 %v865, %v856
        %v1262 = vpack.c.b16 %v866, %v857
        %v1263 = vpack.c.b16 %v867, %v858
        %v1264 = vpack.c.b16 %v868, %v859
        %v1265 = vpack.c.b16 %v869, %v860
        %v1266 = vpack.c.b16 %v879, %v870
        %v1267 = vpack.c.b16 %v880, %v871
        %v1268 = vpack.c.b16 %v881, %v872
        %v1269 = vpack.c.b16 %v882, %v873
        %v1270 = vpack.c.b16 %v883, %v874
        %v1271 = vpack.c.b16 %v884, %v875
        %v1272 = vpack.c.b16 %v885, %v876
        %v1273 = vpack.c.b16 %v886, %v877
        %v1274 = vpack.c.b16 %v887, %v878
        %v1275 = vpack.c.b16 %v897, %v888
        %v1276 = vpack.c.b16 %v898, %v889
        %v1277 = vpack.c.b16 %v899, %v890
        %v1278 = vpack.c.b16 %v900, %v891
        %v1279 = vpack.c.b16 %v901, %v892
        %v1280 = vpack.c.b16 %v902, %v893
        %v1281 = vpack.c.b16 %v903, %v894
        %v1282 = vpack.c.b16 %v904, %v895
        %v1283 = vpack.c.b16 %v905, %v896
        %v1284 = vpack.c.b16 %v915, %v906
        %v1285 = vpack.c.b16 %v916, %v907
        %v1286 = vpack.c.b16 %v917, %v908
        %v1287 = vpack.c.b16 %v918, %v909
        %v1288 = vpack.c.b16 %v919, %v910
        %v1289 = vpack.c.b16 %v920, %v911
        %v1290 = vpack.c.b16 %v921, %v912
        %v1291 = vpack.c.b16 %v922, %v913
        %v1292 = vpack.c.b16 %v923, %v914
        %v1293 = vpack.c.b16 %v933, %v924
        %v1294 = vpack.c.b16 %v934, %v925
        %v1295 = vpack.c.b16 %v935, %v926
        %v1296 = vpack.c.b16 %v936, %v927
        %v1297 = vpack.c.b16 %v937, %v928
        %v1298 = vpack.c.b16 %v938, %v929
        %v1299 = vpack.c.b16 %v939, %v930
        %v1300 = vpack.c.b16 %v940, %v931
        %v1301 = vpack.c.b16 %v941, %v932
        %v1302 = vpack.c.b16 %v951, %v942
        %v1303 = vpack.c.b16 %v952, %v943
        %v1304 = vpack.c.b16 %v953, %v944
        %v1305 = vpack.c.b16 %v954, %v945
        %v1306 = vpack.c.b16 %v955, %v946
        %v1307 = vpack.c.b16 %v956, %v947
        %v1308 = vpack.c.b16 %v957, %v948
        %v1309 = vpack.c.b16 %v958, %v949
        %v1310 = vpack.c.b16 %v959, %v950
        %v1311 = vpack.c.b16 %v969, %v960
        %v1312 = vpack.c.b16 %v970, %v961
        %v1313 = vpack.c.b16 %v971, %v962
        %v1314 = vpack.c.b16 %v972, %v963
        %v1315 = vpack.c.b16 %v973, %v964
        %v1316 = vpack.c.b16 %v974, %v965
        %v1317 = vpack.c.b16 %v975, %v966
        %v1318 = vpack.c.b16 %v976, %v967
        %v1319 = vpack.c.b16 %v977, %v968
        %v1320 = vpack.c.b16 %v987, %v978
        %v1321 = vpack.c.b16 %v988, %v979
        %v1322 = vpack.c.b16 %v989, %v980
        %v1323 = vpack.c.b16 %v990, %v981
        %v1324 = vpack.c.b16 %v991, %v982
        %v1325 = vpack.c.b16 %v992, %v983
        %v1326 = vpack.c.b16 %v993, %v984
        %v1327 = vpack.c.b16 %v994, %v985
        %v1328 = vpack.c.b16 %v995, %v986
        %v1329 = vpack.c.b16 %v1005, %v996
        %v1330 = vpack.c.b16 %v1006, %v997
        %v1331 = vpack.c.b16 %v1007, %v998
        %v1332 = vpack.c.b16 %v1008, %v999
        %v1333 = vpack.c.b16 %v1009, %v1000
        %v1334 = vpack.c.b16 %v1010, %v1001
        %v1335 = vpack.c.b16 %v1011, %v1002
        %v1336 = vpack.c.b16 %v1012, %v1003
        %v1337 = vpack.c.b16 %v1013, %v1004
        %v1338 = vpack.c.b16 %v1023, %v1014
        %v1339 = vpack.c.b16 %v1024, %v1015
        %v1340 = vpack.c.b16 %v1025, %v1016
        %v1341 = vpack.c.b16 %v1026, %v1017
        %v1342 = vpack.c.b16 %v1027, %v1018
        %v1343 = vpack.c.b16 %v1028, %v1019
        %v1344 = vpack.c.b16 %v1029, %v1020
        %v1345 = vpack.c.b16 %v1030, %v1021
        %v1346 = vpack.c.b16 %v1031, %v1022
        %v1347 = vpack.c.b16 %v1041, %v1032
        %v1348 = vpack.c.b16 %v1042, %v1033
        %v1349 = vpack.c.b16 %v1043, %v1034
        %v1350 = vpack.c.b16 %v1044, %v1035
        %v1351 = vpack.c.b16 %v1045, %v1036
        %v1352 = vpack.c.b16 %v1046, %v1037
        %v1353 = vpack.c.b16 %v1047, %v1038
        %v1354 = vpack.c.b16 %v1048, %v1039
        %v1355 = vpack.c.b16 %v1049, %v1040
        %v1356 = vpack.c.b16 %v1059, %v1050
        %v1357 = vpack.c.b16 %v1060, %v1051
        %v1358 = vpack.c.b16 %v1061, %v1052
        %v1359 = vpack.c.b16 %v1062, %v1053
        %v1360 = vpack.c.b16 %v1063, %v1054
        %v1361 = vpack.c.b16 %v1064, %v1055
        %v1362 = vpack.c.b16 %v1065, %v1056
        %v1363 = vpack.c.b16 %v1066, %v1057
        %v1364 = vpack.c.b16 %v1067, %v1058
        %v1365 = vpack.c.b16 %v1077, %v1068
        %v1366 = vpack.c.b16 %v1078, %v1069
        %v1367 = vpack.c.b16 %v1079, %v1070
        %v1368 = vpack.c.b16 %v1080, %v1071
        %v1369 = vpack.c.b16 %v1081, %v1072
        %v1370 = vpack.c.b16 %v1082, %v1073
        %v1371 = vpack.c.b16 %v1083, %v1074
        %v1372 = vpack.c.b16 %v1084, %v1075
        %v1373 = vpack.c.b16 %v1085, %v1076
        %v1374 = vpack.c.b16 %v1095, %v1086
        %v1375 = vpack.c.b16 %v1096, %v1087
        %v1376 = vpack.c.b16 %v1097, %v1088
        %v1377 = vpack.c.b16 %v1098, %v1089
        %v1378 = vpack.c.b16 %v1099, %v1090
        %v1379 = vpack.c.b16 %v1100, %v1091
        %v1380 = vpack.c.b16 %v1101, %v1092
        %v1381 = vpack.c.b16 %v1102, %v1093
        %v1382 = vpack.c.b16 %v1103, %v1094
        %v1383 = vpack.c.b16 %v1113, %v1104
        %v1384 = vpack.c.b16 %v1114, %v1105
        %v1385 = vpack.c.b16 %v1115, %v1106
        %v1386 = vpack.c.b16 %v1116, %v1107
        %v1387 = vpack.c.b16 %v1117, %v1108
        %v1388 = vpack.c.b16 %v1118, %v1109
        %v1389 = vpack.c.b16 %v1119, %v1110
        %v1390 = vpack.c.b16 %v1120, %v1111
        %v1391 = vpack.c.b16 %v1121, %v1112
        %v1392 = vpack.c.b16 %v1131, %v1122
        %v1393 = vpack.c.b16 %v1132, %v1123
        %v1394 = vpack.c.b16 %v1133, %v1124
        %v1395 = vpack.c.b16 %v1134, %v1125
        %v1396 = vpack.c.b16 %v1135, %v1126
        %v1397 = vpack.c.b16 %v1136, %v1127
        %v1398 = vpack.c.b16 %v1137, %v1128
        %v1399 = vpack.c.b16 %v1138, %v1129
        %v1400 = vpack.c.b16 %v1139, %v1130
        %v1401 = vpack.c.b16 %v1149, %v1140
        %v1402 = vpack.c.b16 %v1150, %v1141
        %v1403 = vpack.c.b16 %v1151, %v1142
        %v1404 = vpack.c.b16 %v1152, %v1143
        %v1405 = vpack.c.b16 %v1153, %v1144
        %v1406 = vpack.c.b16 %v1154, %v1145
        %v1407 = vpack.c.b16 %v1155, %v1146
        %v1408 = vpack.c.b16 %v1156, %v1147
        %v1409 = vpack.c.b16 %v1157, %v1148
        %v1410 = vpack.c.b16 %v1167, %v1158
        %v1411 = vpack.c.b16 %v1168, %v1159
        %v1412 = vpack.c.b16 %v1169, %v1160
        %v1413 = vpack.c.b16 %v1170, %v1161
        %v1414 = vpack.c.b16 %v1171, %v1162
        %v1415 = vpack.c.b16 %v1172, %v1163
        %v1416 = vpack.c.b16 %v1173, %v1164
        %v1417 = vpack.c.b16 %v1174, %v1165
        %v1418 = vpack.c.b16 %v1175, %v1166
        %v1419 = vpack.c.b16 %v1185, %v1176
        %v1420 = vpack.c.b16 %v1186, %v1177
        %v1421 = vpack.c.b16 %v1187, %v1178
        %v1422 = vpack.c.b16 %v1188, %v1179
        %v1423 = vpack.c.b16 %v1189, %v1180
        %v1424 = vpack.c.b16 %v1190, %v1181
        %v1425 = vpack.c.b16 %v1191, %v1182
        %v1426 = vpack.c.b16 %v1192, %v1183
        %v1427 = vpack.c.b16 %v1193, %v1184
        %v1428 = vpack.c.b16 %v1203, %v1194
        %v1429 = vpack.c.b16 %v1204, %v1195
        %v1430 = vpack.c.b16 %v1205, %v1196
        %v1431 = vpack.c.b16 %v1206, %v1197
        %v1432 = vpack.c.b16 %v1207, %v1198
        %v1433 = vpack.c.b16 %v1208, %v1199
        %v1434 = vpack.c.b16 %v1209, %v1200
        %v1435 = vpack.c.b16 %v1210, %v1201
        %v1436 = vpack.c.b16 %v1211, %v1202
        %v1437 = vpack.c.b16 %v1221, %v1212
        %v1438 = vpack.c.b16 %v1222, %v1213
        %v1439 = vpack.c.b16 %v1223, %v1214
        %v1440 = vpack.c.b16 %v1224, %v1215
        %v1441 = vpack.c.b16 %v1225, %v1216
        %v1442 = vpack.c.b16 %v1226, %v1217
        %v1443 = vpack.c.b16 %v1227, %v1218
        %v1444 = vpack.c.b16 %v1228, %v1219
        %v1445 = vpack.c.b16 %v1229, %v1220
        %1662 = vmatprep.subr.bf16.mxu0 %v1231
        %1663 = vmatpush1.bf16.msra.mxu0 %v1230
        %1664 = vmatprep.subr.bf16.mxu0 %v1240
        %1665 = vmatpush1.bf16.msra.mxu0 %v1239
        %1666 = vmatprep.subr.bf16.mxu0 %v1249
        %1667 = vmatpush1.bf16.msra.mxu0 %v1248
        %1668 = vmatprep.subr.bf16.mxu0 %v1258
        %1669 = vmatpush1.bf16.msra.mxu0 %v1257
        %1670 = vmatprep.subr.bf16.mxu0 %v1267
        %1671 = vmatpush1.bf16.msra.mxu0 %v1266
        %1672 = vmatprep.subr.bf16.mxu0 %v1276
        %1673 = vmatpush1.bf16.msra.mxu0 %v1275
        %1674 = vmatprep.subr.bf16.mxu0 %v1285
        %1675 = vmatpush1.bf16.msra.mxu0 %v1284
        %1676 = vmatprep.subr.bf16.mxu0 %v1294
        %1677 = vmatpush1.bf16.msra.mxu0 %v1293
        %1678 = vmatprep.subr.bf16.mxu0 %v1303
        %1679 = vmatpush1.bf16.msra.mxu0 %v1302
        %1680 = vmatprep.subr.bf16.mxu0 %v1312
        %1681 = vmatpush1.bf16.msra.mxu0 %v1311
        %1682 = vmatprep.subr.bf16.mxu0 %v1321
        %1683 = vmatpush1.bf16.msra.mxu0 %v1320
        %1684 = vmatprep.subr.bf16.mxu0 %v1330
        %1685 = vmatpush1.bf16.msra.mxu0 %v1329
        %1686 = vmatprep.subr.bf16.mxu0 %v1339
        %1687 = vmatpush1.bf16.msra.mxu0 %v1338
        %1688 = vmatprep.subr.bf16.mxu0 %v1348
        %1689 = vmatpush1.bf16.msra.mxu0 %v1347
        %1690 = vmatprep.subr.bf16.mxu0 %v1357
        %1691 = vmatpush1.bf16.msra.mxu0 %v1356
        %1692 = vmatprep.subr.bf16.mxu0 %v1366
        %1693 = vmatpush1.bf16.msra.mxu0 %v1365
        %1694 = vmatprep.mubr.bf16.mxu0 %v295
        %1695 = vmatmul.mubr.bf16.gmra.mrb[0].mxu0 %v294
        %v1696 = vpop.f32.mrb[0].mxu0
        %v1697 = vadd.f32 0.0, %v1696
        %v1698 = vpop.f32.mrb[0].mxu0
        %v1699 = vadd.f32 0.0, %v1698
        %v1700 = vpop.f32.mrb[0].mxu0
        %v1701 = vadd.f32 0.0, %v1700
        %v1702 = vpop.f32.mrb[0].mxu0
        %v1703 = vadd.f32 0.0, %v1702
        %1704 = vmatprep.mubr.bf16.mxu0 %v298
        %1705 = vmatmul.mubr.bf16.gmra.mrb[0].mxu0 %v297
        %v1706 = vpop.f32.mrb[0].mxu0
        %v1707 = vadd.f32 0.0, %v1706
        %v1708 = vpop.f32.mrb[0].mxu0
        %v1709 = vadd.f32 0.0, %v1708
        %v1710 = vpop.f32.mrb[0].mxu0
        %v1711 = vadd.f32 0.0, %v1710
        %v1712 = vpop.f32.mrb[0].mxu0
        %v1713 = vadd.f32 0.0, %v1712
        %1714 = vmatprep.mubr.bf16.mxu0 %v301
        %1715 = vmatmul.mubr.bf16.gmra.mrb[0].mxu0 %v300
        %v1716 = vpop.f32.mrb[0].mxu0
        %v1717 = vadd.f32 0.0, %v1716
        %v1718 = vpop.f32.mrb[0].mxu0
        %v1719 = vadd.f32 0.0, %v1718
        %v1720 = vpop.f32.mrb[0].mxu0
        %v1721 = vadd.f32 0.0, %v1720
        %v1722 = vpop.f32.mrb[0].mxu0
        %v1723 = vadd.f32 0.0, %v1722
        %1724 = vmatprep.mubr.bf16.mxu0 %v304
        %1725 = vmatmul.mubr.bf16.gmra.mrb[0].mxu0 %v303
        %v1726 = vpop.f32.mrb[0].mxu0
        %v1727 = vadd.f32 0.0, %v1726
        %v1728 = vpop.f32.mrb[0].mxu0
        %v1729 = vadd.f32 0.0, %v1728
        %v1730 = vpop.f32.mrb[0].mxu0
        %v1731 = vadd.f32 0.0, %v1730
        %v1732 = vpop.f32.mrb[0].mxu0
        %v1733 = vadd.f32 0.0, %v1732
        %1734 = vmatprep.mubr.bf16.mxu0 %v307
        %1735 = vmatmul.mubr.bf16.gmra.mrb[0].mxu0 %v306
        %v1736 = vpop.f32.mrb[0].mxu0
        %v1737 = vadd.f32 0.0, %v1736
        %v1738 = vpop.f32.mrb[0].mxu0
        %v1739 = vadd.f32 0.0, %v1738
        %v1740 = vpop.f32.mrb[0].mxu0
        %v1741 = vadd.f32 0.0, %v1740
        %v1742 = vpop.f32.mrb[0].mxu0
        %v1743 = vadd.f32 0.0, %v1742
        %1744 = vmatprep.mubr.bf16.mxu0 %v310
        %1745 = vmatmul.mubr.bf16.gmra.mrb[0].mxu0 %v309
        %v1746 = vpop.f32.mrb[0].mxu0
        %v1747 = vadd.f32 0.0, %v1746
        %v1748 = vpop.f32.mrb[0].mxu0
        %v1749 = vadd.f32 0.0, %v1748
        %v1750 = vpop.f32.mrb[0].mxu0
        %v1751 = vadd.f32 0.0, %v1750
        %v1752 = vpop.f32.mrb[0].mxu0
        %v1753 = vadd.f32 0.0, %v1752
        %1754 = vmatprep.mubr.bf16.mxu0 %v313
        %1755 = vmatmul.mubr.bf16.gmra.mrb[0].mxu0 %v312
        %v1756 = vpop.f32.mrb[0].mxu0
        %v1757 = vadd.f32 0.0, %v1756
        %v1758 = vpop.f32.mrb[0].mxu0
        %v1759 = vadd.f32 0.0, %v1758
        %v1760 = vpop.f32.mrb[0].mxu0
        %v1761 = vadd.f32 0.0, %v1760
        %v1762 = vpop.f32.mrb[0].mxu0
        %v1763 = vadd.f32 0.0, %v1762
        %1764 = vmatprep.mubr.bf16.mxu0 %v316
        %1765 = vmatmul.mubr.bf16.gmra.mrb[0].mxu0 %v315
        %v1766 = vpop.f32.mrb[0].mxu0
        %v1767 = vadd.f32 0.0, %v1766
        %v1768 = vpop.f32.mrb[0].mxu0
        %v1769 = vadd.f32 0.0, %v1768
        %v1770 = vpop.f32.mrb[0].mxu0
        %v1771 = vadd.f32 0.0, %v1770
        %v1772 = vpop.f32.mrb[0].mxu0
        %v1773 = vadd.f32 0.0, %v1772
        %1774 = vdwg.mxu0
        %1775 = vmatprep.subr.bf16.mxu0 %v1375
        %1776 = vmatpush1.bf16.msra.mxu0 %v1374
        %1777 = vmatprep.subr.bf16.mxu0 %v1384
        %1778 = vmatpush1.bf16.msra.mxu0 %v1383
        %1779 = vmatprep.subr.bf16.mxu0 %v1393
        %1780 = vmatpush1.bf16.msra.mxu0 %v1392
        %1781 = vmatprep.subr.bf16.mxu0 %v1402
        %1782 = vmatpush1.bf16.msra.mxu0 %v1401
        %1783 = vmatprep.subr.bf16.mxu0 %v1411
        %1784 = vmatpush1.bf16.msra.mxu0 %v1410
        %1785 = vmatprep.subr.bf16.mxu0 %v1420
        %1786 = vmatpush1.bf16.msra.mxu0 %v1419
        %1787 = vmatprep.subr.bf16.mxu0 %v1429
        %1788 = vmatpush1.bf16.msra.mxu0 %v1428
        %1789 = vmatprep.subr.bf16.mxu0 %v1438
        %1790 = vmatpush1.bf16.msra.mxu0 %v1437
        %1791 = vmatprep.subr.bf16.mxu0 0
        %1792 = vmatpush1.bf16.msra.mxu0 0
        %1793 = vmatprep.subr.bf16.mxu0 0
        %1794 = vmatpush1.bf16.msra.mxu0 0
        %1795 = vmatprep.subr.bf16.mxu0 0
        %1796 = vmatpush1.bf16.msra.mxu0 0
        %1797 = vmatprep.subr.bf16.mxu0 0
        %1798 = vmatpush1.bf16.msra.mxu0 0
        %1799 = vmatprep.subr.bf16.mxu0 0
        %1800 = vmatpush1.bf16.msra.mxu0 0
        %1801 = vmatprep.subr.bf16.mxu0 0
        %1802 = vmatpush1.bf16.msra.mxu0 0
        %1803 = vmatprep.subr.bf16.mxu0 0
        %1804 = vmatpush1.bf16.msra.mxu0 0
        %1805 = vmatprep.subr.bf16.mxu0 0
        %1806 = vmatpush1.bf16.msra.mxu0 0
        %1807 = vmatprep.mubr.bf16.mxu0 0
        %1808 = vmatmul.mubr.bf16.gmra.mrb[0].mxu0 %v296
        %v1809 = vpop.f32.mrb[0].mxu0
        %v1810 = vadd.f32 %v1697, %v1809
        %v1811 = vpop.f32.mrb[0].mxu0
        %v1812 = vadd.f32 %v1699, %v1811
        %v1813 = vpop.f32.mrb[0].mxu0
        %v1814 = vadd.f32 %v1701, %v1813
        %v1815 = vpop.f32.mrb[0].mxu0
        %v1816 = vadd.f32 %v1703, %v1815
        %1817 = vmatprep.mubr.bf16.mxu0 0
        %1818 = vmatmul.mubr.bf16.gmra.mrb[0].mxu0 %v299
        %v1819 = vpop.f32.mrb[0].mxu0
        %v1820 = vadd.f32 %v1707, %v1819
        %v1821 = vpop.f32.mrb[0].mxu0
        %v1822 = vadd.f32 %v1709, %v1821
        %v1823 = vpop.f32.mrb[0].mxu0
        %v1824 = vadd.f32 %v1711, %v1823
        %v1825 = vpop.f32.mrb[0].mxu0
        %v1826 = vadd.f32 %v1713, %v1825
        %1827 = vmatprep.mubr.bf16.mxu0 0
        %1828 = vmatmul.mubr.bf16.gmra.mrb[0].mxu0 %v302
        %v1829 = vpop.f32.mrb[0].mxu0
        %v1830 = vadd.f32 %v1717, %v1829
        %v1831 = vpop.f32.mrb[0].mxu0
        %v1832 = vadd.f32 %v1719, %v1831
        %v1833 = vpop.f32.mrb[0].mxu0
        %v1834 = vadd.f32 %v1721, %v1833
        %v1835 = vpop.f32.mrb[0].mxu0
        %v1836 = vadd.f32 %v1723, %v1835
        %1837 = vmatprep.mubr.bf16.mxu0 0
        %1838 = vmatmul.mubr.bf16.gmra.mrb[0].mxu0 %v305
        %v1839 = vpop.f32.mrb[0].mxu0
        %v1840 = vadd.f32 %v1727, %v1839
        %v1841 = vpop.f32.mrb[0].mxu0
        %v1842 = vadd.f32 %v1729, %v1841
        %v1843 = vpop.f32.mrb[0].mxu0
        %v1844 = vadd.f32 %v1731, %v1843
        %v1845 = vpop.f32.mrb[0].mxu0
        %v1846 = vadd.f32 %v1733, %v1845
        %1847 = vmatprep.mubr.bf16.mxu0 0
        %1848 = vmatmul.mubr.bf16.gmra.mrb[0].mxu0 %v308
        %v1849 = vpop.f32.mrb[0].mxu0
        %v1850 = vadd.f32 %v1737, %v1849
        %v1851 = vpop.f32.mrb[0].mxu0
        %v1852 = vadd.f32 %v1739, %v1851
        %v1853 = vpop.f32.mrb[0].mxu0
        %v1854 = vadd.f32 %v1741, %v1853
        %v1855 = vpop.f32.mrb[0].mxu0
        %v1856 = vadd.f32 %v1743, %v1855
        %1857 = vmatprep.mubr.bf16.mxu0 0
        %1858 = vmatmul.mubr.bf16.gmra.mrb[0].mxu0 %v311
        %v1859 = vpop.f32.mrb[0].mxu0
        %v1860 = vadd.f32 %v1747, %v1859
        %v1861 = vpop.f32.mrb[0].mxu0
        %v1862 = vadd.f32 %v1749, %v1861
        %v1863 = vpop.f32.mrb[0].mxu0
        %v1864 = vadd.f32 %v1751, %v1863
        %v1865 = vpop.f32.mrb[0].mxu0
        %v1866 = vadd.f32 %v1753, %v1865
        %1867 = vmatprep.mubr.bf16.mxu0 0
        %1868 = vmatmul.mubr.bf16.gmra.mrb[0].mxu0 %v314
        %v1869 = vpop.f32.mrb[0].mxu0
        %v1870 = vadd.f32 %v1757, %v1869
        %v1871 = vpop.f32.mrb[0].mxu0
        %v1872 = vadd.f32 %v1759, %v1871
        %v1873 = vpop.f32.mrb[0].mxu0
        %v1874 = vadd.f32 %v1761, %v1873
        %v1875 = vpop.f32.mrb[0].mxu0
        %v1876 = vadd.f32 %v1763, %v1875
        %1877 = vmatprep.mubr.bf16.mxu0 0
        %1878 = vmatmul.mubr.bf16.gmra.mrb[0].mxu0 %v317
        %v1879 = vpop.f32.mrb[0].mxu0
        %v1880 = vadd.f32 %v1767, %v1879
        %v1881 = vpop.f32.mrb[0].mxu0
        %v1882 = vadd.f32 %v1769, %v1881
        %v1883 = vpop.f32.mrb[0].mxu0
        %v1884 = vadd.f32 %v1771, %v1883
        %v1885 = vpop.f32.mrb[0].mxu0
        %v1886 = vadd.f32 %v1773, %v1885
        %1887 = vdwg.mxu0
        %1888 = vmatprep.subr.bf16.mxu0 %v1233
        %1889 = vmatpush1.bf16.msra.mxu0 %v1232
        %1890 = vmatprep.subr.bf16.mxu0 %v1242
        %1891 = vmatpush1.bf16.msra.mxu0 %v1241
        %1892 = vmatprep.subr.bf16.mxu0 %v1251
        %1893 = vmatpush1.bf16.msra.mxu0 %v1250
        %1894 = vmatprep.subr.bf16.mxu0 %v1260
        %1895 = vmatpush1.bf16.msra.mxu0 %v1259
        %1896 = vmatprep.subr.bf16.mxu0 %v1269
        %1897 = vmatpush1.bf16.msra.mxu0 %v1268
        %1898 = vmatprep.subr.bf16.mxu0 %v1278
        %1899 = vmatpush1.bf16.msra.mxu0 %v1277
        %1900 = vmatprep.subr.bf16.mxu0 %v1287
        %1901 = vmatpush1.bf16.msra.mxu0 %v1286
        %1902 = vmatprep.subr.bf16.mxu0 %v1296
        %1903 = vmatpush1.bf16.msra.mxu0 %v1295
        %1904 = vmatprep.subr.bf16.mxu0 %v1305
        %1905 = vmatpush1.bf16.msra.mxu0 %v1304
        %1906 = vmatprep.subr.bf16.mxu0 %v1314
        %1907 = vmatpush1.bf16.msra.mxu0 %v1313
        %1908 = vmatprep.subr.bf16.mxu0 %v1323
        %1909 = vmatpush1.bf16.msra.mxu0 %v1322
        %1910 = vmatprep.subr.bf16.mxu0 %v1332
        %1911 = vmatpush1.bf16.msra.mxu0 %v1331
        %1912 = vmatprep.subr.bf16.mxu0 %v1341
        %1913 = vmatpush1.bf16.msra.mxu0 %v1340
        %1914 = vmatprep.subr.bf16.mxu0 %v1350
        %1915 = vmatpush1.bf16.msra.mxu0 %v1349
        %1916 = vmatprep.subr.bf16.mxu0 %v1359
        %1917 = vmatpush1.bf16.msra.mxu0 %v1358
        %1918 = vmatprep.subr.bf16.mxu0 %v1368
        %1919 = vmatpush1.bf16.msra.mxu0 %v1367
        %1920 = vmatprep.mubr.bf16.mxu0 %v295
        %1921 = vmatmul.mubr.bf16.gmra.mrb[0].mxu0 %v294
        %v1922 = vpop.f32.mrb[0].mxu0
        %v1923 = vadd.f32 0.0, %v1922
        %v1924 = vpop.f32.mrb[0].mxu0
        %v1925 = vadd.f32 0.0, %v1924
        %v1926 = vpop.f32.mrb[0].mxu0
        %v1927 = vadd.f32 0.0, %v1926
        %v1928 = vpop.f32.mrb[0].mxu0
        %v1929 = vadd.f32 0.0, %v1928
        %1930 = vmatprep.mubr.bf16.mxu0 %v298
        %1931 = vmatmul.mubr.bf16.gmra.mrb[0].mxu0 %v297
        %v1932 = vpop.f32.mrb[0].mxu0
        %v1933 = vadd.f32 0.0, %v1932
        %v1934 = vpop.f32.mrb[0].mxu0
        %v1935 = vadd.f32 0.0, %v1934
        %v1936 = vpop.f32.mrb[0].mxu0
        %v1937 = vadd.f32 0.0, %v1936
        %v1938 = vpop.f32.mrb[0].mxu0
        %v1939 = vadd.f32 0.0, %v1938
        %1940 = vmatprep.mubr.bf16.mxu0 %v301
        %1941 = vmatmul.mubr.bf16.gmra.mrb[0].mxu0 %v300
        %v1942 = vpop.f32.mrb[0].mxu0
        %v1943 = vadd.f32 0.0, %v1942
        %v1944 = vpop.f32.mrb[0].mxu0
        %v1945 = vadd.f32 0.0, %v1944
        %v1946 = vpop.f32.mrb[0].mxu0
        %v1947 = vadd.f32 0.0, %v1946
        %v1948 = vpop.f32.mrb[0].mxu0
        %v1949 = vadd.f32 0.0, %v1948
        %1950 = vmatprep.mubr.bf16.mxu0 %v304
        %1951 = vmatmul.mubr.bf16.gmra.mrb[0].mxu0 %v303
        %v1952 = vpop.f32.mrb[0].mxu0
        %v1953 = vadd.f32 0.0, %v1952
        %v1954 = vpop.f32.mrb[0].mxu0
        %v1955 = vadd.f32 0.0, %v1954
        %v1956 = vpop.f32.mrb[0].mxu0
        %v1957 = vadd.f32 0.0, %v1956
        %v1958 = vpop.f32.mrb[0].mxu0
        %v1959 = vadd.f32 0.0, %v1958
        %1960 = vmatprep.mubr.bf16.mxu0 %v307
        %1961 = vmatmul.mubr.bf16.gmra.mrb[0].mxu0 %v306
        %v1962 = vpop.f32.mrb[0].mxu0
        %v1963 = vadd.f32 0.0, %v1962
        %v1964 = vpop.f32.mrb[0].mxu0
        %v1965 = vadd.f32 0.0, %v1964
        %v1966 = vpop.f32.mrb[0].mxu0
        %v1967 = vadd.f32 0.0, %v1966
        %v1968 = vpop.f32.mrb[0].mxu0
        %v1969 = vadd.f32 0.0, %v1968
        %1970 = vmatprep.mubr.bf16.mxu0 %v310
        %1971 = vmatmul.mubr.bf16.gmra.mrb[0].mxu0 %v309
        %v1972 = vpop.f32.mrb[0].mxu0
        %v1973 = vadd.f32 0.0, %v1972
        %v1974 = vpop.f32.mrb[0].mxu0
        %v1975 = vadd.f32 0.0, %v1974
        %v1976 = vpop.f32.mrb[0].mxu0
        %v1977 = vadd.f32 0.0, %v1976
        %v1978 = vpop.f32.mrb[0].mxu0
        %v1979 = vadd.f32 0.0, %v1978
        %1980 = vmatprep.mubr.bf16.mxu0 %v313
        %1981 = vmatmul.mubr.bf16.gmra.mrb[0].mxu0 %v312
        %v1982 = vpop.f32.mrb[0].mxu0
        %v1983 = vadd.f32 0.0, %v1982
        %v1984 = vpop.f32.mrb[0].mxu0
        %v1985 = vadd.f32 0.0, %v1984
        %v1986 = vpop.f32.mrb[0].mxu0
        %v1987 = vadd.f32 0.0, %v1986
        %v1988 = vpop.f32.mrb[0].mxu0
        %v1989 = vadd.f32 0.0, %v1988
        %1990 = vmatprep.mubr.bf16.mxu0 %v316
        %1991 = vmatmul.mubr.bf16.gmra.mrb[0].mxu0 %v315
        %v1992 = vpop.f32.mrb[0].mxu0
        %v1993 = vadd.f32 0.0, %v1992
        %v1994 = vpop.f32.mrb[0].mxu0
        %v1995 = vadd.f32 0.0, %v1994
        %v1996 = vpop.f32.mrb[0].mxu0
        %v1997 = vadd.f32 0.0, %v1996
        %v1998 = vpop.f32.mrb[0].mxu0
        %v1999 = vadd.f32 0.0, %v1998
        %2000 = vdwg.mxu0
        %2001 = vmatprep.subr.bf16.mxu0 %v1377
        %2002 = vmatpush1.bf16.msra.mxu0 %v1376
        %2003 = vmatprep.subr.bf16.mxu0 %v1386
        %2004 = vmatpush1.bf16.msra.mxu0 %v1385
        %2005 = vmatprep.subr.bf16.mxu0 %v1395
        %2006 = vmatpush1.bf16.msra.mxu0 %v1394
        %2007 = vmatprep.subr.bf16.mxu0 %v1404
        %2008 = vmatpush1.bf16.msra.mxu0 %v1403
        %2009 = vmatprep.subr.bf16.mxu0 %v1413
        %2010 = vmatpush1.bf16.msra.mxu0 %v1412
        %2011 = vmatprep.subr.bf16.mxu0 %v1422
        %2012 = vmatpush1.bf16.msra.mxu0 %v1421
        %2013 = vmatprep.subr.bf16.mxu0 %v1431
        %2014 = vmatpush1.bf16.msra.mxu0 %v1430
        %2015 = vmatprep.subr.bf16.mxu0 %v1440
        %2016 = vmatpush1.bf16.msra.mxu0 %v1439
        %2017 = vmatprep.subr.bf16.mxu0 0
        %2018 = vmatpush1.bf16.msra.mxu0 0
        %2019 = vmatprep.subr.bf16.mxu0 0
        %2020 = vmatpush1.bf16.msra.mxu0 0
        %2021 = vmatprep.subr.bf16.mxu0 0
        %2022 = vmatpush1.bf16.msra.mxu0 0
        %2023 = vmatprep.subr.bf16.mxu0 0
        %2024 = vmatpush1.bf16.msra.mxu0 0
        %2025 = vmatprep.subr.bf16.mxu0 0
        %2026 = vmatpush1.bf16.msra.mxu0 0
        %2027 = vmatprep.subr.bf16.mxu0 0
        %2028 = vmatpush1.bf16.msra.mxu0 0
        %2029 = vmatprep.subr.bf16.mxu0 0
        %2030 = vmatpush1.bf16.msra.mxu0 0
        %2031 = vmatprep.subr.bf16.mxu0 0
        %2032 = vmatpush1.bf16.msra.mxu0 0
        %2033 = vmatprep.mubr.bf16.mxu0 0
        %2034 = vmatmul.mubr.bf16.gmra.mrb[0].mxu0 %v296
        %v2035 = vpop.f32.mrb[0].mxu0
        %v2036 = vadd.f32 %v1923, %v2035
        %v2037 = vpop.f32.mrb[0].mxu0
        %v2038 = vadd.f32 %v1925, %v2037
        %v2039 = vpop.f32.mrb[0].mxu0
        %v2040 = vadd.f32 %v1927, %v2039
        %v2041 = vpop.f32.mrb[0].mxu0
        %v2042 = vadd.f32 %v1929, %v2041
        %2043 = vmatprep.mubr.bf16.mxu0 0
        %2044 = vmatmul.mubr.bf16.gmra.mrb[0].mxu0 %v299
        %v2045 = vpop.f32.mrb[0].mxu0
        %v2046 = vadd.f32 %v1933, %v2045
        %v2047 = vpop.f32.mrb[0].mxu0
        %v2048 = vadd.f32 %v1935, %v2047
        %v2049 = vpop.f32.mrb[0].mxu0
        %v2050 = vadd.f32 %v1937, %v2049
        %v2051 = vpop.f32.mrb[0].mxu0
        %v2052 = vadd.f32 %v1939, %v2051
        %2053 = vmatprep.mubr.bf16.mxu0 0
        %2054 = vmatmul.mubr.bf16.gmra.mrb[0].mxu0 %v302
        %v2055 = vpop.f32.mrb[0].mxu0
        %v2056 = vadd.f32 %v1943, %v2055
        %v2057 = vpop.f32.mrb[0].mxu0
        %v2058 = vadd.f32 %v1945, %v2057
        %v2059 = vpop.f32.mrb[0].mxu0
        %v2060 = vadd.f32 %v1947, %v2059
        %v2061 = vpop.f32.mrb[0].mxu0
        %v2062 = vadd.f32 %v1949, %v2061
        %2063 = vmatprep.mubr.bf16.mxu0 0
        %2064 = vmatmul.mubr.bf16.gmra.mrb[0].mxu0 %v305
        %v2065 = vpop.f32.mrb[0].mxu0
        %v2066 = vadd.f32 %v1953, %v2065
        %v2067 = vpop.f32.mrb[0].mxu0
        %v2068 = vadd.f32 %v1955, %v2067
        %v2069 = vpop.f32.mrb[0].mxu0
        %v2070 = vadd.f32 %v1957, %v2069
        %v2071 = vpop.f32.mrb[0].mxu0
        %v2072 = vadd.f32 %v1959, %v2071
        %2073 = vmatprep.mubr.bf16.mxu0 0
        %2074 = vmatmul.mubr.bf16.gmra.mrb[0].mxu0 %v308
        %v2075 = vpop.f32.mrb[0].mxu0
        %v2076 = vadd.f32 %v1963, %v2075
        %v2077 = vpop.f32.mrb[0].mxu0
        %v2078 = vadd.f32 %v1965, %v2077
        %v2079 = vpop.f32.mrb[0].mxu0
        %v2080 = vadd.f32 %v1967, %v2079
        %v2081 = vpop.f32.mrb[0].mxu0
        %v2082 = vadd.f32 %v1969, %v2081
        %2083 = vmatprep.mubr.bf16.mxu0 0
        %2084 = vmatmul.mubr.bf16.gmra.mrb[0].mxu0 %v311
        %v2085 = vpop.f32.mrb[0].mxu0
        %v2086 = vadd.f32 %v1973, %v2085
        %v2087 = vpop.f32.mrb[0].mxu0
        %v2088 = vadd.f32 %v1975, %v2087
        %v2089 = vpop.f32.mrb[0].mxu0
        %v2090 = vadd.f32 %v1977, %v2089
        %v2091 = vpop.f32.mrb[0].mxu0
        %v2092 = vadd.f32 %v1979, %v2091
        %2093 = vmatprep.mubr.bf16.mxu0 0
        %2094 = vmatmul.mubr.bf16.gmra.mrb[0].mxu0 %v314
        %v2095 = vpop.f32.mrb[0].mxu0
        %v2096 = vadd.f32 %v1983, %v2095
        %v2097 = vpop.f32.mrb[0].mxu0
        %v2098 = vadd.f32 %v1985, %v2097
        %v2099 = vpop.f32.mrb[0].mxu0
        %v2100 = vadd.f32 %v1987, %v2099
        %v2101 = vpop.f32.mrb[0].mxu0
        %v2102 = vadd.f32 %v1989, %v2101
        %2103 = vmatprep.mubr.bf16.mxu0 0
        %2104 = vmatmul.mubr.bf16.gmra.mrb[0].mxu0 %v317
        %v2105 = vpop.f32.mrb[0].mxu0
        %v2106 = vadd.f32 %v1993, %v2105
        %v2107 = vpop.f32.mrb[0].mxu0
        %v2108 = vadd.f32 %v1995, %v2107
        %v2109 = vpop.f32.mrb[0].mxu0
        %v2110 = vadd.f32 %v1997, %v2109
        %v2111 = vpop.f32.mrb[0].mxu0
        %v2112 = vadd.f32 %v1999, %v2111
        %2113 = vdwg.mxu0
        %2114 = vmatprep.subr.bf16.mxu0 %v1235
        %2115 = vmatpush1.bf16.msra.mxu0 %v1234
        %2116 = vmatprep.subr.bf16.mxu0 %v1244
        %2117 = vmatpush1.bf16.msra.mxu0 %v1243
        %2118 = vmatprep.subr.bf16.mxu0 %v1253
        %2119 = vmatpush1.bf16.msra.mxu0 %v1252
        %2120 = vmatprep.subr.bf16.mxu0 %v1262
        %2121 = vmatpush1.bf16.msra.mxu0 %v1261
        %2122 = vmatprep.subr.bf16.mxu0 %v1271
        %2123 = vmatpush1.bf16.msra.mxu0 %v1270
        %2124 = vmatprep.subr.bf16.mxu0 %v1280
        %2125 = vmatpush1.bf16.msra.mxu0 %v1279
        %2126 = vmatprep.subr.bf16.mxu0 %v1289
        %2127 = vmatpush1.bf16.msra.mxu0 %v1288
        %2128 = vmatprep.subr.bf16.mxu0 %v1298
        %2129 = vmatpush1.bf16.msra.mxu0 %v1297
        %2130 = vmatprep.subr.bf16.mxu0 %v1307
        %2131 = vmatpush1.bf16.msra.mxu0 %v1306
        %2132 = vmatprep.subr.bf16.mxu0 %v1316
        %2133 = vmatpush1.bf16.msra.mxu0 %v1315
        %2134 = vmatprep.subr.bf16.mxu0 %v1325
        %2135 = vmatpush1.bf16.msra.mxu0 %v1324
        %2136 = vmatprep.subr.bf16.mxu0 %v1334
        %2137 = vmatpush1.bf16.msra.mxu0 %v1333
        %2138 = vmatprep.subr.bf16.mxu0 %v1343
        %2139 = vmatpush1.bf16.msra.mxu0 %v1342
        %2140 = vmatprep.subr.bf16.mxu0 %v1352
        %2141 = vmatpush1.bf16.msra.mxu0 %v1351
        %2142 = vmatprep.subr.bf16.mxu0 %v1361
        %2143 = vmatpush1.bf16.msra.mxu0 %v1360
        %2144 = vmatprep.subr.bf16.mxu0 %v1370
        %2145 = vmatpush1.bf16.msra.mxu0 %v1369
        %2146 = vmatprep.mubr.bf16.mxu0 %v295
        %2147 = vmatmul.mubr.bf16.gmra.mrb[0].mxu0 %v294
        %v2148 = vpop.f32.mrb[0].mxu0
        %v2149 = vadd.f32 0.0, %v2148
        %v2150 = vpop.f32.mrb[0].mxu0
        %v2151 = vadd.f32 0.0, %v2150
        %v2152 = vpop.f32.mrb[0].mxu0
        %v2153 = vadd.f32 0.0, %v2152
        %v2154 = vpop.f32.mrb[0].mxu0
        %v2155 = vadd.f32 0.0, %v2154
        %2156 = vmatprep.mubr.bf16.mxu0 %v298
        %2157 = vmatmul.mubr.bf16.gmra.mrb[0].mxu0 %v297
        %v2158 = vpop.f32.mrb[0].mxu0
        %v2159 = vadd.f32 0.0, %v2158
        %v2160 = vpop.f32.mrb[0].mxu0
        %v2161 = vadd.f32 0.0, %v2160
        %v2162 = vpop.f32.mrb[0].mxu0
        %v2163 = vadd.f32 0.0, %v2162
        %v2164 = vpop.f32.mrb[0].mxu0
        %v2165 = vadd.f32 0.0, %v2164
        %2166 = vmatprep.mubr.bf16.mxu0 %v301
        %2167 = vmatmul.mubr.bf16.gmra.mrb[0].mxu0 %v300
        %v2168 = vpop.f32.mrb[0].mxu0
        %v2169 = vadd.f32 0.0, %v2168
        %v2170 = vpop.f32.mrb[0].mxu0
        %v2171 = vadd.f32 0.0, %v2170
        %v2172 = vpop.f32.mrb[0].mxu0
        %v2173 = vadd.f32 0.0, %v2172
        %v2174 = vpop.f32.mrb[0].mxu0
        %v2175 = vadd.f32 0.0, %v2174
        %2176 = vmatprep.mubr.bf16.mxu0 %v304
        %2177 = vmatmul.mubr.bf16.gmra.mrb[0].mxu0 %v303
        %v2178 = vpop.f32.mrb[0].mxu0
        %v2179 = vadd.f32 0.0, %v2178
        %v2180 = vpop.f32.mrb[0].mxu0
        %v2181 = vadd.f32 0.0, %v2180
        %v2182 = vpop.f32.mrb[0].mxu0
        %v2183 = vadd.f32 0.0, %v2182
        %v2184 = vpop.f32.mrb[0].mxu0
        %v2185 = vadd.f32 0.0, %v2184
        %2186 = vmatprep.mubr.bf16.mxu0 %v307
        %2187 = vmatmul.mubr.bf16.gmra.mrb[0].mxu0 %v306
        %v2188 = vpop.f32.mrb[0].mxu0
        %v2189 = vadd.f32 0.0, %v2188
        %v2190 = vpop.f32.mrb[0].mxu0
        %v2191 = vadd.f32 0.0, %v2190
        %v2192 = vpop.f32.mrb[0].mxu0
        %v2193 = vadd.f32 0.0, %v2192
        %v2194 = vpop.f32.mrb[0].mxu0
        %v2195 = vadd.f32 0.0, %v2194
        %2196 = vmatprep.mubr.bf16.mxu0 %v310
        %2197 = vmatmul.mubr.bf16.gmra.mrb[0].mxu0 %v309
        %v2198 = vpop.f32.mrb[0].mxu0
        %v2199 = vadd.f32 0.0, %v2198
        %v2200 = vpop.f32.mrb[0].mxu0
        %v2201 = vadd.f32 0.0, %v2200
        %v2202 = vpop.f32.mrb[0].mxu0
        %v2203 = vadd.f32 0.0, %v2202
        %v2204 = vpop.f32.mrb[0].mxu0
        %v2205 = vadd.f32 0.0, %v2204
        %2206 = vmatprep.mubr.bf16.mxu0 %v313
        %2207 = vmatmul.mubr.bf16.gmra.mrb[0].mxu0 %v312
        %v2208 = vpop.f32.mrb[0].mxu0
        %v2209 = vadd.f32 0.0, %v2208
        %v2210 = vpop.f32.mrb[0].mxu0
        %v2211 = vadd.f32 0.0, %v2210
        %v2212 = vpop.f32.mrb[0].mxu0
        %v2213 = vadd.f32 0.0, %v2212
        %v2214 = vpop.f32.mrb[0].mxu0
        %v2215 = vadd.f32 0.0, %v2214
        %2216 = vmatprep.mubr.bf16.mxu0 %v316
        %2217 = vmatmul.mubr.bf16.gmra.mrb[0].mxu0 %v315
        %v2218 = vpop.f32.mrb[0].mxu0
        %v2219 = vadd.f32 0.0, %v2218
        %v2220 = vpop.f32.mrb[0].mxu0
        %v2221 = vadd.f32 0.0, %v2220
        %v2222 = vpop.f32.mrb[0].mxu0
        %v2223 = vadd.f32 0.0, %v2222
        %v2224 = vpop.f32.mrb[0].mxu0
        %v2225 = vadd.f32 0.0, %v2224
        %2226 = vdwg.mxu0
        %2227 = vmatprep.subr.bf16.mxu0 %v1379
        %2228 = vmatpush1.bf16.msra.mxu0 %v1378
        %2229 = vmatprep.subr.bf16.mxu0 %v1388
        %2230 = vmatpush1.bf16.msra.mxu0 %v1387
        %2231 = vmatprep.subr.bf16.mxu0 %v1397
        %2232 = vmatpush1.bf16.msra.mxu0 %v1396
        %2233 = vmatprep.subr.bf16.mxu0 %v1406
        %2234 = vmatpush1.bf16.msra.mxu0 %v1405
        %2235 = vmatprep.subr.bf16.mxu0 %v1415
        %2236 = vmatpush1.bf16.msra.mxu0 %v1414
        %2237 = vmatprep.subr.bf16.mxu0 %v1424
        %2238 = vmatpush1.bf16.msra.mxu0 %v1423
        %2239 = vmatprep.subr.bf16.mxu0 %v1433
        %2240 = vmatpush1.bf16.msra.mxu0 %v1432
        %2241 = vmatprep.subr.bf16.mxu0 %v1442
        %2242 = vmatpush1.bf16.msra.mxu0 %v1441
        %2243 = vmatprep.subr.bf16.mxu0 0
        %2244 = vmatpush1.bf16.msra.mxu0 0
        %2245 = vmatprep.subr.bf16.mxu0 0
        %2246 = vmatpush1.bf16.msra.mxu0 0
        %2247 = vmatprep.subr.bf16.mxu0 0
        %2248 = vmatpush1.bf16.msra.mxu0 0
        %2249 = vmatprep.subr.bf16.mxu0 0
        %2250 = vmatpush1.bf16.msra.mxu0 0
        %2251 = vmatprep.subr.bf16.mxu0 0
        %2252 = vmatpush1.bf16.msra.mxu0 0
        %2253 = vmatprep.subr.bf16.mxu0 0
        %2254 = vmatpush1.bf16.msra.mxu0 0
        %2255 = vmatprep.subr.bf16.mxu0 0
        %2256 = vmatpush1.bf16.msra.mxu0 0
        %2257 = vmatprep.subr.bf16.mxu0 0
        %2258 = vmatpush1.bf16.msra.mxu0 0
        %2259 = vmatprep.mubr.bf16.mxu0 0
        %2260 = vmatmul.mubr.bf16.gmra.mrb[0].mxu0 %v296
        %v2261 = vpop.f32.mrb[0].mxu0
        %v2262 = vadd.f32 %v2149, %v2261
        %v2263 = vpop.f32.mrb[0].mxu0
        %v2264 = vadd.f32 %v2151, %v2263
        %v2265 = vpop.f32.mrb[0].mxu0
        %v2266 = vadd.f32 %v2153, %v2265
        %v2267 = vpop.f32.mrb[0].mxu0
        %v2268 = vadd.f32 %v2155, %v2267
        %2269 = vmatprep.mubr.bf16.mxu0 0
        %2270 = vmatmul.mubr.bf16.gmra.mrb[0].mxu0 %v299
        %v2271 = vpop.f32.mrb[0].mxu0
        %v2272 = vadd.f32 %v2159, %v2271
        %v2273 = vpop.f32.mrb[0].mxu0
        %v2274 = vadd.f32 %v2161, %v2273
        %v2275 = vpop.f32.mrb[0].mxu0
        %v2276 = vadd.f32 %v2163, %v2275
        %v2277 = vpop.f32.mrb[0].mxu0
        %v2278 = vadd.f32 %v2165, %v2277
        %2279 = vmatprep.mubr.bf16.mxu0 0
        %2280 = vmatmul.mubr.bf16.gmra.mrb[0].mxu0 %v302
        %v2281 = vpop.f32.mrb[0].mxu0
        %v2282 = vadd.f32 %v2169, %v2281
        %v2283 = vpop.f32.mrb[0].mxu0
        %v2284 = vadd.f32 %v2171, %v2283
        %v2285 = vpop.f32.mrb[0].mxu0
        %v2286 = vadd.f32 %v2173, %v2285
        %v2287 = vpop.f32.mrb[0].mxu0
        %v2288 = vadd.f32 %v2175, %v2287
        %2289 = vmatprep.mubr.bf16.mxu0 0
        %2290 = vmatmul.mubr.bf16.gmra.mrb[0].mxu0 %v305
        %v2291 = vpop.f32.mrb[0].mxu0
        %v2292 = vadd.f32 %v2179, %v2291
        %v2293 = vpop.f32.mrb[0].mxu0
        %v2294 = vadd.f32 %v2181, %v2293
        %v2295 = vpop.f32.mrb[0].mxu0
        %v2296 = vadd.f32 %v2183, %v2295
        %v2297 = vpop.f32.mrb[0].mxu0
        %v2298 = vadd.f32 %v2185, %v2297
        %2299 = vmatprep.mubr.bf16.mxu0 0
        %2300 = vmatmul.mubr.bf16.gmra.mrb[0].mxu0 %v308
        %v2301 = vpop.f32.mrb[0].mxu0
        %v2302 = vadd.f32 %v2189, %v2301
        %v2303 = vpop.f32.mrb[0].mxu0
        %v2304 = vadd.f32 %v2191, %v2303
        %v2305 = vpop.f32.mrb[0].mxu0
        %v2306 = vadd.f32 %v2193, %v2305
        %v2307 = vpop.f32.mrb[0].mxu0
        %v2308 = vadd.f32 %v2195, %v2307
        %2309 = vmatprep.mubr.bf16.mxu0 0
        %2310 = vmatmul.mubr.bf16.gmra.mrb[0].mxu0 %v311
        %v2311 = vpop.f32.mrb[0].mxu0
        %v2312 = vadd.f32 %v2199, %v2311
        %v2313 = vpop.f32.mrb[0].mxu0
        %v2314 = vadd.f32 %v2201, %v2313
        %v2315 = vpop.f32.mrb[0].mxu0
        %v2316 = vadd.f32 %v2203, %v2315
        %v2317 = vpop.f32.mrb[0].mxu0
        %v2318 = vadd.f32 %v2205, %v2317
        %2319 = vmatprep.mubr.bf16.mxu0 0
        %2320 = vmatmul.mubr.bf16.gmra.mrb[0].mxu0 %v314
        %v2321 = vpop.f32.mrb[0].mxu0
        %v2322 = vadd.f32 %v2209, %v2321
        %v2323 = vpop.f32.mrb[0].mxu0
        %v2324 = vadd.f32 %v2211, %v2323
        %v2325 = vpop.f32.mrb[0].mxu0
        %v2326 = vadd.f32 %v2213, %v2325
        %v2327 = vpop.f32.mrb[0].mxu0
        %v2328 = vadd.f32 %v2215, %v2327
        %2329 = vmatprep.mubr.bf16.mxu0 0
        %2330 = vmatmul.mubr.bf16.gmra.mrb[0].mxu0 %v317
        %v2331 = vpop.f32.mrb[0].mxu0
        %v2332 = vadd.f32 %v2219, %v2331
        %v2333 = vpop.f32.mrb[0].mxu0
        %v2334 = vadd.f32 %v2221, %v2333
        %v2335 = vpop.f32.mrb[0].mxu0
        %v2336 = vadd.f32 %v2223, %v2335
        %v2337 = vpop.f32.mrb[0].mxu0
        %v2338 = vadd.f32 %v2225, %v2337
        %2339 = vdwg.mxu0
        %2340 = vmatprep.subr.bf16.mxu0 %v1237
        %2341 = vmatpush1.bf16.msra.mxu0 %v1236
        %2342 = vmatprep.subr.bf16.mxu0 %v1246
        %2343 = vmatpush1.bf16.msra.mxu0 %v1245
        %2344 = vmatprep.subr.bf16.mxu0 %v1255
        %2345 = vmatpush1.bf16.msra.mxu0 %v1254
        %2346 = vmatprep.subr.bf16.mxu0 %v1264
        %2347 = vmatpush1.bf16.msra.mxu0 %v1263
        %2348 = vmatprep.subr.bf16.mxu0 %v1273
        %2349 = vmatpush1.bf16.msra.mxu0 %v1272
        %2350 = vmatprep.subr.bf16.mxu0 %v1282
        %2351 = vmatpush1.bf16.msra.mxu0 %v1281
        %2352 = vmatprep.subr.bf16.mxu0 %v1291
        %2353 = vmatpush1.bf16.msra.mxu0 %v1290
        %2354 = vmatprep.subr.bf16.mxu0 %v1300
        %2355 = vmatpush1.bf16.msra.mxu0 %v1299
        %2356 = vmatprep.subr.bf16.mxu0 %v1309
        %2357 = vmatpush1.bf16.msra.mxu0 %v1308
        %2358 = vmatprep.subr.bf16.mxu0 %v1318
        %2359 = vmatpush1.bf16.msra.mxu0 %v1317
        %2360 = vmatprep.subr.bf16.mxu0 %v1327
        %2361 = vmatpush1.bf16.msra.mxu0 %v1326
        %2362 = vmatprep.subr.bf16.mxu0 %v1336
        %2363 = vmatpush1.bf16.msra.mxu0 %v1335
        %2364 = vmatprep.subr.bf16.mxu0 %v1345
        %2365 = vmatpush1.bf16.msra.mxu0 %v1344
        %2366 = vmatprep.subr.bf16.mxu0 %v1354
        %2367 = vmatpush1.bf16.msra.mxu0 %v1353
        %2368 = vmatprep.subr.bf16.mxu0 %v1363
        %2369 = vmatpush1.bf16.msra.mxu0 %v1362
        %2370 = vmatprep.subr.bf16.mxu0 %v1372
        %2371 = vmatpush1.bf16.msra.mxu0 %v1371
        %2372 = vmatprep.mubr.bf16.mxu0 %v295
        %2373 = vmatmul.mubr.bf16.gmra.mrb[0].mxu0 %v294
        %v2374 = vpop.f32.mrb[0].mxu0
        %v2375 = vadd.f32 0.0, %v2374
        %v2376 = vpop.f32.mrb[0].mxu0
        %v2377 = vadd.f32 0.0, %v2376
        %v2378 = vpop.f32.mrb[0].mxu0
        %v2379 = vadd.f32 0.0, %v2378
        %v2380 = vpop.f32.mrb[0].mxu0
        %v2381 = vadd.f32 0.0, %v2380
        %2382 = vmatprep.mubr.bf16.mxu0 %v298
        %2383 = vmatmul.mubr.bf16.gmra.mrb[0].mxu0 %v297
        %v2384 = vpop.f32.mrb[0].mxu0
        %v2385 = vadd.f32 0.0, %v2384
        %v2386 = vpop.f32.mrb[0].mxu0
        %v2387 = vadd.f32 0.0, %v2386
        %v2388 = vpop.f32.mrb[0].mxu0
        %v2389 = vadd.f32 0.0, %v2388
        %v2390 = vpop.f32.mrb[0].mxu0
        %v2391 = vadd.f32 0.0, %v2390
        %2392 = vmatprep.mubr.bf16.mxu0 %v301
        %2393 = vmatmul.mubr.bf16.gmra.mrb[0].mxu0 %v300
        %v2394 = vpop.f32.mrb[0].mxu0
        %v2395 = vadd.f32 0.0, %v2394
        %v2396 = vpop.f32.mrb[0].mxu0
        %v2397 = vadd.f32 0.0, %v2396
        %v2398 = vpop.f32.mrb[0].mxu0
        %v2399 = vadd.f32 0.0, %v2398
        %v2400 = vpop.f32.mrb[0].mxu0
        %v2401 = vadd.f32 0.0, %v2400
        %2402 = vmatprep.mubr.bf16.mxu0 %v304
        %2403 = vmatmul.mubr.bf16.gmra.mrb[0].mxu0 %v303
        %v2404 = vpop.f32.mrb[0].mxu0
        %v2405 = vadd.f32 0.0, %v2404
        %v2406 = vpop.f32.mrb[0].mxu0
        %v2407 = vadd.f32 0.0, %v2406
        %v2408 = vpop.f32.mrb[0].mxu0
        %v2409 = vadd.f32 0.0, %v2408
        %v2410 = vpop.f32.mrb[0].mxu0
        %v2411 = vadd.f32 0.0, %v2410
        %2412 = vmatprep.mubr.bf16.mxu0 %v307
        %2413 = vmatmul.mubr.bf16.gmra.mrb[0].mxu0 %v306
        %v2414 = vpop.f32.mrb[0].mxu0
        %v2415 = vadd.f32 0.0, %v2414
        %v2416 = vpop.f32.mrb[0].mxu0
        %v2417 = vadd.f32 0.0, %v2416
        %v2418 = vpop.f32.mrb[0].mxu0
        %v2419 = vadd.f32 0.0, %v2418
        %v2420 = vpop.f32.mrb[0].mxu0
        %v2421 = vadd.f32 0.0, %v2420
        %2422 = vmatprep.mubr.bf16.mxu0 %v310
        %2423 = vmatmul.mubr.bf16.gmra.mrb[0].mxu0 %v309
        %v2424 = vpop.f32.mrb[0].mxu0
        %v2425 = vadd.f32 0.0, %v2424
        %v2426 = vpop.f32.mrb[0].mxu0
        %v2427 = vadd.f32 0.0, %v2426
        %v2428 = vpop.f32.mrb[0].mxu0
        %v2429 = vadd.f32 0.0, %v2428
        %v2430 = vpop.f32.mrb[0].mxu0
        %v2431 = vadd.f32 0.0, %v2430
        %2432 = vmatprep.mubr.bf16.mxu0 %v313
        %2433 = vmatmul.mubr.bf16.gmra.mrb[0].mxu0 %v312
        %v2434 = vpop.f32.mrb[0].mxu0
        %v2435 = vadd.f32 0.0, %v2434
        %v2436 = vpop.f32.mrb[0].mxu0
        %v2437 = vadd.f32 0.0, %v2436
        %v2438 = vpop.f32.mrb[0].mxu0
        %v2439 = vadd.f32 0.0, %v2438
        %v2440 = vpop.f32.mrb[0].mxu0
        %v2441 = vadd.f32 0.0, %v2440
        %2442 = vmatprep.mubr.bf16.mxu0 %v316
        %2443 = vmatmul.mubr.bf16.gmra.mrb[0].mxu0 %v315
        %v2444 = vpop.f32.mrb[0].mxu0
        %v2445 = vadd.f32 0.0, %v2444
        %v2446 = vpop.f32.mrb[0].mxu0
        %v2447 = vadd.f32 0.0, %v2446
        %v2448 = vpop.f32.mrb[0].mxu0
        %v2449 = vadd.f32 0.0, %v2448
        %v2450 = vpop.f32.mrb[0].mxu0
        %v2451 = vadd.f32 0.0, %v2450
        %2452 = vdwg.mxu0
        %2453 = vmatprep.subr.bf16.mxu0 %v1381
        %2454 = vmatpush1.bf16.msra.mxu0 %v1380
        %2455 = vmatprep.subr.bf16.mxu0 %v1390
        %2456 = vmatpush1.bf16.msra.mxu0 %v1389
        %2457 = vmatprep.subr.bf16.mxu0 %v1399
        %2458 = vmatpush1.bf16.msra.mxu0 %v1398
        %2459 = vmatprep.subr.bf16.mxu0 %v1408
        %2460 = vmatpush1.bf16.msra.mxu0 %v1407
        %2461 = vmatprep.subr.bf16.mxu0 %v1417
        %2462 = vmatpush1.bf16.msra.mxu0 %v1416
        %2463 = vmatprep.subr.bf16.mxu0 %v1426
        %2464 = vmatpush1.bf16.msra.mxu0 %v1425
        %2465 = vmatprep.subr.bf16.mxu0 %v1435
        %2466 = vmatpush1.bf16.msra.mxu0 %v1434
        %2467 = vmatprep.subr.bf16.mxu0 %v1444
        %2468 = vmatpush1.bf16.msra.mxu0 %v1443
        %2469 = vmatprep.subr.bf16.mxu0 0
        %2470 = vmatpush1.bf16.msra.mxu0 0
        %2471 = vmatprep.subr.bf16.mxu0 0
        %2472 = vmatpush1.bf16.msra.mxu0 0
        %2473 = vmatprep.subr.bf16.mxu0 0
        %2474 = vmatpush1.bf16.msra.mxu0 0
        %2475 = vmatprep.subr.bf16.mxu0 0
        %2476 = vmatpush1.bf16.msra.mxu0 0
        %2477 = vmatprep.subr.bf16.mxu0 0
        %2478 = vmatpush1.bf16.msra.mxu0 0
        %2479 = vmatprep.subr.bf16.mxu0 0
        %2480 = vmatpush1.bf16.msra.mxu0 0
        %2481 = vmatprep.subr.bf16.mxu0 0
        %2482 = vmatpush1.bf16.msra.mxu0 0
        %2483 = vmatprep.subr.bf16.mxu0 0
        %2484 = vmatpush1.bf16.msra.mxu0 0
        %2485 = vmatprep.mubr.bf16.mxu0 0
        %2486 = vmatmul.mubr.bf16.gmra.mrb[0].mxu0 %v296
        %v2487 = vpop.f32.mrb[0].mxu0
        %v2488 = vadd.f32 %v2375, %v2487
        %v2489 = vpop.f32.mrb[0].mxu0
        %v2490 = vadd.f32 %v2377, %v2489
        %v2491 = vpop.f32.mrb[0].mxu0
        %v2492 = vadd.f32 %v2379, %v2491
        %v2493 = vpop.f32.mrb[0].mxu0
        %v2494 = vadd.f32 %v2381, %v2493
        %2495 = vmatprep.mubr.bf16.mxu0 0
        %2496 = vmatmul.mubr.bf16.gmra.mrb[0].mxu0 %v299
        %v2497 = vpop.f32.mrb[0].mxu0
        %v2498 = vadd.f32 %v2385, %v2497
        %v2499 = vpop.f32.mrb[0].mxu0
        %v2500 = vadd.f32 %v2387, %v2499
        %v2501 = vpop.f32.mrb[0].mxu0
        %v2502 = vadd.f32 %v2389, %v2501
        %v2503 = vpop.f32.mrb[0].mxu0
        %v2504 = vadd.f32 %v2391, %v2503
        %2505 = vmatprep.mubr.bf16.mxu0 0
        %2506 = vmatmul.mubr.bf16.gmra.mrb[0].mxu0 %v302
        %v2507 = vpop.f32.mrb[0].mxu0
        %v2508 = vadd.f32 %v2395, %v2507
        %v2509 = vpop.f32.mrb[0].mxu0
        %v2510 = vadd.f32 %v2397, %v2509
        %v2511 = vpop.f32.mrb[0].mxu0
        %v2512 = vadd.f32 %v2399, %v2511
        %v2513 = vpop.f32.mrb[0].mxu0
        %v2514 = vadd.f32 %v2401, %v2513
        %2515 = vmatprep.mubr.bf16.mxu0 0
        %2516 = vmatmul.mubr.bf16.gmra.mrb[0].mxu0 %v305
        %v2517 = vpop.f32.mrb[0].mxu0
        %v2518 = vadd.f32 %v2405, %v2517
        %v2519 = vpop.f32.mrb[0].mxu0
        %v2520 = vadd.f32 %v2407, %v2519
        %v2521 = vpop.f32.mrb[0].mxu0
        %v2522 = vadd.f32 %v2409, %v2521
        %v2523 = vpop.f32.mrb[0].mxu0
        %v2524 = vadd.f32 %v2411, %v2523
        %2525 = vmatprep.mubr.bf16.mxu0 0
        %2526 = vmatmul.mubr.bf16.gmra.mrb[0].mxu0 %v308
        %v2527 = vpop.f32.mrb[0].mxu0
        %v2528 = vadd.f32 %v2415, %v2527
        %v2529 = vpop.f32.mrb[0].mxu0
        %v2530 = vadd.f32 %v2417, %v2529
        %v2531 = vpop.f32.mrb[0].mxu0
        %v2532 = vadd.f32 %v2419, %v2531
        %v2533 = vpop.f32.mrb[0].mxu0
        %v2534 = vadd.f32 %v2421, %v2533
        %2535 = vmatprep.mubr.bf16.mxu0 0
        %2536 = vmatmul.mubr.bf16.gmra.mrb[0].mxu0 %v311
        %v2537 = vpop.f32.mrb[0].mxu0
        %v2538 = vadd.f32 %v2425, %v2537
        %v2539 = vpop.f32.mrb[0].mxu0
        %v2540 = vadd.f32 %v2427, %v2539
        %v2541 = vpop.f32.mrb[0].mxu0
        %v2542 = vadd.f32 %v2429, %v2541
        %v2543 = vpop.f32.mrb[0].mxu0
        %v2544 = vadd.f32 %v2431, %v2543
        %2545 = vmatprep.mubr.bf16.mxu0 0
        %2546 = vmatmul.mubr.bf16.gmra.mrb[0].mxu0 %v314
        %v2547 = vpop.f32.mrb[0].mxu0
        %v2548 = vadd.f32 %v2435, %v2547
        %v2549 = vpop.f32.mrb[0].mxu0
        %v2550 = vadd.f32 %v2437, %v2549
        %v2551 = vpop.f32.mrb[0].mxu0
        %v2552 = vadd.f32 %v2439, %v2551
        %v2553 = vpop.f32.mrb[0].mxu0
        %v2554 = vadd.f32 %v2441, %v2553
        %2555 = vmatprep.mubr.bf16.mxu0 0
        %2556 = vmatmul.mubr.bf16.gmra.mrb[0].mxu0 %v317
        %v2557 = vpop.f32.mrb[0].mxu0
        %v2558 = vadd.f32 %v2445, %v2557
        %v2559 = vpop.f32.mrb[0].mxu0
        %v2560 = vadd.f32 %v2447, %v2559
        %v2561 = vpop.f32.mrb[0].mxu0
        %v2562 = vadd.f32 %v2449, %v2561
        %v2563 = vpop.f32.mrb[0].mxu0
        %v2564 = vadd.f32 %v2451, %v2563
        %2565 = vdwg.mxu0
        %2566 = vmatprep.subr.bf16.mxu0 0
        %2567 = vmatpush1.bf16.msra.mxu0 %v1238
        %2568 = vmatprep.subr.bf16.mxu0 0
        %2569 = vmatpush1.bf16.msra.mxu0 %v1247
        %2570 = vmatprep.subr.bf16.mxu0 0
        %2571 = vmatpush1.bf16.msra.mxu0 %v1256
        %2572 = vmatprep.subr.bf16.mxu0 0
        %2573 = vmatpush1.bf16.msra.mxu0 %v1265
        %2574 = vmatprep.subr.bf16.mxu0 0
        %2575 = vmatpush1.bf16.msra.mxu0 %v1274
        %2576 = vmatprep.subr.bf16.mxu0 0
        %2577 = vmatpush1.bf16.msra.mxu0 %v1283
        %2578 = vmatprep.subr.bf16.mxu0 0
        %2579 = vmatpush1.bf16.msra.mxu0 %v1292
        %2580 = vmatprep.subr.bf16.mxu0 0
        %2581 = vmatpush1.bf16.msra.mxu0 %v1301
        %2582 = vmatprep.subr.bf16.mxu0 0
        %2583 = vmatpush1.bf16.msra.mxu0 %v1310
        %2584 = vmatprep.subr.bf16.mxu0 0
        %2585 = vmatpush1.bf16.msra.mxu0 %v1319
        %2586 = vmatprep.subr.bf16.mxu0 0
        %2587 = vmatpush1.bf16.msra.mxu0 %v1328
        %2588 = vmatprep.subr.bf16.mxu0 0
        %2589 = vmatpush1.bf16.msra.mxu0 %v1337
        %2590 = vmatprep.subr.bf16.mxu0 0
        %2591 = vmatpush1.bf16.msra.mxu0 %v1346
        %2592 = vmatprep.subr.bf16.mxu0 0
        %2593 = vmatpush1.bf16.msra.mxu0 %v1355
        %2594 = vmatprep.subr.bf16.mxu0 0
        %2595 = vmatpush1.bf16.msra.mxu0 %v1364
        %2596 = vmatprep.subr.bf16.mxu0 0
        %2597 = vmatpush1.bf16.msra.mxu0 %v1373
        %2598 = vmatprep.mubr.bf16.mxu0 %v295
        %2599 = vmatmul.mubr.bf16.gmra.mrb[0].mxu0 %v294
        %v2600 = vpop.f32.mrb[0].mxu0
        %v2601 = vadd.f32 0.0, %v2600
        %v2602 = vpop.f32.mrb[0].mxu0
        %v2603 = vpop.f32.mrb[0].mxu0
        %v2604 = vadd.f32 0.0, %v2603
        %v2605 = vpop.f32.mrb[0].mxu0
        %2606 = vmatprep.mubr.bf16.mxu0 %v298
        %2607 = vmatmul.mubr.bf16.gmra.mrb[0].mxu0 %v297
        %v2608 = vpop.f32.mrb[0].mxu0
        %v2609 = vadd.f32 0.0, %v2608
        %v2610 = vpop.f32.mrb[0].mxu0
        %v2611 = vpop.f32.mrb[0].mxu0
        %v2612 = vadd.f32 0.0, %v2611
        %v2613 = vpop.f32.mrb[0].mxu0
        %2614 = vmatprep.mubr.bf16.mxu0 %v301
        %2615 = vmatmul.mubr.bf16.gmra.mrb[0].mxu0 %v300
        %v2616 = vpop.f32.mrb[0].mxu0
        %v2617 = vadd.f32 0.0, %v2616
        %v2618 = vpop.f32.mrb[0].mxu0
        %v2619 = vpop.f32.mrb[0].mxu0
        %v2620 = vadd.f32 0.0, %v2619
        %v2621 = vpop.f32.mrb[0].mxu0
        %2622 = vmatprep.mubr.bf16.mxu0 %v304
        %2623 = vmatmul.mubr.bf16.gmra.mrb[0].mxu0 %v303
        %v2624 = vpop.f32.mrb[0].mxu0
        %v2625 = vadd.f32 0.0, %v2624
        %v2626 = vpop.f32.mrb[0].mxu0
        %v2627 = vpop.f32.mrb[0].mxu0
        %v2628 = vadd.f32 0.0, %v2627
        %v2629 = vpop.f32.mrb[0].mxu0
        %2630 = vmatprep.mubr.bf16.mxu0 %v307
        %2631 = vmatmul.mubr.bf16.gmra.mrb[0].mxu0 %v306
        %v2632 = vpop.f32.mrb[0].mxu0
        %v2633 = vadd.f32 0.0, %v2632
        %v2634 = vpop.f32.mrb[0].mxu0
        %v2635 = vpop.f32.mrb[0].mxu0
        %v2636 = vadd.f32 0.0, %v2635
        %v2637 = vpop.f32.mrb[0].mxu0
        %2638 = vmatprep.mubr.bf16.mxu0 %v310
        %2639 = vmatmul.mubr.bf16.gmra.mrb[0].mxu0 %v309
        %v2640 = vpop.f32.mrb[0].mxu0
        %v2641 = vadd.f32 0.0, %v2640
        %v2642 = vpop.f32.mrb[0].mxu0
        %v2643 = vpop.f32.mrb[0].mxu0
        %v2644 = vadd.f32 0.0, %v2643
        %v2645 = vpop.f32.mrb[0].mxu0
        %2646 = vmatprep.mubr.bf16.mxu0 %v313
        %2647 = vmatmul.mubr.bf16.gmra.mrb[0].mxu0 %v312
        %v2648 = vpop.f32.mrb[0].mxu0
        %v2649 = vadd.f32 0.0, %v2648
        %v2650 = vpop.f32.mrb[0].mxu0
        %v2651 = vpop.f32.mrb[0].mxu0
        %v2652 = vadd.f32 0.0, %v2651
        %v2653 = vpop.f32.mrb[0].mxu0
        %2654 = vmatprep.mubr.bf16.mxu0 %v316
        %2655 = vmatmul.mubr.bf16.gmra.mrb[0].mxu0 %v315
        %v2656 = vpop.f32.mrb[0].mxu0
        %v2657 = vadd.f32 0.0, %v2656
        %v2658 = vpop.f32.mrb[0].mxu0
        %v2659 = vpop.f32.mrb[0].mxu0
        %v2660 = vadd.f32 0.0, %v2659
        %v2661 = vpop.f32.mrb[0].mxu0
        %2662 = vdwg.mxu0
        %2663 = vmatprep.subr.bf16.mxu0 0
        %2664 = vmatpush1.bf16.msra.mxu0 %v1382
        %2665 = vmatprep.subr.bf16.mxu0 0
        %2666 = vmatpush1.bf16.msra.mxu0 %v1391
        %2667 = vmatprep.subr.bf16.mxu0 0
        %2668 = vmatpush1.bf16.msra.mxu0 %v1400
        %2669 = vmatprep.subr.bf16.mxu0 0
        %2670 = vmatpush1.bf16.msra.mxu0 %v1409
        %2671 = vmatprep.subr.bf16.mxu0 0
        %2672 = vmatpush1.bf16.msra.mxu0 %v1418
        %2673 = vmatprep.subr.bf16.mxu0 0
        %2674 = vmatpush1.bf16.msra.mxu0 %v1427
        %2675 = vmatprep.subr.bf16.mxu0 0
        %2676 = vmatpush1.bf16.msra.mxu0 %v1436
        %2677 = vmatprep.subr.bf16.mxu0 0
        %2678 = vmatpush1.bf16.msra.mxu0 %v1445
        %2679 = vmatprep.subr.bf16.mxu0 0
        %2680 = vmatpush1.bf16.msra.mxu0 0
        %2681 = vmatprep.subr.bf16.mxu0 0
        %2682 = vmatpush1.bf16.msra.mxu0 0
        %2683 = vmatprep.subr.bf16.mxu0 0
        %2684 = vmatpush1.bf16.msra.mxu0 0
        %2685 = vmatprep.subr.bf16.mxu0 0
        %2686 = vmatpush1.bf16.msra.mxu0 0
        %2687 = vmatprep.subr.bf16.mxu0 0
        %2688 = vmatpush1.bf16.msra.mxu0 0
        %2689 = vmatprep.subr.bf16.mxu0 0
        %2690 = vmatpush1.bf16.msra.mxu0 0
        %2691 = vmatprep.subr.bf16.mxu0 0
        %2692 = vmatpush1.bf16.msra.mxu0 0
        %2693 = vmatprep.subr.bf16.mxu0 0
        %2694 = vmatpush1.bf16.msra.mxu0 0
        %2695 = vmatprep.mubr.bf16.mxu0 0
        %2696 = vmatmul.mubr.bf16.gmra.mrb[0].mxu0 %v296
        %v2697 = vpop.f32.mrb[0].mxu0
        %v2698 = vadd.f32 %v2601, %v2697
        %v2699 = vpop.f32.mrb[0].mxu0
        %v2700 = vpop.f32.mrb[0].mxu0
        %v2701 = vadd.f32 %v2604, %v2700
        %v2702 = vpop.f32.mrb[0].mxu0
        %2703 = vmatprep.mubr.bf16.mxu0 0
        %2704 = vmatmul.mubr.bf16.gmra.mrb[0].mxu0 %v299
        %v2705 = vpop.f32.mrb[0].mxu0
        %v2706 = vadd.f32 %v2609, %v2705
        %v2707 = vpop.f32.mrb[0].mxu0
        %v2708 = vpop.f32.mrb[0].mxu0
        %v2709 = vadd.f32 %v2612, %v2708
        %v2710 = vpop.f32.mrb[0].mxu0
        %2711 = vmatprep.mubr.bf16.mxu0 0
        %2712 = vmatmul.mubr.bf16.gmra.mrb[0].mxu0 %v302
        %v2713 = vpop.f32.mrb[0].mxu0
        %v2714 = vadd.f32 %v2617, %v2713
        %v2715 = vpop.f32.mrb[0].mxu0
        %v2716 = vpop.f32.mrb[0].mxu0
        %v2717 = vadd.f32 %v2620, %v2716
        %v2718 = vpop.f32.mrb[0].mxu0
        %2719 = vmatprep.mubr.bf16.mxu0 0
        %2720 = vmatmul.mubr.bf16.gmra.mrb[0].mxu0 %v305
        %v2721 = vpop.f32.mrb[0].mxu0
        %v2722 = vadd.f32 %v2625, %v2721
        %v2723 = vpop.f32.mrb[0].mxu0
        %v2724 = vpop.f32.mrb[0].mxu0
        %v2725 = vadd.f32 %v2628, %v2724
        %v2726 = vpop.f32.mrb[0].mxu0
        %2727 = vmatprep.mubr.bf16.mxu0 0
        %2728 = vmatmul.mubr.bf16.gmra.mrb[0].mxu0 %v308
        %v2729 = vpop.f32.mrb[0].mxu0
        %v2730 = vadd.f32 %v2633, %v2729
        %v2731 = vpop.f32.mrb[0].mxu0
        %v2732 = vpop.f32.mrb[0].mxu0
        %v2733 = vadd.f32 %v2636, %v2732
        %v2734 = vpop.f32.mrb[0].mxu0
        %2735 = vmatprep.mubr.bf16.mxu0 0
        %2736 = vmatmul.mubr.bf16.gmra.mrb[0].mxu0 %v311
        %v2737 = vpop.f32.mrb[0].mxu0
        %v2738 = vadd.f32 %v2641, %v2737
        %v2739 = vpop.f32.mrb[0].mxu0
        %v2740 = vpop.f32.mrb[0].mxu0
        %v2741 = vadd.f32 %v2644, %v2740
        %v2742 = vpop.f32.mrb[0].mxu0
        %2743 = vmatprep.mubr.bf16.mxu0 0
        %2744 = vmatmul.mubr.bf16.gmra.mrb[0].mxu0 %v314
        %v2745 = vpop.f32.mrb[0].mxu0
        %v2746 = vadd.f32 %v2649, %v2745
        %v2747 = vpop.f32.mrb[0].mxu0
        %v2748 = vpop.f32.mrb[0].mxu0
        %v2749 = vadd.f32 %v2652, %v2748
        %v2750 = vpop.f32.mrb[0].mxu0
        %2751 = vmatprep.mubr.bf16.mxu0 0
        %2752 = vmatmul.mubr.bf16.gmra.mrb[0].mxu0 %v317
        %v2753 = vpop.f32.mrb[0].mxu0
        %v2754 = vadd.f32 %v2657, %v2753
        %v2755 = vpop.f32.mrb[0].mxu0
        %v2756 = vpop.f32.mrb[0].mxu0
        %v2757 = vadd.f32 %v2660, %v2756
        %v2758 = vpop.f32.mrb[0].mxu0
        %2759 = vdwg.mxu0
        %v2760 = vpack.c.bf16 %v1814, %v1810
        %v2761 = vpack.c.bf16 %v1816, %v1812
        %v2762 = vpack.c.bf16 %v2040, %v2036
        %v2763 = vpack.c.bf16 %v2042, %v2038
        %v2764 = vpack.c.bf16 %v2266, %v2262
        %v2765 = vpack.c.bf16 %v2268, %v2264
        %v2766 = vpack.c.bf16 %v2492, %v2488
        %v2767 = vpack.c.bf16 %v2494, %v2490
        %v2768 = vpack.c.bf16 %v2701, %v2698
        %v2769 = vpack.c.bf16 %v1824, %v1820
        %v2770 = vpack.c.bf16 %v1826, %v1822
        %v2771 = vpack.c.bf16 %v2050, %v2046
        %v2772 = vpack.c.bf16 %v2052, %v2048
        %v2773 = vpack.c.bf16 %v2276, %v2272
        %v2774 = vpack.c.bf16 %v2278, %v2274
        %v2775 = vpack.c.bf16 %v2502, %v2498
        %v2776 = vpack.c.bf16 %v2504, %v2500
        %v2777 = vpack.c.bf16 %v2709, %v2706
        %v2778 = vpack.c.bf16 %v1834, %v1830
        %v2779 = vpack.c.bf16 %v1836, %v1832
        %v2780 = vpack.c.bf16 %v2060, %v2056
        %v2781 = vpack.c.bf16 %v2062, %v2058
        %v2782 = vpack.c.bf16 %v2286, %v2282
        %v2783 = vpack.c.bf16 %v2288, %v2284
        %v2784 = vpack.c.bf16 %v2512, %v2508
        %v2785 = vpack.c.bf16 %v2514, %v2510
        %v2786 = vpack.c.bf16 %v2717, %v2714
        %v2787 = vpack.c.bf16 %v1844, %v1840
        %v2788 = vpack.c.bf16 %v1846, %v1842
        %v2789 = vpack.c.bf16 %v2070, %v2066
        %v2790 = vpack.c.bf16 %v2072, %v2068
        %v2791 = vpack.c.bf16 %v2296, %v2292
        %v2792 = vpack.c.bf16 %v2298, %v2294
        %v2793 = vpack.c.bf16 %v2522, %v2518
        %v2794 = vpack.c.bf16 %v2524, %v2520
        %v2795 = vpack.c.bf16 %v2725, %v2722
        %v2796 = vpack.c.bf16 %v1854, %v1850
        %v2797 = vpack.c.bf16 %v1856, %v1852
        %v2798 = vpack.c.bf16 %v2080, %v2076
        %v2799 = vpack.c.bf16 %v2082, %v2078
        %v2800 = vpack.c.bf16 %v2306, %v2302
        %v2801 = vpack.c.bf16 %v2308, %v2304
        %v2802 = vpack.c.bf16 %v2532, %v2528
        %v2803 = vpack.c.bf16 %v2534, %v2530
        %v2804 = vpack.c.bf16 %v2733, %v2730
        %v2805 = vpack.c.bf16 %v1864, %v1860
        %v2806 = vpack.c.bf16 %v1866, %v1862
        %v2807 = vpack.c.bf16 %v2090, %v2086
        %v2808 = vpack.c.bf16 %v2092, %v2088
        %v2809 = vpack.c.bf16 %v2316, %v2312
        %v2810 = vpack.c.bf16 %v2318, %v2314
        %v2811 = vpack.c.bf16 %v2542, %v2538
        %v2812 = vpack.c.bf16 %v2544, %v2540
        %v2813 = vpack.c.bf16 %v2741, %v2738
        %v2814 = vpack.c.bf16 %v1874, %v1870
        %v2815 = vpack.c.bf16 %v1876, %v1872
        %v2816 = vpack.c.bf16 %v2100, %v2096
        %v2817 = vpack.c.bf16 %v2102, %v2098
        %v2818 = vpack.c.bf16 %v2326, %v2322
        %v2819 = vpack.c.bf16 %v2328, %v2324
        %v2820 = vpack.c.bf16 %v2552, %v2548
        %v2821 = vpack.c.bf16 %v2554, %v2550
        %v2822 = vpack.c.bf16 %v2749, %v2746
        %v2823 = vpack.c.bf16 %v1884, %v1880
        %v2824 = vpack.c.bf16 %v1886, %v1882
        %v2825 = vpack.c.bf16 %v2110, %v2106
        %v2826 = vpack.c.bf16 %v2112, %v2108
        %v2827 = vpack.c.bf16 %v2336, %v2332
        %v2828 = vpack.c.bf16 %v2338, %v2334
        %v2829 = vpack.c.bf16 %v2562, %v2558
        %v2830 = vpack.c.bf16 %v2564, %v2560
        %v2831 = vpack.c.bf16 %v2757, %v2754
        %2832 = vst [vmem:[#allocation2] sm:$0xff] %v2760
        %2833 = vst [vmem:[#allocation2 + $0x8] sm:$0xff] %v2761
        %2834 = vst [vmem:[#allocation2 + $0x10] sm:$0xff] %v2762
        %2835 = vst [vmem:[#allocation2 + $0x18] sm:$0xff] %v2763
        %2836 = vst [vmem:[#allocation2 + $0x20] sm:$0xff] %v2764
        %2837 = vst [vmem:[#allocation2 + $0x28] sm:$0xff] %v2765
        %2838 = vst [vmem:[#allocation2 + $0x30] sm:$0xff] %v2766
        %2839 = vst [vmem:[#allocation2 + $0x38] sm:$0xff] %v2767
        %2840 = vst [vmem:[#allocation2 + $0x40] sm:$0xff] %v2768
        %2841 = vst [vmem:[#allocation2 + $0x48] sm:$0xff] %v2769
        %2842 = vst [vmem:[#allocation2 + $0x50] sm:$0xff] %v2770
        %2843 = vst [vmem:[#allocation2 + $0x58] sm:$0xff] %v2771
        %2844 = vst [vmem:[#allocation2 + $0x60] sm:$0xff] %v2772
        %2845 = vst [vmem:[#allocation2 + $0x68] sm:$0xff] %v2773
        %2846 = vst [vmem:[#allocation2 + $0x70] sm:$0xff] %v2774
        %2847 = vst [vmem:[#allocation2 + $0x78] sm:$0xff] %v2775
        %2848 = vst [vmem:[#allocation2 + $0x80] sm:$0xff] %v2776
        %2849 = vst [vmem:[#allocation2 + $0x88] sm:$0xff] %v2777
        %2850 = vst [vmem:[#allocation2 + $0x90] sm:$0xff] %v2778
        %2851 = vst [vmem:[#allocation2 + $0x98] sm:$0xff] %v2779
        %2852 = vst [vmem:[#allocation2 + $0xa0] sm:$0xff] %v2780
        %2853 = vst [vmem:[#allocation2 + $0xa8] sm:$0xff] %v2781
        %2854 = vst [vmem:[#allocation2 + $0xb0] sm:$0xff] %v2782
        %2855 = vst [vmem:[#allocation2 + $0xb8] sm:$0xff] %v2783
        %2856 = vst [vmem:[#allocation2 + $0xc0] sm:$0xff] %v2784
        %2857 = vst [vmem:[#allocation2 + $0xc8] sm:$0xff] %v2785
        %2858 = vst [vmem:[#allocation2 + $0xd0] sm:$0xff] %v2786
        %2859 = vst [vmem:[#allocation2 + $0xd8] sm:$0xff] %v2787
        %2860 = vst [vmem:[#allocation2 + $0xe0] sm:$0xff] %v2788
        %2861 = vst [vmem:[#allocation2 + $0xe8] sm:$0xff] %v2789
        %2862 = vst [vmem:[#allocation2 + $0xf0] sm:$0xff] %v2790
        %2863 = vst [vmem:[#allocation2 + $0xf8] sm:$0xff] %v2791
        %2864 = vst [vmem:[#allocation2 + $0x100] sm:$0xff] %v2792
        %2865 = vst [vmem:[#allocation2 + $0x108] sm:$0xff] %v2793
        %2866 = vst [vmem:[#allocation2 + $0x110] sm:$0xff] %v2794
        %2867 = vst [vmem:[#allocation2 + $0x118] sm:$0xff] %v2795
        %2868 = vst [vmem:[#allocation2 + $0x120] sm:$0xff] %v2796
        %2869 = vst [vmem:[#allocation2 + $0x128] sm:$0xff] %v2797
        %2870 = vst [vmem:[#allocation2 + $0x130] sm:$0xff] %v2798
        %2871 = vst [vmem:[#allocation2 + $0x138] sm:$0xff] %v2799
        %2872 = vst [vmem:[#allocation2 + $0x140] sm:$0xff] %v2800
        %2873 = vst [vmem:[#allocation2 + $0x148] sm:$0xff] %v2801
        %2874 = vst [vmem:[#allocation2 + $0x150] sm:$0xff] %v2802
        %2875 = vst [vmem:[#allocation2 + $0x158] sm:$0xff] %v2803
        %2876 = vst [vmem:[#allocation2 + $0x160] sm:$0xff] %v2804
        %2877 = vst [vmem:[#allocation2 + $0x168] sm:$0xff] %v2805
        %2878 = vst [vmem:[#allocation2 + $0x170] sm:$0xff] %v2806
        %2879 = vst [vmem:[#allocation2 + $0x178] sm:$0xff] %v2807
        %2880 = vst [vmem:[#allocation2 + $0x180] sm:$0xff] %v2808
        %2881 = vst [vmem:[#allocation2 + $0x188] sm:$0xff] %v2809
        %2882 = vst [vmem:[#allocation2 + $0x190] sm:$0xff] %v2810
        %2883 = vst [vmem:[#allocation2 + $0x198] sm:$0xff] %v2811
        %2884 = vst [vmem:[#allocation2 + $0x1a0] sm:$0xff] %v2812
        %2885 = vst [vmem:[#allocation2 + $0x1a8] sm:$0xff] %v2813
        %2886 = vst [vmem:[#allocation2 + $0x1b0] sm:$0xff] %v2814
        %2887 = vst [vmem:[#allocation2 + $0x1b8] sm:$0xff] %v2815
        %2888 = vst [vmem:[#allocation2 + $0x1c0] sm:$0xff] %v2816
        %2889 = vst [vmem:[#allocation2 + $0x1c8] sm:$0xff] %v2817
        %2890 = vst [vmem:[#allocation2 + $0x1d0] sm:$0xff] %v2818
        %2891 = vst [vmem:[#allocation2 + $0x1d8] sm:$0xff] %v2819
        %2892 = vst [vmem:[#allocation2 + $0x1e0] sm:$0xff] %v2820
        %2893 = vst [vmem:[#allocation2 + $0x1e8] sm:$0xff] %v2821
        %2894 = vst [vmem:[#allocation2 + $0x1f0] sm:$0xff] %v2822
        %2895 = vst [vmem:[#allocation2 + $0x1f8] sm:$0xff] %v2823
        %2896 = vst [vmem:[#allocation2 + $0x200] sm:$0xff] %v2824
        %2897 = vst [vmem:[#allocation2 + $0x208] sm:$0xff] %v2825
        %2898 = vst [vmem:[#allocation2 + $0x210] sm:$0xff] %v2826
        %2899 = vst [vmem:[#allocation2 + $0x218] sm:$0xff] %v2827
        %2900 = vst [vmem:[#allocation2 + $0x220] sm:$0xff] %v2828
        %2901 = vst [vmem:[#allocation2 + $0x228] sm:$0xff] %v2829
        %2902 = vst [vmem:[#allocation2 + $0x230] sm:$0xff] %v2830
        %2903 = vst [vmem:[#allocation2 + $0x238] sm:$0xff] %v2831
        %v2904 = vlaneseq
        %v2905 = vshrl.u32 %v2904, 7
        %v2906 = vadd.s32 %v2905, 8
        %v2907 = vadd.s32 %v2905, 16
        %v2908 = vadd.s32 %v2905, 24
        %v2909 = vadd.s32 %v2905, 32
        %v2910 = vadd.s32 %v2905, 40
        %v2911 = vadd.s32 %v2905, 48
        %v2912 = vadd.s32 %v2905, 56
        %v2913 = vadd.s32 %v2905, 64
        %v2914 = vadd.s32 %v2905, 72
        %v2915 = vadd.s32 %v2905, 80
        %v2916 = vadd.s32 %v2905, 88
        %v2917 = vadd.s32 %v2905, 96
        %v2918 = vadd.s32 %v2905, 104
        %v2919 = vadd.s32 %v2905, 112
        %v2920 = vadd.s32 %v2905, 120
        %v2921 = vlaneseq
        %v2922 = vand.u32 %v2921, 127
        %vm2923 = vcmp.le.s32.totalorder %v2922, %v2905
        %vm2924 = vcmp.le.s32.totalorder %v2922, %v2906
        %vm2925 = vcmp.le.s32.totalorder %v2922, %v2907
        %vm2926 = vcmp.le.s32.totalorder %v2922, %v2908
        %vm2927 = vcmp.le.s32.totalorder %v2922, %v2909
        %vm2928 = vcmp.le.s32.totalorder %v2922, %v2910
        %vm2929 = vcmp.le.s32.totalorder %v2922, %v2911
        %vm2930 = vcmp.le.s32.totalorder %v2922, %v2912
        %vm2931 = vcmp.le.s32.totalorder %v2922, %v2913
        %vm2932 = vcmp.le.s32.totalorder %v2922, %v2914
        %vm2933 = vcmp.le.s32.totalorder %v2922, %v2915
        %vm2934 = vcmp.le.s32.totalorder %v2922, %v2916
        %vm2935 = vcmp.le.s32.totalorder %v2922, %v2917
        %vm2936 = vcmp.le.s32.totalorder %v2922, %v2918
        %vm2937 = vcmp.le.s32.totalorder %v2922, %v2919
        %vm2938 = vcmp.le.s32.totalorder %v2922, %v2920
        %v2939 = vld [vmem:[#allocation2] sm:$0xff]
        %v2940 = vld [vmem:[#allocation2 + $0x48] sm:$0xff]
        %v2941 = vld [vmem:[#allocation2 + $0x90] sm:$0xff]
        %v2942 = vld [vmem:[#allocation2 + $0xd8] sm:$0xff]
        %v2943 = vld [vmem:[#allocation2 + $0x120] sm:$0xff]
        %v2944 = vld [vmem:[#allocation2 + $0x168] sm:$0xff]
        %v2945 = vld [vmem:[#allocation2 + $0x1b0] sm:$0xff]
        %v2946 = vld [vmem:[#allocation2 + $0x1f8] sm:$0xff]
        %v2947 = vld [vmem:[#allocation2 + $0x18] sm:$0xff]
        %v2948 = vld [vmem:[#allocation2 + $0x60] sm:$0xff]
        %v2949 = vld [vmem:[#allocation2 + $0xa8] sm:$0xff]
        %v2950 = vld [vmem:[#allocation2 + $0xf0] sm:$0xff]
        %v2951 = vld [vmem:[#allocation2 + $0x138] sm:$0xff]
        %v2952 = vld [vmem:[#allocation2 + $0x180] sm:$0xff]
        %v2953 = vld [vmem:[#allocation2 + $0x1c8] sm:$0xff]
        %v2954 = vld [vmem:[#allocation2 + $0x210] sm:$0xff]
        %v2955 = vld [vmem:[#allocation2 + $0x30] sm:$0xff]
        %v2956 = vld [vmem:[#allocation2 + $0x78] sm:$0xff]
        %v2957 = vld [vmem:[#allocation2 + $0xc0] sm:$0xff]
        %v2958 = vld [vmem:[#allocation2 + $0x108] sm:$0xff]
        %v2959 = vld [vmem:[#allocation2 + $0x150] sm:$0xff]
        %v2960 = vld [vmem:[#allocation2 + $0x198] sm:$0xff]
        %v2961 = vld [vmem:[#allocation2 + $0x1e0] sm:$0xff]
        %v2962 = vld [vmem:[#allocation2 + $0x228] sm:$0xff]
        %vm2963 = vcmask 523264
        %v2965 = vsel %vm2963, %v2939, 0
        %v2968 = vsel %vm2963, %v2940, 0
        %v2971 = vsel %vm2963, %v2941, 0
        %v2974 = vsel %vm2963, %v2942, 0
        %v2977 = vsel %vm2963, %v2943, 0
        %v2980 = vsel %vm2963, %v2944, 0
        %v2983 = vsel %vm2963, %v2945, 0
        %v2986 = vsel %vm2963, %v2946, 0
        %v2989 = vsel %vm2963, %v2947, 0
        %v2992 = vsel %vm2963, %v2948, 0
        %v2995 = vsel %vm2963, %v2949, 0
        %v2998 = vsel %vm2963, %v2950, 0
        %v3001 = vsel %vm2963, %v2951, 0
        %v3004 = vsel %vm2963, %v2952, 0
        %v3007 = vsel %vm2963, %v2953, 0
        %v3010 = vsel %vm2963, %v2954, 0
        %3012 = vmatprep.subr.bf16.mxu0 0
        %3013 = vmatpush1.bf16.xpose.msra.mxu0 %v2989
        %3014 = vmatprep.subr.bf16.mxu0 0
        %3015 = vmatpush1.bf16.xpose.msra.mxu0 %v2992
        %3016 = vmatprep.subr.bf16.mxu0 0
        %3017 = vmatpush1.bf16.xpose.msra.mxu0 %v2995
        %3018 = vmatprep.subr.bf16.mxu0 0
        %3019 = vmatpush1.bf16.xpose.msra.mxu0 %v2998
        %3020 = vmatprep.subr.bf16.mxu0 0
        %3021 = vmatpush1.bf16.xpose.msra.mxu0 %v3001
        %3022 = vmatprep.subr.bf16.mxu0 0
        %3023 = vmatpush1.bf16.xpose.msra.mxu0 %v3004
        %3024 = vmatprep.subr.bf16.mxu0 0
        %3025 = vmatpush1.bf16.xpose.msra.mxu0 %v3007
        %3026 = vmatprep.subr.bf16.mxu0 0
        %3027 = vmatpush1.bf16.xpose.msra.mxu0 %v3010
        %3028 = vmatprep.subr.bf16.mxu0 0
        %3029 = vmatpush1.bf16.xpose.msra.mxu0 0
        %3030 = vmatprep.subr.bf16.mxu0 0
        %3031 = vmatpush1.bf16.xpose.msra.mxu0 0
        %3032 = vmatprep.subr.bf16.mxu0 0
        %3033 = vmatpush1.bf16.xpose.msra.mxu0 0
        %3034 = vmatprep.subr.bf16.mxu0 0
        %3035 = vmatpush1.bf16.xpose.msra.mxu0 0
        %3036 = vmatprep.subr.bf16.mxu0 0
        %3037 = vmatpush1.bf16.xpose.msra.mxu0 0
        %3038 = vmatprep.subr.bf16.mxu0 0
        %3039 = vmatpush1.bf16.xpose.msra.mxu0 0
        %3040 = vmatprep.subr.bf16.mxu0 0
        %3041 = vmatpush1.bf16.xpose.msra.mxu0 0
        %3042 = vmatprep.subr.bf16.mxu0 0
        %3043 = vmatpush1.bf16.xpose.msra.mxu0 0
        %3044 = vmatprep.mubr.bf16.mxu0 0
        %3045 = vmatmul.mubr.bf16.gmra.mrb[0].mxu0 %v2965
        %v3046 = vpop.f32.mrb[0].mxu0
        %v3047 = vadd.f32 0.0, %v3046
        %v3048 = vpop.f32.mrb[0].mxu0
        %v3049 = vpop.f32.mrb[0].mxu0
        %v3050 = vadd.f32 0.0, %v3049
        %v3051 = vpop.f32.mrb[0].mxu0
        %3052 = vmatprep.mubr.bf16.mxu0 0
        %3053 = vmatmul.mubr.bf16.gmra.mrb[0].mxu0 %v2968
        %v3054 = vpop.f32.mrb[0].mxu0
        %v3055 = vadd.f32 0.0, %v3054
        %v3056 = vpop.f32.mrb[0].mxu0
        %v3057 = vpop.f32.mrb[0].mxu0
        %v3058 = vadd.f32 0.0, %v3057
        %v3059 = vpop.f32.mrb[0].mxu0
        %3060 = vmatprep.mubr.bf16.mxu0 0
        %3061 = vmatmul.mubr.bf16.gmra.mrb[0].mxu0 %v2971
        %v3062 = vpop.f32.mrb[0].mxu0
        %v3063 = vadd.f32 0.0, %v3062
        %v3064 = vpop.f32.mrb[0].mxu0
        %v3065 = vpop.f32.mrb[0].mxu0
        %v3066 = vadd.f32 0.0, %v3065
        %v3067 = vpop.f32.mrb[0].mxu0
        %3068 = vmatprep.mubr.bf16.mxu0 0
        %3069 = vmatmul.mubr.bf16.gmra.mrb[0].mxu0 %v2974
        %v3070 = vpop.f32.mrb[0].mxu0
        %v3071 = vadd.f32 0.0, %v3070
        %v3072 = vpop.f32.mrb[0].mxu0
        %v3073 = vpop.f32.mrb[0].mxu0
        %v3074 = vadd.f32 0.0, %v3073
        %v3075 = vpop.f32.mrb[0].mxu0
        %3076 = vmatprep.mubr.bf16.mxu0 0
        %3077 = vmatmul.mubr.bf16.gmra.mrb[0].mxu0 %v2977
        %v3078 = vpop.f32.mrb[0].mxu0
        %v3079 = vadd.f32 0.0, %v3078
        %v3080 = vpop.f32.mrb[0].mxu0
        %v3081 = vpop.f32.mrb[0].mxu0
        %v3082 = vadd.f32 0.0, %v3081
        %v3083 = vpop.f32.mrb[0].mxu0
        %3084 = vmatprep.mubr.bf16.mxu0 0
        %3085 = vmatmul.mubr.bf16.gmra.mrb[0].mxu0 %v2980
        %v3086 = vpop.f32.mrb[0].mxu0
        %v3087 = vadd.f32 0.0, %v3086
        %v3088 = vpop.f32.mrb[0].mxu0
        %v3089 = vpop.f32.mrb[0].mxu0
        %v3090 = vadd.f32 0.0, %v3089
        %v3091 = vpop.f32.mrb[0].mxu0
        %3092 = vmatprep.mubr.bf16.mxu0 0
        %3093 = vmatmul.mubr.bf16.gmra.mrb[0].mxu0 %v2983
        %v3094 = vpop.f32.mrb[0].mxu0
        %v3095 = vadd.f32 0.0, %v3094
        %v3096 = vpop.f32.mrb[0].mxu0
        %v3097 = vpop.f32.mrb[0].mxu0
        %v3098 = vadd.f32 0.0, %v3097
        %v3099 = vpop.f32.mrb[0].mxu0
        %3100 = vmatprep.mubr.bf16.mxu0 0
        %3101 = vmatmul.mubr.bf16.gmra.mrb[0].mxu0 %v2986
        %v3102 = vpop.f32.mrb[0].mxu0
        %v3103 = vadd.f32 0.0, %v3102
        %v3104 = vpop.f32.mrb[0].mxu0
        %v3105 = vpop.f32.mrb[0].mxu0
        %v3106 = vadd.f32 0.0, %v3105
        %v3107 = vpop.f32.mrb[0].mxu0
        %3108 = vdwg.mxu0
        %v3109 = vsel %vm2923, %v3047, -inf
        %v3110 = vsel %vm2924, %v3050, -inf
        %v3111 = vsel %vm2925, %v3055, -inf
        %v3112 = vsel %vm2926, %v3058, -inf
        %v3113 = vsel %vm2927, %v3063, -inf
        %v3114 = vsel %vm2928, %v3066, -inf
        %v3115 = vsel %vm2929, %v3071, -inf
        %v3116 = vsel %vm2930, %v3074, -inf
        %v3117 = vsel %vm2931, %v3079, -inf
        %v3118 = vsel %vm2932, %v3082, -inf
        %v3119 = vsel %vm2933, %v3087, -inf
        %v3120 = vsel %vm2934, %v3090, -inf
        %v3121 = vsel %vm2935, %v3095, -inf
        %v3122 = vsel %vm2936, %v3098, -inf
        %v3123 = vsel %vm2937, %v3103, -inf
        %v3124 = vsel %vm2938, %v3106, -inf
        %3125 = vmax.xlane.f32.xlu0 %v3109
        %v3126 = vpop.xlane.xlu0 %3125
        %3127 = vmax.xlane.f32.xlu0 %v3110
        %v3128 = vpop.xlane.xlu0 %3127
        %3129 = vmax.xlane.f32.xlu0 %v3111
        %v3130 = vpop.xlane.xlu0 %3129
        %3131 = vmax.xlane.f32.xlu0 %v3112
        %v3132 = vpop.xlane.xlu0 %3131
        %3133 = vmax.xlane.f32.xlu0 %v3113
        %v3134 = vpop.xlane.xlu0 %3133
        %3135 = vmax.xlane.f32.xlu0 %v3114
        %v3136 = vpop.xlane.xlu0 %3135
        %3137 = vmax.xlane.f32.xlu0 %v3115
        %v3138 = vpop.xlane.xlu0 %3137
        %3139 = vmax.xlane.f32.xlu0 %v3116
        %v3140 = vpop.xlane.xlu0 %3139
        %3141 = vmax.xlane.f32.xlu0 %v3117
        %v3142 = vpop.xlane.xlu0 %3141
        %3143 = vmax.xlane.f32.xlu0 %v3118
        %v3144 = vpop.xlane.xlu0 %3143
        %3145 = vmax.xlane.f32.xlu0 %v3119
        %v3146 = vpop.xlane.xlu0 %3145
        %3147 = vmax.xlane.f32.xlu0 %v3120
        %v3148 = vpop.xlane.xlu0 %3147
        %3149 = vmax.xlane.f32.xlu0 %v3121
        %v3150 = vpop.xlane.xlu0 %3149
        %3151 = vmax.xlane.f32.xlu0 %v3122
        %v3152 = vpop.xlane.xlu0 %3151
        %3153 = vmax.xlane.f32.xlu0 %v3123
        %v3154 = vpop.xlane.xlu0 %3153
        %3155 = vmax.xlane.f32.xlu0 %v3124
        %v3156 = vpop.xlane.xlu0 %3155
        %v3157 = vsub.f32 %v3109, %v3126
        %v3158 = vsub.f32 %v3110, %v3128
        %v3159 = vsub.f32 %v3111, %v3130
        %v3160 = vsub.f32 %v3112, %v3132
        %v3161 = vsub.f32 %v3113, %v3134
        %v3162 = vsub.f32 %v3114, %v3136
        %v3163 = vsub.f32 %v3115, %v3138
        %v3164 = vsub.f32 %v3116, %v3140
        %v3165 = vsub.f32 %v3117, %v3142
        %v3166 = vsub.f32 %v3118, %v3144
        %v3167 = vsub.f32 %v3119, %v3146
        %v3168 = vsub.f32 %v3120, %v3148
        %v3169 = vsub.f32 %v3121, %v3150
        %v3170 = vsub.f32 %v3122, %v3152
        %v3171 = vsub.f32 %v3123, %v3154
        %v3172 = vsub.f32 %v3124, %v3156
        %v3173 = vmul.f32 %v3157, 1.442695
        %v3174 = vpow.pop %v3173
        %v3175 = vmul.f32 %v3158, 1.442695
        %v3176 = vpow.pop %v3175
        %v3177 = vmul.f32 %v3159, 1.442695
        %v3178 = vpow.pop %v3177
        %v3179 = vmul.f32 %v3160, 1.442695
        %v3180 = vpow.pop %v3179
        %v3181 = vmul.f32 %v3161, 1.442695
        %v3182 = vpow.pop %v3181
        %v3183 = vmul.f32 %v3162, 1.442695
        %v3184 = vpow.pop %v3183
        %v3185 = vmul.f32 %v3163, 1.442695
        %v3186 = vpow.pop %v3185
        %v3187 = vmul.f32 %v3164, 1.442695
        %v3188 = vpow.pop %v3187
        %v3189 = vmul.f32 %v3165, 1.442695
        %v3190 = vpow.pop %v3189
        %v3191 = vmul.f32 %v3166, 1.442695
        %v3192 = vpow.pop %v3191
        %v3193 = vmul.f32 %v3167, 1.442695
        %v3194 = vpow.pop %v3193
        %v3195 = vmul.f32 %v3168, 1.442695
        %v3196 = vpow.pop %v3195
        %v3197 = vmul.f32 %v3169, 1.442695
        %v3198 = vpow.pop %v3197
        %v3199 = vmul.f32 %v3170, 1.442695
        %v3200 = vpow.pop %v3199
        %v3201 = vmul.f32 %v3171, 1.442695
        %v3202 = vpow.pop %v3201
        %v3203 = vmul.f32 %v3172, 1.442695
        %v3204 = vpow.pop %v3203
        %3205 = vadd.xlane.f32.xlu0 %v3174
        %v3206 = vpop.xlane.xlu0 %3205
        %3207 = vadd.xlane.f32.xlu0 %v3176
        %v3208 = vpop.xlane.xlu0 %3207
        %3209 = vadd.xlane.f32.xlu0 %v3178
        %v3210 = vpop.xlane.xlu0 %3209
        %3211 = vadd.xlane.f32.xlu0 %v3180
        %v3212 = vpop.xlane.xlu0 %3211
        %3213 = vadd.xlane.f32.xlu0 %v3182
        %v3214 = vpop.xlane.xlu0 %3213
        %3215 = vadd.xlane.f32.xlu0 %v3184
        %v3216 = vpop.xlane.xlu0 %3215
        %3217 = vadd.xlane.f32.xlu0 %v3186
        %v3218 = vpop.xlane.xlu0 %3217
        %3219 = vadd.xlane.f32.xlu0 %v3188
        %v3220 = vpop.xlane.xlu0 %3219
        %3221 = vadd.xlane.f32.xlu0 %v3190
        %v3222 = vpop.xlane.xlu0 %3221
        %3223 = vadd.xlane.f32.xlu0 %v3192
        %v3224 = vpop.xlane.xlu0 %3223
        %3225 = vadd.xlane.f32.xlu0 %v3194
        %v3226 = vpop.xlane.xlu0 %3225
        %3227 = vadd.xlane.f32.xlu0 %v3196
        %v3228 = vpop.xlane.xlu0 %3227
        %3229 = vadd.xlane.f32.xlu0 %v3198
        %v3230 = vpop.xlane.xlu0 %3229
        %3231 = vadd.xlane.f32.xlu0 %v3200
        %v3232 = vpop.xlane.xlu0 %3231
        %3233 = vadd.xlane.f32.xlu0 %v3202
        %v3234 = vpop.xlane.xlu0 %3233
        %3235 = vadd.xlane.f32.xlu0 %v3204
        %v3236 = vpop.xlane.xlu0 %3235
        %v3237 = vrcp.pop %v3206
        %v3238 = vrcp.pop %v3208
        %v3239 = vrcp.pop %v3210
        %v3240 = vrcp.pop %v3212
        %v3241 = vrcp.pop %v3214
        %v3242 = vrcp.pop %v3216
        %v3243 = vrcp.pop %v3218
        %v3244 = vrcp.pop %v3220
        %v3245 = vrcp.pop %v3222
        %v3246 = vrcp.pop %v3224
        %v3247 = vrcp.pop %v3226
        %v3248 = vrcp.pop %v3228
        %v3249 = vrcp.pop %v3230
        %v3250 = vrcp.pop %v3232
        %v3251 = vrcp.pop %v3234
        %v3252 = vrcp.pop %v3236
        %v3253 = vmul.f32 %v3174, %v3237
        %v3254 = vmul.f32 %v3176, %v3238
        %v3255 = vmul.f32 %v3178, %v3239
        %v3256 = vmul.f32 %v3180, %v3240
        %v3257 = vmul.f32 %v3182, %v3241
        %v3258 = vmul.f32 %v3184, %v3242
        %v3259 = vmul.f32 %v3186, %v3243
        %v3260 = vmul.f32 %v3188, %v3244
        %v3261 = vmul.f32 %v3190, %v3245
        %v3262 = vmul.f32 %v3192, %v3246
        %v3263 = vmul.f32 %v3194, %v3247
        %v3264 = vmul.f32 %v3196, %v3248
        %v3265 = vmul.f32 %v3198, %v3249
        %v3266 = vmul.f32 %v3200, %v3250
        %v3267 = vmul.f32 %v3202, %v3251
        %v3268 = vmul.f32 %v3204, %v3252
        %v3269 = vpack.c.bf16 %v3254, %v3253
        %v3270 = vpack.c.bf16 %v3256, %v3255
        %v3271 = vpack.c.bf16 %v3258, %v3257
        %v3272 = vpack.c.bf16 %v3260, %v3259
        %v3273 = vpack.c.bf16 %v3262, %v3261
        %v3274 = vpack.c.bf16 %v3264, %v3263
        %v3275 = vpack.c.bf16 %v3266, %v3265
        %v3276 = vpack.c.bf16 %v3268, %v3267
        %3277 = vmatprep.subr.bf16.mxu0 0
        %3278 = vmatpush1.bf16.msra.mxu0 %v2955
        %3279 = vmatprep.subr.bf16.mxu0 0
        %3280 = vmatpush1.bf16.msra.mxu0 %v2956
        %3281 = vmatprep.subr.bf16.mxu0 0
        %3282 = vmatpush1.bf16.msra.mxu0 %v2957
        %3283 = vmatprep.subr.bf16.mxu0 0
        %3284 = vmatpush1.bf16.msra.mxu0 %v2958
        %3285 = vmatprep.subr.bf16.mxu0 0
        %3286 = vmatpush1.bf16.msra.mxu0 %v2959
        %3287 = vmatprep.subr.bf16.mxu0 0
        %3288 = vmatpush1.bf16.msra.mxu0 %v2960
        %3289 = vmatprep.subr.bf16.mxu0 0
        %3290 = vmatpush1.bf16.msra.mxu0 %v2961
        %3291 = vmatprep.subr.bf16.mxu0 0
        %3292 = vmatpush1.bf16.msra.mxu0 %v2962
        %3293 = vmatprep.subr.bf16.mxu0 0
        %3294 = vmatpush1.bf16.msra.mxu0 0
        %3295 = vmatprep.subr.bf16.mxu0 0
        %3296 = vmatpush1.bf16.msra.mxu0 0
        %3297 = vmatprep.subr.bf16.mxu0 0
        %3298 = vmatpush1.bf16.msra.mxu0 0
        %3299 = vmatprep.subr.bf16.mxu0 0
        %3300 = vmatpush1.bf16.msra.mxu0 0
        %3301 = vmatprep.subr.bf16.mxu0 0
        %3302 = vmatpush1.bf16.msra.mxu0 0
        %3303 = vmatprep.subr.bf16.mxu0 0
        %3304 = vmatpush1.bf16.msra.mxu0 0
        %3305 = vmatprep.subr.bf16.mxu0 0
        %3306 = vmatpush1.bf16.msra.mxu0 0
        %3307 = vmatprep.subr.bf16.mxu0 0
        %3308 = vmatpush1.bf16.msra.mxu0 0
        %3309 = vmatprep.mubr.bf16.mxu0 0
        %3310 = vmatmul.mubr.bf16.gmra.mrb[0].mxu0 %v3269
        %v3311 = vpop.f32.mrb[0].mxu0
        %v3312 = vadd.f32 0.0, %v3311
        %v3313 = vpop.f32.mrb[0].mxu0
        %v3314 = vpop.f32.mrb[0].mxu0
        %v3315 = vadd.f32 0.0, %v3314
        %v3316 = vpop.f32.mrb[0].mxu0
        %3317 = vmatprep.mubr.bf16.mxu0 0
        %3318 = vmatmul.mubr.bf16.gmra.mrb[0].mxu0 %v3270
        %v3319 = vpop.f32.mrb[0].mxu0
        %v3320 = vadd.f32 0.0, %v3319
        %v3321 = vpop.f32.mrb[0].mxu0
        %v3322 = vpop.f32.mrb[0].mxu0
        %v3323 = vadd.f32 0.0, %v3322
        %v3324 = vpop.f32.mrb[0].mxu0
        %3325 = vmatprep.mubr.bf16.mxu0 0
        %3326 = vmatmul.mubr.bf16.gmra.mrb[0].mxu0 %v3271
        %v3327 = vpop.f32.mrb[0].mxu0
        %v3328 = vadd.f32 0.0, %v3327
        %v3329 = vpop.f32.mrb[0].mxu0
        %v3330 = vpop.f32.mrb[0].mxu0
        %v3331 = vadd.f32 0.0, %v3330
        %v3332 = vpop.f32.mrb[0].mxu0
        %3333 = vmatprep.mubr.bf16.mxu0 0
        %3334 = vmatmul.mubr.bf16.gmra.mrb[0].mxu0 %v3272
        %v3335 = vpop.f32.mrb[0].mxu0
        %v3336 = vadd.f32 0.0, %v3335
        %v3337 = vpop.f32.mrb[0].mxu0
        %v3338 = vpop.f32.mrb[0].mxu0
        %v3339 = vadd.f32 0.0, %v3338
        %v3340 = vpop.f32.mrb[0].mxu0
        %3341 = vmatprep.mubr.bf16.mxu0 0
        %3342 = vmatmul.mubr.bf16.gmra.mrb[0].mxu0 %v3273
        %v3343 = vpop.f32.mrb[0].mxu0
        %v3344 = vadd.f32 0.0, %v3343
        %v3345 = vpop.f32.mrb[0].mxu0
        %v3346 = vpop.f32.mrb[0].mxu0
        %v3347 = vadd.f32 0.0, %v3346
        %v3348 = vpop.f32.mrb[0].mxu0
        %3349 = vmatprep.mubr.bf16.mxu0 0
        %3350 = vmatmul.mubr.bf16.gmra.mrb[0].mxu0 %v3274
        %v3351 = vpop.f32.mrb[0].mxu0
        %v3352 = vadd.f32 0.0, %v3351
        %v3353 = vpop.f32.mrb[0].mxu0
        %v3354 = vpop.f32.mrb[0].mxu0
        %v3355 = vadd.f32 0.0, %v3354
        %v3356 = vpop.f32.mrb[0].mxu0
        %3357 = vmatprep.mubr.bf16.mxu0 0
        %3358 = vmatmul.mubr.bf16.gmra.mrb[0].mxu0 %v3275
        %v3359 = vpop.f32.mrb[0].mxu0
        %v3360 = vadd.f32 0.0, %v3359
        %v3361 = vpop.f32.mrb[0].mxu0
        %v3362 = vpop.f32.mrb[0].mxu0
        %v3363 = vadd.f32 0.0, %v3362
        %v3364 = vpop.f32.mrb[0].mxu0
        %3365 = vmatprep.mubr.bf16.mxu0 0
        %3366 = vmatmul.mubr.bf16.gmra.mrb[0].mxu0 %v3276
        %v3367 = vpop.f32.mrb[0].mxu0
        %v3368 = vadd.f32 0.0, %v3367
        %v3369 = vpop.f32.mrb[0].mxu0
        %v3370 = vpop.f32.mrb[0].mxu0
        %v3371 = vadd.f32 0.0, %v3370
        %v3372 = vpop.f32.mrb[0].mxu0
        %3373 = vdwg.mxu0
        %v3374 = vpack.c.bf16 %v3315, %v3312
        %v3375 = vpack.c.bf16 %v3323, %v3320
        %v3376 = vpack.c.bf16 %v3331, %v3328
        %v3377 = vpack.c.bf16 %v3339, %v3336
        %v3378 = vpack.c.bf16 %v3347, %v3344
        %v3379 = vpack.c.bf16 %v3355, %v3352
        %v3380 = vpack.c.bf16 %v3363, %v3360
        %v3381 = vpack.c.bf16 %v3371, %v3368
        %3382 = vst.msk [vmem:[#allocation3] sm:$0xff] %vm2963, %v3374
        %3383 = vst.msk [vmem:[#allocation3 + $0x18] sm:$0xff] %vm2963, %v3375
        %3384 = vst.msk [vmem:[#allocation3 + $0x30] sm:$0xff] %vm2963, %v3376
        %3385 = vst.msk [vmem:[#allocation3 + $0x48] sm:$0xff] %vm2963, %v3377
        %3386 = vst.msk [vmem:[#allocation3 + $0x60] sm:$0xff] %vm2963, %v3378
        %3387 = vst.msk [vmem:[#allocation3 + $0x78] sm:$0xff] %vm2963, %v3379
        %3388 = vst.msk [vmem:[#allocation3 + $0x90] sm:$0xff] %vm2963, %v3380
        %3389 = vst.msk [vmem:[#allocation3 + $0xa8] sm:$0xff] %vm2963, %v3381
        %v3390 = vld [vmem:[#allocation2] sm:$0xff]
        %v3391 = vld [vmem:[#allocation2 + $0x48] sm:$0xff]
        %v3392 = vld [vmem:[#allocation2 + $0x90] sm:$0xff]
        %v3393 = vld [vmem:[#allocation2 + $0xd8] sm:$0xff]
        %v3394 = vld [vmem:[#allocation2 + $0x120] sm:$0xff]
        %v3395 = vld [vmem:[#allocation2 + $0x168] sm:$0xff]
        %v3396 = vld [vmem:[#allocation2 + $0x1b0] sm:$0xff]
        %v3397 = vld [vmem:[#allocation2 + $0x1f8] sm:$0xff]
        %v3398 = vld [vmem:[#allocation2 + $0x18] sm:$0xff]
        %v3399 = vld [vmem:[#allocation2 + $0x60] sm:$0xff]
        %v3400 = vld [vmem:[#allocation2 + $0xa8] sm:$0xff]
        %v3401 = vld [vmem:[#allocation2 + $0xf0] sm:$0xff]
        %v3402 = vld [vmem:[#allocation2 + $0x138] sm:$0xff]
        %v3403 = vld [vmem:[#allocation2 + $0x180] sm:$0xff]
        %v3404 = vld [vmem:[#allocation2 + $0x1c8] sm:$0xff]
        %v3405 = vld [vmem:[#allocation2 + $0x210] sm:$0xff]
        %v3406 = vld [vmem:[#allocation2 + $0x30] sm:$0xff]
        %v3407 = vld [vmem:[#allocation2 + $0x78] sm:$0xff]
        %v3408 = vld [vmem:[#allocation2 + $0xc0] sm:$0xff]
        %v3409 = vld [vmem:[#allocation2 + $0x108] sm:$0xff]
        %v3410 = vld [vmem:[#allocation2 + $0x150] sm:$0xff]
        %v3411 = vld [vmem:[#allocation2 + $0x198] sm:$0xff]
        %v3412 = vld [vmem:[#allocation2 + $0x1e0] sm:$0xff]
        %v3413 = vld [vmem:[#allocation2 + $0x228] sm:$0xff]
        %3422 = vrot.lane.b32.xlu0 %v3390, 64
        %v3423 = vpop.permute.xlu0 %3422
        %3424 = vrot.lane.b32.xlu0 %v3391, 64
        %v3425 = vpop.permute.xlu0 %3424
        %3426 = vrot.lane.b32.xlu0 %v3392, 64
        %v3427 = vpop.permute.xlu0 %3426
        %3428 = vrot.lane.b32.xlu0 %v3393, 64
        %v3429 = vpop.permute.xlu0 %3428
        %3430 = vrot.lane.b32.xlu0 %v3394, 64
        %v3431 = vpop.permute.xlu0 %3430
        %3432 = vrot.lane.b32.xlu0 %v3395, 64
        %v3433 = vpop.permute.xlu0 %3432
        %3434 = vrot.lane.b32.xlu0 %v3396, 64
        %v3435 = vpop.permute.xlu0 %3434
        %3436 = vrot.lane.b32.xlu0 %v3397, 64
        %v3437 = vpop.permute.xlu0 %3436
        %3446 = vrot.lane.b32.xlu0 %v3398, 64
        %v3447 = vpop.permute.xlu0 %3446
        %3448 = vrot.lane.b32.xlu0 %v3399, 64
        %v3449 = vpop.permute.xlu0 %3448
        %3450 = vrot.lane.b32.xlu0 %v3400, 64
        %v3451 = vpop.permute.xlu0 %3450
        %3452 = vrot.lane.b32.xlu0 %v3401, 64
        %v3453 = vpop.permute.xlu0 %3452
        %3454 = vrot.lane.b32.xlu0 %v3402, 64
        %v3455 = vpop.permute.xlu0 %3454
        %3456 = vrot.lane.b32.xlu0 %v3403, 64
        %v3457 = vpop.permute.xlu0 %3456
        %3458 = vrot.lane.b32.xlu0 %v3404, 64
        %v3459 = vpop.permute.xlu0 %3458
        %3460 = vrot.lane.b32.xlu0 %v3405, 64
        %v3461 = vpop.permute.xlu0 %3460
        %v3463 = vsel %vm2963, %v3423, 0
        %v3466 = vsel %vm2963, %v3425, 0
        %v3469 = vsel %vm2963, %v3427, 0
        %v3472 = vsel %vm2963, %v3429, 0
        %v3475 = vsel %vm2963, %v3431, 0
        %v3478 = vsel %vm2963, %v3433, 0
        %v3481 = vsel %vm2963, %v3435, 0
        %v3484 = vsel %vm2963, %v3437, 0
        %v3487 = vsel %vm2963, %v3447, 0
        %v3490 = vsel %vm2963, %v3449, 0
        %v3493 = vsel %vm2963, %v3451, 0
        %v3496 = vsel %vm2963, %v3453, 0
        %v3499 = vsel %vm2963, %v3455, 0
        %v3502 = vsel %vm2963, %v3457, 0
        %v3505 = vsel %vm2963, %v3459, 0
        %v3508 = vsel %vm2963, %v3461, 0
        %3510 = vmatprep.subr.bf16.mxu0 0
        %3511 = vmatpush1.bf16.xpose.msra.mxu0 %v3487
        %3512 = vmatprep.subr.bf16.mxu0 0
        %3513 = vmatpush1.bf16.xpose.msra.mxu0 %v3490
        %3514 = vmatprep.subr.bf16.mxu0 0
        %3515 = vmatpush1.bf16.xpose.msra.mxu0 %v3493
        %3516 = vmatprep.subr.bf16.mxu0 0
        %3517 = vmatpush1.bf16.xpose.msra.mxu0 %v3496
        %3518 = vmatprep.subr.bf16.mxu0 0
        %3519 = vmatpush1.bf16.xpose.msra.mxu0 %v3499
        %3520 = vmatprep.subr.bf16.mxu0 0
        %3521 = vmatpush1.bf16.xpose.msra.mxu0 %v3502
        %3522 = vmatprep.subr.bf16.mxu0 0
        %3523 = vmatpush1.bf16.xpose.msra.mxu0 %v3505
        %3524 = vmatprep.subr.bf16.mxu0 0
        %3525 = vmatpush1.bf16.xpose.msra.mxu0 %v3508
        %3526 = vmatprep.subr.bf16.mxu0 0
        %3527 = vmatpush1.bf16.xpose.msra.mxu0 0
        %3528 = vmatprep.subr.bf16.mxu0 0
        %3529 = vmatpush1.bf16.xpose.msra.mxu0 0
        %3530 = vmatprep.subr.bf16.mxu0 0
        %3531 = vmatpush1.bf16.xpose.msra.mxu0 0
        %3532 = vmatprep.subr.bf16.mxu0 0
        %3533 = vmatpush1.bf16.xpose.msra.mxu0 0
        %3534 = vmatprep.subr.bf16.mxu0 0
        %3535 = vmatpush1.bf16.xpose.msra.mxu0 0
        %3536 = vmatprep.subr.bf16.mxu0 0
        %3537 = vmatpush1.bf16.xpose.msra.mxu0 0
        %3538 = vmatprep.subr.bf16.mxu0 0
        %3539 = vmatpush1.bf16.xpose.msra.mxu0 0
        %3540 = vmatprep.subr.bf16.mxu0 0
        %3541 = vmatpush1.bf16.xpose.msra.mxu0 0
        %3542 = vmatprep.mubr.bf16.mxu0 0
        %3543 = vmatmul.mubr.bf16.gmra.mrb[0].mxu0 %v3463
        %v3544 = vpop.f32.mrb[0].mxu0
        %v3545 = vadd.f32 0.0, %v3544
        %v3546 = vpop.f32.mrb[0].mxu0
        %v3547 = vpop.f32.mrb[0].mxu0
        %v3548 = vadd.f32 0.0, %v3547
        %v3549 = vpop.f32.mrb[0].mxu0
        %3550 = vmatprep.mubr.bf16.mxu0 0
        %3551 = vmatmul.mubr.bf16.gmra.mrb[0].mxu0 %v3466
        %v3552 = vpop.f32.mrb[0].mxu0
        %v3553 = vadd.f32 0.0, %v3552
        %v3554 = vpop.f32.mrb[0].mxu0
        %v3555 = vpop.f32.mrb[0].mxu0
        %v3556 = vadd.f32 0.0, %v3555
        %v3557 = vpop.f32.mrb[0].mxu0
        %3558 = vmatprep.mubr.bf16.mxu0 0
        %3559 = vmatmul.mubr.bf16.gmra.mrb[0].mxu0 %v3469
        %v3560 = vpop.f32.mrb[0].mxu0
        %v3561 = vadd.f32 0.0, %v3560
        %v3562 = vpop.f32.mrb[0].mxu0
        %v3563 = vpop.f32.mrb[0].mxu0
        %v3564 = vadd.f32 0.0, %v3563
        %v3565 = vpop.f32.mrb[0].mxu0
        %3566 = vmatprep.mubr.bf16.mxu0 0
        %3567 = vmatmul.mubr.bf16.gmra.mrb[0].mxu0 %v3472
        %v3568 = vpop.f32.mrb[0].mxu0
        %v3569 = vadd.f32 0.0, %v3568
        %v3570 = vpop.f32.mrb[0].mxu0
        %v3571 = vpop.f32.mrb[0].mxu0
        %v3572 = vadd.f32 0.0, %v3571
        %v3573 = vpop.f32.mrb[0].mxu0
        %3574 = vmatprep.mubr.bf16.mxu0 0
        %3575 = vmatmul.mubr.bf16.gmra.mrb[0].mxu0 %v3475
        %v3576 = vpop.f32.mrb[0].mxu0
        %v3577 = vadd.f32 0.0, %v3576
        %v3578 = vpop.f32.mrb[0].mxu0
        %v3579 = vpop.f32.mrb[0].mxu0
        %v3580 = vadd.f32 0.0, %v3579
        %v3581 = vpop.f32.mrb[0].mxu0
        %3582 = vmatprep.mubr.bf16.mxu0 0
        %3583 = vmatmul.mubr.bf16.gmra.mrb[0].mxu0 %v3478
        %v3584 = vpop.f32.mrb[0].mxu0
        %v3585 = vadd.f32 0.0, %v3584
        %v3586 = vpop.f32.mrb[0].mxu0
        %v3587 = vpop.f32.mrb[0].mxu0
        %v3588 = vadd.f32 0.0, %v3587
        %v3589 = vpop.f32.mrb[0].mxu0
        %3590 = vmatprep.mubr.bf16.mxu0 0
        %3591 = vmatmul.mubr.bf16.gmra.mrb[0].mxu0 %v3481
        %v3592 = vpop.f32.mrb[0].mxu0
        %v3593 = vadd.f32 0.0, %v3592
        %v3594 = vpop.f32.mrb[0].mxu0
        %v3595 = vpop.f32.mrb[0].mxu0
        %v3596 = vadd.f32 0.0, %v3595
        %v3597 = vpop.f32.mrb[0].mxu0
        %3598 = vmatprep.mubr.bf16.mxu0 0
        %3599 = vmatmul.mubr.bf16.gmra.mrb[0].mxu0 %v3484
        %v3600 = vpop.f32.mrb[0].mxu0
        %v3601 = vadd.f32 0.0, %v3600
        %v3602 = vpop.f32.mrb[0].mxu0
        %v3603 = vpop.f32.mrb[0].mxu0
        %v3604 = vadd.f32 0.0, %v3603
        %v3605 = vpop.f32.mrb[0].mxu0
        %3606 = vdwg.mxu0
        %v3607 = vsel %vm2923, %v3545, -inf
        %v3608 = vsel %vm2924, %v3548, -inf
        %v3609 = vsel %vm2925, %v3553, -inf
        %v3610 = vsel %vm2926, %v3556, -inf
        %v3611 = vsel %vm2927, %v3561, -inf
        %v3612 = vsel %vm2928, %v3564, -inf
        %v3613 = vsel %vm2929, %v3569, -inf
        %v3614 = vsel %vm2930, %v3572, -inf
        %v3615 = vsel %vm2931, %v3577, -inf
        %v3616 = vsel %vm2932, %v3580, -inf
        %v3617 = vsel %vm2933, %v3585, -inf
        %v3618 = vsel %vm2934, %v3588, -inf
        %v3619 = vsel %vm2935, %v3593, -inf
        %v3620 = vsel %vm2936, %v3596, -inf
        %v3621 = vsel %vm2937, %v3601, -inf
        %v3622 = vsel %vm2938, %v3604, -inf
        %3623 = vmax.xlane.f32.xlu0 %v3607
        %v3624 = vpop.xlane.xlu0 %3623
        %3625 = vmax.xlane.f32.xlu0 %v3608
        %v3626 = vpop.xlane.xlu0 %3625
        %3627 = vmax.xlane.f32.xlu0 %v3609
        %v3628 = vpop.xlane.xlu0 %3627
        %3629 = vmax.xlane.f32.xlu0 %v3610
        %v3630 = vpop.xlane.xlu0 %3629
        %3631 = vmax.xlane.f32.xlu0 %v3611
        %v3632 = vpop.xlane.xlu0 %3631
        %3633 = vmax.xlane.f32.xlu0 %v3612
        %v3634 = vpop.xlane.xlu0 %3633
        %3635 = vmax.xlane.f32.xlu0 %v3613
        %v3636 = vpop.xlane.xlu0 %3635
        %3637 = vmax.xlane.f32.xlu0 %v3614
        %v3638 = vpop.xlane.xlu0 %3637
        %3639 = vmax.xlane.f32.xlu0 %v3615
        %v3640 = vpop.xlane.xlu0 %3639
        %3641 = vmax.xlane.f32.xlu0 %v3616
        %v3642 = vpop.xlane.xlu0 %3641
        %3643 = vmax.xlane.f32.xlu0 %v3617
        %v3644 = vpop.xlane.xlu0 %3643
        %3645 = vmax.xlane.f32.xlu0 %v3618
        %v3646 = vpop.xlane.xlu0 %3645
        %3647 = vmax.xlane.f32.xlu0 %v3619
        %v3648 = vpop.xlane.xlu0 %3647
        %3649 = vmax.xlane.f32.xlu0 %v3620
        %v3650 = vpop.xlane.xlu0 %3649
        %3651 = vmax.xlane.f32.xlu0 %v3621
        %v3652 = vpop.xlane.xlu0 %3651
        %3653 = vmax.xlane.f32.xlu0 %v3622
        %v3654 = vpop.xlane.xlu0 %3653
        %v3655 = vsub.f32 %v3607, %v3624
        %v3656 = vsub.f32 %v3608, %v3626
        %v3657 = vsub.f32 %v3609, %v3628
        %v3658 = vsub.f32 %v3610, %v3630
        %v3659 = vsub.f32 %v3611, %v3632
        %v3660 = vsub.f32 %v3612, %v3634
        %v3661 = vsub.f32 %v3613, %v3636
        %v3662 = vsub.f32 %v3614, %v3638
        %v3663 = vsub.f32 %v3615, %v3640
        %v3664 = vsub.f32 %v3616, %v3642
        %v3665 = vsub.f32 %v3617, %v3644
        %v3666 = vsub.f32 %v3618, %v3646
        %v3667 = vsub.f32 %v3619, %v3648
        %v3668 = vsub.f32 %v3620, %v3650
        %v3669 = vsub.f32 %v3621, %v3652
        %v3670 = vsub.f32 %v3622, %v3654
        %v3671 = vmul.f32 %v3655, 1.442695
        %v3672 = vpow.pop %v3671
        %v3673 = vmul.f32 %v3656, 1.442695
        %v3674 = vpow.pop %v3673
        %v3675 = vmul.f32 %v3657, 1.442695
        %v3676 = vpow.pop %v3675
        %v3677 = vmul.f32 %v3658, 1.442695
        %v3678 = vpow.pop %v3677
        %v3679 = vmul.f32 %v3659, 1.442695
        %v3680 = vpow.pop %v3679
        %v3681 = vmul.f32 %v3660, 1.442695
        %v3682 = vpow.pop %v3681
        %v3683 = vmul.f32 %v3661, 1.442695
        %v3684 = vpow.pop %v3683
        %v3685 = vmul.f32 %v3662, 1.442695
        %v3686 = vpow.pop %v3685
        %v3687 = vmul.f32 %v3663, 1.442695
        %v3688 = vpow.pop %v3687
        %v3689 = vmul.f32 %v3664, 1.442695
        %v3690 = vpow.pop %v3689
        %v3691 = vmul.f32 %v3665, 1.442695
        %v3692 = vpow.pop %v3691
        %v3693 = vmul.f32 %v3666, 1.442695
        %v3694 = vpow.pop %v3693
        %v3695 = vmul.f32 %v3667, 1.442695
        %v3696 = vpow.pop %v3695
        %v3697 = vmul.f32 %v3668, 1.442695
        %v3698 = vpow.pop %v3697
        %v3699 = vmul.f32 %v3669, 1.442695
        %v3700 = vpow.pop %v3699
        %v3701 = vmul.f32 %v3670, 1.442695
        %v3702 = vpow.pop %v3701
        %3703 = vadd.xlane.f32.xlu0 %v3672
        %v3704 = vpop.xlane.xlu0 %3703
        %3705 = vadd.xlane.f32.xlu0 %v3674
        %v3706 = vpop.xlane.xlu0 %3705
        %3707 = vadd.xlane.f32.xlu0 %v3676
        %v3708 = vpop.xlane.xlu0 %3707
        %3709 = vadd.xlane.f32.xlu0 %v3678
        %v3710 = vpop.xlane.xlu0 %3709
        %3711 = vadd.xlane.f32.xlu0 %v3680
        %v3712 = vpop.xlane.xlu0 %3711
        %3713 = vadd.xlane.f32.xlu0 %v3682
        %v3714 = vpop.xlane.xlu0 %3713
        %3715 = vadd.xlane.f32.xlu0 %v3684
        %v3716 = vpop.xlane.xlu0 %3715
        %3717 = vadd.xlane.f32.xlu0 %v3686
        %v3718 = vpop.xlane.xlu0 %3717
        %3719 = vadd.xlane.f32.xlu0 %v3688
        %v3720 = vpop.xlane.xlu0 %3719
        %3721 = vadd.xlane.f32.xlu0 %v3690
        %v3722 = vpop.xlane.xlu0 %3721
        %3723 = vadd.xlane.f32.xlu0 %v3692
        %v3724 = vpop.xlane.xlu0 %3723
        %3725 = vadd.xlane.f32.xlu0 %v3694
        %v3726 = vpop.xlane.xlu0 %3725
        %3727 = vadd.xlane.f32.xlu0 %v3696
        %v3728 = vpop.xlane.xlu0 %3727
        %3729 = vadd.xlane.f32.xlu0 %v3698
        %v3730 = vpop.xlane.xlu0 %3729
        %3731 = vadd.xlane.f32.xlu0 %v3700
        %v3732 = vpop.xlane.xlu0 %3731
        %3733 = vadd.xlane.f32.xlu0 %v3702
        %v3734 = vpop.xlane.xlu0 %3733
        %v3735 = vrcp.pop %v3704
        %v3736 = vrcp.pop %v3706
        %v3737 = vrcp.pop %v3708
        %v3738 = vrcp.pop %v3710
        %v3739 = vrcp.pop %v3712
        %v3740 = vrcp.pop %v3714
        %v3741 = vrcp.pop %v3716
        %v3742 = vrcp.pop %v3718
        %v3743 = vrcp.pop %v3720
        %v3744 = vrcp.pop %v3722
        %v3745 = vrcp.pop %v3724
        %v3746 = vrcp.pop %v3726
        %v3747 = vrcp.pop %v3728
        %v3748 = vrcp.pop %v3730
        %v3749 = vrcp.pop %v3732
        %v3750 = vrcp.pop %v3734
        %v3751 = vmul.f32 %v3672, %v3735
        %v3752 = vmul.f32 %v3674, %v3736
        %v3753 = vmul.f32 %v3676, %v3737
        %v3754 = vmul.f32 %v3678, %v3738
        %v3755 = vmul.f32 %v3680, %v3739
        %v3756 = vmul.f32 %v3682, %v3740
        %v3757 = vmul.f32 %v3684, %v3741
        %v3758 = vmul.f32 %v3686, %v3742
        %v3759 = vmul.f32 %v3688, %v3743
        %v3760 = vmul.f32 %v3690, %v3744
        %v3761 = vmul.f32 %v3692, %v3745
        %v3762 = vmul.f32 %v3694, %v3746
        %v3763 = vmul.f32 %v3696, %v3747
        %v3764 = vmul.f32 %v3698, %v3748
        %v3765 = vmul.f32 %v3700, %v3749
        %v3766 = vmul.f32 %v3702, %v3750
        %v3767 = vpack.c.bf16 %v3752, %v3751
        %v3768 = vpack.c.bf16 %v3754, %v3753
        %v3769 = vpack.c.bf16 %v3756, %v3755
        %v3770 = vpack.c.bf16 %v3758, %v3757
        %v3771 = vpack.c.bf16 %v3760, %v3759
        %v3772 = vpack.c.bf16 %v3762, %v3761
        %v3773 = vpack.c.bf16 %v3764, %v3763
        %v3774 = vpack.c.bf16 %v3766, %v3765
        %3783 = vrot.lane.b32.xlu0 %v3406, 64
        %v3784 = vpop.permute.xlu0 %3783
        %3785 = vrot.lane.b32.xlu0 %v3407, 64
        %v3786 = vpop.permute.xlu0 %3785
        %3787 = vrot.lane.b32.xlu0 %v3408, 64
        %v3788 = vpop.permute.xlu0 %3787
        %3789 = vrot.lane.b32.xlu0 %v3409, 64
        %v3790 = vpop.permute.xlu0 %3789
        %3791 = vrot.lane.b32.xlu0 %v3410, 64
        %v3792 = vpop.permute.xlu0 %3791
        %3793 = vrot.lane.b32.xlu0 %v3411, 64
        %v3794 = vpop.permute.xlu0 %3793
        %3795 = vrot.lane.b32.xlu0 %v3412, 64
        %v3796 = vpop.permute.xlu0 %3795
        %3797 = vrot.lane.b32.xlu0 %v3413, 64
        %v3798 = vpop.permute.xlu0 %3797
        %3807 = vmatprep.subr.bf16.mxu0 0
        %3808 = vmatpush1.bf16.msra.mxu0 %v3784
        %3809 = vmatprep.subr.bf16.mxu0 0
        %3810 = vmatpush1.bf16.msra.mxu0 %v3786
        %3811 = vmatprep.subr.bf16.mxu0 0
        %3812 = vmatpush1.bf16.msra.mxu0 %v3788
        %3813 = vmatprep.subr.bf16.mxu0 0
        %3814 = vmatpush1.bf16.msra.mxu0 %v3790
        %3815 = vmatprep.subr.bf16.mxu0 0
        %3816 = vmatpush1.bf16.msra.mxu0 %v3792
        %3817 = vmatprep.subr.bf16.mxu0 0
        %3818 = vmatpush1.bf16.msra.mxu0 %v3794
        %3819 = vmatprep.subr.bf16.mxu0 0
        %3820 = vmatpush1.bf16.msra.mxu0 %v3796
        %3821 = vmatprep.subr.bf16.mxu0 0
        %3822 = vmatpush1.bf16.msra.mxu0 %v3798
        %3823 = vmatprep.subr.bf16.mxu0 0
        %3824 = vmatpush1.bf16.msra.mxu0 0
        %3825 = vmatprep.subr.bf16.mxu0 0
        %3826 = vmatpush1.bf16.msra.mxu0 0
        %3827 = vmatprep.subr.bf16.mxu0 0
        %3828 = vmatpush1.bf16.msra.mxu0 0
        %3829 = vmatprep.subr.bf16.mxu0 0
        %3830 = vmatpush1.bf16.msra.mxu0 0
        %3831 = vmatprep.subr.bf16.mxu0 0
        %3832 = vmatpush1.bf16.msra.mxu0 0
        %3833 = vmatprep.subr.bf16.mxu0 0
        %3834 = vmatpush1.bf16.msra.mxu0 0
        %3835 = vmatprep.subr.bf16.mxu0 0
        %3836 = vmatpush1.bf16.msra.mxu0 0
        %3837 = vmatprep.subr.bf16.mxu0 0
        %3838 = vmatpush1.bf16.msra.mxu0 0
        %3839 = vmatprep.mubr.bf16.mxu0 0
        %3840 = vmatmul.mubr.bf16.gmra.mrb[0].mxu0 %v3767
        %v3841 = vpop.f32.mrb[0].mxu0
        %v3842 = vadd.f32 0.0, %v3841
        %v3843 = vpop.f32.mrb[0].mxu0
        %v3844 = vpop.f32.mrb[0].mxu0
        %v3845 = vadd.f32 0.0, %v3844
        %v3846 = vpop.f32.mrb[0].mxu0
        %3847 = vmatprep.mubr.bf16.mxu0 0
        %3848 = vmatmul.mubr.bf16.gmra.mrb[0].mxu0 %v3768
        %v3849 = vpop.f32.mrb[0].mxu0
        %v3850 = vadd.f32 0.0, %v3849
        %v3851 = vpop.f32.mrb[0].mxu0
        %v3852 = vpop.f32.mrb[0].mxu0
        %v3853 = vadd.f32 0.0, %v3852
        %v3854 = vpop.f32.mrb[0].mxu0
        %3855 = vmatprep.mubr.bf16.mxu0 0
        %3856 = vmatmul.mubr.bf16.gmra.mrb[0].mxu0 %v3769
        %v3857 = vpop.f32.mrb[0].mxu0
        %v3858 = vadd.f32 0.0, %v3857
        %v3859 = vpop.f32.mrb[0].mxu0
        %v3860 = vpop.f32.mrb[0].mxu0
        %v3861 = vadd.f32 0.0, %v3860
        %v3862 = vpop.f32.mrb[0].mxu0
        %3863 = vmatprep.mubr.bf16.mxu0 0
        %3864 = vmatmul.mubr.bf16.gmra.mrb[0].mxu0 %v3770
        %v3865 = vpop.f32.mrb[0].mxu0
        %v3866 = vadd.f32 0.0, %v3865
        %v3867 = vpop.f32.mrb[0].mxu0
        %v3868 = vpop.f32.mrb[0].mxu0
        %v3869 = vadd.f32 0.0, %v3868
        %v3870 = vpop.f32.mrb[0].mxu0
        %3871 = vmatprep.mubr.bf16.mxu0 0
        %3872 = vmatmul.mubr.bf16.gmra.mrb[0].mxu0 %v3771
        %v3873 = vpop.f32.mrb[0].mxu0
        %v3874 = vadd.f32 0.0, %v3873
        %v3875 = vpop.f32.mrb[0].mxu0
        %v3876 = vpop.f32.mrb[0].mxu0
        %v3877 = vadd.f32 0.0, %v3876
        %v3878 = vpop.f32.mrb[0].mxu0
        %3879 = vmatprep.mubr.bf16.mxu0 0
        %3880 = vmatmul.mubr.bf16.gmra.mrb[0].mxu0 %v3772
        %v3881 = vpop.f32.mrb[0].mxu0
        %v3882 = vadd.f32 0.0, %v3881
        %v3883 = vpop.f32.mrb[0].mxu0
        %v3884 = vpop.f32.mrb[0].mxu0
        %v3885 = vadd.f32 0.0, %v3884
        %v3886 = vpop.f32.mrb[0].mxu0
        %3887 = vmatprep.mubr.bf16.mxu0 0
        %3888 = vmatmul.mubr.bf16.gmra.mrb[0].mxu0 %v3773
        %v3889 = vpop.f32.mrb[0].mxu0
        %v3890 = vadd.f32 0.0, %v3889
        %v3891 = vpop.f32.mrb[0].mxu0
        %v3892 = vpop.f32.mrb[0].mxu0
        %v3893 = vadd.f32 0.0, %v3892
        %v3894 = vpop.f32.mrb[0].mxu0
        %3895 = vmatprep.mubr.bf16.mxu0 0
        %3896 = vmatmul.mubr.bf16.gmra.mrb[0].mxu0 %v3774
        %v3897 = vpop.f32.mrb[0].mxu0
        %v3898 = vadd.f32 0.0, %v3897
        %v3899 = vpop.f32.mrb[0].mxu0
        %v3900 = vpop.f32.mrb[0].mxu0
        %v3901 = vadd.f32 0.0, %v3900
        %v3902 = vpop.f32.mrb[0].mxu0
        %3903 = vdwg.mxu0
        %v3904 = vpack.c.bf16 %v3845, %v3842
        %v3905 = vpack.c.bf16 %v3853, %v3850
        %v3906 = vpack.c.bf16 %v3861, %v3858
        %v3907 = vpack.c.bf16 %v3869, %v3866
        %v3908 = vpack.c.bf16 %v3877, %v3874
        %v3909 = vpack.c.bf16 %v3885, %v3882
        %v3910 = vpack.c.bf16 %v3893, %v3890
        %v3911 = vpack.c.bf16 %v3901, %v3898
        %3920 = vrot.lane.b32.xlu0 %v3904, 64
        %v3921 = vpop.permute.xlu0 %3920
        %3922 = vrot.lane.b32.xlu0 %v3905, 64
        %v3923 = vpop.permute.xlu0 %3922
        %3924 = vrot.lane.b32.xlu0 %v3906, 64
        %v3925 = vpop.permute.xlu0 %3924
        %3926 = vrot.lane.b32.xlu0 %v3907, 64
        %v3927 = vpop.permute.xlu0 %3926
        %3928 = vrot.lane.b32.xlu0 %v3908, 64
        %v3929 = vpop.permute.xlu0 %3928
        %3930 = vrot.lane.b32.xlu0 %v3909, 64
        %v3931 = vpop.permute.xlu0 %3930
        %3932 = vrot.lane.b32.xlu0 %v3910, 64
        %v3933 = vpop.permute.xlu0 %3932
        %3934 = vrot.lane.b32.xlu0 %v3911, 64
        %v3935 = vpop.permute.xlu0 %3934
        %vm3944 = vcmask 1048064
        %3945 = vst.msk [vmem:[#allocation3] sm:$0xff] %vm3944, %v3921
        %3946 = vst.msk [vmem:[#allocation3 + $0x18] sm:$0xff] %vm3944, %v3923
        %3947 = vst.msk [vmem:[#allocation3 + $0x30] sm:$0xff] %vm3944, %v3925
        %3948 = vst.msk [vmem:[#allocation3 + $0x48] sm:$0xff] %vm3944, %v3927
        %3949 = vst.msk [vmem:[#allocation3 + $0x60] sm:$0xff] %vm3944, %v3929
        %3950 = vst.msk [vmem:[#allocation3 + $0x78] sm:$0xff] %vm3944, %v3931
        %3951 = vst.msk [vmem:[#allocation3 + $0x90] sm:$0xff] %vm3944, %v3933
        %3952 = vst.msk [vmem:[#allocation3 + $0xa8] sm:$0xff] %vm3944, %v3935
        %v3953 = vld [vmem:[#allocation2 + $0x8] sm:$0xff]
        %v3954 = vld [vmem:[#allocation2 + $0x50] sm:$0xff]
        %v3955 = vld [vmem:[#allocation2 + $0x98] sm:$0xff]
        %v3956 = vld [vmem:[#allocation2 + $0xe0] sm:$0xff]
        %v3957 = vld [vmem:[#allocation2 + $0x128] sm:$0xff]
        %v3958 = vld [vmem:[#allocation2 + $0x170] sm:$0xff]
        %v3959 = vld [vmem:[#allocation2 + $0x1b8] sm:$0xff]
        %v3960 = vld [vmem:[#allocation2 + $0x200] sm:$0xff]
        %v3961 = vld [vmem:[#allocation2 + $0x20] sm:$0xff]
        %v3962 = vld [vmem:[#allocation2 + $0x68] sm:$0xff]
        %v3963 = vld [vmem:[#allocation2 + $0xb0] sm:$0xff]
        %v3964 = vld [vmem:[#allocation2 + $0xf8] sm:$0xff]
        %v3965 = vld [vmem:[#allocation2 + $0x140] sm:$0xff]
        %v3966 = vld [vmem:[#allocation2 + $0x188] sm:$0xff]
        %v3967 = vld [vmem:[#allocation2 + $0x1d0] sm:$0xff]
        %v3968 = vld [vmem:[#allocation2 + $0x218] sm:$0xff]
        %v3969 = vld [vmem:[#allocation2 + $0x38] sm:$0xff]
        %v3970 = vld [vmem:[#allocation2 + $0x80] sm:$0xff]
        %v3971 = vld [vmem:[#allocation2 + $0xc8] sm:$0xff]
        %v3972 = vld [vmem:[#allocation2 + $0x110] sm:$0xff]
        %v3973 = vld [vmem:[#allocation2 + $0x158] sm:$0xff]
        %v3974 = vld [vmem:[#allocation2 + $0x1a0] sm:$0xff]
        %v3975 = vld [vmem:[#allocation2 + $0x1e8] sm:$0xff]
        %v3976 = vld [vmem:[#allocation2 + $0x230] sm:$0xff]
        %v3978 = vsel %vm2963, %v3953, 0
        %v3981 = vsel %vm2963, %v3954, 0
        %v3984 = vsel %vm2963, %v3955, 0
        %v3987 = vsel %vm2963, %v3956, 0
        %v3990 = vsel %vm2963, %v3957, 0
        %v3993 = vsel %vm2963, %v3958, 0
        %v3996 = vsel %vm2963, %v3959, 0
        %v3999 = vsel %vm2963, %v3960, 0
        %v4002 = vsel %vm2963, %v3961, 0
        %v4005 = vsel %vm2963, %v3962, 0
        %v4008 = vsel %vm2963, %v3963, 0
        %v4011 = vsel %vm2963, %v3964, 0
        %v4014 = vsel %vm2963, %v3965, 0
        %v4017 = vsel %vm2963, %v3966, 0
        %v4020 = vsel %vm2963, %v3967, 0
        %v4023 = vsel %vm2963, %v3968, 0
        %4025 = vmatprep.subr.bf16.mxu0 0
        %4026 = vmatpush1.bf16.xpose.msra.mxu0 %v4002
        %4027 = vmatprep.subr.bf16.mxu0 0
        %4028 = vmatpush1.bf16.xpose.msra.mxu0 %v4005
        %4029 = vmatprep.subr.bf16.mxu0 0
        %4030 = vmatpush1.bf16.xpose.msra.mxu0 %v4008
        %4031 = vmatprep.subr.bf16.mxu0 0
        %4032 = vmatpush1.bf16.xpose.msra.mxu0 %v4011
        %4033 = vmatprep.subr.bf16.mxu0 0
        %4034 = vmatpush1.bf16.xpose.msra.mxu0 %v4014
        %4035 = vmatprep.subr.bf16.mxu0 0
        %4036 = vmatpush1.bf16.xpose.msra.mxu0 %v4017
        %4037 = vmatprep.subr.bf16.mxu0 0
        %4038 = vmatpush1.bf16.xpose.msra.mxu0 %v4020
        %4039 = vmatprep.subr.bf16.mxu0 0
        %4040 = vmatpush1.bf16.xpose.msra.mxu0 %v4023
        %4041 = vmatprep.subr.bf16.mxu0 0
        %4042 = vmatpush1.bf16.xpose.msra.mxu0 0
        %4043 = vmatprep.subr.bf16.mxu0 0
        %4044 = vmatpush1.bf16.xpose.msra.mxu0 0
        %4045 = vmatprep.subr.bf16.mxu0 0
        %4046 = vmatpush1.bf16.xpose.msra.mxu0 0
        %4047 = vmatprep.subr.bf16.mxu0 0
        %4048 = vmatpush1.bf16.xpose.msra.mxu0 0
        %4049 = vmatprep.subr.bf16.mxu0 0
        %4050 = vmatpush1.bf16.xpose.msra.mxu0 0
        %4051 = vmatprep.subr.bf16.mxu0 0
        %4052 = vmatpush1.bf16.xpose.msra.mxu0 0
        %4053 = vmatprep.subr.bf16.mxu0 0
        %4054 = vmatpush1.bf16.xpose.msra.mxu0 0
        %4055 = vmatprep.subr.bf16.mxu0 0
        %4056 = vmatpush1.bf16.xpose.msra.mxu0 0
        %4057 = vmatprep.mubr.bf16.mxu0 0
        %4058 = vmatmul.mubr.bf16.gmra.mrb[0].mxu0 %v3978
        %v4059 = vpop.f32.mrb[0].mxu0
        %v4060 = vadd.f32 0.0, %v4059
        %v4061 = vpop.f32.mrb[0].mxu0
        %v4062 = vpop.f32.mrb[0].mxu0
        %v4063 = vadd.f32 0.0, %v4062
        %v4064 = vpop.f32.mrb[0].mxu0
        %4065 = vmatprep.mubr.bf16.mxu0 0
        %4066 = vmatmul.mubr.bf16.gmra.mrb[0].mxu0 %v3981
        %v4067 = vpop.f32.mrb[0].mxu0
        %v4068 = vadd.f32 0.0, %v4067
        %v4069 = vpop.f32.mrb[0].mxu0
        %v4070 = vpop.f32.mrb[0].mxu0
        %v4071 = vadd.f32 0.0, %v4070
        %v4072 = vpop.f32.mrb[0].mxu0
        %4073 = vmatprep.mubr.bf16.mxu0 0
        %4074 = vmatmul.mubr.bf16.gmra.mrb[0].mxu0 %v3984
        %v4075 = vpop.f32.mrb[0].mxu0
        %v4076 = vadd.f32 0.0, %v4075
        %v4077 = vpop.f32.mrb[0].mxu0
        %v4078 = vpop.f32.mrb[0].mxu0
        %v4079 = vadd.f32 0.0, %v4078
        %v4080 = vpop.f32.mrb[0].mxu0
        %4081 = vmatprep.mubr.bf16.mxu0 0
        %4082 = vmatmul.mubr.bf16.gmra.mrb[0].mxu0 %v3987
        %v4083 = vpop.f32.mrb[0].mxu0
        %v4084 = vadd.f32 0.0, %v4083
        %v4085 = vpop.f32.mrb[0].mxu0
        %v4086 = vpop.f32.mrb[0].mxu0
        %v4087 = vadd.f32 0.0, %v4086
        %v4088 = vpop.f32.mrb[0].mxu0
        %4089 = vmatprep.mubr.bf16.mxu0 0
        %4090 = vmatmul.mubr.bf16.gmra.mrb[0].mxu0 %v3990
        %v4091 = vpop.f32.mrb[0].mxu0
        %v4092 = vadd.f32 0.0, %v4091
        %v4093 = vpop.f32.mrb[0].mxu0
        %v4094 = vpop.f32.mrb[0].mxu0
        %v4095 = vadd.f32 0.0, %v4094
        %v4096 = vpop.f32.mrb[0].mxu0
        %4097 = vmatprep.mubr.bf16.mxu0 0
        %4098 = vmatmul.mubr.bf16.gmra.mrb[0].mxu0 %v3993
        %v4099 = vpop.f32.mrb[0].mxu0
        %v4100 = vadd.f32 0.0, %v4099
        %v4101 = vpop.f32.mrb[0].mxu0
        %v4102 = vpop.f32.mrb[0].mxu0
        %v4103 = vadd.f32 0.0, %v4102
        %v4104 = vpop.f32.mrb[0].mxu0
        %4105 = vmatprep.mubr.bf16.mxu0 0
        %4106 = vmatmul.mubr.bf16.gmra.mrb[0].mxu0 %v3996
        %v4107 = vpop.f32.mrb[0].mxu0
        %v4108 = vadd.f32 0.0, %v4107
        %v4109 = vpop.f32.mrb[0].mxu0
        %v4110 = vpop.f32.mrb[0].mxu0
        %v4111 = vadd.f32 0.0, %v4110
        %v4112 = vpop.f32.mrb[0].mxu0
        %4113 = vmatprep.mubr.bf16.mxu0 0
        %4114 = vmatmul.mubr.bf16.gmra.mrb[0].mxu0 %v3999
        %v4115 = vpop.f32.mrb[0].mxu0
        %v4116 = vadd.f32 0.0, %v4115
        %v4117 = vpop.f32.mrb[0].mxu0
        %v4118 = vpop.f32.mrb[0].mxu0
        %v4119 = vadd.f32 0.0, %v4118
        %v4120 = vpop.f32.mrb[0].mxu0
        %4121 = vdwg.mxu0
        %v4122 = vsel %vm2923, %v4060, -inf
        %v4123 = vsel %vm2924, %v4063, -inf
        %v4124 = vsel %vm2925, %v4068, -inf
        %v4125 = vsel %vm2926, %v4071, -inf
        %v4126 = vsel %vm2927, %v4076, -inf
        %v4127 = vsel %vm2928, %v4079, -inf
        %v4128 = vsel %vm2929, %v4084, -inf
        %v4129 = vsel %vm2930, %v4087, -inf
        %v4130 = vsel %vm2931, %v4092, -inf
        %v4131 = vsel %vm2932, %v4095, -inf
        %v4132 = vsel %vm2933, %v4100, -inf
        %v4133 = vsel %vm2934, %v4103, -inf
        %v4134 = vsel %vm2935, %v4108, -inf
        %v4135 = vsel %vm2936, %v4111, -inf
        %v4136 = vsel %vm2937, %v4116, -inf
        %v4137 = vsel %vm2938, %v4119, -inf
        %4138 = vmax.xlane.f32.xlu0 %v4122
        %v4139 = vpop.xlane.xlu0 %4138
        %4140 = vmax.xlane.f32.xlu0 %v4123
        %v4141 = vpop.xlane.xlu0 %4140
        %4142 = vmax.xlane.f32.xlu0 %v4124
        %v4143 = vpop.xlane.xlu0 %4142
        %4144 = vmax.xlane.f32.xlu0 %v4125
        %v4145 = vpop.xlane.xlu0 %4144
        %4146 = vmax.xlane.f32.xlu0 %v4126
        %v4147 = vpop.xlane.xlu0 %4146
        %4148 = vmax.xlane.f32.xlu0 %v4127
        %v4149 = vpop.xlane.xlu0 %4148
        %4150 = vmax.xlane.f32.xlu0 %v4128
        %v4151 = vpop.xlane.xlu0 %4150
        %4152 = vmax.xlane.f32.xlu0 %v4129
        %v4153 = vpop.xlane.xlu0 %4152
        %4154 = vmax.xlane.f32.xlu0 %v4130
        %v4155 = vpop.xlane.xlu0 %4154
        %4156 = vmax.xlane.f32.xlu0 %v4131
        %v4157 = vpop.xlane.xlu0 %4156
        %4158 = vmax.xlane.f32.xlu0 %v4132
        %v4159 = vpop.xlane.xlu0 %4158
        %4160 = vmax.xlane.f32.xlu0 %v4133
        %v4161 = vpop.xlane.xlu0 %4160
        %4162 = vmax.xlane.f32.xlu0 %v4134
        %v4163 = vpop.xlane.xlu0 %4162
        %4164 = vmax.xlane.f32.xlu0 %v4135
        %v4165 = vpop.xlane.xlu0 %4164
        %4166 = vmax.xlane.f32.xlu0 %v4136
        %v4167 = vpop.xlane.xlu0 %4166
        %4168 = vmax.xlane.f32.xlu0 %v4137
        %v4169 = vpop.xlane.xlu0 %4168
        %v4170 = vsub.f32 %v4122, %v4139
        %v4171 = vsub.f32 %v4123, %v4141
        %v4172 = vsub.f32 %v4124, %v4143
        %v4173 = vsub.f32 %v4125, %v4145
        %v4174 = vsub.f32 %v4126, %v4147
        %v4175 = vsub.f32 %v4127, %v4149
        %v4176 = vsub.f32 %v4128, %v4151
        %v4177 = vsub.f32 %v4129, %v4153
        %v4178 = vsub.f32 %v4130, %v4155
        %v4179 = vsub.f32 %v4131, %v4157
        %v4180 = vsub.f32 %v4132, %v4159
        %v4181 = vsub.f32 %v4133, %v4161
        %v4182 = vsub.f32 %v4134, %v4163
        %v4183 = vsub.f32 %v4135, %v4165
        %v4184 = vsub.f32 %v4136, %v4167
        %v4185 = vsub.f32 %v4137, %v4169
        %v4186 = vmul.f32 %v4170, 1.442695
        %v4187 = vpow.pop %v4186
        %v4188 = vmul.f32 %v4171, 1.442695
        %v4189 = vpow.pop %v4188
        %v4190 = vmul.f32 %v4172, 1.442695
        %v4191 = vpow.pop %v4190
        %v4192 = vmul.f32 %v4173, 1.442695
        %v4193 = vpow.pop %v4192
        %v4194 = vmul.f32 %v4174, 1.442695
        %v4195 = vpow.pop %v4194
        %v4196 = vmul.f32 %v4175, 1.442695
        %v4197 = vpow.pop %v4196
        %v4198 = vmul.f32 %v4176, 1.442695
        %v4199 = vpow.pop %v4198
        %v4200 = vmul.f32 %v4177, 1.442695
        %v4201 = vpow.pop %v4200
        %v4202 = vmul.f32 %v4178, 1.442695
        %v4203 = vpow.pop %v4202
        %v4204 = vmul.f32 %v4179, 1.442695
        %v4205 = vpow.pop %v4204
        %v4206 = vmul.f32 %v4180, 1.442695
        %v4207 = vpow.pop %v4206
        %v4208 = vmul.f32 %v4181, 1.442695
        %v4209 = vpow.pop %v4208
        %v4210 = vmul.f32 %v4182, 1.442695
        %v4211 = vpow.pop %v4210
        %v4212 = vmul.f32 %v4183, 1.442695
        %v4213 = vpow.pop %v4212
        %v4214 = vmul.f32 %v4184, 1.442695
        %v4215 = vpow.pop %v4214
        %v4216 = vmul.f32 %v4185, 1.442695
        %v4217 = vpow.pop %v4216
        %4218 = vadd.xlane.f32.xlu0 %v4187
        %v4219 = vpop.xlane.xlu0 %4218
        %4220 = vadd.xlane.f32.xlu0 %v4189
        %v4221 = vpop.xlane.xlu0 %4220
        %4222 = vadd.xlane.f32.xlu0 %v4191
        %v4223 = vpop.xlane.xlu0 %4222
        %4224 = vadd.xlane.f32.xlu0 %v4193
        %v4225 = vpop.xlane.xlu0 %4224
        %4226 = vadd.xlane.f32.xlu0 %v4195
        %v4227 = vpop.xlane.xlu0 %4226
        %4228 = vadd.xlane.f32.xlu0 %v4197
        %v4229 = vpop.xlane.xlu0 %4228
        %4230 = vadd.xlane.f32.xlu0 %v4199
        %v4231 = vpop.xlane.xlu0 %4230
        %4232 = vadd.xlane.f32.xlu0 %v4201
        %v4233 = vpop.xlane.xlu0 %4232
        %4234 = vadd.xlane.f32.xlu0 %v4203
        %v4235 = vpop.xlane.xlu0 %4234
        %4236 = vadd.xlane.f32.xlu0 %v4205
        %v4237 = vpop.xlane.xlu0 %4236
        %4238 = vadd.xlane.f32.xlu0 %v4207
        %v4239 = vpop.xlane.xlu0 %4238
        %4240 = vadd.xlane.f32.xlu0 %v4209
        %v4241 = vpop.xlane.xlu0 %4240
        %4242 = vadd.xlane.f32.xlu0 %v4211
        %v4243 = vpop.xlane.xlu0 %4242
        %4244 = vadd.xlane.f32.xlu0 %v4213
        %v4245 = vpop.xlane.xlu0 %4244
        %4246 = vadd.xlane.f32.xlu0 %v4215
        %v4247 = vpop.xlane.xlu0 %4246
        %4248 = vadd.xlane.f32.xlu0 %v4217
        %v4249 = vpop.xlane.xlu0 %4248
        %v4250 = vrcp.pop %v4219
        %v4251 = vrcp.pop %v4221
        %v4252 = vrcp.pop %v4223
        %v4253 = vrcp.pop %v4225
        %v4254 = vrcp.pop %v4227
        %v4255 = vrcp.pop %v4229
        %v4256 = vrcp.pop %v4231
        %v4257 = vrcp.pop %v4233
        %v4258 = vrcp.pop %v4235
        %v4259 = vrcp.pop %v4237
        %v4260 = vrcp.pop %v4239
        %v4261 = vrcp.pop %v4241
        %v4262 = vrcp.pop %v4243
        %v4263 = vrcp.pop %v4245
        %v4264 = vrcp.pop %v4247
        %v4265 = vrcp.pop %v4249
        %v4266 = vmul.f32 %v4187, %v4250
        %v4267 = vmul.f32 %v4189, %v4251
        %v4268 = vmul.f32 %v4191, %v4252
        %v4269 = vmul.f32 %v4193, %v4253
        %v4270 = vmul.f32 %v4195, %v4254
        %v4271 = vmul.f32 %v4197, %v4255
        %v4272 = vmul.f32 %v4199, %v4256
        %v4273 = vmul.f32 %v4201, %v4257
        %v4274 = vmul.f32 %v4203, %v4258
        %v4275 = vmul.f32 %v4205, %v4259
        %v4276 = vmul.f32 %v4207, %v4260
        %v4277 = vmul.f32 %v4209, %v4261
        %v4278 = vmul.f32 %v4211, %v4262
        %v4279 = vmul.f32 %v4213, %v4263
        %v4280 = vmul.f32 %v4215, %v4264
        %v4281 = vmul.f32 %v4217, %v4265
        %v4282 = vpack.c.bf16 %v4267, %v4266
        %v4283 = vpack.c.bf16 %v4269, %v4268
        %v4284 = vpack.c.bf16 %v4271, %v4270
        %v4285 = vpack.c.bf16 %v4273, %v4272
        %v4286 = vpack.c.bf16 %v4275, %v4274
        %v4287 = vpack.c.bf16 %v4277, %v4276
        %v4288 = vpack.c.bf16 %v4279, %v4278
        %v4289 = vpack.c.bf16 %v4281, %v4280
        %4290 = vmatprep.subr.bf16.mxu0 0
        %4291 = vmatpush1.bf16.msra.mxu0 %v3969
        %4292 = vmatprep.subr.bf16.mxu0 0
        %4293 = vmatpush1.bf16.msra.mxu0 %v3970
        %4294 = vmatprep.subr.bf16.mxu0 0
        %4295 = vmatpush1.bf16.msra.mxu0 %v3971
        %4296 = vmatprep.subr.bf16.mxu0 0
        %4297 = vmatpush1.bf16.msra.mxu0 %v3972
        %4298 = vmatprep.subr.bf16.mxu0 0
        %4299 = vmatpush1.bf16.msra.mxu0 %v3973
        %4300 = vmatprep.subr.bf16.mxu0 0
        %4301 = vmatpush1.bf16.msra.mxu0 %v3974
        %4302 = vmatprep.subr.bf16.mxu0 0
        %4303 = vmatpush1.bf16.msra.mxu0 %v3975
        %4304 = vmatprep.subr.bf16.mxu0 0
        %4305 = vmatpush1.bf16.msra.mxu0 %v3976
        %4306 = vmatprep.subr.bf16.mxu0 0
        %4307 = vmatpush1.bf16.msra.mxu0 0
        %4308 = vmatprep.subr.bf16.mxu0 0
        %4309 = vmatpush1.bf16.msra.mxu0 0
        %4310 = vmatprep.subr.bf16.mxu0 0
        %4311 = vmatpush1.bf16.msra.mxu0 0
        %4312 = vmatprep.subr.bf16.mxu0 0
        %4313 = vmatpush1.bf16.msra.mxu0 0
        %4314 = vmatprep.subr.bf16.mxu0 0
        %4315 = vmatpush1.bf16.msra.mxu0 0
        %4316 = vmatprep.subr.bf16.mxu0 0
        %4317 = vmatpush1.bf16.msra.mxu0 0
        %4318 = vmatprep.subr.bf16.mxu0 0
        %4319 = vmatpush1.bf16.msra.mxu0 0
        %4320 = vmatprep.subr.bf16.mxu0 0
        %4321 = vmatpush1.bf16.msra.mxu0 0
        %4322 = vmatprep.mubr.bf16.mxu0 0
        %4323 = vmatmul.mubr.bf16.gmra.mrb[0].mxu0 %v4282
        %v4324 = vpop.f32.mrb[0].mxu0
        %v4325 = vadd.f32 0.0, %v4324
        %v4326 = vpop.f32.mrb[0].mxu0
        %v4327 = vpop.f32.mrb[0].mxu0
        %v4328 = vadd.f32 0.0, %v4327
        %v4329 = vpop.f32.mrb[0].mxu0
        %4330 = vmatprep.mubr.bf16.mxu0 0
        %4331 = vmatmul.mubr.bf16.gmra.mrb[0].mxu0 %v4283
        %v4332 = vpop.f32.mrb[0].mxu0
        %v4333 = vadd.f32 0.0, %v4332
        %v4334 = vpop.f32.mrb[0].mxu0
        %v4335 = vpop.f32.mrb[0].mxu0
        %v4336 = vadd.f32 0.0, %v4335
        %v4337 = vpop.f32.mrb[0].mxu0
        %4338 = vmatprep.mubr.bf16.mxu0 0
        %4339 = vmatmul.mubr.bf16.gmra.mrb[0].mxu0 %v4284
        %v4340 = vpop.f32.mrb[0].mxu0
        %v4341 = vadd.f32 0.0, %v4340
        %v4342 = vpop.f32.mrb[0].mxu0
        %v4343 = vpop.f32.mrb[0].mxu0
        %v4344 = vadd.f32 0.0, %v4343
        %v4345 = vpop.f32.mrb[0].mxu0
        %4346 = vmatprep.mubr.bf16.mxu0 0
        %4347 = vmatmul.mubr.bf16.gmra.mrb[0].mxu0 %v4285
        %v4348 = vpop.f32.mrb[0].mxu0
        %v4349 = vadd.f32 0.0, %v4348
        %v4350 = vpop.f32.mrb[0].mxu0
        %v4351 = vpop.f32.mrb[0].mxu0
        %v4352 = vadd.f32 0.0, %v4351
        %v4353 = vpop.f32.mrb[0].mxu0
        %4354 = vmatprep.mubr.bf16.mxu0 0
        %4355 = vmatmul.mubr.bf16.gmra.mrb[0].mxu0 %v4286
        %v4356 = vpop.f32.mrb[0].mxu0
        %v4357 = vadd.f32 0.0, %v4356
        %v4358 = vpop.f32.mrb[0].mxu0
        %v4359 = vpop.f32.mrb[0].mxu0
        %v4360 = vadd.f32 0.0, %v4359
        %v4361 = vpop.f32.mrb[0].mxu0
        %4362 = vmatprep.mubr.bf16.mxu0 0
        %4363 = vmatmul.mubr.bf16.gmra.mrb[0].mxu0 %v4287
        %v4364 = vpop.f32.mrb[0].mxu0
        %v4365 = vadd.f32 0.0, %v4364
        %v4366 = vpop.f32.mrb[0].mxu0
        %v4367 = vpop.f32.mrb[0].mxu0
        %v4368 = vadd.f32 0.0, %v4367
        %v4369 = vpop.f32.mrb[0].mxu0
        %4370 = vmatprep.mubr.bf16.mxu0 0
        %4371 = vmatmul.mubr.bf16.gmra.mrb[0].mxu0 %v4288
        %v4372 = vpop.f32.mrb[0].mxu0
        %v4373 = vadd.f32 0.0, %v4372
        %v4374 = vpop.f32.mrb[0].mxu0
        %v4375 = vpop.f32.mrb[0].mxu0
        %v4376 = vadd.f32 0.0, %v4375
        %v4377 = vpop.f32.mrb[0].mxu0
        %4378 = vmatprep.mubr.bf16.mxu0 0
        %4379 = vmatmul.mubr.bf16.gmra.mrb[0].mxu0 %v4289
        %v4380 = vpop.f32.mrb[0].mxu0
        %v4381 = vadd.f32 0.0, %v4380
        %v4382 = vpop.f32.mrb[0].mxu0
        %v4383 = vpop.f32.mrb[0].mxu0
        %v4384 = vadd.f32 0.0, %v4383
        %v4385 = vpop.f32.mrb[0].mxu0
        %4386 = vdwg.mxu0
        %v4387 = vpack.c.bf16 %v4328, %v4325
        %v4388 = vpack.c.bf16 %v4336, %v4333
        %v4389 = vpack.c.bf16 %v4344, %v4341
        %v4390 = vpack.c.bf16 %v4352, %v4349
        %v4391 = vpack.c.bf16 %v4360, %v4357
        %v4392 = vpack.c.bf16 %v4368, %v4365
        %v4393 = vpack.c.bf16 %v4376, %v4373
        %v4394 = vpack.c.bf16 %v4384, %v4381
        %4395 = vst.msk [vmem:[#allocation3 + $0x8] sm:$0xff] %vm2963, %v4387
        %4396 = vst.msk [vmem:[#allocation3 + $0x20] sm:$0xff] %vm2963, %v4388
        %4397 = vst.msk [vmem:[#allocation3 + $0x38] sm:$0xff] %vm2963, %v4389
        %4398 = vst.msk [vmem:[#allocation3 + $0x50] sm:$0xff] %vm2963, %v4390
        %4399 = vst.msk [vmem:[#allocation3 + $0x68] sm:$0xff] %vm2963, %v4391
        %4400 = vst.msk [vmem:[#allocation3 + $0x80] sm:$0xff] %vm2963, %v4392
        %4401 = vst.msk [vmem:[#allocation3 + $0x98] sm:$0xff] %vm2963, %v4393
        %4402 = vst.msk [vmem:[#allocation3 + $0xb0] sm:$0xff] %vm2963, %v4394
        %v4403 = vld [vmem:[#allocation2 + $0x8] sm:$0xff]
        %v4404 = vld [vmem:[#allocation2 + $0x50] sm:$0xff]
        %v4405 = vld [vmem:[#allocation2 + $0x98] sm:$0xff]
        %v4406 = vld [vmem:[#allocation2 + $0xe0] sm:$0xff]
        %v4407 = vld [vmem:[#allocation2 + $0x128] sm:$0xff]
        %v4408 = vld [vmem:[#allocation2 + $0x170] sm:$0xff]
        %v4409 = vld [vmem:[#allocation2 + $0x1b8] sm:$0xff]
        %v4410 = vld [vmem:[#allocation2 + $0x200] sm:$0xff]
        %v4411 = vld [vmem:[#allocation2 + $0x20] sm:$0xff]
        %v4412 = vld [vmem:[#allocation2 + $0x68] sm:$0xff]
        %v4413 = vld [vmem:[#allocation2 + $0xb0] sm:$0xff]
        %v4414 = vld [vmem:[#allocation2 + $0xf8] sm:$0xff]
        %v4415 = vld [vmem:[#allocation2 + $0x140] sm:$0xff]
        %v4416 = vld [vmem:[#allocation2 + $0x188] sm:$0xff]
        %v4417 = vld [vmem:[#allocation2 + $0x1d0] sm:$0xff]
        %v4418 = vld [vmem:[#allocation2 + $0x218] sm:$0xff]
        %v4419 = vld [vmem:[#allocation2 + $0x38] sm:$0xff]
        %v4420 = vld [vmem:[#allocation2 + $0x80] sm:$0xff]
        %v4421 = vld [vmem:[#allocation2 + $0xc8] sm:$0xff]
        %v4422 = vld [vmem:[#allocation2 + $0x110] sm:$0xff]
        %v4423 = vld [vmem:[#allocation2 + $0x158] sm:$0xff]
        %v4424 = vld [vmem:[#allocation2 + $0x1a0] sm:$0xff]
        %v4425 = vld [vmem:[#allocation2 + $0x1e8] sm:$0xff]
        %v4426 = vld [vmem:[#allocation2 + $0x230] sm:$0xff]
        %4435 = vrot.lane.b32.xlu0 %v4403, 64
        %v4436 = vpop.permute.xlu0 %4435
        %4437 = vrot.lane.b32.xlu0 %v4404, 64
        %v4438 = vpop.permute.xlu0 %4437
        %4439 = vrot.lane.b32.xlu0 %v4405, 64
        %v4440 = vpop.permute.xlu0 %4439
        %4441 = vrot.lane.b32.xlu0 %v4406, 64
        %v4442 = vpop.permute.xlu0 %4441
        %4443 = vrot.lane.b32.xlu0 %v4407, 64
        %v4444 = vpop.permute.xlu0 %4443
        %4445 = vrot.lane.b32.xlu0 %v4408, 64
        %v4446 = vpop.permute.xlu0 %4445
        %4447 = vrot.lane.b32.xlu0 %v4409, 64
        %v4448 = vpop.permute.xlu0 %4447
        %4449 = vrot.lane.b32.xlu0 %v4410, 64
        %v4450 = vpop.permute.xlu0 %4449
        %4459 = vrot.lane.b32.xlu0 %v4411, 64
        %v4460 = vpop.permute.xlu0 %4459
        %4461 = vrot.lane.b32.xlu0 %v4412, 64
        %v4462 = vpop.permute.xlu0 %4461
        %4463 = vrot.lane.b32.xlu0 %v4413, 64
        %v4464 = vpop.permute.xlu0 %4463
        %4465 = vrot.lane.b32.xlu0 %v4414, 64
        %v4466 = vpop.permute.xlu0 %4465
        %4467 = vrot.lane.b32.xlu0 %v4415, 64
        %v4468 = vpop.permute.xlu0 %4467
        %4469 = vrot.lane.b32.xlu0 %v4416, 64
        %v4470 = vpop.permute.xlu0 %4469
        %4471 = vrot.lane.b32.xlu0 %v4417, 64
        %v4472 = vpop.permute.xlu0 %4471
        %4473 = vrot.lane.b32.xlu0 %v4418, 64
        %v4474 = vpop.permute.xlu0 %4473
        %v4476 = vsel %vm2963, %v4436, 0
        %v4479 = vsel %vm2963, %v4438, 0
        %v4482 = vsel %vm2963, %v4440, 0
        %v4485 = vsel %vm2963, %v4442, 0
        %v4488 = vsel %vm2963, %v4444, 0
        %v4491 = vsel %vm2963, %v4446, 0
        %v4494 = vsel %vm2963, %v4448, 0
        %v4497 = vsel %vm2963, %v4450, 0
        %v4500 = vsel %vm2963, %v4460, 0
        %v4503 = vsel %vm2963, %v4462, 0
        %v4506 = vsel %vm2963, %v4464, 0
        %v4509 = vsel %vm2963, %v4466, 0
        %v4512 = vsel %vm2963, %v4468, 0
        %v4515 = vsel %vm2963, %v4470, 0
        %v4518 = vsel %vm2963, %v4472, 0
        %v4521 = vsel %vm2963, %v4474, 0
        %4523 = vmatprep.subr.bf16.mxu0 0
        %4524 = vmatpush1.bf16.xpose.msra.mxu0 %v4500
        %4525 = vmatprep.subr.bf16.mxu0 0
        %4526 = vmatpush1.bf16.xpose.msra.mxu0 %v4503
        %4527 = vmatprep.subr.bf16.mxu0 0
        %4528 = vmatpush1.bf16.xpose.msra.mxu0 %v4506
        %4529 = vmatprep.subr.bf16.mxu0 0
        %4530 = vmatpush1.bf16.xpose.msra.mxu0 %v4509
        %4531 = vmatprep.subr.bf16.mxu0 0
        %4532 = vmatpush1.bf16.xpose.msra.mxu0 %v4512
        %4533 = vmatprep.subr.bf16.mxu0 0
        %4534 = vmatpush1.bf16.xpose.msra.mxu0 %v4515
        %4535 = vmatprep.subr.bf16.mxu0 0
        %4536 = vmatpush1.bf16.xpose.msra.mxu0 %v4518
        %4537 = vmatprep.subr.bf16.mxu0 0
        %4538 = vmatpush1.bf16.xpose.msra.mxu0 %v4521
        %4539 = vmatprep.subr.bf16.mxu0 0
        %4540 = vmatpush1.bf16.xpose.msra.mxu0 0
        %4541 = vmatprep.subr.bf16.mxu0 0
        %4542 = vmatpush1.bf16.xpose.msra.mxu0 0
        %4543 = vmatprep.subr.bf16.mxu0 0
        %4544 = vmatpush1.bf16.xpose.msra.mxu0 0
        %4545 = vmatprep.subr.bf16.mxu0 0
        %4546 = vmatpush1.bf16.xpose.msra.mxu0 0
        %4547 = vmatprep.subr.bf16.mxu0 0
        %4548 = vmatpush1.bf16.xpose.msra.mxu0 0
        %4549 = vmatprep.subr.bf16.mxu0 0
        %4550 = vmatpush1.bf16.xpose.msra.mxu0 0
        %4551 = vmatprep.subr.bf16.mxu0 0
        %4552 = vmatpush1.bf16.xpose.msra.mxu0 0
        %4553 = vmatprep.subr.bf16.mxu0 0
        %4554 = vmatpush1.bf16.xpose.msra.mxu0 0
        %4555 = vmatprep.mubr.bf16.mxu0 0
        %4556 = vmatmul.mubr.bf16.gmra.mrb[0].mxu0 %v4476
        %v4557 = vpop.f32.mrb[0].mxu0
        %v4558 = vadd.f32 0.0, %v4557
        %v4559 = vpop.f32.mrb[0].mxu0
        %v4560 = vpop.f32.mrb[0].mxu0
        %v4561 = vadd.f32 0.0, %v4560
        %v4562 = vpop.f32.mrb[0].mxu0
        %4563 = vmatprep.mubr.bf16.mxu0 0
        %4564 = vmatmul.mubr.bf16.gmra.mrb[0].mxu0 %v4479
        %v4565 = vpop.f32.mrb[0].mxu0
        %v4566 = vadd.f32 0.0, %v4565
        %v4567 = vpop.f32.mrb[0].mxu0
        %v4568 = vpop.f32.mrb[0].mxu0
        %v4569 = vadd.f32 0.0, %v4568
        %v4570 = vpop.f32.mrb[0].mxu0
        %4571 = vmatprep.mubr.bf16.mxu0 0
        %4572 = vmatmul.mubr.bf16.gmra.mrb[0].mxu0 %v4482
        %v4573 = vpop.f32.mrb[0].mxu0
        %v4574 = vadd.f32 0.0, %v4573
        %v4575 = vpop.f32.mrb[0].mxu0
        %v4576 = vpop.f32.mrb[0].mxu0
        %v4577 = vadd.f32 0.0, %v4576
        %v4578 = vpop.f32.mrb[0].mxu0
        %4579 = vmatprep.mubr.bf16.mxu0 0
        %4580 = vmatmul.mubr.bf16.gmra.mrb[0].mxu0 %v4485
        %v4581 = vpop.f32.mrb[0].mxu0
        %v4582 = vadd.f32 0.0, %v4581
        %v4583 = vpop.f32.mrb[0].mxu0
        %v4584 = vpop.f32.mrb[0].mxu0
        %v4585 = vadd.f32 0.0, %v4584
        %v4586 = vpop.f32.mrb[0].mxu0
        %4587 = vmatprep.mubr.bf16.mxu0 0
        %4588 = vmatmul.mubr.bf16.gmra.mrb[0].mxu0 %v4488
        %v4589 = vpop.f32.mrb[0].mxu0
        %v4590 = vadd.f32 0.0, %v4589
        %v4591 = vpop.f32.mrb[0].mxu0
        %v4592 = vpop.f32.mrb[0].mxu0
        %v4593 = vadd.f32 0.0, %v4592
        %v4594 = vpop.f32.mrb[0].mxu0
        %4595 = vmatprep.mubr.bf16.mxu0 0
        %4596 = vmatmul.mubr.bf16.gmra.mrb[0].mxu0 %v4491
        %v4597 = vpop.f32.mrb[0].mxu0
        %v4598 = vadd.f32 0.0, %v4597
        %v4599 = vpop.f32.mrb[0].mxu0
        %v4600 = vpop.f32.mrb[0].mxu0
        %v4601 = vadd.f32 0.0, %v4600
        %v4602 = vpop.f32.mrb[0].mxu0
        %4603 = vmatprep.mubr.bf16.mxu0 0
        %4604 = vmatmul.mubr.bf16.gmra.mrb[0].mxu0 %v4494
        %v4605 = vpop.f32.mrb[0].mxu0
        %v4606 = vadd.f32 0.0, %v4605
        %v4607 = vpop.f32.mrb[0].mxu0
        %v4608 = vpop.f32.mrb[0].mxu0
        %v4609 = vadd.f32 0.0, %v4608
        %v4610 = vpop.f32.mrb[0].mxu0
        %4611 = vmatprep.mubr.bf16.mxu0 0
        %4612 = vmatmul.mubr.bf16.gmra.mrb[0].mxu0 %v4497
        %v4613 = vpop.f32.mrb[0].mxu0
        %v4614 = vadd.f32 0.0, %v4613
        %v4615 = vpop.f32.mrb[0].mxu0
        %v4616 = vpop.f32.mrb[0].mxu0
        %v4617 = vadd.f32 0.0, %v4616
        %v4618 = vpop.f32.mrb[0].mxu0
        %4619 = vdwg.mxu0
        %v4620 = vsel %vm2923, %v4558, -inf
        %v4621 = vsel %vm2924, %v4561, -inf
        %v4622 = vsel %vm2925, %v4566, -inf
        %v4623 = vsel %vm2926, %v4569, -inf
        %v4624 = vsel %vm2927, %v4574, -inf
        %v4625 = vsel %vm2928, %v4577, -inf
        %v4626 = vsel %vm2929, %v4582, -inf
        %v4627 = vsel %vm2930, %v4585, -inf
        %v4628 = vsel %vm2931, %v4590, -inf
        %v4629 = vsel %vm2932, %v4593, -inf
        %v4630 = vsel %vm2933, %v4598, -inf
        %v4631 = vsel %vm2934, %v4601, -inf
        %v4632 = vsel %vm2935, %v4606, -inf
        %v4633 = vsel %vm2936, %v4609, -inf
        %v4634 = vsel %vm2937, %v4614, -inf
        %v4635 = vsel %vm2938, %v4617, -inf
        %4636 = vmax.xlane.f32.xlu0 %v4620
        %v4637 = vpop.xlane.xlu0 %4636
        %4638 = vmax.xlane.f32.xlu0 %v4621
        %v4639 = vpop.xlane.xlu0 %4638
        %4640 = vmax.xlane.f32.xlu0 %v4622
        %v4641 = vpop.xlane.xlu0 %4640
        %4642 = vmax.xlane.f32.xlu0 %v4623
        %v4643 = vpop.xlane.xlu0 %4642
        %4644 = vmax.xlane.f32.xlu0 %v4624
        %v4645 = vpop.xlane.xlu0 %4644
        %4646 = vmax.xlane.f32.xlu0 %v4625
        %v4647 = vpop.xlane.xlu0 %4646
        %4648 = vmax.xlane.f32.xlu0 %v4626
        %v4649 = vpop.xlane.xlu0 %4648
        %4650 = vmax.xlane.f32.xlu0 %v4627
        %v4651 = vpop.xlane.xlu0 %4650
        %4652 = vmax.xlane.f32.xlu0 %v4628
        %v4653 = vpop.xlane.xlu0 %4652
        %4654 = vmax.xlane.f32.xlu0 %v4629
        %v4655 = vpop.xlane.xlu0 %4654
        %4656 = vmax.xlane.f32.xlu0 %v4630
        %v4657 = vpop.xlane.xlu0 %4656
        %4658 = vmax.xlane.f32.xlu0 %v4631
        %v4659 = vpop.xlane.xlu0 %4658
        %4660 = vmax.xlane.f32.xlu0 %v4632
        %v4661 = vpop.xlane.xlu0 %4660
        %4662 = vmax.xlane.f32.xlu0 %v4633
        %v4663 = vpop.xlane.xlu0 %4662
        %4664 = vmax.xlane.f32.xlu0 %v4634
        %v4665 = vpop.xlane.xlu0 %4664
        %4666 = vmax.xlane.f32.xlu0 %v4635
        %v4667 = vpop.xlane.xlu0 %4666
        %v4668 = vsub.f32 %v4620, %v4637
        %v4669 = vsub.f32 %v4621, %v4639
        %v4670 = vsub.f32 %v4622, %v4641
        %v4671 = vsub.f32 %v4623, %v4643
        %v4672 = vsub.f32 %v4624, %v4645
        %v4673 = vsub.f32 %v4625, %v4647
        %v4674 = vsub.f32 %v4626, %v4649
        %v4675 = vsub.f32 %v4627, %v4651
        %v4676 = vsub.f32 %v4628, %v4653
        %v4677 = vsub.f32 %v4629, %v4655
        %v4678 = vsub.f32 %v4630, %v4657
        %v4679 = vsub.f32 %v4631, %v4659
        %v4680 = vsub.f32 %v4632, %v4661
        %v4681 = vsub.f32 %v4633, %v4663
        %v4682 = vsub.f32 %v4634, %v4665
        %v4683 = vsub.f32 %v4635, %v4667
        %v4684 = vmul.f32 %v4668, 1.442695
        %v4685 = vpow.pop %v4684
        %v4686 = vmul.f32 %v4669, 1.442695
        %v4687 = vpow.pop %v4686
        %v4688 = vmul.f32 %v4670, 1.442695
        %v4689 = vpow.pop %v4688
        %v4690 = vmul.f32 %v4671, 1.442695
        %v4691 = vpow.pop %v4690
        %v4692 = vmul.f32 %v4672, 1.442695
        %v4693 = vpow.pop %v4692
        %v4694 = vmul.f32 %v4673, 1.442695
        %v4695 = vpow.pop %v4694
        %v4696 = vmul.f32 %v4674, 1.442695
        %v4697 = vpow.pop %v4696
        %v4698 = vmul.f32 %v4675, 1.442695
        %v4699 = vpow.pop %v4698
        %v4700 = vmul.f32 %v4676, 1.442695
        %v4701 = vpow.pop %v4700
        %v4702 = vmul.f32 %v4677, 1.442695
        %v4703 = vpow.pop %v4702
        %v4704 = vmul.f32 %v4678, 1.442695
        %v4705 = vpow.pop %v4704
        %v4706 = vmul.f32 %v4679, 1.442695
        %v4707 = vpow.pop %v4706
        %v4708 = vmul.f32 %v4680, 1.442695
        %v4709 = vpow.pop %v4708
        %v4710 = vmul.f32 %v4681, 1.442695
        %v4711 = vpow.pop %v4710
        %v4712 = vmul.f32 %v4682, 1.442695
        %v4713 = vpow.pop %v4712
        %v4714 = vmul.f32 %v4683, 1.442695
        %v4715 = vpow.pop %v4714
        %4716 = vadd.xlane.f32.xlu0 %v4685
        %v4717 = vpop.xlane.xlu0 %4716
        %4718 = vadd.xlane.f32.xlu0 %v4687
        %v4719 = vpop.xlane.xlu0 %4718
        %4720 = vadd.xlane.f32.xlu0 %v4689
        %v4721 = vpop.xlane.xlu0 %4720
        %4722 = vadd.xlane.f32.xlu0 %v4691
        %v4723 = vpop.xlane.xlu0 %4722
        %4724 = vadd.xlane.f32.xlu0 %v4693
        %v4725 = vpop.xlane.xlu0 %4724
        %4726 = vadd.xlane.f32.xlu0 %v4695
        %v4727 = vpop.xlane.xlu0 %4726
        %4728 = vadd.xlane.f32.xlu0 %v4697
        %v4729 = vpop.xlane.xlu0 %4728
        %4730 = vadd.xlane.f32.xlu0 %v4699
        %v4731 = vpop.xlane.xlu0 %4730
        %4732 = vadd.xlane.f32.xlu0 %v4701
        %v4733 = vpop.xlane.xlu0 %4732
        %4734 = vadd.xlane.f32.xlu0 %v4703
        %v4735 = vpop.xlane.xlu0 %4734
        %4736 = vadd.xlane.f32.xlu0 %v4705
        %v4737 = vpop.xlane.xlu0 %4736
        %4738 = vadd.xlane.f32.xlu0 %v4707
        %v4739 = vpop.xlane.xlu0 %4738
        %4740 = vadd.xlane.f32.xlu0 %v4709
        %v4741 = vpop.xlane.xlu0 %4740
        %4742 = vadd.xlane.f32.xlu0 %v4711
        %v4743 = vpop.xlane.xlu0 %4742
        %4744 = vadd.xlane.f32.xlu0 %v4713
        %v4745 = vpop.xlane.xlu0 %4744
        %4746 = vadd.xlane.f32.xlu0 %v4715
        %v4747 = vpop.xlane.xlu0 %4746
        %v4748 = vrcp.pop %v4717
        %v4749 = vrcp.pop %v4719
        %v4750 = vrcp.pop %v4721
        %v4751 = vrcp.pop %v4723
        %v4752 = vrcp.pop %v4725
        %v4753 = vrcp.pop %v4727
        %v4754 = vrcp.pop %v4729
        %v4755 = vrcp.pop %v4731
        %v4756 = vrcp.pop %v4733
        %v4757 = vrcp.pop %v4735
        %v4758 = vrcp.pop %v4737
        %v4759 = vrcp.pop %v4739
        %v4760 = vrcp.pop %v4741
        %v4761 = vrcp.pop %v4743
        %v4762 = vrcp.pop %v4745
        %v4763 = vrcp.pop %v4747
        %v4764 = vmul.f32 %v4685, %v4748
        %v4765 = vmul.f32 %v4687, %v4749
        %v4766 = vmul.f32 %v4689, %v4750
        %v4767 = vmul.f32 %v4691, %v4751
        %v4768 = vmul.f32 %v4693, %v4752
        %v4769 = vmul.f32 %v4695, %v4753
        %v4770 = vmul.f32 %v4697, %v4754
        %v4771 = vmul.f32 %v4699, %v4755
        %v4772 = vmul.f32 %v4701, %v4756
        %v4773 = vmul.f32 %v4703, %v4757
        %v4774 = vmul.f32 %v4705, %v4758
        %v4775 = vmul.f32 %v4707, %v4759
        %v4776 = vmul.f32 %v4709, %v4760
        %v4777 = vmul.f32 %v4711, %v4761
        %v4778 = vmul.f32 %v4713, %v4762
        %v4779 = vmul.f32 %v4715, %v4763
        %v4780 = vpack.c.bf16 %v4765, %v4764
        %v4781 = vpack.c.bf16 %v4767, %v4766
        %v4782 = vpack.c.bf16 %v4769, %v4768
        %v4783 = vpack.c.bf16 %v4771, %v4770
        %v4784 = vpack.c.bf16 %v4773, %v4772
        %v4785 = vpack.c.bf16 %v4775, %v4774
        %v4786 = vpack.c.bf16 %v4777, %v4776
        %v4787 = vpack.c.bf16 %v4779, %v4778
        %4796 = vrot.lane.b32.xlu0 %v4419, 64
        %v4797 = vpop.permute.xlu0 %4796
        %4798 = vrot.lane.b32.xlu0 %v4420, 64
        %v4799 = vpop.permute.xlu0 %4798
        %4800 = vrot.lane.b32.xlu0 %v4421, 64
        %v4801 = vpop.permute.xlu0 %4800
        %4802 = vrot.lane.b32.xlu0 %v4422, 64
        %v4803 = vpop.permute.xlu0 %4802
        %4804 = vrot.lane.b32.xlu0 %v4423, 64
        %v4805 = vpop.permute.xlu0 %4804
        %4806 = vrot.lane.b32.xlu0 %v4424, 64
        %v4807 = vpop.permute.xlu0 %4806
        %4808 = vrot.lane.b32.xlu0 %v4425, 64
        %v4809 = vpop.permute.xlu0 %4808
        %4810 = vrot.lane.b32.xlu0 %v4426, 64
        %v4811 = vpop.permute.xlu0 %4810
        %4820 = vmatprep.subr.bf16.mxu0 0
        %4821 = vmatpush1.bf16.msra.mxu0 %v4797
        %4822 = vmatprep.subr.bf16.mxu0 0
        %4823 = vmatpush1.bf16.msra.mxu0 %v4799
        %4824 = vmatprep.subr.bf16.mxu0 0
        %4825 = vmatpush1.bf16.msra.mxu0 %v4801
        %4826 = vmatprep.subr.bf16.mxu0 0
        %4827 = vmatpush1.bf16.msra.mxu0 %v4803
        %4828 = vmatprep.subr.bf16.mxu0 0
        %4829 = vmatpush1.bf16.msra.mxu0 %v4805
        %4830 = vmatprep.subr.bf16.mxu0 0
        %4831 = vmatpush1.bf16.msra.mxu0 %v4807
        %4832 = vmatprep.subr.bf16.mxu0 0
        %4833 = vmatpush1.bf16.msra.mxu0 %v4809
        %4834 = vmatprep.subr.bf16.mxu0 0
        %4835 = vmatpush1.bf16.msra.mxu0 %v4811
        %4836 = vmatprep.subr.bf16.mxu0 0
        %4837 = vmatpush1.bf16.msra.mxu0 0
        %4838 = vmatprep.subr.bf16.mxu0 0
        %4839 = vmatpush1.bf16.msra.mxu0 0
        %4840 = vmatprep.subr.bf16.mxu0 0
        %4841 = vmatpush1.bf16.msra.mxu0 0
        %4842 = vmatprep.subr.bf16.mxu0 0
        %4843 = vmatpush1.bf16.msra.mxu0 0
        %4844 = vmatprep.subr.bf16.mxu0 0
        %4845 = vmatpush1.bf16.msra.mxu0 0
        %4846 = vmatprep.subr.bf16.mxu0 0
        %4847 = vmatpush1.bf16.msra.mxu0 0
        %4848 = vmatprep.subr.bf16.mxu0 0
        %4849 = vmatpush1.bf16.msra.mxu0 0
        %4850 = vmatprep.subr.bf16.mxu0 0
        %4851 = vmatpush1.bf16.msra.mxu0 0
        %4852 = vmatprep.mubr.bf16.mxu0 0
        %4853 = vmatmul.mubr.bf16.gmra.mrb[0].mxu0 %v4780
        %v4854 = vpop.f32.mrb[0].mxu0
        %v4855 = vadd.f32 0.0, %v4854
        %v4856 = vpop.f32.mrb[0].mxu0
        %v4857 = vpop.f32.mrb[0].mxu0
        %v4858 = vadd.f32 0.0, %v4857
        %v4859 = vpop.f32.mrb[0].mxu0
        %4860 = vmatprep.mubr.bf16.mxu0 0
        %4861 = vmatmul.mubr.bf16.gmra.mrb[0].mxu0 %v4781
        %v4862 = vpop.f32.mrb[0].mxu0
        %v4863 = vadd.f32 0.0, %v4862
        %v4864 = vpop.f32.mrb[0].mxu0
        %v4865 = vpop.f32.mrb[0].mxu0
        %v4866 = vadd.f32 0.0, %v4865
        %v4867 = vpop.f32.mrb[0].mxu0
        %4868 = vmatprep.mubr.bf16.mxu0 0
        %4869 = vmatmul.mubr.bf16.gmra.mrb[0].mxu0 %v4782
        %v4870 = vpop.f32.mrb[0].mxu0
        %v4871 = vadd.f32 0.0, %v4870
        %v4872 = vpop.f32.mrb[0].mxu0
        %v4873 = vpop.f32.mrb[0].mxu0
        %v4874 = vadd.f32 0.0, %v4873
        %v4875 = vpop.f32.mrb[0].mxu0
        %4876 = vmatprep.mubr.bf16.mxu0 0
        %4877 = vmatmul.mubr.bf16.gmra.mrb[0].mxu0 %v4783
        %v4878 = vpop.f32.mrb[0].mxu0
        %v4879 = vadd.f32 0.0, %v4878
        %v4880 = vpop.f32.mrb[0].mxu0
        %v4881 = vpop.f32.mrb[0].mxu0
        %v4882 = vadd.f32 0.0, %v4881
        %v4883 = vpop.f32.mrb[0].mxu0
        %4884 = vmatprep.mubr.bf16.mxu0 0
        %4885 = vmatmul.mubr.bf16.gmra.mrb[0].mxu0 %v4784
        %v4886 = vpop.f32.mrb[0].mxu0
        %v4887 = vadd.f32 0.0, %v4886
        %v4888 = vpop.f32.mrb[0].mxu0
        %v4889 = vpop.f32.mrb[0].mxu0
        %v4890 = vadd.f32 0.0, %v4889
        %v4891 = vpop.f32.mrb[0].mxu0
        %4892 = vmatprep.mubr.bf16.mxu0 0
        %4893 = vmatmul.mubr.bf16.gmra.mrb[0].mxu0 %v4785
        %v4894 = vpop.f32.mrb[0].mxu0
        %v4895 = vadd.f32 0.0, %v4894
        %v4896 = vpop.f32.mrb[0].mxu0
        %v4897 = vpop.f32.mrb[0].mxu0
        %v4898 = vadd.f32 0.0, %v4897
        %v4899 = vpop.f32.mrb[0].mxu0
        %4900 = vmatprep.mubr.bf16.mxu0 0
        %4901 = vmatmul.mubr.bf16.gmra.mrb[0].mxu0 %v4786
        %v4902 = vpop.f32.mrb[0].mxu0
        %v4903 = vadd.f32 0.0, %v4902
        %v4904 = vpop.f32.mrb[0].mxu0
        %v4905 = vpop.f32.mrb[0].mxu0
        %v4906 = vadd.f32 0.0, %v4905
        %v4907 = vpop.f32.mrb[0].mxu0
        %4908 = vmatprep.mubr.bf16.mxu0 0
        %4909 = vmatmul.mubr.bf16.gmra.mrb[0].mxu0 %v4787
        %v4910 = vpop.f32.mrb[0].mxu0
        %v4911 = vadd.f32 0.0, %v4910
        %v4912 = vpop.f32.mrb[0].mxu0
        %v4913 = vpop.f32.mrb[0].mxu0
        %v4914 = vadd.f32 0.0, %v4913
        %v4915 = vpop.f32.mrb[0].mxu0
        %4916 = vdwg.mxu0
        %v4917 = vpack.c.bf16 %v4858, %v4855
        %v4918 = vpack.c.bf16 %v4866, %v4863
        %v4919 = vpack.c.bf16 %v4874, %v4871
        %v4920 = vpack.c.bf16 %v4882, %v4879
        %v4921 = vpack.c.bf16 %v4890, %v4887
        %v4922 = vpack.c.bf16 %v4898, %v4895
        %v4923 = vpack.c.bf16 %v4906, %v4903
        %v4924 = vpack.c.bf16 %v4914, %v4911
        %4933 = vrot.lane.b32.xlu0 %v4917, 64
        %v4934 = vpop.permute.xlu0 %4933
        %4935 = vrot.lane.b32.xlu0 %v4918, 64
        %v4936 = vpop.permute.xlu0 %4935
        %4937 = vrot.lane.b32.xlu0 %v4919, 64
        %v4938 = vpop.permute.xlu0 %4937
        %4939 = vrot.lane.b32.xlu0 %v4920, 64
        %v4940 = vpop.permute.xlu0 %4939
        %4941 = vrot.lane.b32.xlu0 %v4921, 64
        %v4942 = vpop.permute.xlu0 %4941
        %4943 = vrot.lane.b32.xlu0 %v4922, 64
        %v4944 = vpop.permute.xlu0 %4943
        %4945 = vrot.lane.b32.xlu0 %v4923, 64
        %v4946 = vpop.permute.xlu0 %4945
        %4947 = vrot.lane.b32.xlu0 %v4924, 64
        %v4948 = vpop.permute.xlu0 %4947
        %4957 = vst.msk [vmem:[#allocation3 + $0x8] sm:$0xff] %vm3944, %v4934
        %4958 = vst.msk [vmem:[#allocation3 + $0x20] sm:$0xff] %vm3944, %v4936
        %4959 = vst.msk [vmem:[#allocation3 + $0x38] sm:$0xff] %vm3944, %v4938
        %4960 = vst.msk [vmem:[#allocation3 + $0x50] sm:$0xff] %vm3944, %v4940
        %4961 = vst.msk [vmem:[#allocation3 + $0x68] sm:$0xff] %vm3944, %v4942
        %4962 = vst.msk [vmem:[#allocation3 + $0x80] sm:$0xff] %vm3944, %v4944
        %4963 = vst.msk [vmem:[#allocation3 + $0x98] sm:$0xff] %vm3944, %v4946
        %4964 = vst.msk [vmem:[#allocation3 + $0xb0] sm:$0xff] %vm3944, %v4948
        %v4965 = vld [vmem:[#allocation2 + $0x10] sm:$0xff]
        %v4966 = vld [vmem:[#allocation2 + $0x58] sm:$0xff]
        %v4967 = vld [vmem:[#allocation2 + $0xa0] sm:$0xff]
        %v4968 = vld [vmem:[#allocation2 + $0xe8] sm:$0xff]
        %v4969 = vld [vmem:[#allocation2 + $0x130] sm:$0xff]
        %v4970 = vld [vmem:[#allocation2 + $0x178] sm:$0xff]
        %v4971 = vld [vmem:[#allocation2 + $0x1c0] sm:$0xff]
        %v4972 = vld [vmem:[#allocation2 + $0x208] sm:$0xff]
        %v4973 = vld [vmem:[#allocation2 + $0x28] sm:$0xff]
        %v4974 = vld [vmem:[#allocation2 + $0x70] sm:$0xff]
        %v4975 = vld [vmem:[#allocation2 + $0xb8] sm:$0xff]
        %v4976 = vld [vmem:[#allocation2 + $0x100] sm:$0xff]
        %v4977 = vld [vmem:[#allocation2 + $0x148] sm:$0xff]
        %v4978 = vld [vmem:[#allocation2 + $0x190] sm:$0xff]
        %v4979 = vld [vmem:[#allocation2 + $0x1d8] sm:$0xff]
        %v4980 = vld [vmem:[#allocation2 + $0x220] sm:$0xff]
        %v4981 = vld [vmem:[#allocation2 + $0x40] sm:$0xff]
        %v4982 = vld [vmem:[#allocation2 + $0x88] sm:$0xff]
        %v4983 = vld [vmem:[#allocation2 + $0xd0] sm:$0xff]
        %v4984 = vld [vmem:[#allocation2 + $0x118] sm:$0xff]
        %v4985 = vld [vmem:[#allocation2 + $0x160] sm:$0xff]
        %v4986 = vld [vmem:[#allocation2 + $0x1a8] sm:$0xff]
        %v4987 = vld [vmem:[#allocation2 + $0x1f0] sm:$0xff]
        %v4988 = vld [vmem:[#allocation2 + $0x238] sm:$0xff]
        %v4990 = vsel %vm2963, %v4965, 0
        %v4993 = vsel %vm2963, %v4966, 0
        %v4996 = vsel %vm2963, %v4967, 0
        %v4999 = vsel %vm2963, %v4968, 0
        %v5002 = vsel %vm2963, %v4969, 0
        %v5005 = vsel %vm2963, %v4970, 0
        %v5008 = vsel %vm2963, %v4971, 0
        %v5011 = vsel %vm2963, %v4972, 0
        %v5014 = vsel %vm2963, %v4973, 0
        %v5017 = vsel %vm2963, %v4974, 0
        %v5020 = vsel %vm2963, %v4975, 0
        %v5023 = vsel %vm2963, %v4976, 0
        %v5026 = vsel %vm2963, %v4977, 0
        %v5029 = vsel %vm2963, %v4978, 0
        %v5032 = vsel %vm2963, %v4979, 0
        %v5035 = vsel %vm2963, %v4980, 0
        %5037 = vmatprep.subr.bf16.mxu0 0
        %5038 = vmatpush1.bf16.xpose.msra.mxu0 %v5014
        %5039 = vmatprep.subr.bf16.mxu0 0
        %5040 = vmatpush1.bf16.xpose.msra.mxu0 %v5017
        %5041 = vmatprep.subr.bf16.mxu0 0
        %5042 = vmatpush1.bf16.xpose.msra.mxu0 %v5020
        %5043 = vmatprep.subr.bf16.mxu0 0
        %5044 = vmatpush1.bf16.xpose.msra.mxu0 %v5023
        %5045 = vmatprep.subr.bf16.mxu0 0
        %5046 = vmatpush1.bf16.xpose.msra.mxu0 %v5026
        %5047 = vmatprep.subr.bf16.mxu0 0
        %5048 = vmatpush1.bf16.xpose.msra.mxu0 %v5029
        %5049 = vmatprep.subr.bf16.mxu0 0
        %5050 = vmatpush1.bf16.xpose.msra.mxu0 %v5032
        %5051 = vmatprep.subr.bf16.mxu0 0
        %5052 = vmatpush1.bf16.xpose.msra.mxu0 %v5035
        %5053 = vmatprep.subr.bf16.mxu0 0
        %5054 = vmatpush1.bf16.xpose.msra.mxu0 0
        %5055 = vmatprep.subr.bf16.mxu0 0
        %5056 = vmatpush1.bf16.xpose.msra.mxu0 0
        %5057 = vmatprep.subr.bf16.mxu0 0
        %5058 = vmatpush1.bf16.xpose.msra.mxu0 0
        %5059 = vmatprep.subr.bf16.mxu0 0
        %5060 = vmatpush1.bf16.xpose.msra.mxu0 0
        %5061 = vmatprep.subr.bf16.mxu0 0
        %5062 = vmatpush1.bf16.xpose.msra.mxu0 0
        %5063 = vmatprep.subr.bf16.mxu0 0
        %5064 = vmatpush1.bf16.xpose.msra.mxu0 0
        %5065 = vmatprep.subr.bf16.mxu0 0
        %5066 = vmatpush1.bf16.xpose.msra.mxu0 0
        %5067 = vmatprep.subr.bf16.mxu0 0
        %5068 = vmatpush1.bf16.xpose.msra.mxu0 0
        %5069 = vmatprep.mubr.bf16.mxu0 0
        %5070 = vmatmul.mubr.bf16.gmra.mrb[0].mxu0 %v4990
        %v5071 = vpop.f32.mrb[0].mxu0
        %v5072 = vadd.f32 0.0, %v5071
        %v5073 = vpop.f32.mrb[0].mxu0
        %v5074 = vpop.f32.mrb[0].mxu0
        %v5075 = vadd.f32 0.0, %v5074
        %v5076 = vpop.f32.mrb[0].mxu0
        %5077 = vmatprep.mubr.bf16.mxu0 0
        %5078 = vmatmul.mubr.bf16.gmra.mrb[0].mxu0 %v4993
        %v5079 = vpop.f32.mrb[0].mxu0
        %v5080 = vadd.f32 0.0, %v5079
        %v5081 = vpop.f32.mrb[0].mxu0
        %v5082 = vpop.f32.mrb[0].mxu0
        %v5083 = vadd.f32 0.0, %v5082
        %v5084 = vpop.f32.mrb[0].mxu0
        %5085 = vmatprep.mubr.bf16.mxu0 0
        %5086 = vmatmul.mubr.bf16.gmra.mrb[0].mxu0 %v4996
        %v5087 = vpop.f32.mrb[0].mxu0
        %v5088 = vadd.f32 0.0, %v5087
        %v5089 = vpop.f32.mrb[0].mxu0
        %v5090 = vpop.f32.mrb[0].mxu0
        %v5091 = vadd.f32 0.0, %v5090
        %v5092 = vpop.f32.mrb[0].mxu0
        %5093 = vmatprep.mubr.bf16.mxu0 0
        %5094 = vmatmul.mubr.bf16.gmra.mrb[0].mxu0 %v4999
        %v5095 = vpop.f32.mrb[0].mxu0
        %v5096 = vadd.f32 0.0, %v5095
        %v5097 = vpop.f32.mrb[0].mxu0
        %v5098 = vpop.f32.mrb[0].mxu0
        %v5099 = vadd.f32 0.0, %v5098
        %v5100 = vpop.f32.mrb[0].mxu0
        %5101 = vmatprep.mubr.bf16.mxu0 0
        %5102 = vmatmul.mubr.bf16.gmra.mrb[0].mxu0 %v5002
        %v5103 = vpop.f32.mrb[0].mxu0
        %v5104 = vadd.f32 0.0, %v5103
        %v5105 = vpop.f32.mrb[0].mxu0
        %v5106 = vpop.f32.mrb[0].mxu0
        %v5107 = vadd.f32 0.0, %v5106
        %v5108 = vpop.f32.mrb[0].mxu0
        %5109 = vmatprep.mubr.bf16.mxu0 0
        %5110 = vmatmul.mubr.bf16.gmra.mrb[0].mxu0 %v5005
        %v5111 = vpop.f32.mrb[0].mxu0
        %v5112 = vadd.f32 0.0, %v5111
        %v5113 = vpop.f32.mrb[0].mxu0
        %v5114 = vpop.f32.mrb[0].mxu0
        %v5115 = vadd.f32 0.0, %v5114
        %v5116 = vpop.f32.mrb[0].mxu0
        %5117 = vmatprep.mubr.bf16.mxu0 0
        %5118 = vmatmul.mubr.bf16.gmra.mrb[0].mxu0 %v5008
        %v5119 = vpop.f32.mrb[0].mxu0
        %v5120 = vadd.f32 0.0, %v5119
        %v5121 = vpop.f32.mrb[0].mxu0
        %v5122 = vpop.f32.mrb[0].mxu0
        %v5123 = vadd.f32 0.0, %v5122
        %v5124 = vpop.f32.mrb[0].mxu0
        %5125 = vmatprep.mubr.bf16.mxu0 0
        %5126 = vmatmul.mubr.bf16.gmra.mrb[0].mxu0 %v5011
        %v5127 = vpop.f32.mrb[0].mxu0
        %v5128 = vadd.f32 0.0, %v5127
        %v5129 = vpop.f32.mrb[0].mxu0
        %v5130 = vpop.f32.mrb[0].mxu0
        %v5131 = vadd.f32 0.0, %v5130
        %v5132 = vpop.f32.mrb[0].mxu0
        %5133 = vdwg.mxu0
        %v5134 = vsel %vm2923, %v5072, -inf
        %v5135 = vsel %vm2924, %v5075, -inf
        %v5136 = vsel %vm2925, %v5080, -inf
        %v5137 = vsel %vm2926, %v5083, -inf
        %v5138 = vsel %vm2927, %v5088, -inf
        %v5139 = vsel %vm2928, %v5091, -inf
        %v5140 = vsel %vm2929, %v5096, -inf
        %v5141 = vsel %vm2930, %v5099, -inf
        %v5142 = vsel %vm2931, %v5104, -inf
        %v5143 = vsel %vm2932, %v5107, -inf
        %v5144 = vsel %vm2933, %v5112, -inf
        %v5145 = vsel %vm2934, %v5115, -inf
        %v5146 = vsel %vm2935, %v5120, -inf
        %v5147 = vsel %vm2936, %v5123, -inf
        %v5148 = vsel %vm2937, %v5128, -inf
        %v5149 = vsel %vm2938, %v5131, -inf
        %5150 = vmax.xlane.f32.xlu0 %v5134
        %v5151 = vpop.xlane.xlu0 %5150
        %5152 = vmax.xlane.f32.xlu0 %v5135
        %v5153 = vpop.xlane.xlu0 %5152
        %5154 = vmax.xlane.f32.xlu0 %v5136
        %v5155 = vpop.xlane.xlu0 %5154
        %5156 = vmax.xlane.f32.xlu0 %v5137
        %v5157 = vpop.xlane.xlu0 %5156
        %5158 = vmax.xlane.f32.xlu0 %v5138
        %v5159 = vpop.xlane.xlu0 %5158
        %5160 = vmax.xlane.f32.xlu0 %v5139
        %v5161 = vpop.xlane.xlu0 %5160
        %5162 = vmax.xlane.f32.xlu0 %v5140
        %v5163 = vpop.xlane.xlu0 %5162
        %5164 = vmax.xlane.f32.xlu0 %v5141
        %v5165 = vpop.xlane.xlu0 %5164
        %5166 = vmax.xlane.f32.xlu0 %v5142
        %v5167 = vpop.xlane.xlu0 %5166
        %5168 = vmax.xlane.f32.xlu0 %v5143
        %v5169 = vpop.xlane.xlu0 %5168
        %5170 = vmax.xlane.f32.xlu0 %v5144
        %v5171 = vpop.xlane.xlu0 %5170
        %5172 = vmax.xlane.f32.xlu0 %v5145
        %v5173 = vpop.xlane.xlu0 %5172
        %5174 = vmax.xlane.f32.xlu0 %v5146
        %v5175 = vpop.xlane.xlu0 %5174
        %5176 = vmax.xlane.f32.xlu0 %v5147
        %v5177 = vpop.xlane.xlu0 %5176
        %5178 = vmax.xlane.f32.xlu0 %v5148
        %v5179 = vpop.xlane.xlu0 %5178
        %5180 = vmax.xlane.f32.xlu0 %v5149
        %v5181 = vpop.xlane.xlu0 %5180
        %v5182 = vsub.f32 %v5134, %v5151
        %v5183 = vsub.f32 %v5135, %v5153
        %v5184 = vsub.f32 %v5136, %v5155
        %v5185 = vsub.f32 %v5137, %v5157
        %v5186 = vsub.f32 %v5138, %v5159
        %v5187 = vsub.f32 %v5139, %v5161
        %v5188 = vsub.f32 %v5140, %v5163
        %v5189 = vsub.f32 %v5141, %v5165
        %v5190 = vsub.f32 %v5142, %v5167
        %v5191 = vsub.f32 %v5143, %v5169
        %v5192 = vsub.f32 %v5144, %v5171
        %v5193 = vsub.f32 %v5145, %v5173
        %v5194 = vsub.f32 %v5146, %v5175
        %v5195 = vsub.f32 %v5147, %v5177
        %v5196 = vsub.f32 %v5148, %v5179
        %v5197 = vsub.f32 %v5149, %v5181
        %v5198 = vmul.f32 %v5182, 1.442695
        %v5199 = vpow.pop %v5198
        %v5200 = vmul.f32 %v5183, 1.442695
        %v5201 = vpow.pop %v5200
        %v5202 = vmul.f32 %v5184, 1.442695
        %v5203 = vpow.pop %v5202
        %v5204 = vmul.f32 %v5185, 1.442695
        %v5205 = vpow.pop %v5204
        %v5206 = vmul.f32 %v5186, 1.442695
        %v5207 = vpow.pop %v5206
        %v5208 = vmul.f32 %v5187, 1.442695
        %v5209 = vpow.pop %v5208
        %v5210 = vmul.f32 %v5188, 1.442695
        %v5211 = vpow.pop %v5210
        %v5212 = vmul.f32 %v5189, 1.442695
        %v5213 = vpow.pop %v5212
        %v5214 = vmul.f32 %v5190, 1.442695
        %v5215 = vpow.pop %v5214
        %v5216 = vmul.f32 %v5191, 1.442695
        %v5217 = vpow.pop %v5216
        %v5218 = vmul.f32 %v5192, 1.442695
        %v5219 = vpow.pop %v5218
        %v5220 = vmul.f32 %v5193, 1.442695
        %v5221 = vpow.pop %v5220
        %v5222 = vmul.f32 %v5194, 1.442695
        %v5223 = vpow.pop %v5222
        %v5224 = vmul.f32 %v5195, 1.442695
        %v5225 = vpow.pop %v5224
        %v5226 = vmul.f32 %v5196, 1.442695
        %v5227 = vpow.pop %v5226
        %v5228 = vmul.f32 %v5197, 1.442695
        %v5229 = vpow.pop %v5228
        %5230 = vadd.xlane.f32.xlu0 %v5199
        %v5231 = vpop.xlane.xlu0 %5230
        %5232 = vadd.xlane.f32.xlu0 %v5201
        %v5233 = vpop.xlane.xlu0 %5232
        %5234 = vadd.xlane.f32.xlu0 %v5203
        %v5235 = vpop.xlane.xlu0 %5234
        %5236 = vadd.xlane.f32.xlu0 %v5205
        %v5237 = vpop.xlane.xlu0 %5236
        %5238 = vadd.xlane.f32.xlu0 %v5207
        %v5239 = vpop.xlane.xlu0 %5238
        %5240 = vadd.xlane.f32.xlu0 %v5209
        %v5241 = vpop.xlane.xlu0 %5240
        %5242 = vadd.xlane.f32.xlu0 %v5211
        %v5243 = vpop.xlane.xlu0 %5242
        %5244 = vadd.xlane.f32.xlu0 %v5213
        %v5245 = vpop.xlane.xlu0 %5244
        %5246 = vadd.xlane.f32.xlu0 %v5215
        %v5247 = vpop.xlane.xlu0 %5246
        %5248 = vadd.xlane.f32.xlu0 %v5217
        %v5249 = vpop.xlane.xlu0 %5248
        %5250 = vadd.xlane.f32.xlu0 %v5219
        %v5251 = vpop.xlane.xlu0 %5250
        %5252 = vadd.xlane.f32.xlu0 %v5221
        %v5253 = vpop.xlane.xlu0 %5252
        %5254 = vadd.xlane.f32.xlu0 %v5223
        %v5255 = vpop.xlane.xlu0 %5254
        %5256 = vadd.xlane.f32.xlu0 %v5225
        %v5257 = vpop.xlane.xlu0 %5256
        %5258 = vadd.xlane.f32.xlu0 %v5227
        %v5259 = vpop.xlane.xlu0 %5258
        %5260 = vadd.xlane.f32.xlu0 %v5229
        %v5261 = vpop.xlane.xlu0 %5260
        %v5262 = vrcp.pop %v5231
        %v5263 = vrcp.pop %v5233
        %v5264 = vrcp.pop %v5235
        %v5265 = vrcp.pop %v5237
        %v5266 = vrcp.pop %v5239
        %v5267 = vrcp.pop %v5241
        %v5268 = vrcp.pop %v5243
        %v5269 = vrcp.pop %v5245
        %v5270 = vrcp.pop %v5247
        %v5271 = vrcp.pop %v5249
        %v5272 = vrcp.pop %v5251
        %v5273 = vrcp.pop %v5253
        %v5274 = vrcp.pop %v5255
        %v5275 = vrcp.pop %v5257
        %v5276 = vrcp.pop %v5259
        %v5277 = vrcp.pop %v5261
        %v5278 = vmul.f32 %v5199, %v5262
        %v5279 = vmul.f32 %v5201, %v5263
        %v5280 = vmul.f32 %v5203, %v5264
        %v5281 = vmul.f32 %v5205, %v5265
        %v5282 = vmul.f32 %v5207, %v5266
        %v5283 = vmul.f32 %v5209, %v5267
        %v5284 = vmul.f32 %v5211, %v5268
        %v5285 = vmul.f32 %v5213, %v5269
        %v5286 = vmul.f32 %v5215, %v5270
        %v5287 = vmul.f32 %v5217, %v5271
        %v5288 = vmul.f32 %v5219, %v5272
        %v5289 = vmul.f32 %v5221, %v5273
        %v5290 = vmul.f32 %v5223, %v5274
        %v5291 = vmul.f32 %v5225, %v5275
        %v5292 = vmul.f32 %v5227, %v5276
        %v5293 = vmul.f32 %v5229, %v5277
        %v5294 = vpack.c.bf16 %v5279, %v5278
        %v5295 = vpack.c.bf16 %v5281, %v5280
        %v5296 = vpack.c.bf16 %v5283, %v5282
        %v5297 = vpack.c.bf16 %v5285, %v5284
        %v5298 = vpack.c.bf16 %v5287, %v5286
        %v5299 = vpack.c.bf16 %v5289, %v5288
        %v5300 = vpack.c.bf16 %v5291, %v5290
        %v5301 = vpack.c.bf16 %v5293, %v5292
        %5302 = vmatprep.subr.bf16.mxu0 0
        %5303 = vmatpush1.bf16.msra.mxu0 %v4981
        %5304 = vmatprep.subr.bf16.mxu0 0
        %5305 = vmatpush1.bf16.msra.mxu0 %v4982
        %5306 = vmatprep.subr.bf16.mxu0 0
        %5307 = vmatpush1.bf16.msra.mxu0 %v4983
        %5308 = vmatprep.subr.bf16.mxu0 0
        %5309 = vmatpush1.bf16.msra.mxu0 %v4984
        %5310 = vmatprep.subr.bf16.mxu0 0
        %5311 = vmatpush1.bf16.msra.mxu0 %v4985
        %5312 = vmatprep.subr.bf16.mxu0 0
        %5313 = vmatpush1.bf16.msra.mxu0 %v4986
        %5314 = vmatprep.subr.bf16.mxu0 0
        %5315 = vmatpush1.bf16.msra.mxu0 %v4987
        %5316 = vmatprep.subr.bf16.mxu0 0
        %5317 = vmatpush1.bf16.msra.mxu0 %v4988
        %5318 = vmatprep.subr.bf16.mxu0 0
        %5319 = vmatpush1.bf16.msra.mxu0 0
        %5320 = vmatprep.subr.bf16.mxu0 0
        %5321 = vmatpush1.bf16.msra.mxu0 0
        %5322 = vmatprep.subr.bf16.mxu0 0
        %5323 = vmatpush1.bf16.msra.mxu0 0
        %5324 = vmatprep.subr.bf16.mxu0 0
        %5325 = vmatpush1.bf16.msra.mxu0 0
        %5326 = vmatprep.subr.bf16.mxu0 0
        %5327 = vmatpush1.bf16.msra.mxu0 0
        %5328 = vmatprep.subr.bf16.mxu0 0
        %5329 = vmatpush1.bf16.msra.mxu0 0
        %5330 = vmatprep.subr.bf16.mxu0 0
        %5331 = vmatpush1.bf16.msra.mxu0 0
        %5332 = vmatprep.subr.bf16.mxu0 0
        %5333 = vmatpush1.bf16.msra.mxu0 0
        %5334 = vmatprep.mubr.bf16.mxu0 0
        %5335 = vmatmul.mubr.bf16.gmra.mrb[0].mxu0 %v5294
        %v5336 = vpop.f32.mrb[0].mxu0
        %v5337 = vadd.f32 0.0, %v5336
        %v5338 = vpop.f32.mrb[0].mxu0
        %v5339 = vpop.f32.mrb[0].mxu0
        %v5340 = vadd.f32 0.0, %v5339
        %v5341 = vpop.f32.mrb[0].mxu0
        %5342 = vmatprep.mubr.bf16.mxu0 0
        %5343 = vmatmul.mubr.bf16.gmra.mrb[0].mxu0 %v5295
        %v5344 = vpop.f32.mrb[0].mxu0
        %v5345 = vadd.f32 0.0, %v5344
        %v5346 = vpop.f32.mrb[0].mxu0
        %v5347 = vpop.f32.mrb[0].mxu0
        %v5348 = vadd.f32 0.0, %v5347
        %v5349 = vpop.f32.mrb[0].mxu0
        %5350 = vmatprep.mubr.bf16.mxu0 0
        %5351 = vmatmul.mubr.bf16.gmra.mrb[0].mxu0 %v5296
        %v5352 = vpop.f32.mrb[0].mxu0
        %v5353 = vadd.f32 0.0, %v5352
        %v5354 = vpop.f32.mrb[0].mxu0
        %v5355 = vpop.f32.mrb[0].mxu0
        %v5356 = vadd.f32 0.0, %v5355
        %v5357 = vpop.f32.mrb[0].mxu0
        %5358 = vmatprep.mubr.bf16.mxu0 0
        %5359 = vmatmul.mubr.bf16.gmra.mrb[0].mxu0 %v5297
        %v5360 = vpop.f32.mrb[0].mxu0
        %v5361 = vadd.f32 0.0, %v5360
        %v5362 = vpop.f32.mrb[0].mxu0
        %v5363 = vpop.f32.mrb[0].mxu0
        %v5364 = vadd.f32 0.0, %v5363
        %v5365 = vpop.f32.mrb[0].mxu0
        %5366 = vmatprep.mubr.bf16.mxu0 0
        %5367 = vmatmul.mubr.bf16.gmra.mrb[0].mxu0 %v5298
        %v5368 = vpop.f32.mrb[0].mxu0
        %v5369 = vadd.f32 0.0, %v5368
        %v5370 = vpop.f32.mrb[0].mxu0
        %v5371 = vpop.f32.mrb[0].mxu0
        %v5372 = vadd.f32 0.0, %v5371
        %v5373 = vpop.f32.mrb[0].mxu0
        %5374 = vmatprep.mubr.bf16.mxu0 0
        %5375 = vmatmul.mubr.bf16.gmra.mrb[0].mxu0 %v5299
        %v5376 = vpop.f32.mrb[0].mxu0
        %v5377 = vadd.f32 0.0, %v5376
        %v5378 = vpop.f32.mrb[0].mxu0
        %v5379 = vpop.f32.mrb[0].mxu0
        %v5380 = vadd.f32 0.0, %v5379
        %v5381 = vpop.f32.mrb[0].mxu0
        %5382 = vmatprep.mubr.bf16.mxu0 0
        %5383 = vmatmul.mubr.bf16.gmra.mrb[0].mxu0 %v5300
        %v5384 = vpop.f32.mrb[0].mxu0
        %v5385 = vadd.f32 0.0, %v5384
        %v5386 = vpop.f32.mrb[0].mxu0
        %v5387 = vpop.f32.mrb[0].mxu0
        %v5388 = vadd.f32 0.0, %v5387
        %v5389 = vpop.f32.mrb[0].mxu0
        %5390 = vmatprep.mubr.bf16.mxu0 0
        %5391 = vmatmul.mubr.bf16.gmra.mrb[0].mxu0 %v5301
        %v5392 = vpop.f32.mrb[0].mxu0
        %v5393 = vadd.f32 0.0, %v5392
        %v5394 = vpop.f32.mrb[0].mxu0
        %v5395 = vpop.f32.mrb[0].mxu0
        %v5396 = vadd.f32 0.0, %v5395
        %v5397 = vpop.f32.mrb[0].mxu0
        %5398 = vdwg.mxu0
        %v5399 = vpack.c.bf16 %v5340, %v5337
        %v5400 = vpack.c.bf16 %v5348, %v5345
        %v5401 = vpack.c.bf16 %v5356, %v5353
        %v5402 = vpack.c.bf16 %v5364, %v5361
        %v5403 = vpack.c.bf16 %v5372, %v5369
        %v5404 = vpack.c.bf16 %v5380, %v5377
        %v5405 = vpack.c.bf16 %v5388, %v5385
        %v5406 = vpack.c.bf16 %v5396, %v5393
        %5407 = vst.msk [vmem:[#allocation3 + $0x10] sm:$0xff] %vm2963, %v5399
        %5408 = vst.msk [vmem:[#allocation3 + $0x28] sm:$0xff] %vm2963, %v5400
        %5409 = vst.msk [vmem:[#allocation3 + $0x40] sm:$0xff] %vm2963, %v5401
        %5410 = vst.msk [vmem:[#allocation3 + $0x58] sm:$0xff] %vm2963, %v5402
        %5411 = vst.msk [vmem:[#allocation3 + $0x70] sm:$0xff] %vm2963, %v5403
        %5412 = vst.msk [vmem:[#allocation3 + $0x88] sm:$0xff] %vm2963, %v5404
        %5413 = vst.msk [vmem:[#allocation3 + $0xa0] sm:$0xff] %vm2963, %v5405
        %5414 = vst.msk [vmem:[#allocation3 + $0xb8] sm:$0xff] %vm2963, %v5406
        %v5415 = vld [vmem:[#allocation2 + $0x10] sm:$0xff]
        %v5416 = vld [vmem:[#allocation2 + $0x58] sm:$0xff]
        %v5417 = vld [vmem:[#allocation2 + $0xa0] sm:$0xff]
        %v5418 = vld [vmem:[#allocation2 + $0xe8] sm:$0xff]
        %v5419 = vld [vmem:[#allocation2 + $0x130] sm:$0xff]
        %v5420 = vld [vmem:[#allocation2 + $0x178] sm:$0xff]
        %v5421 = vld [vmem:[#allocation2 + $0x1c0] sm:$0xff]
        %v5422 = vld [vmem:[#allocation2 + $0x208] sm:$0xff]
        %v5423 = vld [vmem:[#allocation2 + $0x28] sm:$0xff]
        %v5424 = vld [vmem:[#allocation2 + $0x70] sm:$0xff]
        %v5425 = vld [vmem:[#allocation2 + $0xb8] sm:$0xff]
        %v5426 = vld [vmem:[#allocation2 + $0x100] sm:$0xff]
        %v5427 = vld [vmem:[#allocation2 + $0x148] sm:$0xff]
        %v5428 = vld [vmem:[#allocation2 + $0x190] sm:$0xff]
        %v5429 = vld [vmem:[#allocation2 + $0x1d8] sm:$0xff]
        %v5430 = vld [vmem:[#allocation2 + $0x220] sm:$0xff]
        %v5431 = vld [vmem:[#allocation2 + $0x40] sm:$0xff]
        %v5432 = vld [vmem:[#allocation2 + $0x88] sm:$0xff]
        %v5433 = vld [vmem:[#allocation2 + $0xd0] sm:$0xff]
        %v5434 = vld [vmem:[#allocation2 + $0x118] sm:$0xff]
        %v5435 = vld [vmem:[#allocation2 + $0x160] sm:$0xff]
        %v5436 = vld [vmem:[#allocation2 + $0x1a8] sm:$0xff]
        %v5437 = vld [vmem:[#allocation2 + $0x1f0] sm:$0xff]
        %v5438 = vld [vmem:[#allocation2 + $0x238] sm:$0xff]
        %5447 = vrot.lane.b32.xlu0 %v5415, 64
        %v5448 = vpop.permute.xlu0 %5447
        %5449 = vrot.lane.b32.xlu0 %v5416, 64
        %v5450 = vpop.permute.xlu0 %5449
        %5451 = vrot.lane.b32.xlu0 %v5417, 64
        %v5452 = vpop.permute.xlu0 %5451
        %5453 = vrot.lane.b32.xlu0 %v5418, 64
        %v5454 = vpop.permute.xlu0 %5453
        %5455 = vrot.lane.b32.xlu0 %v5419, 64
        %v5456 = vpop.permute.xlu0 %5455
        %5457 = vrot.lane.b32.xlu0 %v5420, 64
        %v5458 = vpop.permute.xlu0 %5457
        %5459 = vrot.lane.b32.xlu0 %v5421, 64
        %v5460 = vpop.permute.xlu0 %5459
        %5461 = vrot.lane.b32.xlu0 %v5422, 64
        %v5462 = vpop.permute.xlu0 %5461
        %5471 = vrot.lane.b32.xlu0 %v5423, 64
        %v5472 = vpop.permute.xlu0 %5471
        %5473 = vrot.lane.b32.xlu0 %v5424, 64
        %v5474 = vpop.permute.xlu0 %5473
        %5475 = vrot.lane.b32.xlu0 %v5425, 64
        %v5476 = vpop.permute.xlu0 %5475
        %5477 = vrot.lane.b32.xlu0 %v5426, 64
        %v5478 = vpop.permute.xlu0 %5477
        %5479 = vrot.lane.b32.xlu0 %v5427, 64
        %v5480 = vpop.permute.xlu0 %5479
        %5481 = vrot.lane.b32.xlu0 %v5428, 64
        %v5482 = vpop.permute.xlu0 %5481
        %5483 = vrot.lane.b32.xlu0 %v5429, 64
        %v5484 = vpop.permute.xlu0 %5483
        %5485 = vrot.lane.b32.xlu0 %v5430, 64
        %v5486 = vpop.permute.xlu0 %5485
        %v5488 = vsel %vm2963, %v5448, 0
        %v5491 = vsel %vm2963, %v5450, 0
        %v5494 = vsel %vm2963, %v5452, 0
        %v5497 = vsel %vm2963, %v5454, 0
        %v5500 = vsel %vm2963, %v5456, 0
        %v5503 = vsel %vm2963, %v5458, 0
        %v5506 = vsel %vm2963, %v5460, 0
        %v5509 = vsel %vm2963, %v5462, 0
        %v5512 = vsel %vm2963, %v5472, 0
        %v5515 = vsel %vm2963, %v5474, 0
        %v5518 = vsel %vm2963, %v5476, 0
        %v5521 = vsel %vm2963, %v5478, 0
        %v5524 = vsel %vm2963, %v5480, 0
        %v5527 = vsel %vm2963, %v5482, 0
        %v5530 = vsel %vm2963, %v5484, 0
        %v5533 = vsel %vm2963, %v5486, 0
        %5535 = vmatprep.subr.bf16.mxu0 0
        %5536 = vmatpush1.bf16.xpose.msra.mxu0 %v5512
        %5537 = vmatprep.subr.bf16.mxu0 0
        %5538 = vmatpush1.bf16.xpose.msra.mxu0 %v5515
        %5539 = vmatprep.subr.bf16.mxu0 0
        %5540 = vmatpush1.bf16.xpose.msra.mxu0 %v5518
        %5541 = vmatprep.subr.bf16.mxu0 0
        %5542 = vmatpush1.bf16.xpose.msra.mxu0 %v5521
        %5543 = vmatprep.subr.bf16.mxu0 0
        %5544 = vmatpush1.bf16.xpose.msra.mxu0 %v5524
        %5545 = vmatprep.subr.bf16.mxu0 0
        %5546 = vmatpush1.bf16.xpose.msra.mxu0 %v5527
        %5547 = vmatprep.subr.bf16.mxu0 0
        %5548 = vmatpush1.bf16.xpose.msra.mxu0 %v5530
        %5549 = vmatprep.subr.bf16.mxu0 0
        %5550 = vmatpush1.bf16.xpose.msra.mxu0 %v5533
        %5551 = vmatprep.subr.bf16.mxu0 0
        %5552 = vmatpush1.bf16.xpose.msra.mxu0 0
        %5553 = vmatprep.subr.bf16.mxu0 0
        %5554 = vmatpush1.bf16.xpose.msra.mxu0 0
        %5555 = vmatprep.subr.bf16.mxu0 0
        %5556 = vmatpush1.bf16.xpose.msra.mxu0 0
        %5557 = vmatprep.subr.bf16.mxu0 0
        %5558 = vmatpush1.bf16.xpose.msra.mxu0 0
        %5559 = vmatprep.subr.bf16.mxu0 0
        %5560 = vmatpush1.bf16.xpose.msra.mxu0 0
        %5561 = vmatprep.subr.bf16.mxu0 0
        %5562 = vmatpush1.bf16.xpose.msra.mxu0 0
        %5563 = vmatprep.subr.bf16.mxu0 0
        %5564 = vmatpush1.bf16.xpose.msra.mxu0 0
        %5565 = vmatprep.subr.bf16.mxu0 0
        %5566 = vmatpush1.bf16.xpose.msra.mxu0 0
        %5567 = vmatprep.mubr.bf16.mxu0 0
        %5568 = vmatmul.mubr.bf16.gmra.mrb[0].mxu0 %v5488
        %v5569 = vpop.f32.mrb[0].mxu0
        %v5570 = vadd.f32 0.0, %v5569
        %v5571 = vpop.f32.mrb[0].mxu0
        %v5572 = vpop.f32.mrb[0].mxu0
        %v5573 = vadd.f32 0.0, %v5572
        %v5574 = vpop.f32.mrb[0].mxu0
        %5575 = vmatprep.mubr.bf16.mxu0 0
        %5576 = vmatmul.mubr.bf16.gmra.mrb[0].mxu0 %v5491
        %v5577 = vpop.f32.mrb[0].mxu0
        %v5578 = vadd.f32 0.0, %v5577
        %v5579 = vpop.f32.mrb[0].mxu0
        %v5580 = vpop.f32.mrb[0].mxu0
        %v5581 = vadd.f32 0.0, %v5580
        %v5582 = vpop.f32.mrb[0].mxu0
        %5583 = vmatprep.mubr.bf16.mxu0 0
        %5584 = vmatmul.mubr.bf16.gmra.mrb[0].mxu0 %v5494
        %v5585 = vpop.f32.mrb[0].mxu0
        %v5586 = vadd.f32 0.0, %v5585
        %v5587 = vpop.f32.mrb[0].mxu0
        %v5588 = vpop.f32.mrb[0].mxu0
        %v5589 = vadd.f32 0.0, %v5588
        %v5590 = vpop.f32.mrb[0].mxu0
        %5591 = vmatprep.mubr.bf16.mxu0 0
        %5592 = vmatmul.mubr.bf16.gmra.mrb[0].mxu0 %v5497
        %v5593 = vpop.f32.mrb[0].mxu0
        %v5594 = vadd.f32 0.0, %v5593
        %v5595 = vpop.f32.mrb[0].mxu0
        %v5596 = vpop.f32.mrb[0].mxu0
        %v5597 = vadd.f32 0.0, %v5596
        %v5598 = vpop.f32.mrb[0].mxu0
        %5599 = vmatprep.mubr.bf16.mxu0 0
        %5600 = vmatmul.mubr.bf16.gmra.mrb[0].mxu0 %v5500
        %v5601 = vpop.f32.mrb[0].mxu0
        %v5602 = vadd.f32 0.0, %v5601
        %v5603 = vpop.f32.mrb[0].mxu0
        %v5604 = vpop.f32.mrb[0].mxu0
        %v5605 = vadd.f32 0.0, %v5604
        %v5606 = vpop.f32.mrb[0].mxu0
        %5607 = vmatprep.mubr.bf16.mxu0 0
        %5608 = vmatmul.mubr.bf16.gmra.mrb[0].mxu0 %v5503
        %v5609 = vpop.f32.mrb[0].mxu0
        %v5610 = vadd.f32 0.0, %v5609
        %v5611 = vpop.f32.mrb[0].mxu0
        %v5612 = vpop.f32.mrb[0].mxu0
        %v5613 = vadd.f32 0.0, %v5612
        %v5614 = vpop.f32.mrb[0].mxu0
        %5615 = vmatprep.mubr.bf16.mxu0 0
        %5616 = vmatmul.mubr.bf16.gmra.mrb[0].mxu0 %v5506
        %v5617 = vpop.f32.mrb[0].mxu0
        %v5618 = vadd.f32 0.0, %v5617
        %v5619 = vpop.f32.mrb[0].mxu0
        %v5620 = vpop.f32.mrb[0].mxu0
        %v5621 = vadd.f32 0.0, %v5620
        %v5622 = vpop.f32.mrb[0].mxu0
        %5623 = vmatprep.mubr.bf16.mxu0 0
        %5624 = vmatmul.mubr.bf16.gmra.mrb[0].mxu0 %v5509
        %v5625 = vpop.f32.mrb[0].mxu0
        %v5626 = vadd.f32 0.0, %v5625
        %v5627 = vpop.f32.mrb[0].mxu0
        %v5628 = vpop.f32.mrb[0].mxu0
        %v5629 = vadd.f32 0.0, %v5628
        %v5630 = vpop.f32.mrb[0].mxu0
        %5631 = vdwg.mxu0
        %v5632 = vsel %vm2923, %v5570, -inf
        %v5633 = vsel %vm2924, %v5573, -inf
        %v5634 = vsel %vm2925, %v5578, -inf
        %v5635 = vsel %vm2926, %v5581, -inf
        %v5636 = vsel %vm2927, %v5586, -inf
        %v5637 = vsel %vm2928, %v5589, -inf
        %v5638 = vsel %vm2929, %v5594, -inf
        %v5639 = vsel %vm2930, %v5597, -inf
        %v5640 = vsel %vm2931, %v5602, -inf
        %v5641 = vsel %vm2932, %v5605, -inf
        %v5642 = vsel %vm2933, %v5610, -inf
        %v5643 = vsel %vm2934, %v5613, -inf
        %v5644 = vsel %vm2935, %v5618, -inf
        %v5645 = vsel %vm2936, %v5621, -inf
        %v5646 = vsel %vm2937, %v5626, -inf
        %v5647 = vsel %vm2938, %v5629, -inf
        %5648 = vmax.xlane.f32.xlu0 %v5632
        %v5649 = vpop.xlane.xlu0 %5648
        %5650 = vmax.xlane.f32.xlu0 %v5633
        %v5651 = vpop.xlane.xlu0 %5650
        %5652 = vmax.xlane.f32.xlu0 %v5634
        %v5653 = vpop.xlane.xlu0 %5652
        %5654 = vmax.xlane.f32.xlu0 %v5635
        %v5655 = vpop.xlane.xlu0 %5654
        %5656 = vmax.xlane.f32.xlu0 %v5636
        %v5657 = vpop.xlane.xlu0 %5656
        %5658 = vmax.xlane.f32.xlu0 %v5637
        %v5659 = vpop.xlane.xlu0 %5658
        %5660 = vmax.xlane.f32.xlu0 %v5638
        %v5661 = vpop.xlane.xlu0 %5660
        %5662 = vmax.xlane.f32.xlu0 %v5639
        %v5663 = vpop.xlane.xlu0 %5662
        %5664 = vmax.xlane.f32.xlu0 %v5640
        %v5665 = vpop.xlane.xlu0 %5664
        %5666 = vmax.xlane.f32.xlu0 %v5641
        %v5667 = vpop.xlane.xlu0 %5666
        %5668 = vmax.xlane.f32.xlu0 %v5642
        %v5669 = vpop.xlane.xlu0 %5668
        %5670 = vmax.xlane.f32.xlu0 %v5643
        %v5671 = vpop.xlane.xlu0 %5670
        %5672 = vmax.xlane.f32.xlu0 %v5644
        %v5673 = vpop.xlane.xlu0 %5672
        %5674 = vmax.xlane.f32.xlu0 %v5645
        %v5675 = vpop.xlane.xlu0 %5674
        %5676 = vmax.xlane.f32.xlu0 %v5646
        %v5677 = vpop.xlane.xlu0 %5676
        %5678 = vmax.xlane.f32.xlu0 %v5647
        %v5679 = vpop.xlane.xlu0 %5678
        %v5680 = vsub.f32 %v5632, %v5649
        %v5681 = vsub.f32 %v5633, %v5651
        %v5682 = vsub.f32 %v5634, %v5653
        %v5683 = vsub.f32 %v5635, %v5655
        %v5684 = vsub.f32 %v5636, %v5657
        %v5685 = vsub.f32 %v5637, %v5659
        %v5686 = vsub.f32 %v5638, %v5661
        %v5687 = vsub.f32 %v5639, %v5663
        %v5688 = vsub.f32 %v5640, %v5665
        %v5689 = vsub.f32 %v5641, %v5667
        %v5690 = vsub.f32 %v5642, %v5669
        %v5691 = vsub.f32 %v5643, %v5671
        %v5692 = vsub.f32 %v5644, %v5673
        %v5693 = vsub.f32 %v5645, %v5675
        %v5694 = vsub.f32 %v5646, %v5677
        %v5695 = vsub.f32 %v5647, %v5679
        %v5696 = vmul.f32 %v5680, 1.442695
        %v5697 = vpow.pop %v5696
        %v5698 = vmul.f32 %v5681, 1.442695
        %v5699 = vpow.pop %v5698
        %v5700 = vmul.f32 %v5682, 1.442695
        %v5701 = vpow.pop %v5700
        %v5702 = vmul.f32 %v5683, 1.442695
        %v5703 = vpow.pop %v5702
        %v5704 = vmul.f32 %v5684, 1.442695
        %v5705 = vpow.pop %v5704
        %v5706 = vmul.f32 %v5685, 1.442695
        %v5707 = vpow.pop %v5706
        %v5708 = vmul.f32 %v5686, 1.442695
        %v5709 = vpow.pop %v5708
        %v5710 = vmul.f32 %v5687, 1.442695
        %v5711 = vpow.pop %v5710
        %v5712 = vmul.f32 %v5688, 1.442695
        %v5713 = vpow.pop %v5712
        %v5714 = vmul.f32 %v5689, 1.442695
        %v5715 = vpow.pop %v5714
        %v5716 = vmul.f32 %v5690, 1.442695
        %v5717 = vpow.pop %v5716
        %v5718 = vmul.f32 %v5691, 1.442695
        %v5719 = vpow.pop %v5718
        %v5720 = vmul.f32 %v5692, 1.442695
        %v5721 = vpow.pop %v5720
        %v5722 = vmul.f32 %v5693, 1.442695
        %v5723 = vpow.pop %v5722
        %v5724 = vmul.f32 %v5694, 1.442695
        %v5725 = vpow.pop %v5724
        %v5726 = vmul.f32 %v5695, 1.442695
        %v5727 = vpow.pop %v5726
        %5728 = vadd.xlane.f32.xlu0 %v5697
        %v5729 = vpop.xlane.xlu0 %5728
        %5730 = vadd.xlane.f32.xlu0 %v5699
        %v5731 = vpop.xlane.xlu0 %5730
        %5732 = vadd.xlane.f32.xlu0 %v5701
        %v5733 = vpop.xlane.xlu0 %5732
        %5734 = vadd.xlane.f32.xlu0 %v5703
        %v5735 = vpop.xlane.xlu0 %5734
        %5736 = vadd.xlane.f32.xlu0 %v5705
        %v5737 = vpop.xlane.xlu0 %5736
        %5738 = vadd.xlane.f32.xlu0 %v5707
        %v5739 = vpop.xlane.xlu0 %5738
        %5740 = vadd.xlane.f32.xlu0 %v5709
        %v5741 = vpop.xlane.xlu0 %5740
        %5742 = vadd.xlane.f32.xlu0 %v5711
        %v5743 = vpop.xlane.xlu0 %5742
        %5744 = vadd.xlane.f32.xlu0 %v5713
        %v5745 = vpop.xlane.xlu0 %5744
        %5746 = vadd.xlane.f32.xlu0 %v5715
        %v5747 = vpop.xlane.xlu0 %5746
        %5748 = vadd.xlane.f32.xlu0 %v5717
        %v5749 = vpop.xlane.xlu0 %5748
        %5750 = vadd.xlane.f32.xlu0 %v5719
        %v5751 = vpop.xlane.xlu0 %5750
        %5752 = vadd.xlane.f32.xlu0 %v5721
        %v5753 = vpop.xlane.xlu0 %5752
        %5754 = vadd.xlane.f32.xlu0 %v5723
        %v5755 = vpop.xlane.xlu0 %5754
        %5756 = vadd.xlane.f32.xlu0 %v5725
        %v5757 = vpop.xlane.xlu0 %5756
        %5758 = vadd.xlane.f32.xlu0 %v5727
        %v5759 = vpop.xlane.xlu0 %5758
        %v5760 = vrcp.pop %v5729
        %v5761 = vrcp.pop %v5731
        %v5762 = vrcp.pop %v5733
        %v5763 = vrcp.pop %v5735
        %v5764 = vrcp.pop %v5737
        %v5765 = vrcp.pop %v5739
        %v5766 = vrcp.pop %v5741
        %v5767 = vrcp.pop %v5743
        %v5768 = vrcp.pop %v5745
        %v5769 = vrcp.pop %v5747
        %v5770 = vrcp.pop %v5749
        %v5771 = vrcp.pop %v5751
        %v5772 = vrcp.pop %v5753
        %v5773 = vrcp.pop %v5755
        %v5774 = vrcp.pop %v5757
        %v5775 = vrcp.pop %v5759
        %v5776 = vmul.f32 %v5697, %v5760
        %v5777 = vmul.f32 %v5699, %v5761
        %v5778 = vmul.f32 %v5701, %v5762
        %v5779 = vmul.f32 %v5703, %v5763
        %v5780 = vmul.f32 %v5705, %v5764
        %v5781 = vmul.f32 %v5707, %v5765
        %v5782 = vmul.f32 %v5709, %v5766
        %v5783 = vmul.f32 %v5711, %v5767
        %v5784 = vmul.f32 %v5713, %v5768
        %v5785 = vmul.f32 %v5715, %v5769
        %v5786 = vmul.f32 %v5717, %v5770
        %v5787 = vmul.f32 %v5719, %v5771
        %v5788 = vmul.f32 %v5721, %v5772
        %v5789 = vmul.f32 %v5723, %v5773
        %v5790 = vmul.f32 %v5725, %v5774
        %v5791 = vmul.f32 %v5727, %v5775
        %v5792 = vpack.c.bf16 %v5777, %v5776
        %v5793 = vpack.c.bf16 %v5779, %v5778
        %v5794 = vpack.c.bf16 %v5781, %v5780
        %v5795 = vpack.c.bf16 %v5783, %v5782
        %v5796 = vpack.c.bf16 %v5785, %v5784
        %v5797 = vpack.c.bf16 %v5787, %v5786
        %v5798 = vpack.c.bf16 %v5789, %v5788
        %v5799 = vpack.c.bf16 %v5791, %v5790
        %5808 = vrot.lane.b32.xlu0 %v5431, 64
        %v5809 = vpop.permute.xlu0 %5808
        %5810 = vrot.lane.b32.xlu0 %v5432, 64
        %v5811 = vpop.permute.xlu0 %5810
        %5812 = vrot.lane.b32.xlu0 %v5433, 64
        %v5813 = vpop.permute.xlu0 %5812
        %5814 = vrot.lane.b32.xlu0 %v5434, 64
        %v5815 = vpop.permute.xlu0 %5814
        %5816 = vrot.lane.b32.xlu0 %v5435, 64
        %v5817 = vpop.permute.xlu0 %5816
        %5818 = vrot.lane.b32.xlu0 %v5436, 64
        %v5819 = vpop.permute.xlu0 %5818
        %5820 = vrot.lane.b32.xlu0 %v5437, 64
        %v5821 = vpop.permute.xlu0 %5820
        %5822 = vrot.lane.b32.xlu0 %v5438, 64
        %v5823 = vpop.permute.xlu0 %5822
        %5832 = vmatprep.subr.bf16.mxu0 0
        %5833 = vmatpush1.bf16.msra.mxu0 %v5809
        %5834 = vmatprep.subr.bf16.mxu0 0
        %5835 = vmatpush1.bf16.msra.mxu0 %v5811
        %5836 = vmatprep.subr.bf16.mxu0 0
        %5837 = vmatpush1.bf16.msra.mxu0 %v5813
        %5838 = vmatprep.subr.bf16.mxu0 0
        %5839 = vmatpush1.bf16.msra.mxu0 %v5815
        %5840 = vmatprep.subr.bf16.mxu0 0
        %5841 = vmatpush1.bf16.msra.mxu0 %v5817
        %5842 = vmatprep.subr.bf16.mxu0 0
        %5843 = vmatpush1.bf16.msra.mxu0 %v5819
        %5844 = vmatprep.subr.bf16.mxu0 0
        %5845 = vmatpush1.bf16.msra.mxu0 %v5821
        %5846 = vmatprep.subr.bf16.mxu0 0
        %5847 = vmatpush1.bf16.msra.mxu0 %v5823
        %5848 = vmatprep.subr.bf16.mxu0 0
        %5849 = vmatpush1.bf16.msra.mxu0 0
        %5850 = vmatprep.subr.bf16.mxu0 0
        %5851 = vmatpush1.bf16.msra.mxu0 0
        %5852 = vmatprep.subr.bf16.mxu0 0
        %5853 = vmatpush1.bf16.msra.mxu0 0
        %5854 = vmatprep.subr.bf16.mxu0 0
        %5855 = vmatpush1.bf16.msra.mxu0 0
        %5856 = vmatprep.subr.bf16.mxu0 0
        %5857 = vmatpush1.bf16.msra.mxu0 0
        %5858 = vmatprep.subr.bf16.mxu0 0
        %5859 = vmatpush1.bf16.msra.mxu0 0
        %5860 = vmatprep.subr.bf16.mxu0 0
        %5861 = vmatpush1.bf16.msra.mxu0 0
        %5862 = vmatprep.subr.bf16.mxu0 0
        %5863 = vmatpush1.bf16.msra.mxu0 0
        %5864 = vmatprep.mubr.bf16.mxu0 0
        %5865 = vmatmul.mubr.bf16.gmra.mrb[0].mxu0 %v5792
        %v5866 = vpop.f32.mrb[0].mxu0
        %v5867 = vadd.f32 0.0, %v5866
        %v5868 = vpop.f32.mrb[0].mxu0
        %v5869 = vpop.f32.mrb[0].mxu0
        %v5870 = vadd.f32 0.0, %v5869
        %v5871 = vpop.f32.mrb[0].mxu0
        %5872 = vmatprep.mubr.bf16.mxu0 0
        %5873 = vmatmul.mubr.bf16.gmra.mrb[0].mxu0 %v5793
        %v5874 = vpop.f32.mrb[0].mxu0
        %v5875 = vadd.f32 0.0, %v5874
        %v5876 = vpop.f32.mrb[0].mxu0
        %v5877 = vpop.f32.mrb[0].mxu0
        %v5878 = vadd.f32 0.0, %v5877
        %v5879 = vpop.f32.mrb[0].mxu0
        %5880 = vmatprep.mubr.bf16.mxu0 0
        %5881 = vmatmul.mubr.bf16.gmra.mrb[0].mxu0 %v5794
        %v5882 = vpop.f32.mrb[0].mxu0
        %v5883 = vadd.f32 0.0, %v5882
        %v5884 = vpop.f32.mrb[0].mxu0
        %v5885 = vpop.f32.mrb[0].mxu0
        %v5886 = vadd.f32 0.0, %v5885
        %v5887 = vpop.f32.mrb[0].mxu0
        %5888 = vmatprep.mubr.bf16.mxu0 0
        %5889 = vmatmul.mubr.bf16.gmra.mrb[0].mxu0 %v5795
        %v5890 = vpop.f32.mrb[0].mxu0
        %v5891 = vadd.f32 0.0, %v5890
        %v5892 = vpop.f32.mrb[0].mxu0
        %v5893 = vpop.f32.mrb[0].mxu0
        %v5894 = vadd.f32 0.0, %v5893
        %v5895 = vpop.f32.mrb[0].mxu0
        %5896 = vmatprep.mubr.bf16.mxu0 0
        %5897 = vmatmul.mubr.bf16.gmra.mrb[0].mxu0 %v5796
        %v5898 = vpop.f32.mrb[0].mxu0
        %v5899 = vadd.f32 0.0, %v5898
        %v5900 = vpop.f32.mrb[0].mxu0
        %v5901 = vpop.f32.mrb[0].mxu0
        %v5902 = vadd.f32 0.0, %v5901
        %v5903 = vpop.f32.mrb[0].mxu0
        %5904 = vmatprep.mubr.bf16.mxu0 0
        %5905 = vmatmul.mubr.bf16.gmra.mrb[0].mxu0 %v5797
        %v5906 = vpop.f32.mrb[0].mxu0
        %v5907 = vadd.f32 0.0, %v5906
        %v5908 = vpop.f32.mrb[0].mxu0
        %v5909 = vpop.f32.mrb[0].mxu0
        %v5910 = vadd.f32 0.0, %v5909
        %v5911 = vpop.f32.mrb[0].mxu0
        %5912 = vmatprep.mubr.bf16.mxu0 0
        %5913 = vmatmul.mubr.bf16.gmra.mrb[0].mxu0 %v5798
        %v5914 = vpop.f32.mrb[0].mxu0
        %v5915 = vadd.f32 0.0, %v5914
        %v5916 = vpop.f32.mrb[0].mxu0
        %v5917 = vpop.f32.mrb[0].mxu0
        %v5918 = vadd.f32 0.0, %v5917
        %v5919 = vpop.f32.mrb[0].mxu0
        %5920 = vmatprep.mubr.bf16.mxu0 0
        %5921 = vmatmul.mubr.bf16.gmra.mrb[0].mxu0 %v5799
        %v5922 = vpop.f32.mrb[0].mxu0
        %v5923 = vadd.f32 0.0, %v5922
        %v5924 = vpop.f32.mrb[0].mxu0
        %v5925 = vpop.f32.mrb[0].mxu0
        %v5926 = vadd.f32 0.0, %v5925
        %v5927 = vpop.f32.mrb[0].mxu0
        %5928 = vdwg.mxu0
        %v5929 = vpack.c.bf16 %v5870, %v5867
        %v5930 = vpack.c.bf16 %v5878, %v5875
        %v5931 = vpack.c.bf16 %v5886, %v5883
        %v5932 = vpack.c.bf16 %v5894, %v5891
        %v5933 = vpack.c.bf16 %v5902, %v5899
        %v5934 = vpack.c.bf16 %v5910, %v5907
        %v5935 = vpack.c.bf16 %v5918, %v5915
        %v5936 = vpack.c.bf16 %v5926, %v5923
        %5945 = vrot.lane.b32.xlu0 %v5929, 64
        %v5946 = vpop.permute.xlu0 %5945
        %5947 = vrot.lane.b32.xlu0 %v5930, 64
        %v5948 = vpop.permute.xlu0 %5947
        %5949 = vrot.lane.b32.xlu0 %v5931, 64
        %v5950 = vpop.permute.xlu0 %5949
        %5951 = vrot.lane.b32.xlu0 %v5932, 64
        %v5952 = vpop.permute.xlu0 %5951
        %5953 = vrot.lane.b32.xlu0 %v5933, 64
        %v5954 = vpop.permute.xlu0 %5953
        %5955 = vrot.lane.b32.xlu0 %v5934, 64
        %v5956 = vpop.permute.xlu0 %5955
        %5957 = vrot.lane.b32.xlu0 %v5935, 64
        %v5958 = vpop.permute.xlu0 %5957
        %5959 = vrot.lane.b32.xlu0 %v5936, 64
        %v5960 = vpop.permute.xlu0 %5959
        %5969 = vst.msk [vmem:[#allocation3 + $0x10] sm:$0xff] %vm3944, %v5946
        %5970 = vst.msk [vmem:[#allocation3 + $0x28] sm:$0xff] %vm3944, %v5948
        %5971 = vst.msk [vmem:[#allocation3 + $0x40] sm:$0xff] %vm3944, %v5950
        %5972 = vst.msk [vmem:[#allocation3 + $0x58] sm:$0xff] %vm3944, %v5952
        %5973 = vst.msk [vmem:[#allocation3 + $0x70] sm:$0xff] %vm3944, %v5954
        %5974 = vst.msk [vmem:[#allocation3 + $0x88] sm:$0xff] %vm3944, %v5956
        %5975 = vst.msk [vmem:[#allocation3 + $0xa0] sm:$0xff] %vm3944, %v5958
        %5976 = vst.msk [vmem:[#allocation3 + $0xb8] sm:$0xff] %vm3944, %v5960
        %v5977 = vld [vmem:[#allocation3] sm:$0xff]
        %v5978 = vld [vmem:[#allocation3 + $0x8] sm:$0xff]
        %v5979 = vld [vmem:[#allocation3 + $0x10] sm:$0xff]
        %v5980 = vld [vmem:[#allocation3 + $0x18] sm:$0xff]
        %v5981 = vld [vmem:[#allocation3 + $0x20] sm:$0xff]
        %v5982 = vld [vmem:[#allocation3 + $0x28] sm:$0xff]
        %v5983 = vld [vmem:[#allocation3 + $0x30] sm:$0xff]
        %v5984 = vld [vmem:[#allocation3 + $0x38] sm:$0xff]
        %v5985 = vld [vmem:[#allocation3 + $0x40] sm:$0xff]
        %v5986 = vld [vmem:[#allocation3 + $0x48] sm:$0xff]
        %v5987 = vld [vmem:[#allocation3 + $0x50] sm:$0xff]
        %v5988 = vld [vmem:[#allocation3 + $0x58] sm:$0xff]
        %v5989 = vld [vmem:[#allocation3 + $0x60] sm:$0xff]
        %v5990 = vld [vmem:[#allocation3 + $0x68] sm:$0xff]
        %v5991 = vld [vmem:[#allocation3 + $0x70] sm:$0xff]
        %v5992 = vld [vmem:[#allocation3 + $0x78] sm:$0xff]
        %v5993 = vld [vmem:[#allocation3 + $0x80] sm:$0xff]
        %v5994 = vld [vmem:[#allocation3 + $0x88] sm:$0xff]
        %v5995 = vld [vmem:[#allocation3 + $0x90] sm:$0xff]
        %v5996 = vld [vmem:[#allocation3 + $0x98] sm:$0xff]
        %v5997 = vld [vmem:[#allocation3 + $0xa0] sm:$0xff]
        %v5998 = vld [vmem:[#allocation3 + $0xa8] sm:$0xff]
        %v5999 = vld [vmem:[#allocation3 + $0xb0] sm:$0xff]
        %v6000 = vld [vmem:[#allocation3 + $0xb8] sm:$0xff]
        %v6001 = vld [vmem:[#allocation9] sm:$0xff]
        %v6002 = vld [vmem:[#allocation9 + $0x8] sm:$0xf]
        %v6003 = vld [vmem:[#allocation9 + $0xc] sm:$0xff]
        %v6004 = vld [vmem:[#allocation9 + $0x14] sm:$0xf]
        %v6005 = vld [vmem:[#allocation9 + $0x18] sm:$0xff]
        %v6006 = vld [vmem:[#allocation9 + $0x20] sm:$0xf]
        %v6007 = vld [vmem:[#allocation9 + $0x24] sm:$0xff]
        %v6008 = vld [vmem:[#allocation9 + $0x2c] sm:$0xf]
        %v6009 = vld [vmem:[#allocation9 + $0x30] sm:$0xff]
        %v6010 = vld [vmem:[#allocation9 + $0x38] sm:$0xf]
        %v6011 = vld [vmem:[#allocation9 + $0x3c] sm:$0xff]
        %v6012 = vld [vmem:[#allocation9 + $0x44] sm:$0xf]
        %v6013 = vld [vmem:[#allocation9 + $0x48] sm:$0xff]
        %v6014 = vld [vmem:[#allocation9 + $0x50] sm:$0xf]
        %v6015 = vld [vmem:[#allocation9 + $0x54] sm:$0xff]
        %v6016 = vld [vmem:[#allocation9 + $0x5c] sm:$0xf]
        %v6017 = vld [vmem:[#allocation9 + $0x60] sm:$0xff]
        %v6018 = vld [vmem:[#allocation9 + $0x68] sm:$0xf]
        %v6019 = vld [vmem:[#allocation9 + $0x6c] sm:$0xff]
        %v6020 = vld [vmem:[#allocation9 + $0x74] sm:$0xf]
        %v6021 = vld [vmem:[#allocation9 + $0x78] sm:$0xff]
        %v6022 = vld [vmem:[#allocation9 + $0x80] sm:$0xf]
        %v6023 = vld [vmem:[#allocation9 + $0x84] sm:$0xff]
        %v6024 = vld [vmem:[#allocation9 + $0x8c] sm:$0xf]
        %v6025 = vld [vmem:[#allocation9 + $0x90] sm:$0xff]
        %v6026 = vld [vmem:[#allocation9 + $0x98] sm:$0xf]
        %v6027 = vld [vmem:[#allocation9 + $0x9c] sm:$0xff]
        %v6028 = vld [vmem:[#allocation9 + $0xa4] sm:$0xf]
        %v6029 = vld [vmem:[#allocation9 + $0xa8] sm:$0xff]
        %v6030 = vld [vmem:[#allocation9 + $0xb0] sm:$0xf]
        %v6031 = vld [vmem:[#allocation9 + $0xb4] sm:$0xff]
        %v6032 = vld [vmem:[#allocation9 + $0xbc] sm:$0xf]
        %v6033 = vld [vmem:[#allocation9 + $0xc0] sm:$0xff]
        %v6034 = vld [vmem:[#allocation9 + $0xc8] sm:$0xf]
        %v6035 = vld [vmem:[#allocation9 + $0xcc] sm:$0xff]
        %v6036 = vld [vmem:[#allocation9 + $0xd4] sm:$0xf]
        %v6037 = vld [vmem:[#allocation9 + $0xd8] sm:$0xff]
        %v6038 = vld [vmem:[#allocation9 + $0xe0] sm:$0xf]
        %v6039 = vld [vmem:[#allocation9 + $0xe4] sm:$0xff]
        %v6040 = vld [vmem:[#allocation9 + $0xec] sm:$0xf]
        %v6041 = vld [vmem:[#allocation9 + $0xf0] sm:$0xff]
        %v6042 = vld [vmem:[#allocation9 + $0xf8] sm:$0xf]
        %v6043 = vld [vmem:[#allocation9 + $0xfc] sm:$0xff]
        %v6044 = vld [vmem:[#allocation9 + $0x104] sm:$0xf]
        %v6045 = vld [vmem:[#allocation9 + $0x108] sm:$0xff]
        %v6046 = vld [vmem:[#allocation9 + $0x110] sm:$0xf]
        %v6047 = vld [vmem:[#allocation9 + $0x114] sm:$0xff]
        %v6048 = vld [vmem:[#allocation9 + $0x11c] sm:$0xf]
        %v6049 = vld [vmem:[#allocation9 + $0x120] sm:$0xff]
        %v6050 = vld [vmem:[#allocation9 + $0x128] sm:$0xf]
        %v6051 = vld [vmem:[#allocation9 + $0x12c] sm:$0xff]
        %v6052 = vld [vmem:[#allocation9 + $0x134] sm:$0xf]
        %v6053 = vld [vmem:[#allocation9 + $0x138] sm:$0xff]
        %v6054 = vld [vmem:[#allocation9 + $0x140] sm:$0xf]
        %v6055 = vld [vmem:[#allocation9 + $0x144] sm:$0xff]
        %v6056 = vld [vmem:[#allocation9 + $0x14c] sm:$0xf]
        %v6057 = vld [vmem:[#allocation9 + $0x150] sm:$0xff]
        %v6058 = vld [vmem:[#allocation9 + $0x158] sm:$0xf]
        %v6059 = vld [vmem:[#allocation9 + $0x15c] sm:$0xff]
        %v6060 = vld [vmem:[#allocation9 + $0x164] sm:$0xf]
        %v6061 = vld [vmem:[#allocation9 + $0x168] sm:$0xff]
        %v6062 = vld [vmem:[#allocation9 + $0x170] sm:$0xf]
        %v6063 = vld [vmem:[#allocation9 + $0x174] sm:$0xff]
        %v6064 = vld [vmem:[#allocation9 + $0x17c] sm:$0xf]
        %v6065 = vld [vmem:[#allocation9 + $0x180] sm:$0xff]
        %v6066 = vld [vmem:[#allocation9 + $0x188] sm:$0xf]
        %v6067 = vld [vmem:[#allocation9 + $0x18c] sm:$0xff]
        %v6068 = vld [vmem:[#allocation9 + $0x194] sm:$0xf]
        %v6069 = vld [vmem:[#allocation9 + $0x198] sm:$0xff]
        %v6070 = vld [vmem:[#allocation9 + $0x1a0] sm:$0xf]
        %v6071 = vld [vmem:[#allocation9 + $0x1a4] sm:$0xff]
        %v6072 = vld [vmem:[#allocation9 + $0x1ac] sm:$0xf]
        %v6073 = vld [vmem:[#allocation9 + $0x1b0] sm:$0xff]
        %v6074 = vld [vmem:[#allocation9 + $0x1b8] sm:$0xf]
        %v6075 = vld [vmem:[#allocation9 + $0x1bc] sm:$0xff]
        %v6076 = vld [vmem:[#allocation9 + $0x1c4] sm:$0xf]
        %v6077 = vld [vmem:[#allocation9 + $0x1c8] sm:$0xff]
        %v6078 = vld [vmem:[#allocation9 + $0x1d0] sm:$0xf]
        %v6079 = vld [vmem:[#allocation9 + $0x1d4] sm:$0xff]
        %v6080 = vld [vmem:[#allocation9 + $0x1dc] sm:$0xf]
        %v6081 = vld [vmem:[#allocation9 + $0x1e0] sm:$0xff]
        %v6082 = vld [vmem:[#allocation9 + $0x1e8] sm:$0xf]
        %v6083 = vld [vmem:[#allocation9 + $0x1ec] sm:$0xff]
        %v6084 = vld [vmem:[#allocation9 + $0x1f4] sm:$0xf]
        %v6085 = vld [vmem:[#allocation9 + $0x1f8] sm:$0xff]
        %v6086 = vld [vmem:[#allocation9 + $0x200] sm:$0xf]
        %v6087 = vld [vmem:[#allocation9 + $0x204] sm:$0xff]
        %v6088 = vld [vmem:[#allocation9 + $0x20c] sm:$0xf]
        %v6089 = vld [vmem:[#allocation9 + $0x210] sm:$0xff]
        %v6090 = vld [vmem:[#allocation9 + $0x218] sm:$0xf]
        %v6091 = vld [vmem:[#allocation9 + $0x21c] sm:$0xff]
        %v6092 = vld [vmem:[#allocation9 + $0x224] sm:$0xf]
        %v6093 = vld [vmem:[#allocation9 + $0x228] sm:$0xff]
        %v6094 = vld [vmem:[#allocation9 + $0x230] sm:$0xf]
        %v6095 = vld [vmem:[#allocation9 + $0x234] sm:$0xff]
        %v6096 = vld [vmem:[#allocation9 + $0x23c] sm:$0xf]
        %v6097 = vld [vmem:[%s3] sm:$0x7]
        %v6099 = vlaneseq
        %v6100 = vshrl.u32 %v6099, 7
        %v6101 = vsub.s32 0, %v6100
        %v6102 = vrot.slane %v6097, %v6101
        %v6103 = vlaneseq
        %v6104 = vshrl.u32 %v6103, 7
        %v6105 = vsub.s32 1, %v6104
        %v6106 = vrot.slane %v6097, %v6105
        %v6107 = vlaneseq
        %v6108 = vshrl.u32 %v6107, 7
        %v6109 = vsub.s32 2, %v6108
        %v6110 = vrot.slane %v6097, %v6109
        %v6210 = vunpack.c.l.b16 %v6001
        %v6211 = vunpack.c.h.b16 %v6001
        %v6212 = vunpack.c.l.b16 %v6002
        %v6213 = vunpack.c.l.b16 %v6003
        %v6214 = vunpack.c.h.b16 %v6003
        %v6215 = vunpack.c.l.b16 %v6004
        %v6216 = vunpack.c.l.b16 %v6005
        %v6217 = vunpack.c.h.b16 %v6005
        %v6218 = vunpack.c.l.b16 %v6006
        %v6219 = vunpack.c.l.b16 %v6007
        %v6220 = vunpack.c.h.b16 %v6007
        %v6221 = vunpack.c.l.b16 %v6008
        %v6222 = vunpack.c.l.b16 %v6009
        %v6223 = vunpack.c.h.b16 %v6009
        %v6224 = vunpack.c.l.b16 %v6010
        %v6225 = vunpack.c.l.b16 %v6011
        %v6226 = vunpack.c.h.b16 %v6011
        %v6227 = vunpack.c.l.b16 %v6012
        %v6228 = vunpack.c.l.b16 %v6013
        %v6229 = vunpack.c.h.b16 %v6013
        %v6230 = vunpack.c.l.b16 %v6014
        %v6231 = vunpack.c.l.b16 %v6015
        %v6232 = vunpack.c.h.b16 %v6015
        %v6233 = vunpack.c.l.b16 %v6016
        %v6234 = vunpack.c.l.b16 %v6017
        %v6235 = vunpack.c.h.b16 %v6017
        %v6236 = vunpack.c.l.b16 %v6018
        %v6237 = vunpack.c.l.b16 %v6019
        %v6238 = vunpack.c.h.b16 %v6019
        %v6239 = vunpack.c.l.b16 %v6020
        %v6240 = vunpack.c.l.b16 %v6021
        %v6241 = vunpack.c.h.b16 %v6021
        %v6242 = vunpack.c.l.b16 %v6022
        %v6243 = vunpack.c.l.b16 %v6023
        %v6244 = vunpack.c.h.b16 %v6023
        %v6245 = vunpack.c.l.b16 %v6024
        %v6246 = vunpack.c.l.b16 %v6025
        %v6247 = vunpack.c.h.b16 %v6025
        %v6248 = vunpack.c.l.b16 %v6026
        %v6249 = vunpack.c.l.b16 %v6027
        %v6250 = vunpack.c.h.b16 %v6027
        %v6251 = vunpack.c.l.b16 %v6028
        %v6252 = vunpack.c.l.b16 %v6029
        %v6253 = vunpack.c.h.b16 %v6029
        %v6254 = vunpack.c.l.b16 %v6030
        %v6255 = vunpack.c.l.b16 %v6031
        %v6256 = vunpack.c.h.b16 %v6031
        %v6257 = vunpack.c.l.b16 %v6032
        %v6258 = vunpack.c.l.b16 %v6033
        %v6259 = vunpack.c.h.b16 %v6033
        %v6260 = vunpack.c.l.b16 %v6034
        %v6261 = vunpack.c.l.b16 %v6035
        %v6262 = vunpack.c.h.b16 %v6035
        %v6263 = vunpack.c.l.b16 %v6036
        %v6264 = vunpack.c.l.b16 %v6037
        %v6265 = vunpack.c.h.b16 %v6037
        %v6266 = vunpack.c.l.b16 %v6038
        %v6267 = vunpack.c.l.b16 %v6039
        %v6268 = vunpack.c.h.b16 %v6039
        %v6269 = vunpack.c.l.b16 %v6040
        %v6270 = vunpack.c.l.b16 %v6041
        %v6271 = vunpack.c.h.b16 %v6041
        %v6272 = vunpack.c.l.b16 %v6042
        %v6273 = vunpack.c.l.b16 %v6043
        %v6274 = vunpack.c.h.b16 %v6043
        %v6275 = vunpack.c.l.b16 %v6044
        %v6276 = vunpack.c.l.b16 %v6045
        %v6277 = vunpack.c.h.b16 %v6045
        %v6278 = vunpack.c.l.b16 %v6046
        %v6279 = vunpack.c.l.b16 %v6047
        %v6280 = vunpack.c.h.b16 %v6047
        %v6281 = vunpack.c.l.b16 %v6048
        %v6282 = vunpack.c.l.b16 %v6049
        %v6283 = vunpack.c.h.b16 %v6049
        %v6284 = vunpack.c.l.b16 %v6050
        %v6285 = vunpack.c.l.b16 %v6051
        %v6286 = vunpack.c.h.b16 %v6051
        %v6287 = vunpack.c.l.b16 %v6052
        %v6288 = vunpack.c.l.b16 %v6053
        %v6289 = vunpack.c.h.b16 %v6053
        %v6290 = vunpack.c.l.b16 %v6054
        %v6291 = vunpack.c.l.b16 %v6055
        %v6292 = vunpack.c.h.b16 %v6055
        %v6293 = vunpack.c.l.b16 %v6056
        %v6294 = vunpack.c.l.b16 %v6057
        %v6295 = vunpack.c.h.b16 %v6057
        %v6296 = vunpack.c.l.b16 %v6058
        %v6297 = vunpack.c.l.b16 %v6059
        %v6298 = vunpack.c.h.b16 %v6059
        %v6299 = vunpack.c.l.b16 %v6060
        %v6300 = vunpack.c.l.b16 %v6061
        %v6301 = vunpack.c.h.b16 %v6061
        %v6302 = vunpack.c.l.b16 %v6062
        %v6303 = vunpack.c.l.b16 %v6063
        %v6304 = vunpack.c.h.b16 %v6063
        %v6305 = vunpack.c.l.b16 %v6064
        %v6306 = vunpack.c.l.b16 %v6065
        %v6307 = vunpack.c.h.b16 %v6065
        %v6308 = vunpack.c.l.b16 %v6066
        %v6309 = vunpack.c.l.b16 %v6067
        %v6310 = vunpack.c.h.b16 %v6067
        %v6311 = vunpack.c.l.b16 %v6068
        %v6312 = vunpack.c.l.b16 %v6069
        %v6313 = vunpack.c.h.b16 %v6069
        %v6314 = vunpack.c.l.b16 %v6070
        %v6315 = vunpack.c.l.b16 %v6071
        %v6316 = vunpack.c.h.b16 %v6071
        %v6317 = vunpack.c.l.b16 %v6072
        %v6318 = vunpack.c.l.b16 %v6073
        %v6319 = vunpack.c.h.b16 %v6073
        %v6320 = vunpack.c.l.b16 %v6074
        %v6321 = vunpack.c.l.b16 %v6075
        %v6322 = vunpack.c.h.b16 %v6075
        %v6323 = vunpack.c.l.b16 %v6076
        %v6324 = vunpack.c.l.b16 %v6077
        %v6325 = vunpack.c.h.b16 %v6077
        %v6326 = vunpack.c.l.b16 %v6078
        %v6327 = vunpack.c.l.b16 %v6079
        %v6328 = vunpack.c.h.b16 %v6079
        %v6329 = vunpack.c.l.b16 %v6080
        %v6330 = vunpack.c.l.b16 %v6081
        %v6331 = vunpack.c.h.b16 %v6081
        %v6332 = vunpack.c.l.b16 %v6082
        %v6333 = vunpack.c.l.b16 %v6083
        %v6334 = vunpack.c.h.b16 %v6083
        %v6335 = vunpack.c.l.b16 %v6084
        %v6336 = vunpack.c.l.b16 %v6085
        %v6337 = vunpack.c.h.b16 %v6085
        %v6338 = vunpack.c.l.b16 %v6086
        %v6339 = vunpack.c.l.b16 %v6087
        %v6340 = vunpack.c.h.b16 %v6087
        %v6341 = vunpack.c.l.b16 %v6088
        %v6342 = vunpack.c.l.b16 %v6089
        %v6343 = vunpack.c.h.b16 %v6089
        %v6344 = vunpack.c.l.b16 %v6090
        %v6345 = vunpack.c.l.b16 %v6091
        %v6346 = vunpack.c.h.b16 %v6091
        %v6347 = vunpack.c.l.b16 %v6092
        %v6348 = vunpack.c.l.b16 %v6093
        %v6349 = vunpack.c.h.b16 %v6093
        %v6350 = vunpack.c.l.b16 %v6094
        %v6351 = vunpack.c.l.b16 %v6095
        %v6352 = vunpack.c.h.b16 %v6095
        %v6353 = vunpack.c.l.b16 %v6096
        %v6354 = vpack.c.b16 %v6213, %v6210
        %v6355 = vpack.c.b16 %v6214, %v6211
        %v6356 = vpack.c.b16 %v6215, %v6212
        %v6357 = vpack.c.b16 %v6219, %v6216
        %v6358 = vpack.c.b16 %v6220, %v6217
        %v6359 = vpack.c.b16 %v6221, %v6218
        %v6360 = vpack.c.b16 %v6225, %v6222
        %v6361 = vpack.c.b16 %v6226, %v6223
        %v6362 = vpack.c.b16 %v6227, %v6224
        %v6363 = vpack.c.b16 %v6231, %v6228
        %v6364 = vpack.c.b16 %v6232, %v6229
        %v6365 = vpack.c.b16 %v6233, %v6230
        %v6366 = vpack.c.b16 %v6237, %v6234
        %v6367 = vpack.c.b16 %v6238, %v6235
        %v6368 = vpack.c.b16 %v6239, %v6236
        %v6369 = vpack.c.b16 %v6243, %v6240
        %v6370 = vpack.c.b16 %v6244, %v6241
        %v6371 = vpack.c.b16 %v6245, %v6242
        %v6372 = vpack.c.b16 %v6249, %v6246
        %v6373 = vpack.c.b16 %v6250, %v6247
        %v6374 = vpack.c.b16 %v6251, %v6248
        %v6375 = vpack.c.b16 %v6255, %v6252
        %v6376 = vpack.c.b16 %v6256, %v6253
        %v6377 = vpack.c.b16 %v6257, %v6254
        %v6378 = vpack.c.b16 %v6261, %v6258
        %v6379 = vpack.c.b16 %v6262, %v6259
        %v6380 = vpack.c.b16 %v6263, %v6260
        %v6381 = vpack.c.b16 %v6267, %v6264
        %v6382 = vpack.c.b16 %v6268, %v6265
        %v6383 = vpack.c.b16 %v6269, %v6266
        %v6384 = vpack.c.b16 %v6273, %v6270
        %v6385 = vpack.c.b16 %v6274, %v6271
        %v6386 = vpack.c.b16 %v6275, %v6272
        %v6387 = vpack.c.b16 %v6279, %v6276
        %v6388 = vpack.c.b16 %v6280, %v6277
        %v6389 = vpack.c.b16 %v6281, %v6278
        %v6390 = vpack.c.b16 %v6285, %v6282
        %v6391 = vpack.c.b16 %v6286, %v6283
        %v6392 = vpack.c.b16 %v6287, %v6284
        %v6393 = vpack.c.b16 %v6291, %v6288
        %v6394 = vpack.c.b16 %v6292, %v6289
        %v6395 = vpack.c.b16 %v6293, %v6290
        %v6396 = vpack.c.b16 %v6297, %v6294
        %v6397 = vpack.c.b16 %v6298, %v6295
        %v6398 = vpack.c.b16 %v6299, %v6296
        %v6399 = vpack.c.b16 %v6303, %v6300
        %v6400 = vpack.c.b16 %v6304, %v6301
        %v6401 = vpack.c.b16 %v6305, %v6302
        %v6402 = vpack.c.b16 %v6309, %v6306
        %v6403 = vpack.c.b16 %v6310, %v6307
        %v6404 = vpack.c.b16 %v6311, %v6308
        %v6405 = vpack.c.b16 %v6315, %v6312
        %v6406 = vpack.c.b16 %v6316, %v6313
        %v6407 = vpack.c.b16 %v6317, %v6314
        %v6408 = vpack.c.b16 %v6321, %v6318
        %v6409 = vpack.c.b16 %v6322, %v6319
        %v6410 = vpack.c.b16 %v6323, %v6320
        %v6411 = vpack.c.b16 %v6327, %v6324
        %v6412 = vpack.c.b16 %v6328, %v6325
        %v6413 = vpack.c.b16 %v6329, %v6326
        %v6414 = vpack.c.b16 %v6333, %v6330
        %v6415 = vpack.c.b16 %v6334, %v6331
        %v6416 = vpack.c.b16 %v6335, %v6332
        %v6417 = vpack.c.b16 %v6339, %v6336
        %v6418 = vpack.c.b16 %v6340, %v6337
        %v6419 = vpack.c.b16 %v6341, %v6338
        %v6420 = vpack.c.b16 %v6345, %v6342
        %v6421 = vpack.c.b16 %v6346, %v6343
        %v6422 = vpack.c.b16 %v6347, %v6344
        %v6423 = vpack.c.b16 %v6351, %v6348
        %v6424 = vpack.c.b16 %v6352, %v6349
        %v6425 = vpack.c.b16 %v6353, %v6350
        %6498 = vmatprep.subr.bf16.mxu0 %v6355
        %6499 = vmatpush1.bf16.msra.mxu0 %v6354
        %6500 = vmatprep.subr.bf16.mxu0 %v6358
        %6501 = vmatpush1.bf16.msra.mxu0 %v6357
        %6502 = vmatprep.subr.bf16.mxu0 %v6361
        %6503 = vmatpush1.bf16.msra.mxu0 %v6360
        %6504 = vmatprep.subr.bf16.mxu0 %v6364
        %6505 = vmatpush1.bf16.msra.mxu0 %v6363
        %6506 = vmatprep.subr.bf16.mxu0 %v6367
        %6507 = vmatpush1.bf16.msra.mxu0 %v6366
        %6508 = vmatprep.subr.bf16.mxu0 %v6370
        %6509 = vmatpush1.bf16.msra.mxu0 %v6369
        %6510 = vmatprep.subr.bf16.mxu0 %v6373
        %6511 = vmatpush1.bf16.msra.mxu0 %v6372
        %6512 = vmatprep.subr.bf16.mxu0 %v6376
        %6513 = vmatpush1.bf16.msra.mxu0 %v6375
        %6514 = vmatprep.subr.bf16.mxu0 %v6379
        %6515 = vmatpush1.bf16.msra.mxu0 %v6378
        %6516 = vmatprep.subr.bf16.mxu0 %v6382
        %6517 = vmatpush1.bf16.msra.mxu0 %v6381
        %6518 = vmatprep.subr.bf16.mxu0 %v6385
        %6519 = vmatpush1.bf16.msra.mxu0 %v6384
        %6520 = vmatprep.subr.bf16.mxu0 %v6388
        %6521 = vmatpush1.bf16.msra.mxu0 %v6387
        %6522 = vmatprep.subr.bf16.mxu0 %v6391
        %6523 = vmatpush1.bf16.msra.mxu0 %v6390
        %6524 = vmatprep.subr.bf16.mxu0 %v6394
        %6525 = vmatpush1.bf16.msra.mxu0 %v6393
        %6526 = vmatprep.subr.bf16.mxu0 %v6397
        %6527 = vmatpush1.bf16.msra.mxu0 %v6396
        %6528 = vmatprep.subr.bf16.mxu0 %v6400
        %6529 = vmatpush1.bf16.msra.mxu0 %v6399
        %6530 = vmatprep.mubr.bf16.mxu0 %v5978
        %6531 = vmatmul.mubr.bf16.gmra.mrb[0].mxu0 %v5977
        %v6532 = vpop.f32.mrb[0].mxu0
        %v6533 = vadd.f32 %v6102, %v6532
        %v6534 = vpop.f32.mrb[0].mxu0
        %v6535 = vadd.f32 %v6106, %v6534
        %v6536 = vpop.f32.mrb[0].mxu0
        %v6537 = vadd.f32 %v6102, %v6536
        %v6538 = vpop.f32.mrb[0].mxu0
        %v6539 = vadd.f32 %v6106, %v6538
        %6540 = vmatprep.mubr.bf16.mxu0 %v5981
        %6541 = vmatmul.mubr.bf16.gmra.mrb[0].mxu0 %v5980
        %v6542 = vpop.f32.mrb[0].mxu0
        %v6543 = vadd.f32 %v6102, %v6542
        %v6544 = vpop.f32.mrb[0].mxu0
        %v6545 = vadd.f32 %v6106, %v6544
        %v6546 = vpop.f32.mrb[0].mxu0
        %v6547 = vadd.f32 %v6102, %v6546
        %v6548 = vpop.f32.mrb[0].mxu0
        %v6549 = vadd.f32 %v6106, %v6548
        %6550 = vmatprep.mubr.bf16.mxu0 %v5984
        %6551 = vmatmul.mubr.bf16.gmra.mrb[0].mxu0 %v5983
        %v6552 = vpop.f32.mrb[0].mxu0
        %v6553 = vadd.f32 %v6102, %v6552
        %v6554 = vpop.f32.mrb[0].mxu0
        %v6555 = vadd.f32 %v6106, %v6554
        %v6556 = vpop.f32.mrb[0].mxu0
        %v6557 = vadd.f32 %v6102, %v6556
        %v6558 = vpop.f32.mrb[0].mxu0
        %v6559 = vadd.f32 %v6106, %v6558
        %6560 = vmatprep.mubr.bf16.mxu0 %v5987
        %6561 = vmatmul.mubr.bf16.gmra.mrb[0].mxu0 %v5986
        %v6562 = vpop.f32.mrb[0].mxu0
        %v6563 = vadd.f32 %v6102, %v6562
        %v6564 = vpop.f32.mrb[0].mxu0
        %v6565 = vadd.f32 %v6106, %v6564
        %v6566 = vpop.f32.mrb[0].mxu0
        %v6567 = vadd.f32 %v6102, %v6566
        %v6568 = vpop.f32.mrb[0].mxu0
        %v6569 = vadd.f32 %v6106, %v6568
        %6570 = vmatprep.mubr.bf16.mxu0 %v5990
        %6571 = vmatmul.mubr.bf16.gmra.mrb[0].mxu0 %v5989
        %v6572 = vpop.f32.mrb[0].mxu0
        %v6573 = vadd.f32 %v6102, %v6572
        %v6574 = vpop.f32.mrb[0].mxu0
        %v6575 = vadd.f32 %v6106, %v6574
        %v6576 = vpop.f32.mrb[0].mxu0
        %v6577 = vadd.f32 %v6102, %v6576
        %v6578 = vpop.f32.mrb[0].mxu0
        %v6579 = vadd.f32 %v6106, %v6578
        %6580 = vmatprep.mubr.bf16.mxu0 %v5993
        %6581 = vmatmul.mubr.bf16.gmra.mrb[0].mxu0 %v5992
        %v6582 = vpop.f32.mrb[0].mxu0
        %v6583 = vadd.f32 %v6102, %v6582
        %v6584 = vpop.f32.mrb[0].mxu0
        %v6585 = vadd.f32 %v6106, %v6584
        %v6586 = vpop.f32.mrb[0].mxu0
        %v6587 = vadd.f32 %v6102, %v6586
        %v6588 = vpop.f32.mrb[0].mxu0
        %v6589 = vadd.f32 %v6106, %v6588
        %6590 = vmatprep.mubr.bf16.mxu0 %v5996
        %6591 = vmatmul.mubr.bf16.gmra.mrb[0].mxu0 %v5995
        %v6592 = vpop.f32.mrb[0].mxu0
        %v6593 = vadd.f32 %v6102, %v6592
        %v6594 = vpop.f32.mrb[0].mxu0
        %v6595 = vadd.f32 %v6106, %v6594
        %v6596 = vpop.f32.mrb[0].mxu0
        %v6597 = vadd.f32 %v6102, %v6596
        %v6598 = vpop.f32.mrb[0].mxu0
        %v6599 = vadd.f32 %v6106, %v6598
        %6600 = vmatprep.mubr.bf16.mxu0 %v5999
        %6601 = vmatmul.mubr.bf16.gmra.mrb[0].mxu0 %v5998
        %v6602 = vpop.f32.mrb[0].mxu0
        %v6603 = vadd.f32 %v6102, %v6602
        %v6604 = vpop.f32.mrb[0].mxu0
        %v6605 = vadd.f32 %v6106, %v6604
        %v6606 = vpop.f32.mrb[0].mxu0
        %v6607 = vadd.f32 %v6102, %v6606
        %v6608 = vpop.f32.mrb[0].mxu0
        %v6609 = vadd.f32 %v6106, %v6608
        %6610 = vdwg.mxu0
        %6611 = vmatprep.subr.bf16.mxu0 %v6403
        %6612 = vmatpush1.bf16.msra.mxu0 %v6402
        %6613 = vmatprep.subr.bf16.mxu0 %v6406
        %6614 = vmatpush1.bf16.msra.mxu0 %v6405
        %6615 = vmatprep.subr.bf16.mxu0 %v6409
        %6616 = vmatpush1.bf16.msra.mxu0 %v6408
        %6617 = vmatprep.subr.bf16.mxu0 %v6412
        %6618 = vmatpush1.bf16.msra.mxu0 %v6411
        %6619 = vmatprep.subr.bf16.mxu0 %v6415
        %6620 = vmatpush1.bf16.msra.mxu0 %v6414
        %6621 = vmatprep.subr.bf16.mxu0 %v6418
        %6622 = vmatpush1.bf16.msra.mxu0 %v6417
        %6623 = vmatprep.subr.bf16.mxu0 %v6421
        %6624 = vmatpush1.bf16.msra.mxu0 %v6420
        %6625 = vmatprep.subr.bf16.mxu0 %v6424
        %6626 = vmatpush1.bf16.msra.mxu0 %v6423
        %6627 = vmatprep.subr.bf16.mxu0 0
        %6628 = vmatpush1.bf16.msra.mxu0 0
        %6629 = vmatprep.subr.bf16.mxu0 0
        %6630 = vmatpush1.bf16.msra.mxu0 0
        %6631 = vmatprep.subr.bf16.mxu0 0
        %6632 = vmatpush1.bf16.msra.mxu0 0
        %6633 = vmatprep.subr.bf16.mxu0 0
        %6634 = vmatpush1.bf16.msra.mxu0 0
        %6635 = vmatprep.subr.bf16.mxu0 0
        %6636 = vmatpush1.bf16.msra.mxu0 0
        %6637 = vmatprep.subr.bf16.mxu0 0
        %6638 = vmatpush1.bf16.msra.mxu0 0
        %6639 = vmatprep.subr.bf16.mxu0 0
        %6640 = vmatpush1.bf16.msra.mxu0 0
        %6641 = vmatprep.subr.bf16.mxu0 0
        %6642 = vmatpush1.bf16.msra.mxu0 0
        %6643 = vmatprep.mubr.bf16.mxu0 0
        %6644 = vmatmul.mubr.bf16.gmra.mrb[0].mxu0 %v5979
        %v6645 = vpop.f32.mrb[0].mxu0
        %v6646 = vadd.f32 %v6533, %v6645
        %v6647 = vpop.f32.mrb[0].mxu0
        %v6648 = vadd.f32 %v6535, %v6647
        %v6649 = vpop.f32.mrb[0].mxu0
        %v6650 = vadd.f32 %v6537, %v6649
        %v6651 = vpop.f32.mrb[0].mxu0
        %v6652 = vadd.f32 %v6539, %v6651
        %6653 = vmatprep.mubr.bf16.mxu0 0
        %6654 = vmatmul.mubr.bf16.gmra.mrb[0].mxu0 %v5982
        %v6655 = vpop.f32.mrb[0].mxu0
        %v6656 = vadd.f32 %v6543, %v6655
        %v6657 = vpop.f32.mrb[0].mxu0
        %v6658 = vadd.f32 %v6545, %v6657
        %v6659 = vpop.f32.mrb[0].mxu0
        %v6660 = vadd.f32 %v6547, %v6659
        %v6661 = vpop.f32.mrb[0].mxu0
        %v6662 = vadd.f32 %v6549, %v6661
        %6663 = vmatprep.mubr.bf16.mxu0 0
        %6664 = vmatmul.mubr.bf16.gmra.mrb[0].mxu0 %v5985
        %v6665 = vpop.f32.mrb[0].mxu0
        %v6666 = vadd.f32 %v6553, %v6665
        %v6667 = vpop.f32.mrb[0].mxu0
        %v6668 = vadd.f32 %v6555, %v6667
        %v6669 = vpop.f32.mrb[0].mxu0
        %v6670 = vadd.f32 %v6557, %v6669
        %v6671 = vpop.f32.mrb[0].mxu0
        %v6672 = vadd.f32 %v6559, %v6671
        %6673 = vmatprep.mubr.bf16.mxu0 0
        %6674 = vmatmul.mubr.bf16.gmra.mrb[0].mxu0 %v5988
        %v6675 = vpop.f32.mrb[0].mxu0
        %v6676 = vadd.f32 %v6563, %v6675
        %v6677 = vpop.f32.mrb[0].mxu0
        %v6678 = vadd.f32 %v6565, %v6677
        %v6679 = vpop.f32.mrb[0].mxu0
        %v6680 = vadd.f32 %v6567, %v6679
        %v6681 = vpop.f32.mrb[0].mxu0
        %v6682 = vadd.f32 %v6569, %v6681
        %6683 = vmatprep.mubr.bf16.mxu0 0
        %6684 = vmatmul.mubr.bf16.gmra.mrb[0].mxu0 %v5991
        %v6685 = vpop.f32.mrb[0].mxu0
        %v6686 = vadd.f32 %v6573, %v6685
        %v6687 = vpop.f32.mrb[0].mxu0
        %v6688 = vadd.f32 %v6575, %v6687
        %v6689 = vpop.f32.mrb[0].mxu0
        %v6690 = vadd.f32 %v6577, %v6689
        %v6691 = vpop.f32.mrb[0].mxu0
        %v6692 = vadd.f32 %v6579, %v6691
        %6693 = vmatprep.mubr.bf16.mxu0 0
        %6694 = vmatmul.mubr.bf16.gmra.mrb[0].mxu0 %v5994
        %v6695 = vpop.f32.mrb[0].mxu0
        %v6696 = vadd.f32 %v6583, %v6695
        %v6697 = vpop.f32.mrb[0].mxu0
        %v6698 = vadd.f32 %v6585, %v6697
        %v6699 = vpop.f32.mrb[0].mxu0
        %v6700 = vadd.f32 %v6587, %v6699
        %v6701 = vpop.f32.mrb[0].mxu0
        %v6702 = vadd.f32 %v6589, %v6701
        %6703 = vmatprep.mubr.bf16.mxu0 0
        %6704 = vmatmul.mubr.bf16.gmra.mrb[0].mxu0 %v5997
        %v6705 = vpop.f32.mrb[0].mxu0
        %v6706 = vadd.f32 %v6593, %v6705
        %v6707 = vpop.f32.mrb[0].mxu0
        %v6708 = vadd.f32 %v6595, %v6707
        %v6709 = vpop.f32.mrb[0].mxu0
        %v6710 = vadd.f32 %v6597, %v6709
        %v6711 = vpop.f32.mrb[0].mxu0
        %v6712 = vadd.f32 %v6599, %v6711
        %6713 = vmatprep.mubr.bf16.mxu0 0
        %6714 = vmatmul.mubr.bf16.gmra.mrb[0].mxu0 %v6000
        %v6715 = vpop.f32.mrb[0].mxu0
        %v6716 = vadd.f32 %v6603, %v6715
        %v6717 = vpop.f32.mrb[0].mxu0
        %v6718 = vadd.f32 %v6605, %v6717
        %v6719 = vpop.f32.mrb[0].mxu0
        %v6720 = vadd.f32 %v6607, %v6719
        %v6721 = vpop.f32.mrb[0].mxu0
        %v6722 = vadd.f32 %v6609, %v6721
        %6723 = vdwg.mxu0
        %6724 = vmatprep.subr.bf16.mxu0 0
        %6725 = vmatpush1.bf16.msra.mxu0 %v6356
        %6726 = vmatprep.subr.bf16.mxu0 0
        %6727 = vmatpush1.bf16.msra.mxu0 %v6359
        %6728 = vmatprep.subr.bf16.mxu0 0
        %6729 = vmatpush1.bf16.msra.mxu0 %v6362
        %6730 = vmatprep.subr.bf16.mxu0 0
        %6731 = vmatpush1.bf16.msra.mxu0 %v6365
        %6732 = vmatprep.subr.bf16.mxu0 0
        %6733 = vmatpush1.bf16.msra.mxu0 %v6368
        %6734 = vmatprep.subr.bf16.mxu0 0
        %6735 = vmatpush1.bf16.msra.mxu0 %v6371
        %6736 = vmatprep.subr.bf16.mxu0 0
        %6737 = vmatpush1.bf16.msra.mxu0 %v6374
        %6738 = vmatprep.subr.bf16.mxu0 0
        %6739 = vmatpush1.bf16.msra.mxu0 %v6377
        %6740 = vmatprep.subr.bf16.mxu0 0
        %6741 = vmatpush1.bf16.msra.mxu0 %v6380
        %6742 = vmatprep.subr.bf16.mxu0 0
        %6743 = vmatpush1.bf16.msra.mxu0 %v6383
        %6744 = vmatprep.subr.bf16.mxu0 0
        %6745 = vmatpush1.bf16.msra.mxu0 %v6386
        %6746 = vmatprep.subr.bf16.mxu0 0
        %6747 = vmatpush1.bf16.msra.mxu0 %v6389
        %6748 = vmatprep.subr.bf16.mxu0 0
        %6749 = vmatpush1.bf16.msra.mxu0 %v6392
        %6750 = vmatprep.subr.bf16.mxu0 0
        %6751 = vmatpush1.bf16.msra.mxu0 %v6395
        %6752 = vmatprep.subr.bf16.mxu0 0
        %6753 = vmatpush1.bf16.msra.mxu0 %v6398
        %6754 = vmatprep.subr.bf16.mxu0 0
        %6755 = vmatpush1.bf16.msra.mxu0 %v6401
        %6756 = vmatprep.mubr.bf16.mxu0 %v5978
        %6757 = vmatmul.mubr.bf16.gmra.mrb[0].mxu0 %v5977
        %v6758 = vpop.f32.mrb[0].mxu0
        %v6759 = vadd.f32 %v6110, %v6758
        %v6760 = vpop.f32.mrb[0].mxu0
        %v6761 = vpop.f32.mrb[0].mxu0
        %v6762 = vadd.f32 %v6110, %v6761
        %v6763 = vpop.f32.mrb[0].mxu0
        %6764 = vmatprep.mubr.bf16.mxu0 %v5981
        %6765 = vmatmul.mubr.bf16.gmra.mrb[0].mxu0 %v5980
        %v6766 = vpop.f32.mrb[0].mxu0
        %v6767 = vadd.f32 %v6110, %v6766
        %v6768 = vpop.f32.mrb[0].mxu0
        %v6769 = vpop.f32.mrb[0].mxu0
        %v6770 = vadd.f32 %v6110, %v6769
        %v6771 = vpop.f32.mrb[0].mxu0
        %6772 = vmatprep.mubr.bf16.mxu0 %v5984
        %6773 = vmatmul.mubr.bf16.gmra.mrb[0].mxu0 %v5983
        %v6774 = vpop.f32.mrb[0].mxu0
        %v6775 = vadd.f32 %v6110, %v6774
        %v6776 = vpop.f32.mrb[0].mxu0
        %v6777 = vpop.f32.mrb[0].mxu0
        %v6778 = vadd.f32 %v6110, %v6777
        %v6779 = vpop.f32.mrb[0].mxu0
        %6780 = vmatprep.mubr.bf16.mxu0 %v5987
        %6781 = vmatmul.mubr.bf16.gmra.mrb[0].mxu0 %v5986
        %v6782 = vpop.f32.mrb[0].mxu0
        %v6783 = vadd.f32 %v6110, %v6782
        %v6784 = vpop.f32.mrb[0].mxu0
        %v6785 = vpop.f32.mrb[0].mxu0
        %v6786 = vadd.f32 %v6110, %v6785
        %v6787 = vpop.f32.mrb[0].mxu0
        %6788 = vmatprep.mubr.bf16.mxu0 %v5990
        %6789 = vmatmul.mubr.bf16.gmra.mrb[0].mxu0 %v5989
        %v6790 = vpop.f32.mrb[0].mxu0
        %v6791 = vadd.f32 %v6110, %v6790
        %v6792 = vpop.f32.mrb[0].mxu0
        %v6793 = vpop.f32.mrb[0].mxu0
        %v6794 = vadd.f32 %v6110, %v6793
        %v6795 = vpop.f32.mrb[0].mxu0
        %6796 = vmatprep.mubr.bf16.mxu0 %v5993
        %6797 = vmatmul.mubr.bf16.gmra.mrb[0].mxu0 %v5992
        %v6798 = vpop.f32.mrb[0].mxu0
        %v6799 = vadd.f32 %v6110, %v6798
        %v6800 = vpop.f32.mrb[0].mxu0
        %v6801 = vpop.f32.mrb[0].mxu0
        %v6802 = vadd.f32 %v6110, %v6801
        %v6803 = vpop.f32.mrb[0].mxu0
        %6804 = vmatprep.mubr.bf16.mxu0 %v5996
        %6805 = vmatmul.mubr.bf16.gmra.mrb[0].mxu0 %v5995
        %v6806 = vpop.f32.mrb[0].mxu0
        %v6807 = vadd.f32 %v6110, %v6806
        %v6808 = vpop.f32.mrb[0].mxu0
        %v6809 = vpop.f32.mrb[0].mxu0
        %v6810 = vadd.f32 %v6110, %v6809
        %v6811 = vpop.f32.mrb[0].mxu0
        %6812 = vmatprep.mubr.bf16.mxu0 %v5999
        %6813 = vmatmul.mubr.bf16.gmra.mrb[0].mxu0 %v5998
        %v6814 = vpop.f32.mrb[0].mxu0
        %v6815 = vadd.f32 %v6110, %v6814
        %v6816 = vpop.f32.mrb[0].mxu0
        %v6817 = vpop.f32.mrb[0].mxu0
        %v6818 = vadd.f32 %v6110, %v6817
        %v6819 = vpop.f32.mrb[0].mxu0
        %6820 = vdwg.mxu0
        %6821 = vmatprep.subr.bf16.mxu0 0
        %6822 = vmatpush1.bf16.msra.mxu0 %v6404
        %6823 = vmatprep.subr.bf16.mxu0 0
        %6824 = vmatpush1.bf16.msra.mxu0 %v6407
        %6825 = vmatprep.subr.bf16.mxu0 0
        %6826 = vmatpush1.bf16.msra.mxu0 %v6410
        %6827 = vmatprep.subr.bf16.mxu0 0
        %6828 = vmatpush1.bf16.msra.mxu0 %v6413
        %6829 = vmatprep.subr.bf16.mxu0 0
        %6830 = vmatpush1.bf16.msra.mxu0 %v6416
        %6831 = vmatprep.subr.bf16.mxu0 0
        %6832 = vmatpush1.bf16.msra.mxu0 %v6419
        %6833 = vmatprep.subr.bf16.mxu0 0
        %6834 = vmatpush1.bf16.msra.mxu0 %v6422
        %6835 = vmatprep.subr.bf16.mxu0 0
        %6836 = vmatpush1.bf16.msra.mxu0 %v6425
        %6837 = vmatprep.subr.bf16.mxu0 0
        %6838 = vmatpush1.bf16.msra.mxu0 0
        %6839 = vmatprep.subr.bf16.mxu0 0
        %6840 = vmatpush1.bf16.msra.mxu0 0
        %6841 = vmatprep.subr.bf16.mxu0 0
        %6842 = vmatpush1.bf16.msra.mxu0 0
        %6843 = vmatprep.subr.bf16.mxu0 0
        %6844 = vmatpush1.bf16.msra.mxu0 0
        %6845 = vmatprep.subr.bf16.mxu0 0
        %6846 = vmatpush1.bf16.msra.mxu0 0
        %6847 = vmatprep.subr.bf16.mxu0 0
        %6848 = vmatpush1.bf16.msra.mxu0 0
        %6849 = vmatprep.subr.bf16.mxu0 0
        %6850 = vmatpush1.bf16.msra.mxu0 0
        %6851 = vmatprep.subr.bf16.mxu0 0
        %6852 = vmatpush1.bf16.msra.mxu0 0
        %6853 = vmatprep.mubr.bf16.mxu0 0
        %6854 = vmatmul.mubr.bf16.gmra.mrb[0].mxu0 %v5979
        %v6855 = vpop.f32.mrb[0].mxu0
        %v6856 = vadd.f32 %v6759, %v6855
        %v6857 = vpop.f32.mrb[0].mxu0
        %v6858 = vpop.f32.mrb[0].mxu0
        %v6859 = vadd.f32 %v6762, %v6858
        %v6860 = vpop.f32.mrb[0].mxu0
        %6861 = vmatprep.mubr.bf16.mxu0 0
        %6862 = vmatmul.mubr.bf16.gmra.mrb[0].mxu0 %v5982
        %v6863 = vpop.f32.mrb[0].mxu0
        %v6864 = vadd.f32 %v6767, %v6863
        %v6865 = vpop.f32.mrb[0].mxu0
        %v6866 = vpop.f32.mrb[0].mxu0
        %v6867 = vadd.f32 %v6770, %v6866
        %v6868 = vpop.f32.mrb[0].mxu0
        %6869 = vmatprep.mubr.bf16.mxu0 0
        %6870 = vmatmul.mubr.bf16.gmra.mrb[0].mxu0 %v5985
        %v6871 = vpop.f32.mrb[0].mxu0
        %v6872 = vadd.f32 %v6775, %v6871
        %v6873 = vpop.f32.mrb[0].mxu0
        %v6874 = vpop.f32.mrb[0].mxu0
        %v6875 = vadd.f32 %v6778, %v6874
        %v6876 = vpop.f32.mrb[0].mxu0
        %6877 = vmatprep.mubr.bf16.mxu0 0
        %6878 = vmatmul.mubr.bf16.gmra.mrb[0].mxu0 %v5988
        %v6879 = vpop.f32.mrb[0].mxu0
        %v6880 = vadd.f32 %v6783, %v6879
        %v6881 = vpop.f32.mrb[0].mxu0
        %v6882 = vpop.f32.mrb[0].mxu0
        %v6883 = vadd.f32 %v6786, %v6882
        %v6884 = vpop.f32.mrb[0].mxu0
        %6885 = vmatprep.mubr.bf16.mxu0 0
        %6886 = vmatmul.mubr.bf16.gmra.mrb[0].mxu0 %v5991
        %v6887 = vpop.f32.mrb[0].mxu0
        %v6888 = vadd.f32 %v6791, %v6887
        %v6889 = vpop.f32.mrb[0].mxu0
        %v6890 = vpop.f32.mrb[0].mxu0
        %v6891 = vadd.f32 %v6794, %v6890
        %v6892 = vpop.f32.mrb[0].mxu0
        %6893 = vmatprep.mubr.bf16.mxu0 0
        %6894 = vmatmul.mubr.bf16.gmra.mrb[0].mxu0 %v5994
        %v6895 = vpop.f32.mrb[0].mxu0
        %v6896 = vadd.f32 %v6799, %v6895
        %v6897 = vpop.f32.mrb[0].mxu0
        %v6898 = vpop.f32.mrb[0].mxu0
        %v6899 = vadd.f32 %v6802, %v6898
        %v6900 = vpop.f32.mrb[0].mxu0
        %6901 = vmatprep.mubr.bf16.mxu0 0
        %6902 = vmatmul.mubr.bf16.gmra.mrb[0].mxu0 %v5997
        %v6903 = vpop.f32.mrb[0].mxu0
        %v6904 = vadd.f32 %v6807, %v6903
        %v6905 = vpop.f32.mrb[0].mxu0
        %v6906 = vpop.f32.mrb[0].mxu0
        %v6907 = vadd.f32 %v6810, %v6906
        %v6908 = vpop.f32.mrb[0].mxu0
        %6909 = vmatprep.mubr.bf16.mxu0 0
        %6910 = vmatmul.mubr.bf16.gmra.mrb[0].mxu0 %v6000
        %v6911 = vpop.f32.mrb[0].mxu0
        %v6912 = vadd.f32 %v6815, %v6911
        %v6913 = vpop.f32.mrb[0].mxu0
        %v6914 = vpop.f32.mrb[0].mxu0
        %v6915 = vadd.f32 %v6818, %v6914
        %v6916 = vpop.f32.mrb[0].mxu0
        %6917 = vdwg.mxu0
        %6918 = vst [vmem:[%s244] sm:$0xff] %v6646
        %6919 = vst [vmem:[%s244 + $0x8] sm:$0xff] %v6648
        %6920 = vst [vmem:[%s244 + $0x10] sm:$0xff] %v6856
        %6921 = vst [vmem:[%s244 + $0x18] sm:$0xff] %v6650
        %6922 = vst [vmem:[%s244 + $0x20] sm:$0xff] %v6652
        %6923 = vst [vmem:[%s244 + $0x28] sm:$0xff] %v6859
        %6924 = vst [vmem:[%s244 + $0x30] sm:$0xff] %v6656
        %6925 = vst [vmem:[%s244 + $0x38] sm:$0xff] %v6658
        %6926 = vst [vmem:[%s244 + $0x40] sm:$0xff] %v6864
        %6927 = vst [vmem:[%s244 + $0x48] sm:$0xff] %v6660
        %6928 = vst [vmem:[%s244 + $0x50] sm:$0xff] %v6662
        %6929 = vst [vmem:[%s244 + $0x58] sm:$0xff] %v6867
        %6930 = vst [vmem:[%s244 + $0x60] sm:$0xff] %v6666
        %6931 = vst [vmem:[%s244 + $0x68] sm:$0xff] %v6668
        %6932 = vst [vmem:[%s244 + $0x70] sm:$0xff] %v6872
        %6933 = vst [vmem:[%s244 + $0x78] sm:$0xff] %v6670
        %6934 = vst [vmem:[%s244 + $0x80] sm:$0xff] %v6672
        %6935 = vst [vmem:[%s244 + $0x88] sm:$0xff] %v6875
        %6936 = vst [vmem:[%s244 + $0x90] sm:$0xff] %v6676
        %6937 = vst [vmem:[%s244 + $0x98] sm:$0xff] %v6678
        %6938 = vst [vmem:[%s244 + $0xa0] sm:$0xff] %v6880
        %6939 = vst [vmem:[%s244 + $0xa8] sm:$0xff] %v6680
        %6940 = vst [vmem:[%s244 + $0xb0] sm:$0xff] %v6682
        %6941 = vst [vmem:[%s244 + $0xb8] sm:$0xff] %v6883
        %6942 = vst [vmem:[%s244 + $0xc0] sm:$0xff] %v6686
        %6943 = vst [vmem:[%s244 + $0xc8] sm:$0xff] %v6688
        %6944 = vst [vmem:[%s244 + $0xd0] sm:$0xff] %v6888
        %6945 = vst [vmem:[%s244 + $0xd8] sm:$0xff] %v6690
        %6946 = vst [vmem:[%s244 + $0xe0] sm:$0xff] %v6692
        %6947 = vst [vmem:[%s244 + $0xe8] sm:$0xff] %v6891
        %6948 = vst [vmem:[%s244 + $0xf0] sm:$0xff] %v6696
        %6949 = vst [vmem:[%s244 + $0xf8] sm:$0xff] %v6698
        %6950 = vst [vmem:[%s244 + $0x100] sm:$0xff] %v6896
        %6951 = vst [vmem:[%s244 + $0x108] sm:$0xff] %v6700
        %6952 = vst [vmem:[%s244 + $0x110] sm:$0xff] %v6702
        %6953 = vst [vmem:[%s244 + $0x118] sm:$0xff] %v6899
        %6954 = vst [vmem:[%s244 + $0x120] sm:$0xff] %v6706
        %6955 = vst [vmem:[%s244 + $0x128] sm:$0xff] %v6708
        %6956 = vst [vmem:[%s244 + $0x130] sm:$0xff] %v6904
        %6957 = vst [vmem:[%s244 + $0x138] sm:$0xff] %v6710
        %6958 = vst [vmem:[%s244 + $0x140] sm:$0xff] %v6712
        %6959 = vst [vmem:[%s244 + $0x148] sm:$0xff] %v6907
        %6960 = vst [vmem:[%s244 + $0x150] sm:$0xff] %v6716
        %6961 = vst [vmem:[%s244 + $0x158] sm:$0xff] %v6718
        %6962 = vst [vmem:[%s244 + $0x160] sm:$0xff] %v6912
        %6963 = vst [vmem:[%s244 + $0x168] sm:$0xff] %v6720
        %6964 = vst [vmem:[%s244 + $0x170] sm:$0xff] %v6722
        %6965 = vst [vmem:[%s244 + $0x178] sm:$0xff] %v6915
        %s6966 = sand.u32 %s119, 1
        %s6967 = scalar_lea.sflag [#allocation6], %s6966
        %s6968 = sand.u32 %s119, 1
        %s6969 = smul.addr %s6968, 384
        %s6970 = scalar_lea.vmem [#allocation10], %s6969
        // Predicated region
        $region49: #{tpu_custom_call.1} parent=35 // pred_check
          %p6971 = pneg %p129
        $region50: #{tpu_custom_call.1} parent=35 // pred_check_branch
          %6973 = sbr.rel (%p6971) target = $region52
        $region51: #{tpu_custom_call.1} parent=35 // pred_region
          %s6975 = ssub.s32 6144, 6144
          %6976 = vsyncadd %s6967, %s6975
          %s6977 = smul.addr %s22, 48
          %s6978 = smul.addr %s6977, 128
          %s6979 = scalar_lea.hbm %s4, %s6978
          %s6980 = sshll.u32 %s6970, 4
          %s6981 = int_to_ptr.vmem [resolvable:$true] %s6980
          %6986 = dma.vmem_to_hbm [thread:$0]  %s6981, 6144, %s6979, %s6967, 384, 384, 24
        $region52: #{tpu_custom_call.1} parent=35 // pred_fallthru
          _
      $region36: #{tpu_custom_call.1} parent=5 // pred_fallthru
        _
      %p6987 = scmp.le.s32.totalorder 2, %s17
      // Predicated region
      $region53: #{tpu_custom_call.1} parent=5 // pred_check
        %p6988 = pneg %p6987
      $region54: #{tpu_custom_call.1} parent=5 // pred_check_branch
        %6990 = sbr.rel (%p6988) target = $region56
      $region55: #{tpu_custom_call.1} parent=5 // pred_region
        %s6991 = ssub.s32 %s17, 2
        // Predicated region
        $region57: #{tpu_custom_call.1} parent=55 // pred_check
          %p6992 = pneg %p135
        $region58: #{tpu_custom_call.1} parent=55 // pred_check_branch
          %6994 = sbr.rel (%p6992) target = $region60
        $region59: #{tpu_custom_call.1} parent=55 // pred_region
          %s6995 = sand.u32 %s120, 1
          %s6996 = scalar_lea.sflag [#allocation6], %s6995
          %s6997 = sand.u32 %s120, 1
          %s6998 = smul.addr %s6997, 384
          %s6999 = scalar_lea.vmem [#allocation10], %s6998
          %7000 = dma.done %s6996, 6144
        $region60: #{tpu_custom_call.1} parent=55 // pred_fallthru
          _
      $region56: #{tpu_custom_call.1} parent=5 // pred_fallthru
        _
    $region6: #{tpu_custom_call.1} parent=1 // loop_footer
      %s21 = sadd.s32 1, %s17
    $region7: #{tpu_custom_call.1} parent=1 // loop_footer_branch
      %16 = sbr.rel target = $region3
    $region8: #{tpu_custom_call.1} parent=1 // loop_exit
      _
    %7001 = vsyncpa [#allocation5], 1
    %s7002 = scalar_lea.sflag [#allocation5], 1
    %7003 = vsyncpa %s7002, 1
    %7004 = vsyncpa [#allocation8], 1
    %7005 = vsyncpa [#allocation6], 1
    %s7006 = scalar_lea.sflag [#allocation6], 1
    %7007 = vsyncpa %s7006, 1

</llo_original>
